<compile_context>
chip_gen: v7x
topology: tpu7x:2x2x1
jax: 0.10.0
libtpu: 0.0.40
codegen_flags: <defaults>
</compile_context>

<pallas_src>
import jax
import jax.numpy as jnp
from jax.experimental import pallas as pl
from jax.experimental.pallas import tpu as pltpu

F_MAPS = 16      # conv2/conv3 feature maps
K_T = 50         # temporal kernel length of conv2/conv3
POOL = 13        # max-pool window (= stride)
BN_EPS = 1e-5
# number of 13-sample input blocks spanned by one pool window's 50-tap convs
N_SHIFT = (POOL - 1 + K_T - 1) // POOL + 1      # = 5


# ----------------------------------------------------------------------------
# Pallas kernels (grid = (B,), one batch element per step)
# ----------------------------------------------------------------------------
def _stage_a_kernel(x_ref, w_ref, aff_ref, o_ref):
    """conv1 + permute + conv2 + max-pool(13) + ReLU + BN1 for ONE batch.

      x_ref  : (P1+4, 13*C)      raw input, 13-sample time blocks (no duplication)
      w_ref  : (5, 13*C, 13*C*F) banded conv weights, one slab per block shift
      aff_ref: (3, C*F)          [conv bias ; BN scale ; BN shift]
      o_ref  : (P1, C*F)         pooled / activated / normalized output
    """
    n_shift = w_ref.shape[0]
    p1, na = o_ref.shape
    n_phase = w_ref.shape[2] // na          # 13 pool phases live in N

    # 50-tap conv at all 13 phases of every pool window, as a sum of
    # block-shifted matmuls over the raw blocked input (in-kernel windowing).
    acc = jnp.zeros((p1, n_phase * na), jnp.float32)
    for a in range(n_shift):
        acc = acc + jnp.dot(x_ref[a:a + p1, :], w_ref[a],
                            preferred_element_type=jnp.float32)

    # max-pool over the 13 conv phases (bias commutes with max -> added after)
    pooled = acc[:, 0:na]
    for r in range(1, n_phase):
        pooled = jnp.maximum(pooled, acc[:, r * na:(r + 1) * na])

    bias, scale, shift = aff_ref[0:1, :], aff_ref[1:2, :], aff_ref[2:3, :]
    o_ref[...] = jnp.maximum(pooled + bias, 0.0) * scale + shift


def _stage_bc_kernel(z_ref, w_ref, aff_ref, wl_ref, bl_ref, o_ref):
    """conv3 + max-pool(13) + ReLU + BN2 + flatten + Linear for ONE batch.

      z_ref  : ((P2+4)*C, 13*F)  stage-A output, rows = (time-block, channel)
      w_ref  : (5, 13*F, 13*F)   banded conv3 weights per block shift
      aff_ref: (3, F)            [conv3 bias ; BN2 scale ; BN2 shift]
      wl_ref : (F, P2*C*E)       linear weight, pre-permuted for torch flatten order
      bl_ref : (1, E)            linear bias
      o_ref  : (1, E)            embedding row for this batch element
    """
    n_shift = w_ref.shape[0]
    f = aff_ref.shape[1]
    n_phase = w_ref.shape[2] // f
    e = o_ref.shape[1]
    pc = wl_ref.shape[1] // e                      # P2 * C rows
    c = (z_ref.shape[0] - pc) // (n_shift - 1)     # channels

    acc = jnp.zeros((pc, n_phase * f), jnp.float32)
    for a in range(n_shift):
        acc = acc + jnp.dot(z_ref[a * c:a * c + pc, :], w_ref[a],
                            preferred_element_type=jnp.float32)

    pooled = acc[:, 0:f]
    for r in range(1, n_phase):
        pooled = jnp.maximum(pooled, acc[:, r * f:(r + 1) * f])

    bias, scale, shift = aff_ref[0:1, :], aff_ref[1:2, :], aff_ref[2:3, :]
    z2 = jnp.maximum(pooled + bias, 0.0) * scale + shift          # (P2*C, F)

    # Fused flatten + Linear: contract the feature axis on the MXU, then pick
    # the matching row/column-block "diagonal" and sum.  This keeps the
    # (P2*C, 16) tile off HBM and avoids any sublane->lane relayout.
    g = jnp.dot(z2, wl_ref[...], preferred_element_type=jnp.float32)   # (pc, pc*e)
    out = bl_ref[...]
    for q in range(pc):
        out = out + g[q:q + 1, q * e:(q + 1) * e]
    o_ref[...] = out


# ----------------------------------------------------------------------------
# pallas_call wrappers
# ----------------------------------------------------------------------------
def _stage_a(x_blk, w_a, aff_a, p1):
    b, m1, kc = x_blk.shape
    na = aff_a.shape[1]
    return pl.pallas_call(
        _stage_a_kernel,
        out_shape=jax.ShapeDtypeStruct((b, p1, na), jnp.float32),
        grid_spec=pltpu.PrefetchScalarGridSpec(
            num_scalar_prefetch=0,
            grid=(b,),
            in_specs=[
                pl.BlockSpec((None, m1, kc), lambda i: (i, 0, 0)),
                pl.BlockSpec(w_a.shape, lambda i: (0, 0, 0)),
                pl.BlockSpec(aff_a.shape, lambda i: (0, 0)),
            ],
            out_specs=pl.BlockSpec((None, p1, na), lambda i: (i, 0, 0)),
        ),
        compiler_params=pltpu.CompilerParams(
            dimension_semantics=("parallel",)),
    )(x_blk, w_a, aff_a)


def _stage_bc(z_blk, w_b, aff_b, w_l, b_l):
    b, mc, kb = z_blk.shape
    e = b_l.shape[1]
    out = pl.pallas_call(
        _stage_bc_kernel,
        out_shape=jax.ShapeDtypeStruct((b, 1, e), jnp.float32),
        grid_spec=pltpu.PrefetchScalarGridSpec(
            num_scalar_prefetch=0,
            grid=(b,),
            in_specs=[
                pl.BlockSpec((None, mc, kb), lambda i: (i, 0, 0)),
                pl.BlockSpec(w_b.shape, lambda i: (0, 0, 0)),
                pl.BlockSpec(aff_b.shape, lambda i: (0, 0)),
                pl.BlockSpec(w_l.shape, lambda i: (0, 0)),
                pl.BlockSpec(b_l.shape, lambda i: (0, 0)),
            ],
            out_specs=pl.BlockSpec((None, 1, e), lambda i: (i, 0, 0)),
        ),
        compiler_params=pltpu.CompilerParams(
            dimension_semantics=("parallel",)),
    )(z_blk, w_b, aff_b, w_l, b_l)
    return out.reshape(b, e)


# ----------------------------------------------------------------------------
# StagerNet forward built from the kernels
# ----------------------------------------------------------------------------
def stagernet_forward(x, p):
    """StagerNet forward pass (inference semantics)."""
    B, T, C = x.shape
    F = F_MAPS
    T2 = T - (K_T - 1)                  # conv2 output length
    P1 = (T2 - POOL) // POOL + 1        # after first max-pool
    T3 = P1 - (K_T - 1)                 # conv3 output length
    P2 = (T3 - POOL) // POOL + 1        # after second max-pool
    E = p["w_lin"].shape[0]
    M1 = P1 + (N_SHIFT - 1)             # 13-sample blocks needed by stage A
    M2 = P2 + (N_SHIFT - 1)             # 13-row blocks needed by stage B
    assert M1 * POOL >= T

    # ---- parameter folding (parameters only; tiny vs. the conv work) --------
    s1 = p["gamma1"] / jnp.sqrt(p["var1"] + BN_EPS)
    t1 = p["beta1"] - p["mean1"] * s1
    s2 = p["gamma2"] / jnp.sqrt(p["var2"] + BN_EPS)
    t2 = p["beta2"] - p["mean2"] * s2

    # Banded, 13-blocked weights: the conv output at pool window i, phase r
    # uses tap k = 13*a + s - r of input block i+a (offset s inside the block).
    a_i = jnp.arange(N_SHIFT)[:, None, None]
    s_i = jnp.arange(POOL)[None, :, None]
    r_i = jnp.arange(POOL)[None, None, :]
    k = POOL * a_i + s_i - r_i                                    # (5,13,13)
    valid = (k >= 0) & (k < K_T)
    kcl = jnp.clip(k, 0, K_T - 1)

    # stage A: conv1 (1x1 channel mix) folded into conv2 -> one banded weight.
    w2_k = jnp.where(valid[..., None], p["w2"].T[kcl], 0.0)       # (5,13,13,F)
    w_a = jnp.einsum("ci,asrf->asircf", p["w1"], w2_k)            # (a,s,ci,r,c,f)
    w_a = w_a.reshape(N_SHIFT, POOL * C, POOL * C * F)
    bias_a = (p["b1"][:, None] * jnp.sum(p["w2"], axis=1)[None, :]
              + p["b2"][None, :]).reshape(-1)
    aff_a = jnp.stack([bias_a, jnp.tile(s1, C), jnp.tile(t1, C)], axis=0)

    # stage B: conv3 as a banded weight (contraction over (s, g), per channel).
    w3_k = jnp.where(valid[..., None, None],
                     jnp.transpose(p["w3"], (2, 1, 0))[kcl], 0.0)  # (5,13,13,G,F2)
    w_b = jnp.transpose(w3_k, (0, 1, 3, 2, 4)).reshape(N_SHIFT, POOL * F, POOL * F)
    aff_b = jnp.stack([p["b3"], s2, t2], axis=0)

    # stage C: linear weight permuted from torch flatten order (f2, p2, c) to
    # the kernel's (p2*C + c, f2) tile, laid out for the diagonal-block trick.
    w_l = (p["w_lin"].reshape(E, F, P2 * C).transpose(1, 2, 0)
           .reshape(F, P2 * C * E))
    b_l = p["b_lin"].reshape(1, E)

    # ---- layout plumbing on the raw input only: pad + 13-block reshape ------
    # (48 KB/batch pad copy; no duplication, no im2col, no gathers)
    x_blk = jnp.pad(x, ((0, 0), (0, M1 * POOL - T), (0, 0))).reshape(B, M1, POOL * C)

    # stage A: conv1 + permute + conv2 + max-pool + ReLU + BN1
    out_a = _stage_a(x_blk, w_a, aff_a, P1)                       # (B, P1, C*F)

    # Re-block the ~57 KB/batch stage-A output for stage B:
    # rows -> (time-block, channel), cols -> (in-block offset, feature).
    z_blk = (out_a[:, : M2 * POOL, :]
             .reshape(B, M2, POOL, C, F)
             .transpose(0, 1, 3, 2, 4)
             .reshape(B, M2 * C, POOL * F))

    # stage B+C: conv3 + max-pool + ReLU + BN2 + flatten + dropout + Linear
    # TODO(synk): dropout is inference-mode identity here (no RNG mask applied).
    # TODO(synk): BatchNorm uses running statistics (eval); training-mode batch
    #             statistics are not implemented.
    return _stage_bc(z_blk, w_b, aff_b, w_l, b_l)


# ----------------------------------------------------------------------------
# Pure-jnp reference (straight transcription of the PyTorch forward, eval mode)
# ----------------------------------------------------------------------------
def stagernet_reference(x, p):
    B, T, C = x.shape
    F = F_MAPS
    # conv1 + permute: y1[b, t, co]
    y1 = jnp.einsum("btc,oc->bto", x, p["w1"]) + p["b1"]
    # conv2: out2[b, f, t, c]
    T2 = T - (K_T - 1)
    idx = jnp.arange(T2)[:, None] + jnp.arange(K_T)[None, :]
    out2 = (jnp.einsum("btkc,fk->bftc", y1[:, idx, :], p["w2"])
            + p["b2"][None, :, None, None])
    P1 = (T2 - POOL) // POOL + 1
    pooled = out2[:, :, : P1 * POOL, :].reshape(B, F, P1, POOL, C).max(axis=3)
    s1 = p["gamma1"] / jnp.sqrt(p["var1"] + BN_EPS)
    t1 = p["beta1"] - p["mean1"] * s1
    z1 = jnp.maximum(pooled, 0.0) * s1[None, :, None, None] + t1[None, :, None, None]
    # conv3
    T3 = P1 - (K_T - 1)
    idx3 = jnp.arange(T3)[:, None] + jnp.arange(K_T)[None, :]
    out3 = (jnp.einsum("bgtkc,fgk->bftc", z1[:, :, idx3, :], p["w3"])
            + p["b3"][None, :, None, None])
    P2 = (T3 - POOL) // POOL + 1
    pooled3 = out3[:, :, : P2 * POOL, :].reshape(B, F, P2, POOL, C).max(axis=3)
    s2 = p["gamma2"] / jnp.sqrt(p["var2"] + BN_EPS)
    t2 = p["beta2"] - p["mean2"] * s2
    z2 = jnp.maximum(pooled3, 0.0) * s2[None, :, None, None] + t2[None, :, None, None]
    flat = z2.reshape(B, -1)                 # torch.flatten(x, 1): (f2, p2, c) order
    return flat @ p["w_lin"].T + p["b_lin"]  # dropout == identity at inference


if __name__ == "__main__":
    # T = 3000 is implied by Linear(208 * channels): 16 * 13 * C = 208 * C
    # requires ~3000 input samples (canonical StagerNet 30 s @ 100 Hz epoch).
    B, C, T, E = 2, 4, 3000, 32
    key = jax.random.PRNGKey(0)
    ks = jax.random.split(key, 18)

    def rnd(k, shape, scale=0.1):
        return scale * jax.random.normal(k, shape, dtype=jnp.float32)

    x = jax.random.normal(ks[0], (B, T, C), dtype=jnp.float32)
    params = dict(
        w1=rnd(ks[1], (C, C)),                 b1=rnd(ks[2], (C,)),
        w2=rnd(ks[3], (F_MAPS, K_T)),          b2=rnd(ks[4], (F_MAPS,)),
        w3=rnd(ks[5], (F_MAPS, F_MAPS, K_T)),  b3=rnd(ks[6], (F_MAPS,)),
        gamma1=1.0 + rnd(ks[7], (F_MAPS,)),    beta1=rnd(ks[8], (F_MAPS,)),
        mean1=rnd(ks[9], (F_MAPS,)),
        var1=1.0 + 0.1 * jax.random.uniform(ks[10], (F_MAPS,), dtype=jnp.float32),
        gamma2=1.0 + rnd(ks[11], (F_MAPS,)),   beta2=rnd(ks[12], (F_MAPS,)),
        mean2=rnd(ks[13], (F_MAPS,)),
        var2=1.0 + 0.1 * jax.random.uniform(ks[14], (F_MAPS,), dtype=jnp.float32),
        w_lin=rnd(ks[15], (E, 208 * C), scale=0.05),
        b_lin=rnd(ks[16], (E,)),
    )

    out = jax.jit(stagernet_forward)(x, params)
    out = jax.block_until_ready(out)
    assert out.shape == (B, E), out.shape
    assert out.dtype == jnp.float32

    ref = stagernet_reference(x, params)
    max_err = float(jnp.max(jnp.abs(out - ref)))
    assert max_err < 5e-3, f"Pallas StagerNet mismatch vs reference: {max_err}"

    print("KERNEL_OK")
</pallas_src>

<mosaic_0001>
module attributes {stable_mosaic.version = 11 : i64} {
  func.func @_stage_a_kernel(%arg0: i32, %arg1: memref<1x231x52xf32, #tpu.memory_space<vmem>>, %arg2: memref<5x52x832xf32, #tpu.memory_space<vmem>>, %arg3: memref<3x64xf32, #tpu.memory_space<vmem>>, %arg4: memref<1x227x64xf32, #tpu.memory_space<vmem>>) attributes {dimension_semantics = [#tpu.dimension_semantics<parallel>], iteration_bounds = array<i64: 2>, scalar_prefetch = 0 : i64, scratch_operands = 0 : i64, tpu.core_type = #tpu.core_type<tc>, window_params = [{transform_indices = @transform_0, window_bounds = array<i64: 1, 231, 52>}, {pipeline_mode = #tpu.pipeline_mode<synchronous>, transform_indices = @transform_1, window_bounds = array<i64: 5, 52, 832>}, {pipeline_mode = #tpu.pipeline_mode<synchronous>, transform_indices = @transform_2, window_bounds = array<i64: 3, 64>}, {transform_indices = @transform_3, window_bounds = array<i64: 1, 227, 64>}]} {
    %cst = arith.constant 0.000000e+00 : f32
    %0 = vector.broadcast %cst : f32 to vector<227x832xf32>
    %c0 = arith.constant 0 : index
    %c0_0 = arith.constant 0 : index
    %c0_1 = arith.constant 0 : index
    %1 = vector.load %arg1[%c0, %c0_0, %c0_1] : memref<1x231x52xf32, #tpu.memory_space<vmem>>, vector<1x227x52xf32>
    %2 = vector.shape_cast %1 : vector<1x227x52xf32> to vector<227x52xf32>
    %c0_2 = arith.constant 0 : index
    %c0_3 = arith.constant 0 : index
    %c0_4 = arith.constant 0 : index
    %3 = vector.load %arg2[%c0_2, %c0_3, %c0_4] : memref<5x52x832xf32, #tpu.memory_space<vmem>>, vector<1x52x832xf32>
    %4 = vector.shape_cast %3 : vector<1x52x832xf32> to vector<52x832xf32>
    %cst_5 = arith.constant dense<0.000000e+00> : vector<227x832xf32>
    %5 = tpu.matmul %2, %4, %cst_5 {dimension_numbers = #tpu.dot_dimension_numbers<[1], [0], [0], [1], [0, 0, 1, 1], [], []>} : vector<227x52xf32>, vector<52x832xf32>, vector<227x832xf32> -> vector<227x832xf32>
    %6 = arith.addf %0, %5 : vector<227x832xf32>
    %c0_6 = arith.constant 0 : index
    %c1 = arith.constant 1 : index
    %c0_7 = arith.constant 0 : index
    %7 = vector.load %arg1[%c0_6, %c1, %c0_7] : memref<1x231x52xf32, #tpu.memory_space<vmem>>, vector<1x227x52xf32>
    %8 = vector.shape_cast %7 : vector<1x227x52xf32> to vector<227x52xf32>
    %c1_8 = arith.constant 1 : index
    %c0_9 = arith.constant 0 : index
    %c0_10 = arith.constant 0 : index
    %9 = vector.load %arg2[%c1_8, %c0_9, %c0_10] : memref<5x52x832xf32, #tpu.memory_space<vmem>>, vector<1x52x832xf32>
    %10 = vector.shape_cast %9 : vector<1x52x832xf32> to vector<52x832xf32>
    %cst_11 = arith.constant dense<0.000000e+00> : vector<227x832xf32>
    %11 = tpu.matmul %8, %10, %cst_11 {dimension_numbers = #tpu.dot_dimension_numbers<[1], [0], [0], [1], [0, 0, 1, 1], [], []>} : vector<227x52xf32>, vector<52x832xf32>, vector<227x832xf32> -> vector<227x832xf32>
    %12 = arith.addf %6, %11 : vector<227x832xf32>
    %c0_12 = arith.constant 0 : index
    %c2 = arith.constant 2 : index
    %c0_13 = arith.constant 0 : index
    %13 = vector.load %arg1[%c0_12, %c2, %c0_13] : memref<1x231x52xf32, #tpu.memory_space<vmem>>, vector<1x227x52xf32>
    %14 = vector.shape_cast %13 : vector<1x227x52xf32> to vector<227x52xf32>
    %c2_14 = arith.constant 2 : index
    %c0_15 = arith.constant 0 : index
    %c0_16 = arith.constant 0 : index
    %15 = vector.load %arg2[%c2_14, %c0_15, %c0_16] : memref<5x52x832xf32, #tpu.memory_space<vmem>>, vector<1x52x832xf32>
    %16 = vector.shape_cast %15 : vector<1x52x832xf32> to vector<52x832xf32>
    %cst_17 = arith.constant dense<0.000000e+00> : vector<227x832xf32>
    %17 = tpu.matmul %14, %16, %cst_17 {dimension_numbers = #tpu.dot_dimension_numbers<[1], [0], [0], [1], [0, 0, 1, 1], [], []>} : vector<227x52xf32>, vector<52x832xf32>, vector<227x832xf32> -> vector<227x832xf32>
    %18 = arith.addf %12, %17 : vector<227x832xf32>
    %c0_18 = arith.constant 0 : index
    %c3 = arith.constant 3 : index
    %c0_19 = arith.constant 0 : index
    %19 = vector.load %arg1[%c0_18, %c3, %c0_19] : memref<1x231x52xf32, #tpu.memory_space<vmem>>, vector<1x227x52xf32>
    %20 = vector.shape_cast %19 : vector<1x227x52xf32> to vector<227x52xf32>
    %c3_20 = arith.constant 3 : index
    %c0_21 = arith.constant 0 : index
    %c0_22 = arith.constant 0 : index
    %21 = vector.load %arg2[%c3_20, %c0_21, %c0_22] : memref<5x52x832xf32, #tpu.memory_space<vmem>>, vector<1x52x832xf32>
    %22 = vector.shape_cast %21 : vector<1x52x832xf32> to vector<52x832xf32>
    %cst_23 = arith.constant dense<0.000000e+00> : vector<227x832xf32>
    %23 = tpu.matmul %20, %22, %cst_23 {dimension_numbers = #tpu.dot_dimension_numbers<[1], [0], [0], [1], [0, 0, 1, 1], [], []>} : vector<227x52xf32>, vector<52x832xf32>, vector<227x832xf32> -> vector<227x832xf32>
    %24 = arith.addf %18, %23 : vector<227x832xf32>
    %c0_24 = arith.constant 0 : index
    %c4 = arith.constant 4 : index
    %c0_25 = arith.constant 0 : index
    %25 = vector.load %arg1[%c0_24, %c4, %c0_25] : memref<1x231x52xf32, #tpu.memory_space<vmem>>, vector<1x227x52xf32>
    %26 = vector.shape_cast %25 : vector<1x227x52xf32> to vector<227x52xf32>
    %c4_26 = arith.constant 4 : index
    %c0_27 = arith.constant 0 : index
    %c0_28 = arith.constant 0 : index
    %27 = vector.load %arg2[%c4_26, %c0_27, %c0_28] : memref<5x52x832xf32, #tpu.memory_space<vmem>>, vector<1x52x832xf32>
    %28 = vector.shape_cast %27 : vector<1x52x832xf32> to vector<52x832xf32>
    %cst_29 = arith.constant dense<0.000000e+00> : vector<227x832xf32>
    %29 = tpu.matmul %26, %28, %cst_29 {dimension_numbers = #tpu.dot_dimension_numbers<[1], [0], [0], [1], [0, 0, 1, 1], [], []>} : vector<227x52xf32>, vector<52x832xf32>, vector<227x832xf32> -> vector<227x832xf32>
    %30 = arith.addf %24, %29 : vector<227x832xf32>
    %31 = vector.extract_strided_slice %30 {offsets = [0, 0], sizes = [227, 64], strides = [1, 1]} : vector<227x832xf32> to vector<227x64xf32>
    %32 = vector.extract_strided_slice %30 {offsets = [0, 64], sizes = [227, 64], strides = [1, 1]} : vector<227x832xf32> to vector<227x64xf32>
    %33 = arith.maximumf %31, %32 : vector<227x64xf32>
    %34 = vector.extract_strided_slice %30 {offsets = [0, 128], sizes = [227, 64], strides = [1, 1]} : vector<227x832xf32> to vector<227x64xf32>
    %35 = arith.maximumf %33, %34 : vector<227x64xf32>
    %36 = vector.extract_strided_slice %30 {offsets = [0, 192], sizes = [227, 64], strides = [1, 1]} : vector<227x832xf32> to vector<227x64xf32>
    %37 = arith.maximumf %35, %36 : vector<227x64xf32>
    %38 = vector.extract_strided_slice %30 {offsets = [0, 256], sizes = [227, 64], strides = [1, 1]} : vector<227x832xf32> to vector<227x64xf32>
    %39 = arith.maximumf %37, %38 : vector<227x64xf32>
    %40 = vector.extract_strided_slice %30 {offsets = [0, 320], sizes = [227, 64], strides = [1, 1]} : vector<227x832xf32> to vector<227x64xf32>
    %41 = arith.maximumf %39, %40 : vector<227x64xf32>
    %42 = vector.extract_strided_slice %30 {offsets = [0, 384], sizes = [227, 64], strides = [1, 1]} : vector<227x832xf32> to vector<227x64xf32>
    %43 = arith.maximumf %41, %42 : vector<227x64xf32>
    %44 = vector.extract_strided_slice %30 {offsets = [0, 448], sizes = [227, 64], strides = [1, 1]} : vector<227x832xf32> to vector<227x64xf32>
    %45 = arith.maximumf %43, %44 : vector<227x64xf32>
    %46 = vector.extract_strided_slice %30 {offsets = [0, 512], sizes = [227, 64], strides = [1, 1]} : vector<227x832xf32> to vector<227x64xf32>
    %47 = arith.maximumf %45, %46 : vector<227x64xf32>
    %48 = vector.extract_strided_slice %30 {offsets = [0, 576], sizes = [227, 64], strides = [1, 1]} : vector<227x832xf32> to vector<227x64xf32>
    %49 = arith.maximumf %47, %48 : vector<227x64xf32>
    %50 = vector.extract_strided_slice %30 {offsets = [0, 640], sizes = [227, 64], strides = [1, 1]} : vector<227x832xf32> to vector<227x64xf32>
    %51 = arith.maximumf %49, %50 : vector<227x64xf32>
    %52 = vector.extract_strided_slice %30 {offsets = [0, 704], sizes = [227, 64], strides = [1, 1]} : vector<227x832xf32> to vector<227x64xf32>
    %53 = arith.maximumf %51, %52 : vector<227x64xf32>
    %54 = vector.extract_strided_slice %30 {offsets = [0, 768], sizes = [227, 64], strides = [1, 1]} : vector<227x832xf32> to vector<227x64xf32>
    %55 = arith.maximumf %53, %54 : vector<227x64xf32>
    %c0_30 = arith.constant 0 : index
    %c0_31 = arith.constant 0 : index
    %56 = vector.load %arg3[%c0_30, %c0_31] : memref<3x64xf32, #tpu.memory_space<vmem>>, vector<1x64xf32>
    %c1_32 = arith.constant 1 : index
    %c0_33 = arith.constant 0 : index
    %57 = vector.load %arg3[%c1_32, %c0_33] : memref<3x64xf32, #tpu.memory_space<vmem>>, vector<1x64xf32>
    %c2_34 = arith.constant 2 : index
    %c0_35 = arith.constant 0 : index
    %58 = vector.load %arg3[%c2_34, %c0_35] : memref<3x64xf32, #tpu.memory_space<vmem>>, vector<1x64xf32>
    %59 = vector.broadcast %56 : vector<1x64xf32> to vector<227x64xf32>
    %60 = arith.addf %55, %59 : vector<227x64xf32>
    %cst_36 = arith.constant 0.000000e+00 : f32
    %61 = vector.broadcast %cst_36 : f32 to vector<227x64xf32>
    %62 = arith.maximumf %60, %61 : vector<227x64xf32>
    %63 = vector.broadcast %57 : vector<1x64xf32> to vector<227x64xf32>
    %64 = arith.mulf %62, %63 : vector<227x64xf32>
    %65 = vector.broadcast %58 : vector<1x64xf32> to vector<227x64xf32>
    %66 = arith.addf %64, %65 : vector<227x64xf32>
    %c0_37 = arith.constant 0 : index
    %c0_38 = arith.constant 0 : index
    %c0_39 = arith.constant 0 : index
    %67 = vector.load %arg4[%c0_37, %c0_38, %c0_39] : memref<1x227x64xf32, #tpu.memory_space<vmem>>, vector<1x227x64xf32>
    %68 = vector.shape_cast %67 : vector<1x227x64xf32> to vector<227x64xf32>
    %69 = vector.shape_cast %66 : vector<227x64xf32> to vector<1x227x64xf32>
    tpu.vector_store %arg4[%c0_37, %c0_38, %c0_39], %69 {strides = array<i32>} : memref<1x227x64xf32, #tpu.memory_space<vmem>>, vector<1x227x64xf32>,
    return
  }
  func.func @transform_0(%arg0: i32) -> (i32, i32, i32) {
    %c0_i32 = arith.constant 0 : i32
    %c0_i32_0 = arith.constant 0 : i32
    %c0_i32_1 = arith.constant 0 : i32
    return %arg0, %c0_i32, %c0_i32_0 : i32, i32, i32
  }
  func.func @transform_1(%arg0: i32) -> (i32, i32, i32) {
    %c0_i32 = arith.constant 0 : i32
    %c0_i32_0 = arith.constant 0 : i32
    %c0_i32_1 = arith.constant 0 : i32
    %c0_i32_2 = arith.constant 0 : i32
    return %c0_i32, %c0_i32_0, %c0_i32_1 : i32, i32, i32
  }
  func.func @transform_2(%arg0: i32) -> (i32, i32) {
    %c0_i32 = arith.constant 0 : i32
    %c0_i32_0 = arith.constant 0 : i32
    %c0_i32_1 = arith.constant 0 : i32
    return %c0_i32, %c0_i32_0 : i32, i32
  }
  func.func @transform_3(%arg0: i32) -> (i32, i32, i32) {
    %c0_i32 = arith.constant 0 : i32
    %c0_i32_0 = arith.constant 0 : i32
    %c0_i32_1 = arith.constant 0 : i32
    return %arg0, %c0_i32, %c0_i32_0 : i32, i32, i32
  }
}

module attributes {stable_mosaic.version = 11 : i64} {
  func.func @_stage_bc_kernel(%arg0: i32, %arg1: memref<1x68x208xf32, #tpu.memory_space<vmem>>, %arg2: memref<5x208x208xf32, #tpu.memory_space<vmem>>, %arg3: memref<3x16xf32, #tpu.memory_space<vmem>>, %arg4: memref<16x1664xf32, #tpu.memory_space<vmem>>, %arg5: memref<1x32xf32, #tpu.memory_space<vmem>>, %arg6: memref<1x1x32xf32, #tpu.memory_space<vmem>>) attributes {dimension_semantics = [#tpu.dimension_semantics<parallel>], iteration_bounds = array<i64: 2>, scalar_prefetch = 0 : i64, scratch_operands = 0 : i64, tpu.core_type = #tpu.core_type<tc>, window_params = [{transform_indices = @transform_0, window_bounds = array<i64: 1, 68, 208>}, {pipeline_mode = #tpu.pipeline_mode<synchronous>, transform_indices = @transform_1, window_bounds = array<i64: 5, 208, 208>}, {pipeline_mode = #tpu.pipeline_mode<synchronous>, transform_indices = @transform_2, window_bounds = array<i64: 3, 16>}, {pipeline_mode = #tpu.pipeline_mode<synchronous>, transform_indices = @transform_3, window_bounds = array<i64: 16, 1664>}, {pipeline_mode = #tpu.pipeline_mode<synchronous>, transform_indices = @transform_4, window_bounds = array<i64: 1, 32>}, {transform_indices = @transform_5, window_bounds = array<i64: 1, 1, 32>}]} {
    %cst = arith.constant 0.000000e+00 : f32
    %0 = vector.broadcast %cst : f32 to vector<52x208xf32>
    %c0 = arith.constant 0 : index
    %c0_0 = arith.constant 0 : index
    %c0_1 = arith.constant 0 : index
    %1 = vector.load %arg1[%c0, %c0_0, %c0_1] : memref<1x68x208xf32, #tpu.memory_space<vmem>>, vector<1x52x208xf32>
    %2 = vector.shape_cast %1 : vector<1x52x208xf32> to vector<52x208xf32>
    %c0_2 = arith.constant 0 : index
    %c0_3 = arith.constant 0 : index
    %c0_4 = arith.constant 0 : index
    %3 = vector.load %arg2[%c0_2, %c0_3, %c0_4] : memref<5x208x208xf32, #tpu.memory_space<vmem>>, vector<1x208x208xf32>
    %4 = vector.shape_cast %3 : vector<1x208x208xf32> to vector<208x208xf32>
    %cst_5 = arith.constant dense<0.000000e+00> : vector<52x208xf32>
    %5 = tpu.matmul %2, %4, %cst_5 {dimension_numbers = #tpu.dot_dimension_numbers<[1], [0], [0], [1], [0, 0, 1, 1], [], []>} : vector<52x208xf32>, vector<208x208xf32>, vector<52x208xf32> -> vector<52x208xf32>
    %6 = arith.addf %0, %5 : vector<52x208xf32>
    %c0_6 = arith.constant 0 : index
    %c4 = arith.constant 4 : index
    %c0_7 = arith.constant 0 : index
    %7 = vector.load %arg1[%c0_6, %c4, %c0_7] : memref<1x68x208xf32, #tpu.memory_space<vmem>>, vector<1x52x208xf32>
    %8 = vector.shape_cast %7 : vector<1x52x208xf32> to vector<52x208xf32>
    %c1 = arith.constant 1 : index
    %c0_8 = arith.constant 0 : index
    %c0_9 = arith.constant 0 : index
    %9 = vector.load %arg2[%c1, %c0_8, %c0_9] : memref<5x208x208xf32, #tpu.memory_space<vmem>>, vector<1x208x208xf32>
    %10 = vector.shape_cast %9 : vector<1x208x208xf32> to vector<208x208xf32>
    %cst_10 = arith.constant dense<0.000000e+00> : vector<52x208xf32>
    %11 = tpu.matmul %8, %10, %cst_10 {dimension_numbers = #tpu.dot_dimension_numbers<[1], [0], [0], [1], [0, 0, 1, 1], [], []>} : vector<52x208xf32>, vector<208x208xf32>, vector<52x208xf32> -> vector<52x208xf32>
    %12 = arith.addf %6, %11 : vector<52x208xf32>
    %c0_11 = arith.constant 0 : index
    %c8 = arith.constant 8 : index
    %c0_12 = arith.constant 0 : index
    %13 = vector.load %arg1[%c0_11, %c8, %c0_12] : memref<1x68x208xf32, #tpu.memory_space<vmem>>, vector<1x52x208xf32>
    %14 = vector.shape_cast %13 : vector<1x52x208xf32> to vector<52x208xf32>
    %c2 = arith.constant 2 : index
    %c0_13 = arith.constant 0 : index
    %c0_14 = arith.constant 0 : index
    %15 = vector.load %arg2[%c2, %c0_13, %c0_14] : memref<5x208x208xf32, #tpu.memory_space<vmem>>, vector<1x208x208xf32>
    %16 = vector.shape_cast %15 : vector<1x208x208xf32> to vector<208x208xf32>
    %cst_15 = arith.constant dense<0.000000e+00> : vector<52x208xf32>
    %17 = tpu.matmul %14, %16, %cst_15 {dimension_numbers = #tpu.dot_dimension_numbers<[1], [0], [0], [1], [0, 0, 1, 1], [], []>} : vector<52x208xf32>, vector<208x208xf32>, vector<52x208xf32> -> vector<52x208xf32>
    %18 = arith.addf %12, %17 : vector<52x208xf32>
    %c0_16 = arith.constant 0 : index
    %c12 = arith.constant 12 : index
    %c0_17 = arith.constant 0 : index
    %19 = vector.load %arg1[%c0_16, %c12, %c0_17] : memref<1x68x208xf32, #tpu.memory_space<vmem>>, vector<1x52x208xf32>
    %20 = vector.shape_cast %19 : vector<1x52x208xf32> to vector<52x208xf32>
    %c3 = arith.constant 3 : index
    %c0_18 = arith.constant 0 : index
    %c0_19 = arith.constant 0 : index
    %21 = vector.load %arg2[%c3, %c0_18, %c0_19] : memref<5x208x208xf32, #tpu.memory_space<vmem>>, vector<1x208x208xf32>
    %22 = vector.shape_cast %21 : vector<1x208x208xf32> to vector<208x208xf32>
    %cst_20 = arith.constant dense<0.000000e+00> : vector<52x208xf32>
    %23 = tpu.matmul %20, %22, %cst_20 {dimension_numbers = #tpu.dot_dimension_numbers<[1], [0], [0], [1], [0, 0, 1, 1], [], []>} : vector<52x208xf32>, vector<208x208xf32>, vector<52x208xf32> -> vector<52x208xf32>
    %24 = arith.addf %18, %23 : vector<52x208xf32>
    %c0_21 = arith.constant 0 : index
    %c16 = arith.constant 16 : index
    %c0_22 = arith.constant 0 : index
    %25 = vector.load %arg1[%c0_21, %c16, %c0_22] : memref<1x68x208xf32, #tpu.memory_space<vmem>>, vector<1x52x208xf32>
    %26 = vector.shape_cast %25 : vector<1x52x208xf32> to vector<52x208xf32>
    %c4_23 = arith.constant 4 : index
    %c0_24 = arith.constant 0 : index
    %c0_25 = arith.constant 0 : index
    %27 = vector.load %arg2[%c4_23, %c0_24, %c0_25] : memref<5x208x208xf32, #tpu.memory_space<vmem>>, vector<1x208x208xf32>
    %28 = vector.shape_cast %27 : vector<1x208x208xf32> to vector<208x208xf32>
    %cst_26 = arith.constant dense<0.000000e+00> : vector<52x208xf32>
    %29 = tpu.matmul %26, %28, %cst_26 {dimension_numbers = #tpu.dot_dimension_numbers<[1], [0], [0], [1], [0, 0, 1, 1], [], []>} : vector<52x208xf32>, vector<208x208xf32>, vector<52x208xf32> -> vector<52x208xf32>
    %30 = arith.addf %24, %29 : vector<52x208xf32>
    %31 = vector.extract_strided_slice %30 {offsets = [0, 0], sizes = [52, 16], strides = [1, 1]} : vector<52x208xf32> to vector<52x16xf32>
    %32 = vector.extract_strided_slice %30 {offsets = [0, 16], sizes = [52, 16], strides = [1, 1]} : vector<52x208xf32> to vector<52x16xf32>
    %33 = arith.maximumf %31, %32 : vector<52x16xf32>
    %34 = vector.extract_strided_slice %30 {offsets = [0, 32], sizes = [52, 16], strides = [1, 1]} : vector<52x208xf32> to vector<52x16xf32>
    %35 = arith.maximumf %33, %34 : vector<52x16xf32>
    %36 = vector.extract_strided_slice %30 {offsets = [0, 48], sizes = [52, 16], strides = [1, 1]} : vector<52x208xf32> to vector<52x16xf32>
    %37 = arith.maximumf %35, %36 : vector<52x16xf32>
    %38 = vector.extract_strided_slice %30 {offsets = [0, 64], sizes = [52, 16], strides = [1, 1]} : vector<52x208xf32> to vector<52x16xf32>
    %39 = arith.maximumf %37, %38 : vector<52x16xf32>
    %40 = vector.extract_strided_slice %30 {offsets = [0, 80], sizes = [52, 16], strides = [1, 1]} : vector<52x208xf32> to vector<52x16xf32>
    %41 = arith.maximumf %39, %40 : vector<52x16xf32>
    %42 = vector.extract_strided_slice %30 {offsets = [0, 96], sizes = [52, 16], strides = [1, 1]} : vector<52x208xf32> to vector<52x16xf32>
    %43 = arith.maximumf %41, %42 : vector<52x16xf32>
    %44 = vector.extract_strided_slice %30 {offsets = [0, 112], sizes = [52, 16], strides = [1, 1]} : vector<52x208xf32> to vector<52x16xf32>
    %45 = arith.maximumf %43, %44 : vector<52x16xf32>
    %46 = vector.extract_strided_slice %30 {offsets = [0, 128], sizes = [52, 16], strides = [1, 1]} : vector<52x208xf32> to vector<52x16xf32>
    %47 = arith.maximumf %45, %46 : vector<52x16xf32>
    %48 = vector.extract_strided_slice %30 {offsets = [0, 144], sizes = [52, 16], strides = [1, 1]} : vector<52x208xf32> to vector<52x16xf32>
    %49 = arith.maximumf %47, %48 : vector<52x16xf32>
    %50 = vector.extract_strided_slice %30 {offsets = [0, 160], sizes = [52, 16], strides = [1, 1]} : vector<52x208xf32> to vector<52x16xf32>
    %51 = arith.maximumf %49, %50 : vector<52x16xf32>
    %52 = vector.extract_strided_slice %30 {offsets = [0, 176], sizes = [52, 16], strides = [1, 1]} : vector<52x208xf32> to vector<52x16xf32>
    %53 = arith.maximumf %51, %52 : vector<52x16xf32>
    %54 = vector.extract_strided_slice %30 {offsets = [0, 192], sizes = [52, 16], strides = [1, 1]} : vector<52x208xf32> to vector<52x16xf32>
    %55 = arith.maximumf %53, %54 : vector<52x16xf32>
    %c0_27 = arith.constant 0 : index
    %c0_28 = arith.constant 0 : index
    %56 = vector.load %arg3[%c0_27, %c0_28] : memref<3x16xf32, #tpu.memory_space<vmem>>, vector<1x16xf32>
    %c1_29 = arith.constant 1 : index
    %c0_30 = arith.constant 0 : index
    %57 = vector.load %arg3[%c1_29, %c0_30] : memref<3x16xf32, #tpu.memory_space<vmem>>, vector<1x16xf32>
    %c2_31 = arith.constant 2 : index
    %c0_32 = arith.constant 0 : index
    %58 = vector.load %arg3[%c2_31, %c0_32] : memref<3x16xf32, #tpu.memory_space<vmem>>, vector<1x16xf32>
    %59 = vector.broadcast %56 : vector<1x16xf32> to vector<52x16xf32>
    %60 = arith.addf %55, %59 : vector<52x16xf32>
    %cst_33 = arith.constant 0.000000e+00 : f32
    %61 = vector.broadcast %cst_33 : f32 to vector<52x16xf32>
    %62 = arith.maximumf %60, %61 : vector<52x16xf32>
    %63 = vector.broadcast %57 : vector<1x16xf32> to vector<52x16xf32>
    %64 = arith.mulf %62, %63 : vector<52x16xf32>
    %65 = vector.broadcast %58 : vector<1x16xf32> to vector<52x16xf32>
    %66 = arith.addf %64, %65 : vector<52x16xf32>
    %c0_34 = arith.constant 0 : index
    %c0_35 = arith.constant 0 : index
    %67 = vector.load %arg4[%c0_34, %c0_35] : memref<16x1664xf32, #tpu.memory_space<vmem>>, vector<16x1664xf32>
    %cst_36 = arith.constant dense<0.000000e+00> : vector<52x1664xf32>
    %68 = tpu.matmul %66, %67, %cst_36 {dimension_numbers = #tpu.dot_dimension_numbers<[1], [0], [0], [1], [0, 0, 1, 1], [], []>} : vector<52x16xf32>, vector<16x1664xf32>, vector<52x1664xf32> -> vector<52x1664xf32>
    %c0_37 = arith.constant 0 : index
    %c0_38 = arith.constant 0 : index
    %69 = vector.load %arg5[%c0_37, %c0_38] : memref<1x32xf32, #tpu.memory_space<vmem>>, vector<1x32xf32>
    %70 = vector.extract_strided_slice %68 {offsets = [0, 0], sizes = [1, 32], strides = [1, 1]} : vector<52x1664xf32> to vector<1x32xf32>
    %71 = arith.addf %69, %70 : vector<1x32xf32>
    %72 = vector.extract_strided_slice %68 {offsets = [1, 32], sizes = [1, 32], strides = [1, 1]} : vector<52x1664xf32> to vector<1x32xf32>
    %73 = arith.addf %71, %72 : vector<1x32xf32>
    %74 = vector.extract_strided_slice %68 {offsets = [2, 64], sizes = [1, 32], strides = [1, 1]} : vector<52x1664xf32> to vector<1x32xf32>
    %75 = arith.addf %73, %74 : vector<1x32xf32>
    %76 = vector.extract_strided_slice %68 {offsets = [3, 96], sizes = [1, 32], strides = [1, 1]} : vector<52x1664xf32> to vector<1x32xf32>
    %77 = arith.addf %75, %76 : vector<1x32xf32>
    %78 = vector.extract_strided_slice %68 {offsets = [4, 128], sizes = [1, 32], strides = [1, 1]} : vector<52x1664xf32> to vector<1x32xf32>
    %79 = arith.addf %77, %78 : vector<1x32xf32>
    %80 = vector.extract_strided_slice %68 {offsets = [5, 160], sizes = [1, 32], strides = [1, 1]} : vector<52x1664xf32> to vector<1x32xf32>
    %81 = arith.addf %79, %80 : vector<1x32xf32>
    %82 = vector.extract_strided_slice %68 {offsets = [6, 192], sizes = [1, 32], strides = [1, 1]} : vector<52x1664xf32> to vector<1x32xf32>
    %83 = arith.addf %81, %82 : vector<1x32xf32>
    %84 = vector.extract_strided_slice %68 {offsets = [7, 224], sizes = [1, 32], strides = [1, 1]} : vector<52x1664xf32> to vector<1x32xf32>
    %85 = arith.addf %83, %84 : vector<1x32xf32>
    %86 = vector.extract_strided_slice %68 {offsets = [8, 256], sizes = [1, 32], strides = [1, 1]} : vector<52x1664xf32> to vector<1x32xf32>
    %87 = arith.addf %85, %86 : vector<1x32xf32>
    %88 = vector.extract_strided_slice %68 {offsets = [9, 288], sizes = [1, 32], strides = [1, 1]} : vector<52x1664xf32> to vector<1x32xf32>
    %89 = arith.addf %87, %88 : vector<1x32xf32>
    %90 = vector.extract_strided_slice %68 {offsets = [10, 320], sizes = [1, 32], strides = [1, 1]} : vector<52x1664xf32> to vector<1x32xf32>
    %91 = arith.addf %89, %90 : vector<1x32xf32>
    %92 = vector.extract_strided_slice %68 {offsets = [11, 352], sizes = [1, 32], strides = [1, 1]} : vector<52x1664xf32> to vector<1x32xf32>
    %93 = arith.addf %91, %92 : vector<1x32xf32>
    %94 = vector.extract_strided_slice %68 {offsets = [12, 384], sizes = [1, 32], strides = [1, 1]} : vector<52x1664xf32> to vector<1x32xf32>
    %95 = arith.addf %93, %94 : vector<1x32xf32>
    %96 = vector.extract_strided_slice %68 {offsets = [13, 416], sizes = [1, 32], strides = [1, 1]} : vector<52x1664xf32> to vector<1x32xf32>
    %97 = arith.addf %95, %96 : vector<1x32xf32>
    %98 = vector.extract_strided_slice %68 {offsets = [14, 448], sizes = [1, 32], strides = [1, 1]} : vector<52x1664xf32> to vector<1x32xf32>
    %99 = arith.addf %97, %98 : vector<1x32xf32>
    %100 = vector.extract_strided_slice %68 {offsets = [15, 480], sizes = [1, 32], strides = [1, 1]} : vector<52x1664xf32> to vector<1x32xf32>
    %101 = arith.addf %99, %100 : vector<1x32xf32>
    %102 = vector.extract_strided_slice %68 {offsets = [16, 512], sizes = [1, 32], strides = [1, 1]} : vector<52x1664xf32> to vector<1x32xf32>
    %103 = arith.addf %101, %102 : vector<1x32xf32>
    %104 = vector.extract_strided_slice %68 {offsets = [17, 544], sizes = [1, 32], strides = [1, 1]} : vector<52x1664xf32> to vector<1x32xf32>
    %105 = arith.addf %103, %104 : vector<1x32xf32>
    %106 = vector.extract_strided_slice %68 {offsets = [18, 576], sizes = [1, 32], strides = [1, 1]} : vector<52x1664xf32> to vector<1x32xf32>
    %107 = arith.addf %105, %106 : vector<1x32xf32>
    %108 = vector.extract_strided_slice %68 {offsets = [19, 608], sizes = [1, 32], strides = [1, 1]} : vector<52x1664xf32> to vector<1x32xf32>
    %109 = arith.addf %107, %108 : vector<1x32xf32>
    %110 = vector.extract_strided_slice %68 {offsets = [20, 640], sizes = [1, 32], strides = [1, 1]} : vector<52x1664xf32> to vector<1x32xf32>
    %111 = arith.addf %109, %110 : vector<1x32xf32>
    %112 = vector.extract_strided_slice %68 {offsets = [21, 672], sizes = [1, 32], strides = [1, 1]} : vector<52x1664xf32> to vector<1x32xf32>
    %113 = arith.addf %111, %112 : vector<1x32xf32>
    %114 = vector.extract_strided_slice %68 {offsets = [22, 704], sizes = [1, 32], strides = [1, 1]} : vector<52x1664xf32> to vector<1x32xf32>
    %115 = arith.addf %113, %114 : vector<1x32xf32>
    %116 = vector.extract_strided_slice %68 {offsets = [23, 736], sizes = [1, 32], strides = [1, 1]} : vector<52x1664xf32> to vector<1x32xf32>
    %117 = arith.addf %115, %116 : vector<1x32xf32>
    %118 = vector.extract_strided_slice %68 {offsets = [24, 768], sizes = [1, 32], strides = [1, 1]} : vector<52x1664xf32> to vector<1x32xf32>
    %119 = arith.addf %117, %118 : vector<1x32xf32>
    %120 = vector.extract_strided_slice %68 {offsets = [25, 800], sizes = [1, 32], strides = [1, 1]} : vector<52x1664xf32> to vector<1x32xf32>
    %121 = arith.addf %119, %120 : vector<1x32xf32>
    %122 = vector.extract_strided_slice %68 {offsets = [26, 832], sizes = [1, 32], strides = [1, 1]} : vector<52x1664xf32> to vector<1x32xf32>
    %123 = arith.addf %121, %122 : vector<1x32xf32>
    %124 = vector.extract_strided_slice %68 {offsets = [27, 864], sizes = [1, 32], strides = [1, 1]} : vector<52x1664xf32> to vector<1x32xf32>
    %125 = arith.addf %123, %124 : vector<1x32xf32>
    %126 = vector.extract_strided_slice %68 {offsets = [28, 896], sizes = [1, 32], strides = [1, 1]} : vector<52x1664xf32> to vector<1x32xf32>
    %127 = arith.addf %125, %126 : vector<1x32xf32>
    %128 = vector.extract_strided_slice %68 {offsets = [29, 928], sizes = [1, 32], strides = [1, 1]} : vector<52x1664xf32> to vector<1x32xf32>
    %129 = arith.addf %127, %128 : vector<1x32xf32>
    %130 = vector.extract_strided_slice %68 {offsets = [30, 960], sizes = [1, 32], strides = [1, 1]} : vector<52x1664xf32> to vector<1x32xf32>
    %131 = arith.addf %129, %130 : vector<1x32xf32>
    %132 = vector.extract_strided_slice %68 {offsets = [31, 992], sizes = [1, 32], strides = [1, 1]} : vector<52x1664xf32> to vector<1x32xf32>
    %133 = arith.addf %131, %132 : vector<1x32xf32>
    %134 = vector.extract_strided_slice %68 {offsets = [32, 1024], sizes = [1, 32], strides = [1, 1]} : vector<52x1664xf32> to vector<1x32xf32>
    %135 = arith.addf %133, %134 : vector<1x32xf32>
    %136 = vector.extract_strided_slice %68 {offsets = [33, 1056], sizes = [1, 32], strides = [1, 1]} : vector<52x1664xf32> to vector<1x32xf32>
    %137 = arith.addf %135, %136 : vector<1x32xf32>
    %138 = vector.extract_strided_slice %68 {offsets = [34, 1088], sizes = [1, 32], strides = [1, 1]} : vector<52x1664xf32> to vector<1x32xf32>
    %139 = arith.addf %137, %138 : vector<1x32xf32>
    %140 = vector.extract_strided_slice %68 {offsets = [35, 1120], sizes = [1, 32], strides = [1, 1]} : vector<52x1664xf32> to vector<1x32xf32>
    %141 = arith.addf %139, %140 : vector<1x32xf32>
    %142 = vector.extract_strided_slice %68 {offsets = [36, 1152], sizes = [1, 32], strides = [1, 1]} : vector<52x1664xf32> to vector<1x32xf32>
    %143 = arith.addf %141, %142 : vector<1x32xf32>
    %144 = vector.extract_strided_slice %68 {offsets = [37, 1184], sizes = [1, 32], strides = [1, 1]} : vector<52x1664xf32> to vector<1x32xf32>
    %145 = arith.addf %143, %144 : vector<1x32xf32>
    %146 = vector.extract_strided_slice %68 {offsets = [38, 1216], sizes = [1, 32], strides = [1, 1]} : vector<52x1664xf32> to vector<1x32xf32>
    %147 = arith.addf %145, %146 : vector<1x32xf32>
    %148 = vector.extract_strided_slice %68 {offsets = [39, 1248], sizes = [1, 32], strides = [1, 1]} : vector<52x1664xf32> to vector<1x32xf32>
    %149 = arith.addf %147, %148 : vector<1x32xf32>
    %150 = vector.extract_strided_slice %68 {offsets = [40, 1280], sizes = [1, 32], strides = [1, 1]} : vector<52x1664xf32> to vector<1x32xf32>
    %151 = arith.addf %149, %150 : vector<1x32xf32>
    %152 = vector.extract_strided_slice %68 {offsets = [41, 1312], sizes = [1, 32], strides = [1, 1]} : vector<52x1664xf32> to vector<1x32xf32>
    %153 = arith.addf %151, %152 : vector<1x32xf32>
    %154 = vector.extract_strided_slice %68 {offsets = [42, 1344], sizes = [1, 32], strides = [1, 1]} : vector<52x1664xf32> to vector<1x32xf32>
    %155 = arith.addf %153, %154 : vector<1x32xf32>
    %156 = vector.extract_strided_slice %68 {offsets = [43, 1376], sizes = [1, 32], strides = [1, 1]} : vector<52x1664xf32> to vector<1x32xf32>
    %157 = arith.addf %155, %156 : vector<1x32xf32>
    %158 = vector.extract_strided_slice %68 {offsets = [44, 1408], sizes = [1, 32], strides = [1, 1]} : vector<52x1664xf32> to vector<1x32xf32>
    %159 = arith.addf %157, %158 : vector<1x32xf32>
    %160 = vector.extract_strided_slice %68 {offsets = [45, 1440], sizes = [1, 32], strides = [1, 1]} : vector<52x1664xf32> to vector<1x32xf32>
    %161 = arith.addf %159, %160 : vector<1x32xf32>
    %162 = vector.extract_strided_slice %68 {offsets = [46, 1472], sizes = [1, 32], strides = [1, 1]} : vector<52x1664xf32> to vector<1x32xf32>
    %163 = arith.addf %161, %162 : vector<1x32xf32>
    %164 = vector.extract_strided_slice %68 {offsets = [47, 1504], sizes = [1, 32], strides = [1, 1]} : vector<52x1664xf32> to vector<1x32xf32>
    %165 = arith.addf %163, %164 : vector<1x32xf32>
    %166 = vector.extract_strided_slice %68 {offsets = [48, 1536], sizes = [1, 32], strides = [1, 1]} : vector<52x1664xf32> to vector<1x32xf32>
    %167 = arith.addf %165, %166 : vector<1x32xf32>
    %168 = vector.extract_strided_slice %68 {offsets = [49, 1568], sizes = [1, 32], strides = [1, 1]} : vector<52x1664xf32> to vector<1x32xf32>
    %169 = arith.addf %167, %168 : vector<1x32xf32>
    %170 = vector.extract_strided_slice %68 {offsets = [50, 1600], sizes = [1, 32], strides = [1, 1]} : vector<52x1664xf32> to vector<1x32xf32>
    %171 = arith.addf %169, %170 : vector<1x32xf32>
    %172 = vector.extract_strided_slice %68 {offsets = [51, 1632], sizes = [1, 32], strides = [1, 1]} : vector<52x1664xf32> to vector<1x32xf32>
    %173 = arith.addf %171, %172 : vector<1x32xf32>
    %c0_39 = arith.constant 0 : index
    %c0_40 = arith.constant 0 : index
    %c0_41 = arith.constant 0 : index
    %174 = vector.load %arg6[%c0_39, %c0_40, %c0_41] : memref<1x1x32xf32, #tpu.memory_space<vmem>>, vector<1x1x32xf32>
    %175 = vector.shape_cast %174 : vector<1x1x32xf32> to vector<1x32xf32>
    %176 = vector.shape_cast %173 : vector<1x32xf32> to vector<1x1x32xf32>
    tpu.vector_store %arg6[%c0_39, %c0_40, %c0_41], %176 {strides = array<i32>} : memref<1x1x32xf32, #tpu.memory_space<vmem>>, vector<1x1x32xf32>,
    return
  }
  func.func @transform_0(%arg0: i32) -> (i32, i32, i32) {
    %c0_i32 = arith.constant 0 : i32
    %c0_i32_0 = arith.constant 0 : i32
    %c0_i32_1 = arith.constant 0 : i32
    return %arg0, %c0_i32, %c0_i32_0 : i32, i32, i32
  }
  func.func @transform_1(%arg0: i32) -> (i32, i32, i32) {
    %c0_i32 = arith.constant 0 : i32
    %c0_i32_0 = arith.constant 0 : i32
    %c0_i32_1 = arith.constant 0 : i32
    %c0_i32_2 = arith.constant 0 : i32
    return %c0_i32, %c0_i32_0, %c0_i32_1 : i32, i32, i32
  }
  func.func @transform_2(%arg0: i32) -> (i32, i32) {
    %c0_i32 = arith.constant 0 : i32
    %c0_i32_0 = arith.constant 0 : i32
    %c0_i32_1 = arith.constant 0 : i32
    return %c0_i32, %c0_i32_0 : i32, i32
  }
  func.func @transform_3(%arg0: i32) -> (i32, i32) {
    %c0_i32 = arith.constant 0 : i32
    %c0_i32_0 = arith.constant 0 : i32
    %c0_i32_1 = arith.constant 0 : i32
    return %c0_i32, %c0_i32_0 : i32, i32
  }
  func.func @transform_4(%arg0: i32) -> (i32, i32) {
    %c0_i32 = arith.constant 0 : i32
    %c0_i32_0 = arith.constant 0 : i32
    %c0_i32_1 = arith.constant 0 : i32
    return %c0_i32, %c0_i32_0 : i32, i32
  }
  func.func @transform_5(%arg0: i32) -> (i32, i32, i32) {
    %c0_i32 = arith.constant 0 : i32
    %c0_i32_0 = arith.constant 0 : i32
    %c0_i32_1 = arith.constant 0 : i32
    return %arg0, %c0_i32, %c0_i32_0 : i32, i32, i32
  }
}

</mosaic_0001>

<llo_original>
// kernel: tile.13
$region0: #{tile.13}
  #allocation0 [shape = 's32[1]{0}', space=sflag, size = 0x4, scoped, tag = 'scoped memory for tile.13']
  %s0 = inlined_call_operand.vmem [shape: f32[16], index: 0, kind: input, shape index: {}]
  %s1 = inlined_call_operand.vmem [shape: f32[4,16], index: 1, kind: output, shape index: {}]
  // Predicated region
  $region2: #{tile.13} parent=0 // pred_check
    _
  $region3: #{tile.13} parent=0 // pred_check_branch
    %3 = sbr.rel (0) target = $region5
  $region4: #{tile.13} parent=0 // pred_region
    _
  $region5: #{tile.13} parent=0 // pred_fallthru
    _
  %v4 = vld [vmem:[%s0] ss:$0 sm:$0xff]
  %5 = vst [vmem:[%s1] sm:$0xf] %v4

// kernel: tile.18
$region0: #{tile.18}
  %s0 = inlined_call_operand.vmem [shape: f32[4,16], index: 0, kind: input, shape index: {}]
  %s1 = inlined_call_operand.vmem [shape: f32[1,64], index: 1, kind: output, shape index: {}]
  $region1: #{tile.18} parent=0
    #allocation0 [shape = 'u8[4096]{0}', space=vmem, size = 0x1000, scoped, tag = 'scoped mem for output reshape']
    #allocation1 [shape = 'u8[4096]{0}', space=vmem, size = 0x1000, scoped, tag = 'scoped mem for input reshape']
    %s3 = sshllo.u32 0, 4
    %v4 = vld [vmem:[%s0] sm:%s3]
    %5 = vst [vmem:[#allocation1] sm:%s3] %v4
    %v6 = vld [vmem:[#allocation1] sm:$0x1]
    %vm7 = vcmask 130048
    %8 = vst.msk [vmem:[#allocation0] sm:$0x1] %vm7, %v6
    %s9 = scalar_lea.vmem [#allocation1], 3
    %v10 = vld [vmem:[%s9] sm:$0x1]
    %11 = vrot.lane.b32.xlu0 %v10, 48
    %v12 = vpop.permute.xlu0 %11
    %vm13 = vcmask 523648
    %14 = vst.msk [vmem:[#allocation0] sm:$0x1] %vm13, %v12
    %s15 = scalar_lea.vmem [#allocation1], 2
    %v16 = vld [vmem:[%s15] sm:$0x1]
    %17 = vrot.lane.b32.xlu0 %v16, 32
    %v18 = vpop.permute.xlu0 %17
    %vm19 = vcmask 392448
    %20 = vst.msk [vmem:[#allocation0] sm:$0x1] %vm19, %v18
    %s21 = scalar_lea.vmem [#allocation1], 1
    %v22 = vld [vmem:[%s21] sm:$0x1]
    %23 = vrot.lane.b32.xlu0 %v22, 16
    %v24 = vpop.permute.xlu0 %23
    %vm25 = vcmask 261248
    %26 = vst.msk [vmem:[#allocation0] sm:$0x1] %vm25, %v24
    %s28 = sshllo.u32 0, 1
    %v30 = vld [vmem:[#allocation0] sm:%s28]
    %s31 = sshllo.u32 0, 1
    %32 = vst [vmem:[%s1] sm:%s31] %v30

// kernel: stagernet_forward.2
$region0: #{stagernet_forward.2}
  #allocation0 [shape = 'u32[]', space=smem, size = 0x4, offset = 0x4, fixed_abs, tag = 'smem constant byte address 0x4 - core index']
  #allocation1 [shape = 'u32[144,128]{1,0:T(1,128)}', space=vmem, size = 0x12000, scoped, tag = 'internal scratch']
  %s0 = inlined_call_operand.vmem [shape: f32[2,231,52], index: 0, kind: input, shape index: {}]
  %s1 = inlined_call_operand.vmem [shape: f32[5,52,832], index: 1, kind: input, shape index: {}]
  %s2 = inlined_call_operand.vmem [shape: f32[3,64], index: 2, kind: input, shape index: {}]
  %s3 = inlined_call_operand.vmem [shape: f32[2,227,64], index: 3, kind: output, shape index: {}]
  %s4 = sld [smem:[#allocation0]]
  $region45: #{stagernet_forward.2} parent=0
    _
  %s6 = ssub.s32 1, %s4
  %s7 = scalar_select 0, %s6, %s4
  loop: start=0, step=1, limit=4
  $region2: #{stagernet_forward.2} parent=0 // loop_pre_header
    _
  $region3: #{stagernet_forward.2} parent=0 // loop_header
    %s9 = sphi 0, %s13
    %p10 = scmp.ge.s32.totalorder %s9, 4
    %s19 = sphi 0, %s21
    %s22 = sphi 0, %s19
    %s23 = sphi 0, %s22
    %s39 = sphi 0, %s23
    %s43 = sphi 0, %s43
    %s45 = sphi 0, %s43
    %s46 = sphi 0, %s45
    %s60 = sphi 0, %s46
    %s64 = sphi 0, %s64
    %s66 = sphi 0, %s64
    %s67 = sphi 0, %s66
    %s81 = sphi 0, %s67
    %s87 = sphi 0, %s89
    %s90 = sphi 0, %s87
    %s91 = sphi 0, %s90
    %s107 = sphi 0, %s91
  $region4: #{stagernet_forward.2} parent=0 // loop_header_branch
    %12 = sbr.rel (%p10) target = $region8
  $region5: #{stagernet_forward.2} parent=0 // loop_body
    %s14 = ssub.s32 %s9, 1
    %s15 = ssub.s32 %s9, 2
    %s16 = sadd.s32 %s9, 1
    %s17 = ssub.s32 %s9, %s16
    %p18 = scmp.eq.s32.totalorder %s17, 0
    %s20 = sadd.s32 %s19, 1
    %s21 = scalar_select %p18, %s19, %s20
    %p24 = pneg %p18
    %p25 = scmp.eq.s32.totalorder %s9, 1
    %p26 = por %p24, %p25
    %p27 = scmp.ne.s32.totalorder %s19, %s22
    %p28 = scmp.eq.s32.totalorder %s9, 0
    %p29 = por %p27, %p28
    %p30 = scmp.ne.s32.totalorder %s19, %s22
    %p31 = scmp.eq.s32.totalorder %s14, 1
    %p32 = por %p30, %p31
    %p33 = scmp.ne.s32.totalorder %s22, %s23
    %p34 = scmp.eq.s32.totalorder %s14, 0
    %p35 = por %p33, %p34
    %p36 = scmp.ne.s32.totalorder %s22, %s23
    %p37 = scmp.eq.s32.totalorder %s15, 1
    %p38 = por %p36, %p37
    %p40 = scmp.ne.s32.totalorder %s23, %s39
    %p41 = scmp.eq.s32.totalorder %s15, 0
    %p42 = por %p40, %p41
    %s44 = sadd.s32 %s43, 1
    %p47 = scmp.eq.s32.totalorder %s9, 1
    %p48 = scmp.ne.s32.totalorder %s43, %s45
    %p49 = scmp.eq.s32.totalorder %s9, 0
    %p50 = por %p48, %p49
    %p51 = scmp.ne.s32.totalorder %s43, %s45
    %p52 = scmp.eq.s32.totalorder %s14, 1
    %p53 = por %p51, %p52
    %p54 = scmp.ne.s32.totalorder %s45, %s46
    %p55 = scmp.eq.s32.totalorder %s14, 0
    %p56 = por %p54, %p55
    %p57 = scmp.ne.s32.totalorder %s45, %s46
    %p58 = scmp.eq.s32.totalorder %s15, 1
    %p59 = por %p57, %p58
    %p61 = scmp.ne.s32.totalorder %s46, %s60
    %p62 = scmp.eq.s32.totalorder %s15, 0
    %p63 = por %p61, %p62
    %s65 = sadd.s32 %s64, 1
    %p68 = scmp.eq.s32.totalorder %s9, 1
    %p69 = scmp.ne.s32.totalorder %s64, %s66
    %p70 = scmp.eq.s32.totalorder %s9, 0
    %p71 = por %p69, %p70
    %p72 = scmp.ne.s32.totalorder %s64, %s66
    %p73 = scmp.eq.s32.totalorder %s14, 1
    %p74 = por %p72, %p73
    %p75 = scmp.ne.s32.totalorder %s66, %s67
    %p76 = scmp.eq.s32.totalorder %s14, 0
    %p77 = por %p75, %p76
    %p78 = scmp.ne.s32.totalorder %s66, %s67
    %p79 = scmp.eq.s32.totalorder %s15, 1
    %p80 = por %p78, %p79
    %p82 = scmp.ne.s32.totalorder %s67, %s81
    %p83 = scmp.eq.s32.totalorder %s15, 0
    %p84 = por %p82, %p83
    %s85 = ssub.s32 %s9, %s16
    %p86 = scmp.eq.s32.totalorder %s85, 0
    %s88 = sadd.s32 %s87, 1
    %s89 = scalar_select %p86, %s87, %s88
    %p92 = pneg %p86
    %p93 = scmp.eq.s32.totalorder %s9, 1
    %p94 = por %p92, %p93
    %p95 = scmp.ne.s32.totalorder %s87, %s90
    %p96 = scmp.eq.s32.totalorder %s9, 0
    %p97 = por %p95, %p96
    %p98 = scmp.ne.s32.totalorder %s87, %s90
    %p99 = scmp.eq.s32.totalorder %s14, 1
    %p100 = por %p98, %p99
    %p101 = scmp.ne.s32.totalorder %s90, %s91
    %p102 = scmp.eq.s32.totalorder %s14, 0
    %p103 = por %p101, %p102
    %p104 = scmp.ne.s32.totalorder %s90, %s91
    %p105 = scmp.eq.s32.totalorder %s15, 1
    %p106 = por %p104, %p105
    %p108 = scmp.ne.s32.totalorder %s91, %s107
    %p109 = scmp.eq.s32.totalorder %s15, 0
    %p110 = por %p108, %p109
    %p111 = scmp.le.s32.totalorder 1, %s9
    %p112 = scmp.lt.s32.totalorder %s9, 3
    %p113 = pnand %p111, %p112
    %p114 = pneg %p113
    // Predicated region
    $region9: #{stagernet_forward.2} parent=5 // pred_check
      _
    $region10: #{stagernet_forward.2} parent=5 // pred_check_branch
      %116 = sbr.rel (%p113) target = $region12
    $region11: #{stagernet_forward.2} parent=5 // pred_region
      %s117 = ssub.s32 %s9, 1
      // Predicated region
      $region13: #{stagernet_forward.2} parent=11 // pred_check
        %p118 = pneg %p56
      $region14: #{stagernet_forward.2} parent=11 // pred_check_branch
        %120 = sbr.rel (%p118) target = $region16
      $region15: #{stagernet_forward.2} parent=11 // pred_region
        _
      $region16: #{stagernet_forward.2} parent=11 // pred_fallthru
        _
      // Predicated region
      $region17: #{stagernet_forward.2} parent=11 // pred_check
        %p121 = pneg %p77
      $region18: #{stagernet_forward.2} parent=11 // pred_check_branch
        %123 = sbr.rel (%p121) target = $region20
      $region19: #{stagernet_forward.2} parent=11 // pred_region
        _
      $region20: #{stagernet_forward.2} parent=11 // pred_fallthru
        _
    $region12: #{stagernet_forward.2} parent=5 // pred_fallthru
      _
    %p124 = scmp.lt.s32.totalorder %s9, 2
    // Predicated region
    $region21: #{stagernet_forward.2} parent=5 // pred_check
      %p125 = pneg %p124
    $region22: #{stagernet_forward.2} parent=5 // pred_check_branch
      %127 = sbr.rel (%p125) target = $region24
    $region23: #{stagernet_forward.2} parent=5 // pred_region
      // Predicated region
      $region25: #{stagernet_forward.2} parent=23 // pred_check
        %p128 = pneg %p29
      $region26: #{stagernet_forward.2} parent=23 // pred_check_branch
        %130 = sbr.rel (%p128) target = $region28
      $region27: #{stagernet_forward.2} parent=23 // pred_region
        %p131 = scmp.lt.s32.totalorder %s9, 1
        %s132 = scalar_select %p131, %s9, 1
        %s133 = smul.addr %s132, 29
        %s134 = smul.addr %s133, 8
        %s135 = scalar_lea.vmem %s0, %s134
      $region28: #{stagernet_forward.2} parent=23 // pred_fallthru
        _
    $region24: #{stagernet_forward.2} parent=5 // pred_fallthru
      _
    %p136 = scmp.le.s32.totalorder 1, %s9
    %p137 = scmp.lt.s32.totalorder %s9, 3
    %p138 = pnand %p136, %p137
    %p139 = pneg %p138
    // Predicated region
    $region29: #{stagernet_forward.2} parent=5 // pred_check
      _
    $region30: #{stagernet_forward.2} parent=5 // pred_check_branch
      %141 = sbr.rel (%p138) target = $region32
    $region31: #{stagernet_forward.2} parent=5 // pred_region
      %s142 = ssub.s32 %s9, 1
      %p143 = scmp.lt.s32.totalorder %s14, 1
      %s144 = scalar_select %p143, %s14, 1
      %s145 = smul.addr %s144, 29
      %s146 = smul.addr %s145, 8
      %s147 = scalar_lea.vmem %s0, %s146
      %p148 = pneg %p35
      %p149 = pneg %p32
      %p150 = pneg %p56
      %p151 = pneg %p53
      %p152 = pneg %p77
      %p153 = pneg %p74
      %p154 = pneg %p103
      %p155 = pneg %p100
      %p156 = scmp.lt.s32.totalorder %s14, 1
      %s157 = scalar_select %p156, %s14, 1
      %s158 = smul.addr %s157, 29
      %s159 = smul.addr %s158, 8
      %s160 = scalar_lea.vmem %s3, %s159
      %p161 = scmp.lt.s32.totalorder %s14, 1
      %s162 = scalar_select %p161, %s14, 1
      %s163 = smul.addr %s162, 29
      %s164 = smul.addr %s163, 8
      %s165 = scalar_lea.vmem %s0, %s164
      %p166 = scmp.lt.s32.totalorder %s14, 1
      %s167 = scalar_select %p166, %s14, 1
      %s168 = smul.addr %s167, 29
      %s169 = smul.addr %s168, 8
      %s170 = scalar_lea.vmem %s3, %s169
      %v171 = vld [vmem:[%s165] sm:$0xff]
      %v172 = vld [vmem:[%s165 + $0x8] sm:$0xff]
      %v173 = vld [vmem:[%s165 + $0x10] sm:$0xff]
      %v174 = vld [vmem:[%s165 + $0x18] sm:$0xff]
      %v175 = vld [vmem:[%s165 + $0x20] sm:$0xff]
      %v176 = vld [vmem:[%s165 + $0x28] sm:$0xff]
      %v177 = vld [vmem:[%s165 + $0x30] sm:$0xff]
      %v178 = vld [vmem:[%s165 + $0x38] sm:$0xff]
      %v179 = vld [vmem:[%s165 + $0x40] sm:$0xff]
      %v180 = vld [vmem:[%s165 + $0x48] sm:$0xff]
      %v181 = vld [vmem:[%s165 + $0x50] sm:$0xff]
      %v182 = vld [vmem:[%s165 + $0x58] sm:$0xff]
      %v183 = vld [vmem:[%s165 + $0x60] sm:$0xff]
      %v184 = vld [vmem:[%s165 + $0x68] sm:$0xff]
      %v185 = vld [vmem:[%s165 + $0x70] sm:$0xff]
      %v186 = vld [vmem:[%s165 + $0x78] sm:$0xff]
      %v187 = vld [vmem:[%s165 + $0x80] sm:$0xff]
      %v188 = vld [vmem:[%s165 + $0x88] sm:$0xff]
      %v189 = vld [vmem:[%s165 + $0x90] sm:$0xff]
      %v190 = vld [vmem:[%s165 + $0x98] sm:$0xff]
      %v191 = vld [vmem:[%s165 + $0xa0] sm:$0xff]
      %v192 = vld [vmem:[%s165 + $0xa8] sm:$0xff]
      %v193 = vld [vmem:[%s165 + $0xb0] sm:$0xff]
      %v194 = vld [vmem:[%s165 + $0xb8] sm:$0xff]
      %v195 = vld [vmem:[%s165 + $0xc0] sm:$0xff]
      %v196 = vld [vmem:[%s165 + $0xc8] sm:$0xff]
      %v197 = vld [vmem:[%s165 + $0xd0] sm:$0xff]
      %v198 = vld [vmem:[%s165 + $0xd8] sm:$0xff]
      %v199 = vld [vmem:[%s165 + $0xe0] sm:$0x7]
      %v200 = vld [vmem:[%s1] sm:$0xff]
      %v201 = vld [vmem:[%s1 + $0x8] sm:$0xff]
      %v202 = vld [vmem:[%s1 + $0x10] sm:$0xff]
      %v203 = vld [vmem:[%s1 + $0x18] sm:$0xff]
      %v204 = vld [vmem:[%s1 + $0x20] sm:$0xff]
      %v205 = vld [vmem:[%s1 + $0x28] sm:$0xff]
      %v206 = vld [vmem:[%s1 + $0x30] sm:$0xff]
      %v207 = vld [vmem:[%s1 + $0x38] sm:$0xff]
      %v208 = vld [vmem:[%s1 + $0x40] sm:$0xff]
      %v209 = vld [vmem:[%s1 + $0x48] sm:$0xff]
      %v210 = vld [vmem:[%s1 + $0x50] sm:$0xff]
      %v211 = vld [vmem:[%s1 + $0x58] sm:$0xff]
      %v212 = vld [vmem:[%s1 + $0x60] sm:$0xff]
      %v213 = vld [vmem:[%s1 + $0x68] sm:$0xff]
      %v214 = vld [vmem:[%s1 + $0x70] sm:$0xff]
      %v215 = vld [vmem:[%s1 + $0x78] sm:$0xff]
      %v216 = vld [vmem:[%s1 + $0x80] sm:$0xff]
      %v217 = vld [vmem:[%s1 + $0x88] sm:$0xff]
      %v218 = vld [vmem:[%s1 + $0x90] sm:$0xff]
      %v219 = vld [vmem:[%s1 + $0x98] sm:$0xff]
      %v220 = vld [vmem:[%s1 + $0xa0] sm:$0xff]
      %v221 = vld [vmem:[%s1 + $0xa8] sm:$0xff]
      %v222 = vld [vmem:[%s1 + $0xb0] sm:$0xff]
      %v223 = vld [vmem:[%s1 + $0xb8] sm:$0xff]
      %v224 = vld [vmem:[%s1 + $0xc0] sm:$0xff]
      %v225 = vld [vmem:[%s1 + $0xc8] sm:$0xff]
      %v226 = vld [vmem:[%s1 + $0xd0] sm:$0xff]
      %v227 = vld [vmem:[%s1 + $0xd8] sm:$0xff]
      %v228 = vld [vmem:[%s1 + $0xe0] sm:$0xff]
      %v229 = vld [vmem:[%s1 + $0xe8] sm:$0xff]
      %v230 = vld [vmem:[%s1 + $0xf0] sm:$0xff]
      %v231 = vld [vmem:[%s1 + $0xf8] sm:$0xff]
      %v232 = vld [vmem:[%s1 + $0x100] sm:$0xff]
      %v233 = vld [vmem:[%s1 + $0x108] sm:$0xff]
      %v234 = vld [vmem:[%s1 + $0x110] sm:$0xff]
      %v235 = vld [vmem:[%s1 + $0x118] sm:$0xff]
      %v236 = vld [vmem:[%s1 + $0x120] sm:$0xff]
      %v237 = vld [vmem:[%s1 + $0x128] sm:$0xff]
      %v238 = vld [vmem:[%s1 + $0x130] sm:$0xff]
      %v239 = vld [vmem:[%s1 + $0x138] sm:$0xff]
      %v240 = vld [vmem:[%s1 + $0x140] sm:$0xff]
      %v241 = vld [vmem:[%s1 + $0x148] sm:$0xff]
      %v242 = vld [vmem:[%s1 + $0x150] sm:$0xf]
      %v243 = vld [vmem:[%s1 + $0x158] sm:$0xf]
      %v244 = vld [vmem:[%s1 + $0x160] sm:$0xf]
      %v245 = vld [vmem:[%s1 + $0x168] sm:$0xf]
      %v246 = vld [vmem:[%s1 + $0x170] sm:$0xf]
      %v247 = vld [vmem:[%s1 + $0x178] sm:$0xf]
      %v248 = vld [vmem:[%s1 + $0x180] sm:$0xf]
      %v249 = vld [vmem:[%s165 + $0x1] sm:$0xff]
      %v250 = vld [vmem:[%s165 + $0x9] sm:$0xff]
      %v251 = vld [vmem:[%s165 + $0x11] sm:$0xff]
      %v252 = vld [vmem:[%s165 + $0x19] sm:$0xff]
      %v253 = vld [vmem:[%s165 + $0x21] sm:$0xff]
      %v254 = vld [vmem:[%s165 + $0x29] sm:$0xff]
      %v255 = vld [vmem:[%s165 + $0x31] sm:$0xff]
      %v256 = vld [vmem:[%s165 + $0x39] sm:$0xff]
      %v257 = vld [vmem:[%s165 + $0x41] sm:$0xff]
      %v258 = vld [vmem:[%s165 + $0x49] sm:$0xff]
      %v259 = vld [vmem:[%s165 + $0x51] sm:$0xff]
      %v260 = vld [vmem:[%s165 + $0x59] sm:$0xff]
      %v261 = vld [vmem:[%s165 + $0x61] sm:$0xff]
      %v262 = vld [vmem:[%s165 + $0x69] sm:$0xff]
      %v263 = vld [vmem:[%s165 + $0x71] sm:$0xff]
      %v264 = vld [vmem:[%s165 + $0x79] sm:$0xff]
      %v265 = vld [vmem:[%s165 + $0x81] sm:$0xff]
      %v266 = vld [vmem:[%s165 + $0x89] sm:$0xff]
      %v267 = vld [vmem:[%s165 + $0x91] sm:$0xff]
      %v268 = vld [vmem:[%s165 + $0x99] sm:$0xff]
      %v269 = vld [vmem:[%s165 + $0xa1] sm:$0xff]
      %v270 = vld [vmem:[%s165 + $0xa9] sm:$0xff]
      %v271 = vld [vmem:[%s165 + $0xb1] sm:$0xff]
      %v272 = vld [vmem:[%s165 + $0xb9] sm:$0xff]
      %v273 = vld [vmem:[%s165 + $0xc1] sm:$0xff]
      %v274 = vld [vmem:[%s165 + $0xc9] sm:$0xff]
      %v275 = vld [vmem:[%s165 + $0xd1] sm:$0xff]
      %v276 = vld [vmem:[%s165 + $0xd9] sm:$0xff]
      %v277 = vld [vmem:[%s165 + $0xe1] sm:$0x7]
      %s278 = scalar_lea.vmem %s1, 392
      %v279 = vld [vmem:[%s278] sm:$0xff]
      %v280 = vld [vmem:[%s278 + $0x8] sm:$0xff]
      %v281 = vld [vmem:[%s278 + $0x10] sm:$0xff]
      %v282 = vld [vmem:[%s278 + $0x18] sm:$0xff]
      %v283 = vld [vmem:[%s278 + $0x20] sm:$0xff]
      %v284 = vld [vmem:[%s278 + $0x28] sm:$0xff]
      %v285 = vld [vmem:[%s278 + $0x30] sm:$0xff]
      %v286 = vld [vmem:[%s278 + $0x38] sm:$0xff]
      %v287 = vld [vmem:[%s278 + $0x40] sm:$0xff]
      %v288 = vld [vmem:[%s278 + $0x48] sm:$0xff]
      %v289 = vld [vmem:[%s278 + $0x50] sm:$0xff]
      %v290 = vld [vmem:[%s278 + $0x58] sm:$0xff]
      %v291 = vld [vmem:[%s278 + $0x60] sm:$0xff]
      %v292 = vld [vmem:[%s278 + $0x68] sm:$0xff]
      %v293 = vld [vmem:[%s278 + $0x70] sm:$0xff]
      %v294 = vld [vmem:[%s278 + $0x78] sm:$0xff]
      %v295 = vld [vmem:[%s278 + $0x80] sm:$0xff]
      %v296 = vld [vmem:[%s278 + $0x88] sm:$0xff]
      %v297 = vld [vmem:[%s278 + $0x90] sm:$0xff]
      %v298 = vld [vmem:[%s278 + $0x98] sm:$0xff]
      %v299 = vld [vmem:[%s278 + $0xa0] sm:$0xff]
      %v300 = vld [vmem:[%s278 + $0xa8] sm:$0xff]
      %v301 = vld [vmem:[%s278 + $0xb0] sm:$0xff]
      %v302 = vld [vmem:[%s278 + $0xb8] sm:$0xff]
      %v303 = vld [vmem:[%s278 + $0xc0] sm:$0xff]
      %v304 = vld [vmem:[%s278 + $0xc8] sm:$0xff]
      %v305 = vld [vmem:[%s278 + $0xd0] sm:$0xff]
      %v306 = vld [vmem:[%s278 + $0xd8] sm:$0xff]
      %v307 = vld [vmem:[%s278 + $0xe0] sm:$0xff]
      %v308 = vld [vmem:[%s278 + $0xe8] sm:$0xff]
      %v309 = vld [vmem:[%s278 + $0xf0] sm:$0xff]
      %v310 = vld [vmem:[%s278 + $0xf8] sm:$0xff]
      %v311 = vld [vmem:[%s278 + $0x100] sm:$0xff]
      %v312 = vld [vmem:[%s278 + $0x108] sm:$0xff]
      %v313 = vld [vmem:[%s278 + $0x110] sm:$0xff]
      %v314 = vld [vmem:[%s278 + $0x118] sm:$0xff]
      %v315 = vld [vmem:[%s278 + $0x120] sm:$0xff]
      %v316 = vld [vmem:[%s278 + $0x128] sm:$0xff]
      %v317 = vld [vmem:[%s278 + $0x130] sm:$0xff]
      %v318 = vld [vmem:[%s278 + $0x138] sm:$0xff]
      %v319 = vld [vmem:[%s278 + $0x140] sm:$0xff]
      %v320 = vld [vmem:[%s278 + $0x148] sm:$0xff]
      %v321 = vld [vmem:[%s278 + $0x150] sm:$0xf]
      %v322 = vld [vmem:[%s278 + $0x158] sm:$0xf]
      %v323 = vld [vmem:[%s278 + $0x160] sm:$0xf]
      %v324 = vld [vmem:[%s278 + $0x168] sm:$0xf]
      %v325 = vld [vmem:[%s278 + $0x170] sm:$0xf]
      %v326 = vld [vmem:[%s278 + $0x178] sm:$0xf]
      %v327 = vld [vmem:[%s278 + $0x180] sm:$0xf]
      %vm328 = vcmask 424960
      %v330 = vsel %vm328, %v249, 0
      %v333 = vsel %vm328, %v250, 0
      %v336 = vsel %vm328, %v251, 0
      %v339 = vsel %vm328, %v252, 0
      %v342 = vsel %vm328, %v253, 0
      %v345 = vsel %vm328, %v254, 0
      %v348 = vsel %vm328, %v255, 0
      %v351 = vsel %vm328, %v256, 0
      %v354 = vsel %vm328, %v257, 0
      %v357 = vsel %vm328, %v258, 0
      %v360 = vsel %vm328, %v259, 0
      %v363 = vsel %vm328, %v260, 0
      %v366 = vsel %vm328, %v261, 0
      %v369 = vsel %vm328, %v262, 0
      %v372 = vsel %vm328, %v263, 0
      %v375 = vsel %vm328, %v264, 0
      %v378 = vsel %vm328, %v265, 0
      %v381 = vsel %vm328, %v266, 0
      %v384 = vsel %vm328, %v267, 0
      %v387 = vsel %vm328, %v268, 0
      %v390 = vsel %vm328, %v269, 0
      %v393 = vsel %vm328, %v270, 0
      %v396 = vsel %vm328, %v271, 0
      %v399 = vsel %vm328, %v272, 0
      %v402 = vsel %vm328, %v273, 0
      %v405 = vsel %vm328, %v274, 0
      %v408 = vsel %vm328, %v275, 0
      %v411 = vsel %vm328, %v276, 0
      %v414 = vsel %vm328, %v277, 0
      %vm416 = vcmask 1043456
      %v418 = vsel %vm416, %v321, 0
      %v421 = vsel %vm416, %v322, 0
      %v424 = vsel %vm416, %v323, 0
      %v427 = vsel %vm416, %v324, 0
      %v430 = vsel %vm416, %v325, 0
      %v433 = vsel %vm416, %v326, 0
      %v436 = vsel %vm416, %v327, 0
      %438 = vmatprep.subr.mxu0 %v280
      %439 = vmatpush1.msra.mxu0 %v279
      %440 = vmatprep.subr.mxu0 %v287
      %441 = vmatpush1.msra.mxu0 %v286
      %442 = vmatprep.subr.mxu0 %v294
      %443 = vmatpush1.msra.mxu0 %v293
      %444 = vmatprep.subr.mxu0 %v301
      %445 = vmatpush1.msra.mxu0 %v300
      %446 = vmatprep.subr.mxu0 %v308
      %447 = vmatpush1.msra.mxu0 %v307
      %448 = vmatprep.subr.mxu0 %v315
      %449 = vmatpush1.msra.mxu0 %v314
      %450 = vmatprep.subr.mxu0 %v421
      %451 = vmatpush1.msra.mxu0 %v418
      %452 = vmatprep.subr.mxu0 0.0
      %453 = vmatpush1.msra.mxu0 0.0
      %454 = vmatprep.subr.mxu0 0.0
      %455 = vmatpush1.msra.mxu0 0.0
      %456 = vmatprep.subr.mxu0 0.0
      %457 = vmatpush1.msra.mxu0 0.0
      %458 = vmatprep.subr.mxu0 0.0
      %459 = vmatpush1.msra.mxu0 0.0
      %460 = vmatprep.subr.mxu0 0.0
      %461 = vmatpush1.msra.mxu0 0.0
      %462 = vmatprep.subr.mxu0 0.0
      %463 = vmatpush1.msra.mxu0 0.0
      %464 = vmatprep.subr.mxu0 0.0
      %465 = vmatpush1.msra.mxu0 0.0
      %466 = vmatprep.subr.mxu0 0.0
      %467 = vmatpush1.msra.mxu0 0.0
      %468 = vmatprep.subr.mxu0 0.0
      %469 = vmatpush1.msra.mxu0 0.0
      %470 = vmatprep.subr.mxu0 0.0
      %471 = vmatpush1.msra.mxu0 0.0
      %472 = vmatprep.subr.mxu0 0.0
      %473 = vmatpush1.msra.mxu0 0.0
      %474 = vmatprep.subr.mxu0 0.0
      %475 = vmatpush1.msra.mxu0 0.0
      %476 = vmatprep.subr.mxu0 0.0
      %477 = vmatpush1.msra.mxu0 0.0
      %478 = vmatprep.subr.mxu0 0.0
      %479 = vmatpush1.msra.mxu0 0.0
      %480 = vmatprep.subr.mxu0 0.0
      %481 = vmatpush1.msra.mxu0 0.0
      %482 = vmatprep.subr.mxu0 0.0
      %483 = vmatpush1.msra.mxu0 0.0
      %484 = vmatprep.subr.mxu0 0.0
      %485 = vmatpush1.msra.mxu0 0.0
      %486 = vmatprep.subr.mxu0 0.0
      %487 = vmatpush1.msra.mxu0 0.0
      %488 = vmatprep.subr.mxu0 0.0
      %489 = vmatpush1.msra.mxu0 0.0
      %490 = vmatprep.subr.mxu0 0.0
      %491 = vmatpush1.msra.mxu0 0.0
      %492 = vmatprep.subr.mxu0 0.0
      %493 = vmatpush1.msra.mxu0 0.0
      %494 = vmatprep.subr.mxu0 0.0
      %495 = vmatpush1.msra.mxu0 0.0
      %496 = vmatprep.subr.mxu0 0.0
      %497 = vmatpush1.msra.mxu0 0.0
      %498 = vmatprep.subr.mxu0 0.0
      %499 = vmatpush1.msra.mxu0 0.0
      %500 = vmatprep.subr.mxu0 0.0
      %501 = vmatpush1.msra.mxu0 0.0
      %502 = vmatprep.mubr.f32.mxu0 0.0
      %503 = vmatmul.mubr.f32.gmra.mrb[0].mxu0 %v330
      %v504 = vpop.f32.mrb[0].mxu0
      %v505 = vadd.f32 0.0, %v504
      %v506 = vpop.f32.mrb[0].mxu0
      %v507 = vadd.f32 0.0, %v506
      %508 = vmatprep.mubr.f32.mxu0 0.0
      %509 = vmatmul.mubr.f32.gmra.mrb[0].mxu0 %v333
      %v510 = vpop.f32.mrb[0].mxu0
      %v511 = vadd.f32 0.0, %v510
      %v512 = vpop.f32.mrb[0].mxu0
      %v513 = vadd.f32 0.0, %v512
      %514 = vmatprep.mubr.f32.mxu0 0.0
      %515 = vmatmul.mubr.f32.gmra.mrb[0].mxu0 %v336
      %v516 = vpop.f32.mrb[0].mxu0
      %v517 = vadd.f32 0.0, %v516
      %v518 = vpop.f32.mrb[0].mxu0
      %v519 = vadd.f32 0.0, %v518
      %520 = vmatprep.mubr.f32.mxu0 0.0
      %521 = vmatmul.mubr.f32.gmra.mrb[0].mxu0 %v339
      %v522 = vpop.f32.mrb[0].mxu0
      %v523 = vadd.f32 0.0, %v522
      %v524 = vpop.f32.mrb[0].mxu0
      %v525 = vadd.f32 0.0, %v524
      %526 = vmatprep.mubr.f32.mxu0 0.0
      %527 = vmatmul.mubr.f32.gmra.mrb[0].mxu0 %v342
      %v528 = vpop.f32.mrb[0].mxu0
      %v529 = vadd.f32 0.0, %v528
      %v530 = vpop.f32.mrb[0].mxu0
      %v531 = vadd.f32 0.0, %v530
      %532 = vmatprep.mubr.f32.mxu0 0.0
      %533 = vmatmul.mubr.f32.gmra.mrb[0].mxu0 %v345
      %v534 = vpop.f32.mrb[0].mxu0
      %v535 = vadd.f32 0.0, %v534
      %v536 = vpop.f32.mrb[0].mxu0
      %v537 = vadd.f32 0.0, %v536
      %538 = vmatprep.mubr.f32.mxu0 0.0
      %539 = vmatmul.mubr.f32.gmra.mrb[0].mxu0 %v348
      %v540 = vpop.f32.mrb[0].mxu0
      %v541 = vadd.f32 0.0, %v540
      %v542 = vpop.f32.mrb[0].mxu0
      %v543 = vadd.f32 0.0, %v542
      %544 = vmatprep.mubr.f32.mxu0 0.0
      %545 = vmatmul.mubr.f32.gmra.mrb[0].mxu0 %v351
      %v546 = vpop.f32.mrb[0].mxu0
      %v547 = vadd.f32 0.0, %v546
      %v548 = vpop.f32.mrb[0].mxu0
      %v549 = vadd.f32 0.0, %v548
      %550 = vmatprep.mubr.f32.mxu0 0.0
      %551 = vmatmul.mubr.f32.gmra.mrb[0].mxu0 %v354
      %v552 = vpop.f32.mrb[0].mxu0
      %v553 = vadd.f32 0.0, %v552
      %v554 = vpop.f32.mrb[0].mxu0
      %v555 = vadd.f32 0.0, %v554
      %556 = vmatprep.mubr.f32.mxu0 0.0
      %557 = vmatmul.mubr.f32.gmra.mrb[0].mxu0 %v357
      %v558 = vpop.f32.mrb[0].mxu0
      %v559 = vadd.f32 0.0, %v558
      %v560 = vpop.f32.mrb[0].mxu0
      %v561 = vadd.f32 0.0, %v560
      %562 = vmatprep.mubr.f32.mxu0 0.0
      %563 = vmatmul.mubr.f32.gmra.mrb[0].mxu0 %v360
      %v564 = vpop.f32.mrb[0].mxu0
      %v565 = vadd.f32 0.0, %v564
      %v566 = vpop.f32.mrb[0].mxu0
      %v567 = vadd.f32 0.0, %v566
      %568 = vmatprep.mubr.f32.mxu0 0.0
      %569 = vmatmul.mubr.f32.gmra.mrb[0].mxu0 %v363
      %v570 = vpop.f32.mrb[0].mxu0
      %v571 = vadd.f32 0.0, %v570
      %v572 = vpop.f32.mrb[0].mxu0
      %v573 = vadd.f32 0.0, %v572
      %574 = vmatprep.mubr.f32.mxu0 0.0
      %575 = vmatmul.mubr.f32.gmra.mrb[0].mxu0 %v366
      %v576 = vpop.f32.mrb[0].mxu0
      %v577 = vadd.f32 0.0, %v576
      %v578 = vpop.f32.mrb[0].mxu0
      %v579 = vadd.f32 0.0, %v578
      %580 = vmatprep.mubr.f32.mxu0 0.0
      %581 = vmatmul.mubr.f32.gmra.mrb[0].mxu0 %v369
      %v582 = vpop.f32.mrb[0].mxu0
      %v583 = vadd.f32 0.0, %v582
      %v584 = vpop.f32.mrb[0].mxu0
      %v585 = vadd.f32 0.0, %v584
      %586 = vmatprep.mubr.f32.mxu0 0.0
      %587 = vmatmul.mubr.f32.gmra.mrb[0].mxu0 %v372
      %v588 = vpop.f32.mrb[0].mxu0
      %v589 = vadd.f32 0.0, %v588
      %v590 = vpop.f32.mrb[0].mxu0
      %v591 = vadd.f32 0.0, %v590
      %592 = vmatprep.mubr.f32.mxu0 0.0
      %593 = vmatmul.mubr.f32.gmra.mrb[0].mxu0 %v375
      %v594 = vpop.f32.mrb[0].mxu0
      %v595 = vadd.f32 0.0, %v594
      %v596 = vpop.f32.mrb[0].mxu0
      %v597 = vadd.f32 0.0, %v596
      %598 = vmatprep.mubr.f32.mxu0 0.0
      %599 = vmatmul.mubr.f32.gmra.mrb[0].mxu0 %v378
      %v600 = vpop.f32.mrb[0].mxu0
      %v601 = vadd.f32 0.0, %v600
      %v602 = vpop.f32.mrb[0].mxu0
      %v603 = vadd.f32 0.0, %v602
      %604 = vmatprep.mubr.f32.mxu0 0.0
      %605 = vmatmul.mubr.f32.gmra.mrb[0].mxu0 %v381
      %v606 = vpop.f32.mrb[0].mxu0
      %v607 = vadd.f32 0.0, %v606
      %v608 = vpop.f32.mrb[0].mxu0
      %v609 = vadd.f32 0.0, %v608
      %610 = vmatprep.mubr.f32.mxu0 0.0
      %611 = vmatmul.mubr.f32.gmra.mrb[0].mxu0 %v384
      %v612 = vpop.f32.mrb[0].mxu0
      %v613 = vadd.f32 0.0, %v612
      %v614 = vpop.f32.mrb[0].mxu0
      %v615 = vadd.f32 0.0, %v614
      %616 = vmatprep.mubr.f32.mxu0 0.0
      %617 = vmatmul.mubr.f32.gmra.mrb[0].mxu0 %v387
      %v618 = vpop.f32.mrb[0].mxu0
      %v619 = vadd.f32 0.0, %v618
      %v620 = vpop.f32.mrb[0].mxu0
      %v621 = vadd.f32 0.0, %v620
      %622 = vmatprep.mubr.f32.mxu0 0.0
      %623 = vmatmul.mubr.f32.gmra.mrb[0].mxu0 %v390
      %v624 = vpop.f32.mrb[0].mxu0
      %v625 = vadd.f32 0.0, %v624
      %v626 = vpop.f32.mrb[0].mxu0
      %v627 = vadd.f32 0.0, %v626
      %628 = vmatprep.mubr.f32.mxu0 0.0
      %629 = vmatmul.mubr.f32.gmra.mrb[0].mxu0 %v393
      %v630 = vpop.f32.mrb[0].mxu0
      %v631 = vadd.f32 0.0, %v630
      %v632 = vpop.f32.mrb[0].mxu0
      %v633 = vadd.f32 0.0, %v632
      %634 = vmatprep.mubr.f32.mxu0 0.0
      %635 = vmatmul.mubr.f32.gmra.mrb[0].mxu0 %v396
      %v636 = vpop.f32.mrb[0].mxu0
      %v637 = vadd.f32 0.0, %v636
      %v638 = vpop.f32.mrb[0].mxu0
      %v639 = vadd.f32 0.0, %v638
      %640 = vmatprep.mubr.f32.mxu0 0.0
      %641 = vmatmul.mubr.f32.gmra.mrb[0].mxu0 %v399
      %v642 = vpop.f32.mrb[0].mxu0
      %v643 = vadd.f32 0.0, %v642
      %v644 = vpop.f32.mrb[0].mxu0
      %v645 = vadd.f32 0.0, %v644
      %646 = vmatprep.mubr.f32.mxu0 0.0
      %647 = vmatmul.mubr.f32.gmra.mrb[0].mxu0 %v402
      %v648 = vpop.f32.mrb[0].mxu0
      %v649 = vadd.f32 0.0, %v648
      %v650 = vpop.f32.mrb[0].mxu0
      %v651 = vadd.f32 0.0, %v650
      %652 = vmatprep.mubr.f32.mxu0 0.0
      %653 = vmatmul.mubr.f32.gmra.mrb[0].mxu0 %v405
      %v654 = vpop.f32.mrb[0].mxu0
      %v655 = vadd.f32 0.0, %v654
      %v656 = vpop.f32.mrb[0].mxu0
      %v657 = vadd.f32 0.0, %v656
      %658 = vmatprep.mubr.f32.mxu0 0.0
      %659 = vmatmul.mubr.f32.gmra.mrb[0].mxu0 %v408
      %v660 = vpop.f32.mrb[0].mxu0
      %v661 = vadd.f32 0.0, %v660
      %v662 = vpop.f32.mrb[0].mxu0
      %v663 = vadd.f32 0.0, %v662
      %664 = vmatprep.mubr.f32.mxu0 0.0
      %665 = vmatmul.mubr.f32.gmra.mrb[0].mxu0 %v411
      %v666 = vpop.f32.mrb[0].mxu0
      %v667 = vadd.f32 0.0, %v666
      %v668 = vpop.f32.mrb[0].mxu0
      %v669 = vadd.f32 0.0, %v668
      %670 = vmatprep.mubr.f32.mxu0 0.0
      %671 = vmatmul.mubr.f32.gmra.mrb[0].mxu0 %v414
      %v672 = vpop.f32.mrb[0].mxu0
      %v673 = vadd.f32 0.0, %v672
      %v674 = vpop.f32.mrb[0].mxu0
      %v675 = vadd.f32 0.0, %v674
      %676 = vdwg.mxu0
      %677 = vmatprep.subr.mxu0 %v282
      %678 = vmatpush1.msra.mxu0 %v281
      %679 = vmatprep.subr.mxu0 %v289
      %680 = vmatpush1.msra.mxu0 %v288
      %681 = vmatprep.subr.mxu0 %v296
      %682 = vmatpush1.msra.mxu0 %v295
      %683 = vmatprep.subr.mxu0 %v303
      %684 = vmatpush1.msra.mxu0 %v302
      %685 = vmatprep.subr.mxu0 %v310
      %686 = vmatpush1.msra.mxu0 %v309
      %687 = vmatprep.subr.mxu0 %v317
      %688 = vmatpush1.msra.mxu0 %v316
      %689 = vmatprep.subr.mxu0 %v427
      %690 = vmatpush1.msra.mxu0 %v424
      %691 = vmatprep.subr.mxu0 0.0
      %692 = vmatpush1.msra.mxu0 0.0
      %693 = vmatprep.subr.mxu0 0.0
      %694 = vmatpush1.msra.mxu0 0.0
      %695 = vmatprep.subr.mxu0 0.0
      %696 = vmatpush1.msra.mxu0 0.0
      %697 = vmatprep.subr.mxu0 0.0
      %698 = vmatpush1.msra.mxu0 0.0
      %699 = vmatprep.subr.mxu0 0.0
      %700 = vmatpush1.msra.mxu0 0.0
      %701 = vmatprep.subr.mxu0 0.0
      %702 = vmatpush1.msra.mxu0 0.0
      %703 = vmatprep.subr.mxu0 0.0
      %704 = vmatpush1.msra.mxu0 0.0
      %705 = vmatprep.subr.mxu0 0.0
      %706 = vmatpush1.msra.mxu0 0.0
      %707 = vmatprep.subr.mxu0 0.0
      %708 = vmatpush1.msra.mxu0 0.0
      %709 = vmatprep.subr.mxu0 0.0
      %710 = vmatpush1.msra.mxu0 0.0
      %711 = vmatprep.subr.mxu0 0.0
      %712 = vmatpush1.msra.mxu0 0.0
      %713 = vmatprep.subr.mxu0 0.0
      %714 = vmatpush1.msra.mxu0 0.0
      %715 = vmatprep.subr.mxu0 0.0
      %716 = vmatpush1.msra.mxu0 0.0
      %717 = vmatprep.subr.mxu0 0.0
      %718 = vmatpush1.msra.mxu0 0.0
      %719 = vmatprep.subr.mxu0 0.0
      %720 = vmatpush1.msra.mxu0 0.0
      %721 = vmatprep.subr.mxu0 0.0
      %722 = vmatpush1.msra.mxu0 0.0
      %723 = vmatprep.subr.mxu0 0.0
      %724 = vmatpush1.msra.mxu0 0.0
      %725 = vmatprep.subr.mxu0 0.0
      %726 = vmatpush1.msra.mxu0 0.0
      %727 = vmatprep.subr.mxu0 0.0
      %728 = vmatpush1.msra.mxu0 0.0
      %729 = vmatprep.subr.mxu0 0.0
      %730 = vmatpush1.msra.mxu0 0.0
      %731 = vmatprep.subr.mxu0 0.0
      %732 = vmatpush1.msra.mxu0 0.0
      %733 = vmatprep.subr.mxu0 0.0
      %734 = vmatpush1.msra.mxu0 0.0
      %735 = vmatprep.subr.mxu0 0.0
      %736 = vmatpush1.msra.mxu0 0.0
      %737 = vmatprep.subr.mxu0 0.0
      %738 = vmatpush1.msra.mxu0 0.0
      %739 = vmatprep.subr.mxu0 0.0
      %740 = vmatpush1.msra.mxu0 0.0
      %741 = vmatprep.mubr.f32.mxu0 0.0
      %742 = vmatmul.mubr.f32.gmra.mrb[0].mxu0 %v330
      %v743 = vpop.f32.mrb[0].mxu0
      %v744 = vadd.f32 0.0, %v743
      %v745 = vpop.f32.mrb[0].mxu0
      %v746 = vadd.f32 0.0, %v745
      %747 = vmatprep.mubr.f32.mxu0 0.0
      %748 = vmatmul.mubr.f32.gmra.mrb[0].mxu0 %v333
      %v749 = vpop.f32.mrb[0].mxu0
      %v750 = vadd.f32 0.0, %v749
      %v751 = vpop.f32.mrb[0].mxu0
      %v752 = vadd.f32 0.0, %v751
      %753 = vmatprep.mubr.f32.mxu0 0.0
      %754 = vmatmul.mubr.f32.gmra.mrb[0].mxu0 %v336
      %v755 = vpop.f32.mrb[0].mxu0
      %v756 = vadd.f32 0.0, %v755
      %v757 = vpop.f32.mrb[0].mxu0
      %v758 = vadd.f32 0.0, %v757
      %759 = vmatprep.mubr.f32.mxu0 0.0
      %760 = vmatmul.mubr.f32.gmra.mrb[0].mxu0 %v339
      %v761 = vpop.f32.mrb[0].mxu0
      %v762 = vadd.f32 0.0, %v761
      %v763 = vpop.f32.mrb[0].mxu0
      %v764 = vadd.f32 0.0, %v763
      %765 = vmatprep.mubr.f32.mxu0 0.0
      %766 = vmatmul.mubr.f32.gmra.mrb[0].mxu0 %v342
      %v767 = vpop.f32.mrb[0].mxu0
      %v768 = vadd.f32 0.0, %v767
      %v769 = vpop.f32.mrb[0].mxu0
      %v770 = vadd.f32 0.0, %v769
      %771 = vmatprep.mubr.f32.mxu0 0.0
      %772 = vmatmul.mubr.f32.gmra.mrb[0].mxu0 %v345
      %v773 = vpop.f32.mrb[0].mxu0
      %v774 = vadd.f32 0.0, %v773
      %v775 = vpop.f32.mrb[0].mxu0
      %v776 = vadd.f32 0.0, %v775
      %777 = vmatprep.mubr.f32.mxu0 0.0
      %778 = vmatmul.mubr.f32.gmra.mrb[0].mxu0 %v348
      %v779 = vpop.f32.mrb[0].mxu0
      %v780 = vadd.f32 0.0, %v779
      %v781 = vpop.f32.mrb[0].mxu0
      %v782 = vadd.f32 0.0, %v781
      %783 = vmatprep.mubr.f32.mxu0 0.0
      %784 = vmatmul.mubr.f32.gmra.mrb[0].mxu0 %v351
      %v785 = vpop.f32.mrb[0].mxu0
      %v786 = vadd.f32 0.0, %v785
      %v787 = vpop.f32.mrb[0].mxu0
      %v788 = vadd.f32 0.0, %v787
      %789 = vmatprep.mubr.f32.mxu0 0.0
      %790 = vmatmul.mubr.f32.gmra.mrb[0].mxu0 %v354
      %v791 = vpop.f32.mrb[0].mxu0
      %v792 = vadd.f32 0.0, %v791
      %v793 = vpop.f32.mrb[0].mxu0
      %v794 = vadd.f32 0.0, %v793
      %795 = vmatprep.mubr.f32.mxu0 0.0
      %796 = vmatmul.mubr.f32.gmra.mrb[0].mxu0 %v357
      %v797 = vpop.f32.mrb[0].mxu0
      %v798 = vadd.f32 0.0, %v797
      %v799 = vpop.f32.mrb[0].mxu0
      %v800 = vadd.f32 0.0, %v799
      %801 = vmatprep.mubr.f32.mxu0 0.0
      %802 = vmatmul.mubr.f32.gmra.mrb[0].mxu0 %v360
      %v803 = vpop.f32.mrb[0].mxu0
      %v804 = vadd.f32 0.0, %v803
      %v805 = vpop.f32.mrb[0].mxu0
      %v806 = vadd.f32 0.0, %v805
      %807 = vmatprep.mubr.f32.mxu0 0.0
      %808 = vmatmul.mubr.f32.gmra.mrb[0].mxu0 %v363
      %v809 = vpop.f32.mrb[0].mxu0
      %v810 = vadd.f32 0.0, %v809
      %v811 = vpop.f32.mrb[0].mxu0
      %v812 = vadd.f32 0.0, %v811
      %813 = vmatprep.mubr.f32.mxu0 0.0
      %814 = vmatmul.mubr.f32.gmra.mrb[0].mxu0 %v366
      %v815 = vpop.f32.mrb[0].mxu0
      %v816 = vadd.f32 0.0, %v815
      %v817 = vpop.f32.mrb[0].mxu0
      %v818 = vadd.f32 0.0, %v817
      %819 = vmatprep.mubr.f32.mxu0 0.0
      %820 = vmatmul.mubr.f32.gmra.mrb[0].mxu0 %v369
      %v821 = vpop.f32.mrb[0].mxu0
      %v822 = vadd.f32 0.0, %v821
      %v823 = vpop.f32.mrb[0].mxu0
      %v824 = vadd.f32 0.0, %v823
      %825 = vmatprep.mubr.f32.mxu0 0.0
      %826 = vmatmul.mubr.f32.gmra.mrb[0].mxu0 %v372
      %v827 = vpop.f32.mrb[0].mxu0
      %v828 = vadd.f32 0.0, %v827
      %v829 = vpop.f32.mrb[0].mxu0
      %v830 = vadd.f32 0.0, %v829
      %831 = vmatprep.mubr.f32.mxu0 0.0
      %832 = vmatmul.mubr.f32.gmra.mrb[0].mxu0 %v375
      %v833 = vpop.f32.mrb[0].mxu0
      %v834 = vadd.f32 0.0, %v833
      %v835 = vpop.f32.mrb[0].mxu0
      %v836 = vadd.f32 0.0, %v835
      %837 = vmatprep.mubr.f32.mxu0 0.0
      %838 = vmatmul.mubr.f32.gmra.mrb[0].mxu0 %v378
      %v839 = vpop.f32.mrb[0].mxu0
      %v840 = vadd.f32 0.0, %v839
      %v841 = vpop.f32.mrb[0].mxu0
      %v842 = vadd.f32 0.0, %v841
      %843 = vmatprep.mubr.f32.mxu0 0.0
      %844 = vmatmul.mubr.f32.gmra.mrb[0].mxu0 %v381
      %v845 = vpop.f32.mrb[0].mxu0
      %v846 = vadd.f32 0.0, %v845
      %v847 = vpop.f32.mrb[0].mxu0
      %v848 = vadd.f32 0.0, %v847
      %849 = vmatprep.mubr.f32.mxu0 0.0
      %850 = vmatmul.mubr.f32.gmra.mrb[0].mxu0 %v384
      %v851 = vpop.f32.mrb[0].mxu0
      %v852 = vadd.f32 0.0, %v851
      %v853 = vpop.f32.mrb[0].mxu0
      %v854 = vadd.f32 0.0, %v853
      %855 = vmatprep.mubr.f32.mxu0 0.0
      %856 = vmatmul.mubr.f32.gmra.mrb[0].mxu0 %v387
      %v857 = vpop.f32.mrb[0].mxu0
      %v858 = vadd.f32 0.0, %v857
      %v859 = vpop.f32.mrb[0].mxu0
      %v860 = vadd.f32 0.0, %v859
      %861 = vmatprep.mubr.f32.mxu0 0.0
      %862 = vmatmul.mubr.f32.gmra.mrb[0].mxu0 %v390
      %v863 = vpop.f32.mrb[0].mxu0
      %v864 = vadd.f32 0.0, %v863
      %v865 = vpop.f32.mrb[0].mxu0
      %v866 = vadd.f32 0.0, %v865
      %867 = vmatprep.mubr.f32.mxu0 0.0
      %868 = vmatmul.mubr.f32.gmra.mrb[0].mxu0 %v393
      %v869 = vpop.f32.mrb[0].mxu0
      %v870 = vadd.f32 0.0, %v869
      %v871 = vpop.f32.mrb[0].mxu0
      %v872 = vadd.f32 0.0, %v871
      %873 = vmatprep.mubr.f32.mxu0 0.0
      %874 = vmatmul.mubr.f32.gmra.mrb[0].mxu0 %v396
      %v875 = vpop.f32.mrb[0].mxu0
      %v876 = vadd.f32 0.0, %v875
      %v877 = vpop.f32.mrb[0].mxu0
      %v878 = vadd.f32 0.0, %v877
      %879 = vmatprep.mubr.f32.mxu0 0.0
      %880 = vmatmul.mubr.f32.gmra.mrb[0].mxu0 %v399
      %v881 = vpop.f32.mrb[0].mxu0
      %v882 = vadd.f32 0.0, %v881
      %v883 = vpop.f32.mrb[0].mxu0
      %v884 = vadd.f32 0.0, %v883
      %885 = vmatprep.mubr.f32.mxu0 0.0
      %886 = vmatmul.mubr.f32.gmra.mrb[0].mxu0 %v402
      %v887 = vpop.f32.mrb[0].mxu0
      %v888 = vadd.f32 0.0, %v887
      %v889 = vpop.f32.mrb[0].mxu0
      %v890 = vadd.f32 0.0, %v889
      %891 = vmatprep.mubr.f32.mxu0 0.0
      %892 = vmatmul.mubr.f32.gmra.mrb[0].mxu0 %v405
      %v893 = vpop.f32.mrb[0].mxu0
      %v894 = vadd.f32 0.0, %v893
      %v895 = vpop.f32.mrb[0].mxu0
      %v896 = vadd.f32 0.0, %v895
      %897 = vmatprep.mubr.f32.mxu0 0.0
      %898 = vmatmul.mubr.f32.gmra.mrb[0].mxu0 %v408
      %v899 = vpop.f32.mrb[0].mxu0
      %v900 = vadd.f32 0.0, %v899
      %v901 = vpop.f32.mrb[0].mxu0
      %v902 = vadd.f32 0.0, %v901
      %903 = vmatprep.mubr.f32.mxu0 0.0
      %904 = vmatmul.mubr.f32.gmra.mrb[0].mxu0 %v411
      %v905 = vpop.f32.mrb[0].mxu0
      %v906 = vadd.f32 0.0, %v905
      %v907 = vpop.f32.mrb[0].mxu0
      %v908 = vadd.f32 0.0, %v907
      %909 = vmatprep.mubr.f32.mxu0 0.0
      %910 = vmatmul.mubr.f32.gmra.mrb[0].mxu0 %v414
      %v911 = vpop.f32.mrb[0].mxu0
      %v912 = vadd.f32 0.0, %v911
      %v913 = vpop.f32.mrb[0].mxu0
      %v914 = vadd.f32 0.0, %v913
      %915 = vdwg.mxu0
      %916 = vmatprep.subr.mxu0 %v284
      %917 = vmatpush1.msra.mxu0 %v283
      %918 = vmatprep.subr.mxu0 %v291
      %919 = vmatpush1.msra.mxu0 %v290
      %920 = vmatprep.subr.mxu0 %v298
      %921 = vmatpush1.msra.mxu0 %v297
      %922 = vmatprep.subr.mxu0 %v305
      %923 = vmatpush1.msra.mxu0 %v304
      %924 = vmatprep.subr.mxu0 %v312
      %925 = vmatpush1.msra.mxu0 %v311
      %926 = vmatprep.subr.mxu0 %v319
      %927 = vmatpush1.msra.mxu0 %v318
      %928 = vmatprep.subr.mxu0 %v433
      %929 = vmatpush1.msra.mxu0 %v430
      %930 = vmatprep.subr.mxu0 0.0
      %931 = vmatpush1.msra.mxu0 0.0
      %932 = vmatprep.subr.mxu0 0.0
      %933 = vmatpush1.msra.mxu0 0.0
      %934 = vmatprep.subr.mxu0 0.0
      %935 = vmatpush1.msra.mxu0 0.0
      %936 = vmatprep.subr.mxu0 0.0
      %937 = vmatpush1.msra.mxu0 0.0
      %938 = vmatprep.subr.mxu0 0.0
      %939 = vmatpush1.msra.mxu0 0.0
      %940 = vmatprep.subr.mxu0 0.0
      %941 = vmatpush1.msra.mxu0 0.0
      %942 = vmatprep.subr.mxu0 0.0
      %943 = vmatpush1.msra.mxu0 0.0
      %944 = vmatprep.subr.mxu0 0.0
      %945 = vmatpush1.msra.mxu0 0.0
      %946 = vmatprep.subr.mxu0 0.0
      %947 = vmatpush1.msra.mxu0 0.0
      %948 = vmatprep.subr.mxu0 0.0
      %949 = vmatpush1.msra.mxu0 0.0
      %950 = vmatprep.subr.mxu0 0.0
      %951 = vmatpush1.msra.mxu0 0.0
      %952 = vmatprep.subr.mxu0 0.0
      %953 = vmatpush1.msra.mxu0 0.0
      %954 = vmatprep.subr.mxu0 0.0
      %955 = vmatpush1.msra.mxu0 0.0
      %956 = vmatprep.subr.mxu0 0.0
      %957 = vmatpush1.msra.mxu0 0.0
      %958 = vmatprep.subr.mxu0 0.0
      %959 = vmatpush1.msra.mxu0 0.0
      %960 = vmatprep.subr.mxu0 0.0
      %961 = vmatpush1.msra.mxu0 0.0
      %962 = vmatprep.subr.mxu0 0.0
      %963 = vmatpush1.msra.mxu0 0.0
      %964 = vmatprep.subr.mxu0 0.0
      %965 = vmatpush1.msra.mxu0 0.0
      %966 = vmatprep.subr.mxu0 0.0
      %967 = vmatpush1.msra.mxu0 0.0
      %968 = vmatprep.subr.mxu0 0.0
      %969 = vmatpush1.msra.mxu0 0.0
      %970 = vmatprep.subr.mxu0 0.0
      %971 = vmatpush1.msra.mxu0 0.0
      %972 = vmatprep.subr.mxu0 0.0
      %973 = vmatpush1.msra.mxu0 0.0
      %974 = vmatprep.subr.mxu0 0.0
      %975 = vmatpush1.msra.mxu0 0.0
      %976 = vmatprep.subr.mxu0 0.0
      %977 = vmatpush1.msra.mxu0 0.0
      %978 = vmatprep.subr.mxu0 0.0
      %979 = vmatpush1.msra.mxu0 0.0
      %980 = vmatprep.mubr.f32.mxu0 0.0
      %981 = vmatmul.mubr.f32.gmra.mrb[0].mxu0 %v330
      %v982 = vpop.f32.mrb[0].mxu0
      %v983 = vadd.f32 0.0, %v982
      %v984 = vpop.f32.mrb[0].mxu0
      %v985 = vadd.f32 0.0, %v984
      %986 = vmatprep.mubr.f32.mxu0 0.0
      %987 = vmatmul.mubr.f32.gmra.mrb[0].mxu0 %v333
      %v988 = vpop.f32.mrb[0].mxu0
      %v989 = vadd.f32 0.0, %v988
      %v990 = vpop.f32.mrb[0].mxu0
      %v991 = vadd.f32 0.0, %v990
      %992 = vmatprep.mubr.f32.mxu0 0.0
      %993 = vmatmul.mubr.f32.gmra.mrb[0].mxu0 %v336
      %v994 = vpop.f32.mrb[0].mxu0
      %v995 = vadd.f32 0.0, %v994
      %v996 = vpop.f32.mrb[0].mxu0
      %v997 = vadd.f32 0.0, %v996
      %998 = vmatprep.mubr.f32.mxu0 0.0
      %999 = vmatmul.mubr.f32.gmra.mrb[0].mxu0 %v339
      %v1000 = vpop.f32.mrb[0].mxu0
      %v1001 = vadd.f32 0.0, %v1000
      %v1002 = vpop.f32.mrb[0].mxu0
      %v1003 = vadd.f32 0.0, %v1002
      %1004 = vmatprep.mubr.f32.mxu0 0.0
      %1005 = vmatmul.mubr.f32.gmra.mrb[0].mxu0 %v342
      %v1006 = vpop.f32.mrb[0].mxu0
      %v1007 = vadd.f32 0.0, %v1006
      %v1008 = vpop.f32.mrb[0].mxu0
      %v1009 = vadd.f32 0.0, %v1008
      %1010 = vmatprep.mubr.f32.mxu0 0.0
      %1011 = vmatmul.mubr.f32.gmra.mrb[0].mxu0 %v345
      %v1012 = vpop.f32.mrb[0].mxu0
      %v1013 = vadd.f32 0.0, %v1012
      %v1014 = vpop.f32.mrb[0].mxu0
      %v1015 = vadd.f32 0.0, %v1014
      %1016 = vmatprep.mubr.f32.mxu0 0.0
      %1017 = vmatmul.mubr.f32.gmra.mrb[0].mxu0 %v348
      %v1018 = vpop.f32.mrb[0].mxu0
      %v1019 = vadd.f32 0.0, %v1018
      %v1020 = vpop.f32.mrb[0].mxu0
      %v1021 = vadd.f32 0.0, %v1020
      %1022 = vmatprep.mubr.f32.mxu0 0.0
      %1023 = vmatmul.mubr.f32.gmra.mrb[0].mxu0 %v351
      %v1024 = vpop.f32.mrb[0].mxu0
      %v1025 = vadd.f32 0.0, %v1024
      %v1026 = vpop.f32.mrb[0].mxu0
      %v1027 = vadd.f32 0.0, %v1026
      %1028 = vmatprep.mubr.f32.mxu0 0.0
      %1029 = vmatmul.mubr.f32.gmra.mrb[0].mxu0 %v354
      %v1030 = vpop.f32.mrb[0].mxu0
      %v1031 = vadd.f32 0.0, %v1030
      %v1032 = vpop.f32.mrb[0].mxu0
      %v1033 = vadd.f32 0.0, %v1032
      %1034 = vmatprep.mubr.f32.mxu0 0.0
      %1035 = vmatmul.mubr.f32.gmra.mrb[0].mxu0 %v357
      %v1036 = vpop.f32.mrb[0].mxu0
      %v1037 = vadd.f32 0.0, %v1036
      %v1038 = vpop.f32.mrb[0].mxu0
      %v1039 = vadd.f32 0.0, %v1038
      %1040 = vmatprep.mubr.f32.mxu0 0.0
      %1041 = vmatmul.mubr.f32.gmra.mrb[0].mxu0 %v360
      %v1042 = vpop.f32.mrb[0].mxu0
      %v1043 = vadd.f32 0.0, %v1042
      %v1044 = vpop.f32.mrb[0].mxu0
      %v1045 = vadd.f32 0.0, %v1044
      %1046 = vmatprep.mubr.f32.mxu0 0.0
      %1047 = vmatmul.mubr.f32.gmra.mrb[0].mxu0 %v363
      %v1048 = vpop.f32.mrb[0].mxu0
      %v1049 = vadd.f32 0.0, %v1048
      %v1050 = vpop.f32.mrb[0].mxu0
      %v1051 = vadd.f32 0.0, %v1050
      %1052 = vmatprep.mubr.f32.mxu0 0.0
      %1053 = vmatmul.mubr.f32.gmra.mrb[0].mxu0 %v366
      %v1054 = vpop.f32.mrb[0].mxu0
      %v1055 = vadd.f32 0.0, %v1054
      %v1056 = vpop.f32.mrb[0].mxu0
      %v1057 = vadd.f32 0.0, %v1056
      %1058 = vmatprep.mubr.f32.mxu0 0.0
      %1059 = vmatmul.mubr.f32.gmra.mrb[0].mxu0 %v369
      %v1060 = vpop.f32.mrb[0].mxu0
      %v1061 = vadd.f32 0.0, %v1060
      %v1062 = vpop.f32.mrb[0].mxu0
      %v1063 = vadd.f32 0.0, %v1062
      %1064 = vmatprep.mubr.f32.mxu0 0.0
      %1065 = vmatmul.mubr.f32.gmra.mrb[0].mxu0 %v372
      %v1066 = vpop.f32.mrb[0].mxu0
      %v1067 = vadd.f32 0.0, %v1066
      %v1068 = vpop.f32.mrb[0].mxu0
      %v1069 = vadd.f32 0.0, %v1068
      %1070 = vmatprep.mubr.f32.mxu0 0.0
      %1071 = vmatmul.mubr.f32.gmra.mrb[0].mxu0 %v375
      %v1072 = vpop.f32.mrb[0].mxu0
      %v1073 = vadd.f32 0.0, %v1072
      %v1074 = vpop.f32.mrb[0].mxu0
      %v1075 = vadd.f32 0.0, %v1074
      %1076 = vmatprep.mubr.f32.mxu0 0.0
      %1077 = vmatmul.mubr.f32.gmra.mrb[0].mxu0 %v378
      %v1078 = vpop.f32.mrb[0].mxu0
      %v1079 = vadd.f32 0.0, %v1078
      %v1080 = vpop.f32.mrb[0].mxu0
      %v1081 = vadd.f32 0.0, %v1080
      %1082 = vmatprep.mubr.f32.mxu0 0.0
      %1083 = vmatmul.mubr.f32.gmra.mrb[0].mxu0 %v381
      %v1084 = vpop.f32.mrb[0].mxu0
      %v1085 = vadd.f32 0.0, %v1084
      %v1086 = vpop.f32.mrb[0].mxu0
      %v1087 = vadd.f32 0.0, %v1086
      %1088 = vmatprep.mubr.f32.mxu0 0.0
      %1089 = vmatmul.mubr.f32.gmra.mrb[0].mxu0 %v384
      %v1090 = vpop.f32.mrb[0].mxu0
      %v1091 = vadd.f32 0.0, %v1090
      %v1092 = vpop.f32.mrb[0].mxu0
      %v1093 = vadd.f32 0.0, %v1092
      %1094 = vmatprep.mubr.f32.mxu0 0.0
      %1095 = vmatmul.mubr.f32.gmra.mrb[0].mxu0 %v387
      %v1096 = vpop.f32.mrb[0].mxu0
      %v1097 = vadd.f32 0.0, %v1096
      %v1098 = vpop.f32.mrb[0].mxu0
      %v1099 = vadd.f32 0.0, %v1098
      %1100 = vmatprep.mubr.f32.mxu0 0.0
      %1101 = vmatmul.mubr.f32.gmra.mrb[0].mxu0 %v390
      %v1102 = vpop.f32.mrb[0].mxu0
      %v1103 = vadd.f32 0.0, %v1102
      %v1104 = vpop.f32.mrb[0].mxu0
      %v1105 = vadd.f32 0.0, %v1104
      %1106 = vmatprep.mubr.f32.mxu0 0.0
      %1107 = vmatmul.mubr.f32.gmra.mrb[0].mxu0 %v393
      %v1108 = vpop.f32.mrb[0].mxu0
      %v1109 = vadd.f32 0.0, %v1108
      %v1110 = vpop.f32.mrb[0].mxu0
      %v1111 = vadd.f32 0.0, %v1110
      %1112 = vmatprep.mubr.f32.mxu0 0.0
      %1113 = vmatmul.mubr.f32.gmra.mrb[0].mxu0 %v396
      %v1114 = vpop.f32.mrb[0].mxu0
      %v1115 = vadd.f32 0.0, %v1114
      %v1116 = vpop.f32.mrb[0].mxu0
      %v1117 = vadd.f32 0.0, %v1116
      %1118 = vmatprep.mubr.f32.mxu0 0.0
      %1119 = vmatmul.mubr.f32.gmra.mrb[0].mxu0 %v399
      %v1120 = vpop.f32.mrb[0].mxu0
      %v1121 = vadd.f32 0.0, %v1120
      %v1122 = vpop.f32.mrb[0].mxu0
      %v1123 = vadd.f32 0.0, %v1122
      %1124 = vmatprep.mubr.f32.mxu0 0.0
      %1125 = vmatmul.mubr.f32.gmra.mrb[0].mxu0 %v402
      %v1126 = vpop.f32.mrb[0].mxu0
      %v1127 = vadd.f32 0.0, %v1126
      %v1128 = vpop.f32.mrb[0].mxu0
      %v1129 = vadd.f32 0.0, %v1128
      %1130 = vmatprep.mubr.f32.mxu0 0.0
      %1131 = vmatmul.mubr.f32.gmra.mrb[0].mxu0 %v405
      %v1132 = vpop.f32.mrb[0].mxu0
      %v1133 = vadd.f32 0.0, %v1132
      %v1134 = vpop.f32.mrb[0].mxu0
      %v1135 = vadd.f32 0.0, %v1134
      %1136 = vmatprep.mubr.f32.mxu0 0.0
      %1137 = vmatmul.mubr.f32.gmra.mrb[0].mxu0 %v408
      %v1138 = vpop.f32.mrb[0].mxu0
      %v1139 = vadd.f32 0.0, %v1138
      %v1140 = vpop.f32.mrb[0].mxu0
      %v1141 = vadd.f32 0.0, %v1140
      %1142 = vmatprep.mubr.f32.mxu0 0.0
      %1143 = vmatmul.mubr.f32.gmra.mrb[0].mxu0 %v411
      %v1144 = vpop.f32.mrb[0].mxu0
      %v1145 = vadd.f32 0.0, %v1144
      %v1146 = vpop.f32.mrb[0].mxu0
      %v1147 = vadd.f32 0.0, %v1146
      %1148 = vmatprep.mubr.f32.mxu0 0.0
      %1149 = vmatmul.mubr.f32.gmra.mrb[0].mxu0 %v414
      %v1150 = vpop.f32.mrb[0].mxu0
      %v1151 = vadd.f32 0.0, %v1150
      %v1152 = vpop.f32.mrb[0].mxu0
      %v1153 = vadd.f32 0.0, %v1152
      %1154 = vdwg.mxu0
      %1155 = vmatprep.subr.mxu0 0.0
      %1156 = vmatpush1.msra.mxu0 %v285
      %1157 = vmatprep.subr.mxu0 0.0
      %1158 = vmatpush1.msra.mxu0 %v292
      %1159 = vmatprep.subr.mxu0 0.0
      %1160 = vmatpush1.msra.mxu0 %v299
      %1161 = vmatprep.subr.mxu0 0.0
      %1162 = vmatpush1.msra.mxu0 %v306
      %1163 = vmatprep.subr.mxu0 0.0
      %1164 = vmatpush1.msra.mxu0 %v313
      %1165 = vmatprep.subr.mxu0 0.0
      %1166 = vmatpush1.msra.mxu0 %v320
      %1167 = vmatprep.subr.mxu0 0.0
      %1168 = vmatpush1.msra.mxu0 %v436
      %1169 = vmatprep.subr.mxu0 0.0
      %1170 = vmatpush1.msra.mxu0 0.0
      %1171 = vmatprep.subr.mxu0 0.0
      %1172 = vmatpush1.msra.mxu0 0.0
      %1173 = vmatprep.subr.mxu0 0.0
      %1174 = vmatpush1.msra.mxu0 0.0
      %1175 = vmatprep.subr.mxu0 0.0
      %1176 = vmatpush1.msra.mxu0 0.0
      %1177 = vmatprep.subr.mxu0 0.0
      %1178 = vmatpush1.msra.mxu0 0.0
      %1179 = vmatprep.subr.mxu0 0.0
      %1180 = vmatpush1.msra.mxu0 0.0
      %1181 = vmatprep.subr.mxu0 0.0
      %1182 = vmatpush1.msra.mxu0 0.0
      %1183 = vmatprep.subr.mxu0 0.0
      %1184 = vmatpush1.msra.mxu0 0.0
      %1185 = vmatprep.subr.mxu0 0.0
      %1186 = vmatpush1.msra.mxu0 0.0
      %1187 = vmatprep.subr.mxu0 0.0
      %1188 = vmatpush1.msra.mxu0 0.0
      %1189 = vmatprep.subr.mxu0 0.0
      %1190 = vmatpush1.msra.mxu0 0.0
      %1191 = vmatprep.subr.mxu0 0.0
      %1192 = vmatpush1.msra.mxu0 0.0
      %1193 = vmatprep.subr.mxu0 0.0
      %1194 = vmatpush1.msra.mxu0 0.0
      %1195 = vmatprep.subr.mxu0 0.0
      %1196 = vmatpush1.msra.mxu0 0.0
      %1197 = vmatprep.subr.mxu0 0.0
      %1198 = vmatpush1.msra.mxu0 0.0
      %1199 = vmatprep.subr.mxu0 0.0
      %1200 = vmatpush1.msra.mxu0 0.0
      %1201 = vmatprep.subr.mxu0 0.0
      %1202 = vmatpush1.msra.mxu0 0.0
      %1203 = vmatprep.subr.mxu0 0.0
      %1204 = vmatpush1.msra.mxu0 0.0
      %1205 = vmatprep.subr.mxu0 0.0
      %1206 = vmatpush1.msra.mxu0 0.0
      %1207 = vmatprep.subr.mxu0 0.0
      %1208 = vmatpush1.msra.mxu0 0.0
      %1209 = vmatprep.subr.mxu0 0.0
      %1210 = vmatpush1.msra.mxu0 0.0
      %1211 = vmatprep.subr.mxu0 0.0
      %1212 = vmatpush1.msra.mxu0 0.0
      %1213 = vmatprep.subr.mxu0 0.0
      %1214 = vmatpush1.msra.mxu0 0.0
      %1215 = vmatprep.subr.mxu0 0.0
      %1216 = vmatpush1.msra.mxu0 0.0
      %1217 = vmatprep.subr.mxu0 0.0
      %1218 = vmatpush1.msra.mxu0 0.0
      %1219 = vmatprep.mubr.f32.mxu0 0.0
      %1220 = vmatmul.mubr.f32.gmra.mrb[0].mxu0 %v330
      %v1221 = vpop.f32.mrb[0].mxu0
      %v1222 = vadd.f32 0.0, %v1221
      %v1223 = vpop.f32.mrb[0].mxu0
      %1224 = vmatprep.mubr.f32.mxu0 0.0
      %1225 = vmatmul.mubr.f32.gmra.mrb[0].mxu0 %v333
      %v1226 = vpop.f32.mrb[0].mxu0
      %v1227 = vadd.f32 0.0, %v1226
      %v1228 = vpop.f32.mrb[0].mxu0
      %1229 = vmatprep.mubr.f32.mxu0 0.0
      %1230 = vmatmul.mubr.f32.gmra.mrb[0].mxu0 %v336
      %v1231 = vpop.f32.mrb[0].mxu0
      %v1232 = vadd.f32 0.0, %v1231
      %v1233 = vpop.f32.mrb[0].mxu0
      %1234 = vmatprep.mubr.f32.mxu0 0.0
      %1235 = vmatmul.mubr.f32.gmra.mrb[0].mxu0 %v339
      %v1236 = vpop.f32.mrb[0].mxu0
      %v1237 = vadd.f32 0.0, %v1236
      %v1238 = vpop.f32.mrb[0].mxu0
      %1239 = vmatprep.mubr.f32.mxu0 0.0
      %1240 = vmatmul.mubr.f32.gmra.mrb[0].mxu0 %v342
      %v1241 = vpop.f32.mrb[0].mxu0
      %v1242 = vadd.f32 0.0, %v1241
      %v1243 = vpop.f32.mrb[0].mxu0
      %1244 = vmatprep.mubr.f32.mxu0 0.0
      %1245 = vmatmul.mubr.f32.gmra.mrb[0].mxu0 %v345
      %v1246 = vpop.f32.mrb[0].mxu0
      %v1247 = vadd.f32 0.0, %v1246
      %v1248 = vpop.f32.mrb[0].mxu0
      %1249 = vmatprep.mubr.f32.mxu0 0.0
      %1250 = vmatmul.mubr.f32.gmra.mrb[0].mxu0 %v348
      %v1251 = vpop.f32.mrb[0].mxu0
      %v1252 = vadd.f32 0.0, %v1251
      %v1253 = vpop.f32.mrb[0].mxu0
      %1254 = vmatprep.mubr.f32.mxu0 0.0
      %1255 = vmatmul.mubr.f32.gmra.mrb[0].mxu0 %v351
      %v1256 = vpop.f32.mrb[0].mxu0
      %v1257 = vadd.f32 0.0, %v1256
      %v1258 = vpop.f32.mrb[0].mxu0
      %1259 = vmatprep.mubr.f32.mxu0 0.0
      %1260 = vmatmul.mubr.f32.gmra.mrb[0].mxu0 %v354
      %v1261 = vpop.f32.mrb[0].mxu0
      %v1262 = vadd.f32 0.0, %v1261
      %v1263 = vpop.f32.mrb[0].mxu0
      %1264 = vmatprep.mubr.f32.mxu0 0.0
      %1265 = vmatmul.mubr.f32.gmra.mrb[0].mxu0 %v357
      %v1266 = vpop.f32.mrb[0].mxu0
      %v1267 = vadd.f32 0.0, %v1266
      %v1268 = vpop.f32.mrb[0].mxu0
      %1269 = vmatprep.mubr.f32.mxu0 0.0
      %1270 = vmatmul.mubr.f32.gmra.mrb[0].mxu0 %v360
      %v1271 = vpop.f32.mrb[0].mxu0
      %v1272 = vadd.f32 0.0, %v1271
      %v1273 = vpop.f32.mrb[0].mxu0
      %1274 = vmatprep.mubr.f32.mxu0 0.0
      %1275 = vmatmul.mubr.f32.gmra.mrb[0].mxu0 %v363
      %v1276 = vpop.f32.mrb[0].mxu0
      %v1277 = vadd.f32 0.0, %v1276
      %v1278 = vpop.f32.mrb[0].mxu0
      %1279 = vmatprep.mubr.f32.mxu0 0.0
      %1280 = vmatmul.mubr.f32.gmra.mrb[0].mxu0 %v366
      %v1281 = vpop.f32.mrb[0].mxu0
      %v1282 = vadd.f32 0.0, %v1281
      %v1283 = vpop.f32.mrb[0].mxu0
      %1284 = vmatprep.mubr.f32.mxu0 0.0
      %1285 = vmatmul.mubr.f32.gmra.mrb[0].mxu0 %v369
      %v1286 = vpop.f32.mrb[0].mxu0
      %v1287 = vadd.f32 0.0, %v1286
      %v1288 = vpop.f32.mrb[0].mxu0
      %1289 = vmatprep.mubr.f32.mxu0 0.0
      %1290 = vmatmul.mubr.f32.gmra.mrb[0].mxu0 %v372
      %v1291 = vpop.f32.mrb[0].mxu0
      %v1292 = vadd.f32 0.0, %v1291
      %v1293 = vpop.f32.mrb[0].mxu0
      %1294 = vmatprep.mubr.f32.mxu0 0.0
      %1295 = vmatmul.mubr.f32.gmra.mrb[0].mxu0 %v375
      %v1296 = vpop.f32.mrb[0].mxu0
      %v1297 = vadd.f32 0.0, %v1296
      %v1298 = vpop.f32.mrb[0].mxu0
      %1299 = vmatprep.mubr.f32.mxu0 0.0
      %1300 = vmatmul.mubr.f32.gmra.mrb[0].mxu0 %v378
      %v1301 = vpop.f32.mrb[0].mxu0
      %v1302 = vadd.f32 0.0, %v1301
      %v1303 = vpop.f32.mrb[0].mxu0
      %1304 = vmatprep.mubr.f32.mxu0 0.0
      %1305 = vmatmul.mubr.f32.gmra.mrb[0].mxu0 %v381
      %v1306 = vpop.f32.mrb[0].mxu0
      %v1307 = vadd.f32 0.0, %v1306
      %v1308 = vpop.f32.mrb[0].mxu0
      %1309 = vmatprep.mubr.f32.mxu0 0.0
      %1310 = vmatmul.mubr.f32.gmra.mrb[0].mxu0 %v384
      %v1311 = vpop.f32.mrb[0].mxu0
      %v1312 = vadd.f32 0.0, %v1311
      %v1313 = vpop.f32.mrb[0].mxu0
      %1314 = vmatprep.mubr.f32.mxu0 0.0
      %1315 = vmatmul.mubr.f32.gmra.mrb[0].mxu0 %v387
      %v1316 = vpop.f32.mrb[0].mxu0
      %v1317 = vadd.f32 0.0, %v1316
      %v1318 = vpop.f32.mrb[0].mxu0
      %1319 = vmatprep.mubr.f32.mxu0 0.0
      %1320 = vmatmul.mubr.f32.gmra.mrb[0].mxu0 %v390
      %v1321 = vpop.f32.mrb[0].mxu0
      %v1322 = vadd.f32 0.0, %v1321
      %v1323 = vpop.f32.mrb[0].mxu0
      %1324 = vmatprep.mubr.f32.mxu0 0.0
      %1325 = vmatmul.mubr.f32.gmra.mrb[0].mxu0 %v393
      %v1326 = vpop.f32.mrb[0].mxu0
      %v1327 = vadd.f32 0.0, %v1326
      %v1328 = vpop.f32.mrb[0].mxu0
      %1329 = vmatprep.mubr.f32.mxu0 0.0
      %1330 = vmatmul.mubr.f32.gmra.mrb[0].mxu0 %v396
      %v1331 = vpop.f32.mrb[0].mxu0
      %v1332 = vadd.f32 0.0, %v1331
      %v1333 = vpop.f32.mrb[0].mxu0
      %1334 = vmatprep.mubr.f32.mxu0 0.0
      %1335 = vmatmul.mubr.f32.gmra.mrb[0].mxu0 %v399
      %v1336 = vpop.f32.mrb[0].mxu0
      %v1337 = vadd.f32 0.0, %v1336
      %v1338 = vpop.f32.mrb[0].mxu0
      %1339 = vmatprep.mubr.f32.mxu0 0.0
      %1340 = vmatmul.mubr.f32.gmra.mrb[0].mxu0 %v402
      %v1341 = vpop.f32.mrb[0].mxu0
      %v1342 = vadd.f32 0.0, %v1341
      %v1343 = vpop.f32.mrb[0].mxu0
      %1344 = vmatprep.mubr.f32.mxu0 0.0
      %1345 = vmatmul.mubr.f32.gmra.mrb[0].mxu0 %v405
      %v1346 = vpop.f32.mrb[0].mxu0
      %v1347 = vadd.f32 0.0, %v1346
      %v1348 = vpop.f32.mrb[0].mxu0
      %1349 = vmatprep.mubr.f32.mxu0 0.0
      %1350 = vmatmul.mubr.f32.gmra.mrb[0].mxu0 %v408
      %v1351 = vpop.f32.mrb[0].mxu0
      %v1352 = vadd.f32 0.0, %v1351
      %v1353 = vpop.f32.mrb[0].mxu0
      %1354 = vmatprep.mubr.f32.mxu0 0.0
      %1355 = vmatmul.mubr.f32.gmra.mrb[0].mxu0 %v411
      %v1356 = vpop.f32.mrb[0].mxu0
      %v1357 = vadd.f32 0.0, %v1356
      %v1358 = vpop.f32.mrb[0].mxu0
      %1359 = vmatprep.mubr.f32.mxu0 0.0
      %1360 = vmatmul.mubr.f32.gmra.mrb[0].mxu0 %v414
      %v1361 = vpop.f32.mrb[0].mxu0
      %v1362 = vadd.f32 0.0, %v1361
      %v1363 = vpop.f32.mrb[0].mxu0
      %1364 = vdwg.mxu0
      %v1366 = vsel %vm328, %v171, 0
      %v1369 = vsel %vm328, %v172, 0
      %v1372 = vsel %vm328, %v173, 0
      %v1375 = vsel %vm328, %v174, 0
      %v1378 = vsel %vm328, %v175, 0
      %v1381 = vsel %vm328, %v176, 0
      %v1384 = vsel %vm328, %v177, 0
      %v1387 = vsel %vm328, %v178, 0
      %v1390 = vsel %vm328, %v179, 0
      %v1393 = vsel %vm328, %v180, 0
      %v1396 = vsel %vm328, %v181, 0
      %v1399 = vsel %vm328, %v182, 0
      %v1402 = vsel %vm328, %v183, 0
      %v1405 = vsel %vm328, %v184, 0
      %v1408 = vsel %vm328, %v185, 0
      %v1411 = vsel %vm328, %v186, 0
      %v1414 = vsel %vm328, %v187, 0
      %v1417 = vsel %vm328, %v188, 0
      %v1420 = vsel %vm328, %v189, 0
      %v1423 = vsel %vm328, %v190, 0
      %v1426 = vsel %vm328, %v191, 0
      %v1429 = vsel %vm328, %v192, 0
      %v1432 = vsel %vm328, %v193, 0
      %v1435 = vsel %vm328, %v194, 0
      %v1438 = vsel %vm328, %v195, 0
      %v1441 = vsel %vm328, %v196, 0
      %v1444 = vsel %vm328, %v197, 0
      %v1447 = vsel %vm328, %v198, 0
      %v1450 = vsel %vm328, %v199, 0
      %v1453 = vsel %vm416, %v242, 0
      %v1456 = vsel %vm416, %v243, 0
      %v1459 = vsel %vm416, %v244, 0
      %v1462 = vsel %vm416, %v245, 0
      %v1465 = vsel %vm416, %v246, 0
      %v1468 = vsel %vm416, %v247, 0
      %v1471 = vsel %vm416, %v248, 0
      %1473 = vmatprep.subr.mxu0 %v201
      %1474 = vmatpush1.msra.mxu0 %v200
      %1475 = vmatprep.subr.mxu0 %v208
      %1476 = vmatpush1.msra.mxu0 %v207
      %1477 = vmatprep.subr.mxu0 %v215
      %1478 = vmatpush1.msra.mxu0 %v214
      %1479 = vmatprep.subr.mxu0 %v222
      %1480 = vmatpush1.msra.mxu0 %v221
      %1481 = vmatprep.subr.mxu0 %v229
      %1482 = vmatpush1.msra.mxu0 %v228
      %1483 = vmatprep.subr.mxu0 %v236
      %1484 = vmatpush1.msra.mxu0 %v235
      %1485 = vmatprep.subr.mxu0 %v1456
      %1486 = vmatpush1.msra.mxu0 %v1453
      %1487 = vmatprep.subr.mxu0 0.0
      %1488 = vmatpush1.msra.mxu0 0.0
      %1489 = vmatprep.subr.mxu0 0.0
      %1490 = vmatpush1.msra.mxu0 0.0
      %1491 = vmatprep.subr.mxu0 0.0
      %1492 = vmatpush1.msra.mxu0 0.0
      %1493 = vmatprep.subr.mxu0 0.0
      %1494 = vmatpush1.msra.mxu0 0.0
      %1495 = vmatprep.subr.mxu0 0.0
      %1496 = vmatpush1.msra.mxu0 0.0
      %1497 = vmatprep.subr.mxu0 0.0
      %1498 = vmatpush1.msra.mxu0 0.0
      %1499 = vmatprep.subr.mxu0 0.0
      %1500 = vmatpush1.msra.mxu0 0.0
      %1501 = vmatprep.subr.mxu0 0.0
      %1502 = vmatpush1.msra.mxu0 0.0
      %1503 = vmatprep.subr.mxu0 0.0
      %1504 = vmatpush1.msra.mxu0 0.0
      %1505 = vmatprep.subr.mxu0 0.0
      %1506 = vmatpush1.msra.mxu0 0.0
      %1507 = vmatprep.subr.mxu0 0.0
      %1508 = vmatpush1.msra.mxu0 0.0
      %1509 = vmatprep.subr.mxu0 0.0
      %1510 = vmatpush1.msra.mxu0 0.0
      %1511 = vmatprep.subr.mxu0 0.0
      %1512 = vmatpush1.msra.mxu0 0.0
      %1513 = vmatprep.subr.mxu0 0.0
      %1514 = vmatpush1.msra.mxu0 0.0
      %1515 = vmatprep.subr.mxu0 0.0
      %1516 = vmatpush1.msra.mxu0 0.0
      %1517 = vmatprep.subr.mxu0 0.0
      %1518 = vmatpush1.msra.mxu0 0.0
      %1519 = vmatprep.subr.mxu0 0.0
      %1520 = vmatpush1.msra.mxu0 0.0
      %1521 = vmatprep.subr.mxu0 0.0
      %1522 = vmatpush1.msra.mxu0 0.0
      %1523 = vmatprep.subr.mxu0 0.0
      %1524 = vmatpush1.msra.mxu0 0.0
      %1525 = vmatprep.subr.mxu0 0.0
      %1526 = vmatpush1.msra.mxu0 0.0
      %1527 = vmatprep.subr.mxu0 0.0
      %1528 = vmatpush1.msra.mxu0 0.0
      %1529 = vmatprep.subr.mxu0 0.0
      %1530 = vmatpush1.msra.mxu0 0.0
      %1531 = vmatprep.subr.mxu0 0.0
      %1532 = vmatpush1.msra.mxu0 0.0
      %1533 = vmatprep.subr.mxu0 0.0
      %1534 = vmatpush1.msra.mxu0 0.0
      %1535 = vmatprep.subr.mxu0 0.0
      %1536 = vmatpush1.msra.mxu0 0.0
      %1537 = vmatprep.mubr.f32.mxu0 0.0
      %1538 = vmatmul.mubr.f32.gmra.mrb[0].mxu0 %v1366
      %v1539 = vpop.f32.mrb[0].mxu0
      %v1540 = vadd.f32 %v505, %v1539
      %v1541 = vpop.f32.mrb[0].mxu0
      %v1542 = vadd.f32 %v507, %v1541
      %1543 = vmatprep.mubr.f32.mxu0 0.0
      %1544 = vmatmul.mubr.f32.gmra.mrb[0].mxu0 %v1369
      %v1545 = vpop.f32.mrb[0].mxu0
      %v1546 = vadd.f32 %v511, %v1545
      %v1547 = vpop.f32.mrb[0].mxu0
      %v1548 = vadd.f32 %v513, %v1547
      %1549 = vmatprep.mubr.f32.mxu0 0.0
      %1550 = vmatmul.mubr.f32.gmra.mrb[0].mxu0 %v1372
      %v1551 = vpop.f32.mrb[0].mxu0
      %v1552 = vadd.f32 %v517, %v1551
      %v1553 = vpop.f32.mrb[0].mxu0
      %v1554 = vadd.f32 %v519, %v1553
      %1555 = vmatprep.mubr.f32.mxu0 0.0
      %1556 = vmatmul.mubr.f32.gmra.mrb[0].mxu0 %v1375
      %v1557 = vpop.f32.mrb[0].mxu0
      %v1558 = vadd.f32 %v523, %v1557
      %v1559 = vpop.f32.mrb[0].mxu0
      %v1560 = vadd.f32 %v525, %v1559
      %1561 = vmatprep.mubr.f32.mxu0 0.0
      %1562 = vmatmul.mubr.f32.gmra.mrb[0].mxu0 %v1378
      %v1563 = vpop.f32.mrb[0].mxu0
      %v1564 = vadd.f32 %v529, %v1563
      %v1565 = vpop.f32.mrb[0].mxu0
      %v1566 = vadd.f32 %v531, %v1565
      %1567 = vmatprep.mubr.f32.mxu0 0.0
      %1568 = vmatmul.mubr.f32.gmra.mrb[0].mxu0 %v1381
      %v1569 = vpop.f32.mrb[0].mxu0
      %v1570 = vadd.f32 %v535, %v1569
      %v1571 = vpop.f32.mrb[0].mxu0
      %v1572 = vadd.f32 %v537, %v1571
      %1573 = vmatprep.mubr.f32.mxu0 0.0
      %1574 = vmatmul.mubr.f32.gmra.mrb[0].mxu0 %v1384
      %v1575 = vpop.f32.mrb[0].mxu0
      %v1576 = vadd.f32 %v541, %v1575
      %v1577 = vpop.f32.mrb[0].mxu0
      %v1578 = vadd.f32 %v543, %v1577
      %1579 = vmatprep.mubr.f32.mxu0 0.0
      %1580 = vmatmul.mubr.f32.gmra.mrb[0].mxu0 %v1387
      %v1581 = vpop.f32.mrb[0].mxu0
      %v1582 = vadd.f32 %v547, %v1581
      %v1583 = vpop.f32.mrb[0].mxu0
      %v1584 = vadd.f32 %v549, %v1583
      %1585 = vmatprep.mubr.f32.mxu0 0.0
      %1586 = vmatmul.mubr.f32.gmra.mrb[0].mxu0 %v1390
      %v1587 = vpop.f32.mrb[0].mxu0
      %v1588 = vadd.f32 %v553, %v1587
      %v1589 = vpop.f32.mrb[0].mxu0
      %v1590 = vadd.f32 %v555, %v1589
      %1591 = vmatprep.mubr.f32.mxu0 0.0
      %1592 = vmatmul.mubr.f32.gmra.mrb[0].mxu0 %v1393
      %v1593 = vpop.f32.mrb[0].mxu0
      %v1594 = vadd.f32 %v559, %v1593
      %v1595 = vpop.f32.mrb[0].mxu0
      %v1596 = vadd.f32 %v561, %v1595
      %1597 = vmatprep.mubr.f32.mxu0 0.0
      %1598 = vmatmul.mubr.f32.gmra.mrb[0].mxu0 %v1396
      %v1599 = vpop.f32.mrb[0].mxu0
      %v1600 = vadd.f32 %v565, %v1599
      %v1601 = vpop.f32.mrb[0].mxu0
      %v1602 = vadd.f32 %v567, %v1601
      %1603 = vmatprep.mubr.f32.mxu0 0.0
      %1604 = vmatmul.mubr.f32.gmra.mrb[0].mxu0 %v1399
      %v1605 = vpop.f32.mrb[0].mxu0
      %v1606 = vadd.f32 %v571, %v1605
      %v1607 = vpop.f32.mrb[0].mxu0
      %v1608 = vadd.f32 %v573, %v1607
      %1609 = vmatprep.mubr.f32.mxu0 0.0
      %1610 = vmatmul.mubr.f32.gmra.mrb[0].mxu0 %v1402
      %v1611 = vpop.f32.mrb[0].mxu0
      %v1612 = vadd.f32 %v577, %v1611
      %v1613 = vpop.f32.mrb[0].mxu0
      %v1614 = vadd.f32 %v579, %v1613
      %1615 = vmatprep.mubr.f32.mxu0 0.0
      %1616 = vmatmul.mubr.f32.gmra.mrb[0].mxu0 %v1405
      %v1617 = vpop.f32.mrb[0].mxu0
      %v1618 = vadd.f32 %v583, %v1617
      %v1619 = vpop.f32.mrb[0].mxu0
      %v1620 = vadd.f32 %v585, %v1619
      %1621 = vmatprep.mubr.f32.mxu0 0.0
      %1622 = vmatmul.mubr.f32.gmra.mrb[0].mxu0 %v1408
      %v1623 = vpop.f32.mrb[0].mxu0
      %v1624 = vadd.f32 %v589, %v1623
      %v1625 = vpop.f32.mrb[0].mxu0
      %v1626 = vadd.f32 %v591, %v1625
      %1627 = vmatprep.mubr.f32.mxu0 0.0
      %1628 = vmatmul.mubr.f32.gmra.mrb[0].mxu0 %v1411
      %v1629 = vpop.f32.mrb[0].mxu0
      %v1630 = vadd.f32 %v595, %v1629
      %v1631 = vpop.f32.mrb[0].mxu0
      %v1632 = vadd.f32 %v597, %v1631
      %1633 = vmatprep.mubr.f32.mxu0 0.0
      %1634 = vmatmul.mubr.f32.gmra.mrb[0].mxu0 %v1414
      %v1635 = vpop.f32.mrb[0].mxu0
      %v1636 = vadd.f32 %v601, %v1635
      %v1637 = vpop.f32.mrb[0].mxu0
      %v1638 = vadd.f32 %v603, %v1637
      %1639 = vmatprep.mubr.f32.mxu0 0.0
      %1640 = vmatmul.mubr.f32.gmra.mrb[0].mxu0 %v1417
      %v1641 = vpop.f32.mrb[0].mxu0
      %v1642 = vadd.f32 %v607, %v1641
      %v1643 = vpop.f32.mrb[0].mxu0
      %v1644 = vadd.f32 %v609, %v1643
      %1645 = vmatprep.mubr.f32.mxu0 0.0
      %1646 = vmatmul.mubr.f32.gmra.mrb[0].mxu0 %v1420
      %v1647 = vpop.f32.mrb[0].mxu0
      %v1648 = vadd.f32 %v613, %v1647
      %v1649 = vpop.f32.mrb[0].mxu0
      %v1650 = vadd.f32 %v615, %v1649
      %1651 = vmatprep.mubr.f32.mxu0 0.0
      %1652 = vmatmul.mubr.f32.gmra.mrb[0].mxu0 %v1423
      %v1653 = vpop.f32.mrb[0].mxu0
      %v1654 = vadd.f32 %v619, %v1653
      %v1655 = vpop.f32.mrb[0].mxu0
      %v1656 = vadd.f32 %v621, %v1655
      %1657 = vmatprep.mubr.f32.mxu0 0.0
      %1658 = vmatmul.mubr.f32.gmra.mrb[0].mxu0 %v1426
      %v1659 = vpop.f32.mrb[0].mxu0
      %v1660 = vadd.f32 %v625, %v1659
      %v1661 = vpop.f32.mrb[0].mxu0
      %v1662 = vadd.f32 %v627, %v1661
      %1663 = vmatprep.mubr.f32.mxu0 0.0
      %1664 = vmatmul.mubr.f32.gmra.mrb[0].mxu0 %v1429
      %v1665 = vpop.f32.mrb[0].mxu0
      %v1666 = vadd.f32 %v631, %v1665
      %v1667 = vpop.f32.mrb[0].mxu0
      %v1668 = vadd.f32 %v633, %v1667
      %1669 = vmatprep.mubr.f32.mxu0 0.0
      %1670 = vmatmul.mubr.f32.gmra.mrb[0].mxu0 %v1432
      %v1671 = vpop.f32.mrb[0].mxu0
      %v1672 = vadd.f32 %v637, %v1671
      %v1673 = vpop.f32.mrb[0].mxu0
      %v1674 = vadd.f32 %v639, %v1673
      %1675 = vmatprep.mubr.f32.mxu0 0.0
      %1676 = vmatmul.mubr.f32.gmra.mrb[0].mxu0 %v1435
      %v1677 = vpop.f32.mrb[0].mxu0
      %v1678 = vadd.f32 %v643, %v1677
      %v1679 = vpop.f32.mrb[0].mxu0
      %v1680 = vadd.f32 %v645, %v1679
      %1681 = vmatprep.mubr.f32.mxu0 0.0
      %1682 = vmatmul.mubr.f32.gmra.mrb[0].mxu0 %v1438
      %v1683 = vpop.f32.mrb[0].mxu0
      %v1684 = vadd.f32 %v649, %v1683
      %v1685 = vpop.f32.mrb[0].mxu0
      %v1686 = vadd.f32 %v651, %v1685
      %1687 = vmatprep.mubr.f32.mxu0 0.0
      %1688 = vmatmul.mubr.f32.gmra.mrb[0].mxu0 %v1441
      %v1689 = vpop.f32.mrb[0].mxu0
      %v1690 = vadd.f32 %v655, %v1689
      %v1691 = vpop.f32.mrb[0].mxu0
      %v1692 = vadd.f32 %v657, %v1691
      %1693 = vmatprep.mubr.f32.mxu0 0.0
      %1694 = vmatmul.mubr.f32.gmra.mrb[0].mxu0 %v1444
      %v1695 = vpop.f32.mrb[0].mxu0
      %v1696 = vadd.f32 %v661, %v1695
      %v1697 = vpop.f32.mrb[0].mxu0
      %v1698 = vadd.f32 %v663, %v1697
      %1699 = vmatprep.mubr.f32.mxu0 0.0
      %1700 = vmatmul.mubr.f32.gmra.mrb[0].mxu0 %v1447
      %v1701 = vpop.f32.mrb[0].mxu0
      %v1702 = vadd.f32 %v667, %v1701
      %v1703 = vpop.f32.mrb[0].mxu0
      %v1704 = vadd.f32 %v669, %v1703
      %1705 = vmatprep.mubr.f32.mxu0 0.0
      %1706 = vmatmul.mubr.f32.gmra.mrb[0].mxu0 %v1450
      %v1707 = vpop.f32.mrb[0].mxu0
      %v1708 = vadd.f32 %v673, %v1707
      %v1709 = vpop.f32.mrb[0].mxu0
      %v1710 = vadd.f32 %v675, %v1709
      %1711 = vdwg.mxu0
      %1712 = vmatprep.subr.mxu0 %v203
      %1713 = vmatpush1.msra.mxu0 %v202
      %1714 = vmatprep.subr.mxu0 %v210
      %1715 = vmatpush1.msra.mxu0 %v209
      %1716 = vmatprep.subr.mxu0 %v217
      %1717 = vmatpush1.msra.mxu0 %v216
      %1718 = vmatprep.subr.mxu0 %v224
      %1719 = vmatpush1.msra.mxu0 %v223
      %1720 = vmatprep.subr.mxu0 %v231
      %1721 = vmatpush1.msra.mxu0 %v230
      %1722 = vmatprep.subr.mxu0 %v238
      %1723 = vmatpush1.msra.mxu0 %v237
      %1724 = vmatprep.subr.mxu0 %v1462
      %1725 = vmatpush1.msra.mxu0 %v1459
      %1726 = vmatprep.subr.mxu0 0.0
      %1727 = vmatpush1.msra.mxu0 0.0
      %1728 = vmatprep.subr.mxu0 0.0
      %1729 = vmatpush1.msra.mxu0 0.0
      %1730 = vmatprep.subr.mxu0 0.0
      %1731 = vmatpush1.msra.mxu0 0.0
      %1732 = vmatprep.subr.mxu0 0.0
      %1733 = vmatpush1.msra.mxu0 0.0
      %1734 = vmatprep.subr.mxu0 0.0
      %1735 = vmatpush1.msra.mxu0 0.0
      %1736 = vmatprep.subr.mxu0 0.0
      %1737 = vmatpush1.msra.mxu0 0.0
      %1738 = vmatprep.subr.mxu0 0.0
      %1739 = vmatpush1.msra.mxu0 0.0
      %1740 = vmatprep.subr.mxu0 0.0
      %1741 = vmatpush1.msra.mxu0 0.0
      %1742 = vmatprep.subr.mxu0 0.0
      %1743 = vmatpush1.msra.mxu0 0.0
      %1744 = vmatprep.subr.mxu0 0.0
      %1745 = vmatpush1.msra.mxu0 0.0
      %1746 = vmatprep.subr.mxu0 0.0
      %1747 = vmatpush1.msra.mxu0 0.0
      %1748 = vmatprep.subr.mxu0 0.0
      %1749 = vmatpush1.msra.mxu0 0.0
      %1750 = vmatprep.subr.mxu0 0.0
      %1751 = vmatpush1.msra.mxu0 0.0
      %1752 = vmatprep.subr.mxu0 0.0
      %1753 = vmatpush1.msra.mxu0 0.0
      %1754 = vmatprep.subr.mxu0 0.0
      %1755 = vmatpush1.msra.mxu0 0.0
      %1756 = vmatprep.subr.mxu0 0.0
      %1757 = vmatpush1.msra.mxu0 0.0
      %1758 = vmatprep.subr.mxu0 0.0
      %1759 = vmatpush1.msra.mxu0 0.0
      %1760 = vmatprep.subr.mxu0 0.0
      %1761 = vmatpush1.msra.mxu0 0.0
      %1762 = vmatprep.subr.mxu0 0.0
      %1763 = vmatpush1.msra.mxu0 0.0
      %1764 = vmatprep.subr.mxu0 0.0
      %1765 = vmatpush1.msra.mxu0 0.0
      %1766 = vmatprep.subr.mxu0 0.0
      %1767 = vmatpush1.msra.mxu0 0.0
      %1768 = vmatprep.subr.mxu0 0.0
      %1769 = vmatpush1.msra.mxu0 0.0
      %1770 = vmatprep.subr.mxu0 0.0
      %1771 = vmatpush1.msra.mxu0 0.0
      %1772 = vmatprep.subr.mxu0 0.0
      %1773 = vmatpush1.msra.mxu0 0.0
      %1774 = vmatprep.subr.mxu0 0.0
      %1775 = vmatpush1.msra.mxu0 0.0
      %1776 = vmatprep.mubr.f32.mxu0 0.0
      %1777 = vmatmul.mubr.f32.gmra.mrb[0].mxu0 %v1366
      %v1778 = vpop.f32.mrb[0].mxu0
      %v1779 = vadd.f32 %v744, %v1778
      %v1780 = vpop.f32.mrb[0].mxu0
      %v1781 = vadd.f32 %v746, %v1780
      %1782 = vmatprep.mubr.f32.mxu0 0.0
      %1783 = vmatmul.mubr.f32.gmra.mrb[0].mxu0 %v1369
      %v1784 = vpop.f32.mrb[0].mxu0
      %v1785 = vadd.f32 %v750, %v1784
      %v1786 = vpop.f32.mrb[0].mxu0
      %v1787 = vadd.f32 %v752, %v1786
      %1788 = vmatprep.mubr.f32.mxu0 0.0
      %1789 = vmatmul.mubr.f32.gmra.mrb[0].mxu0 %v1372
      %v1790 = vpop.f32.mrb[0].mxu0
      %v1791 = vadd.f32 %v756, %v1790
      %v1792 = vpop.f32.mrb[0].mxu0
      %v1793 = vadd.f32 %v758, %v1792
      %1794 = vmatprep.mubr.f32.mxu0 0.0
      %1795 = vmatmul.mubr.f32.gmra.mrb[0].mxu0 %v1375
      %v1796 = vpop.f32.mrb[0].mxu0
      %v1797 = vadd.f32 %v762, %v1796
      %v1798 = vpop.f32.mrb[0].mxu0
      %v1799 = vadd.f32 %v764, %v1798
      %1800 = vmatprep.mubr.f32.mxu0 0.0
      %1801 = vmatmul.mubr.f32.gmra.mrb[0].mxu0 %v1378
      %v1802 = vpop.f32.mrb[0].mxu0
      %v1803 = vadd.f32 %v768, %v1802
      %v1804 = vpop.f32.mrb[0].mxu0
      %v1805 = vadd.f32 %v770, %v1804
      %1806 = vmatprep.mubr.f32.mxu0 0.0
      %1807 = vmatmul.mubr.f32.gmra.mrb[0].mxu0 %v1381
      %v1808 = vpop.f32.mrb[0].mxu0
      %v1809 = vadd.f32 %v774, %v1808
      %v1810 = vpop.f32.mrb[0].mxu0
      %v1811 = vadd.f32 %v776, %v1810
      %1812 = vmatprep.mubr.f32.mxu0 0.0
      %1813 = vmatmul.mubr.f32.gmra.mrb[0].mxu0 %v1384
      %v1814 = vpop.f32.mrb[0].mxu0
      %v1815 = vadd.f32 %v780, %v1814
      %v1816 = vpop.f32.mrb[0].mxu0
      %v1817 = vadd.f32 %v782, %v1816
      %1818 = vmatprep.mubr.f32.mxu0 0.0
      %1819 = vmatmul.mubr.f32.gmra.mrb[0].mxu0 %v1387
      %v1820 = vpop.f32.mrb[0].mxu0
      %v1821 = vadd.f32 %v786, %v1820
      %v1822 = vpop.f32.mrb[0].mxu0
      %v1823 = vadd.f32 %v788, %v1822
      %1824 = vmatprep.mubr.f32.mxu0 0.0
      %1825 = vmatmul.mubr.f32.gmra.mrb[0].mxu0 %v1390
      %v1826 = vpop.f32.mrb[0].mxu0
      %v1827 = vadd.f32 %v792, %v1826
      %v1828 = vpop.f32.mrb[0].mxu0
      %v1829 = vadd.f32 %v794, %v1828
      %1830 = vmatprep.mubr.f32.mxu0 0.0
      %1831 = vmatmul.mubr.f32.gmra.mrb[0].mxu0 %v1393
      %v1832 = vpop.f32.mrb[0].mxu0
      %v1833 = vadd.f32 %v798, %v1832
      %v1834 = vpop.f32.mrb[0].mxu0
      %v1835 = vadd.f32 %v800, %v1834
      %1836 = vmatprep.mubr.f32.mxu0 0.0
      %1837 = vmatmul.mubr.f32.gmra.mrb[0].mxu0 %v1396
      %v1838 = vpop.f32.mrb[0].mxu0
      %v1839 = vadd.f32 %v804, %v1838
      %v1840 = vpop.f32.mrb[0].mxu0
      %v1841 = vadd.f32 %v806, %v1840
      %1842 = vmatprep.mubr.f32.mxu0 0.0
      %1843 = vmatmul.mubr.f32.gmra.mrb[0].mxu0 %v1399
      %v1844 = vpop.f32.mrb[0].mxu0
      %v1845 = vadd.f32 %v810, %v1844
      %v1846 = vpop.f32.mrb[0].mxu0
      %v1847 = vadd.f32 %v812, %v1846
      %1848 = vmatprep.mubr.f32.mxu0 0.0
      %1849 = vmatmul.mubr.f32.gmra.mrb[0].mxu0 %v1402
      %v1850 = vpop.f32.mrb[0].mxu0
      %v1851 = vadd.f32 %v816, %v1850
      %v1852 = vpop.f32.mrb[0].mxu0
      %v1853 = vadd.f32 %v818, %v1852
      %1854 = vmatprep.mubr.f32.mxu0 0.0
      %1855 = vmatmul.mubr.f32.gmra.mrb[0].mxu0 %v1405
      %v1856 = vpop.f32.mrb[0].mxu0
      %v1857 = vadd.f32 %v822, %v1856
      %v1858 = vpop.f32.mrb[0].mxu0
      %v1859 = vadd.f32 %v824, %v1858
      %1860 = vmatprep.mubr.f32.mxu0 0.0
      %1861 = vmatmul.mubr.f32.gmra.mrb[0].mxu0 %v1408
      %v1862 = vpop.f32.mrb[0].mxu0
      %v1863 = vadd.f32 %v828, %v1862
      %v1864 = vpop.f32.mrb[0].mxu0
      %v1865 = vadd.f32 %v830, %v1864
      %1866 = vmatprep.mubr.f32.mxu0 0.0
      %1867 = vmatmul.mubr.f32.gmra.mrb[0].mxu0 %v1411
      %v1868 = vpop.f32.mrb[0].mxu0
      %v1869 = vadd.f32 %v834, %v1868
      %v1870 = vpop.f32.mrb[0].mxu0
      %v1871 = vadd.f32 %v836, %v1870
      %1872 = vmatprep.mubr.f32.mxu0 0.0
      %1873 = vmatmul.mubr.f32.gmra.mrb[0].mxu0 %v1414
      %v1874 = vpop.f32.mrb[0].mxu0
      %v1875 = vadd.f32 %v840, %v1874
      %v1876 = vpop.f32.mrb[0].mxu0
      %v1877 = vadd.f32 %v842, %v1876
      %1878 = vmatprep.mubr.f32.mxu0 0.0
      %1879 = vmatmul.mubr.f32.gmra.mrb[0].mxu0 %v1417
      %v1880 = vpop.f32.mrb[0].mxu0
      %v1881 = vadd.f32 %v846, %v1880
      %v1882 = vpop.f32.mrb[0].mxu0
      %v1883 = vadd.f32 %v848, %v1882
      %1884 = vmatprep.mubr.f32.mxu0 0.0
      %1885 = vmatmul.mubr.f32.gmra.mrb[0].mxu0 %v1420
      %v1886 = vpop.f32.mrb[0].mxu0
      %v1887 = vadd.f32 %v852, %v1886
      %v1888 = vpop.f32.mrb[0].mxu0
      %v1889 = vadd.f32 %v854, %v1888
      %1890 = vmatprep.mubr.f32.mxu0 0.0
      %1891 = vmatmul.mubr.f32.gmra.mrb[0].mxu0 %v1423
      %v1892 = vpop.f32.mrb[0].mxu0
      %v1893 = vadd.f32 %v858, %v1892
      %v1894 = vpop.f32.mrb[0].mxu0
      %v1895 = vadd.f32 %v860, %v1894
      %1896 = vmatprep.mubr.f32.mxu0 0.0
      %1897 = vmatmul.mubr.f32.gmra.mrb[0].mxu0 %v1426
      %v1898 = vpop.f32.mrb[0].mxu0
      %v1899 = vadd.f32 %v864, %v1898
      %v1900 = vpop.f32.mrb[0].mxu0
      %v1901 = vadd.f32 %v866, %v1900
      %1902 = vmatprep.mubr.f32.mxu0 0.0
      %1903 = vmatmul.mubr.f32.gmra.mrb[0].mxu0 %v1429
      %v1904 = vpop.f32.mrb[0].mxu0
      %v1905 = vadd.f32 %v870, %v1904
      %v1906 = vpop.f32.mrb[0].mxu0
      %v1907 = vadd.f32 %v872, %v1906
      %1908 = vmatprep.mubr.f32.mxu0 0.0
      %1909 = vmatmul.mubr.f32.gmra.mrb[0].mxu0 %v1432
      %v1910 = vpop.f32.mrb[0].mxu0
      %v1911 = vadd.f32 %v876, %v1910
      %v1912 = vpop.f32.mrb[0].mxu0
      %v1913 = vadd.f32 %v878, %v1912
      %1914 = vmatprep.mubr.f32.mxu0 0.0
      %1915 = vmatmul.mubr.f32.gmra.mrb[0].mxu0 %v1435
      %v1916 = vpop.f32.mrb[0].mxu0
      %v1917 = vadd.f32 %v882, %v1916
      %v1918 = vpop.f32.mrb[0].mxu0
      %v1919 = vadd.f32 %v884, %v1918
      %1920 = vmatprep.mubr.f32.mxu0 0.0
      %1921 = vmatmul.mubr.f32.gmra.mrb[0].mxu0 %v1438
      %v1922 = vpop.f32.mrb[0].mxu0
      %v1923 = vadd.f32 %v888, %v1922
      %v1924 = vpop.f32.mrb[0].mxu0
      %v1925 = vadd.f32 %v890, %v1924
      %1926 = vmatprep.mubr.f32.mxu0 0.0
      %1927 = vmatmul.mubr.f32.gmra.mrb[0].mxu0 %v1441
      %v1928 = vpop.f32.mrb[0].mxu0
      %v1929 = vadd.f32 %v894, %v1928
      %v1930 = vpop.f32.mrb[0].mxu0
      %v1931 = vadd.f32 %v896, %v1930
      %1932 = vmatprep.mubr.f32.mxu0 0.0
      %1933 = vmatmul.mubr.f32.gmra.mrb[0].mxu0 %v1444
      %v1934 = vpop.f32.mrb[0].mxu0
      %v1935 = vadd.f32 %v900, %v1934
      %v1936 = vpop.f32.mrb[0].mxu0
      %v1937 = vadd.f32 %v902, %v1936
      %1938 = vmatprep.mubr.f32.mxu0 0.0
      %1939 = vmatmul.mubr.f32.gmra.mrb[0].mxu0 %v1447
      %v1940 = vpop.f32.mrb[0].mxu0
      %v1941 = vadd.f32 %v906, %v1940
      %v1942 = vpop.f32.mrb[0].mxu0
      %v1943 = vadd.f32 %v908, %v1942
      %1944 = vmatprep.mubr.f32.mxu0 0.0
      %1945 = vmatmul.mubr.f32.gmra.mrb[0].mxu0 %v1450
      %v1946 = vpop.f32.mrb[0].mxu0
      %v1947 = vadd.f32 %v912, %v1946
      %v1948 = vpop.f32.mrb[0].mxu0
      %v1949 = vadd.f32 %v914, %v1948
      %1950 = vdwg.mxu0
      %1951 = vmatprep.subr.mxu0 %v205
      %1952 = vmatpush1.msra.mxu0 %v204
      %1953 = vmatprep.subr.mxu0 %v212
      %1954 = vmatpush1.msra.mxu0 %v211
      %1955 = vmatprep.subr.mxu0 %v219
      %1956 = vmatpush1.msra.mxu0 %v218
      %1957 = vmatprep.subr.mxu0 %v226
      %1958 = vmatpush1.msra.mxu0 %v225
      %1959 = vmatprep.subr.mxu0 %v233
      %1960 = vmatpush1.msra.mxu0 %v232
      %1961 = vmatprep.subr.mxu0 %v240
      %1962 = vmatpush1.msra.mxu0 %v239
      %1963 = vmatprep.subr.mxu0 %v1468
      %1964 = vmatpush1.msra.mxu0 %v1465
      %1965 = vmatprep.subr.mxu0 0.0
      %1966 = vmatpush1.msra.mxu0 0.0
      %1967 = vmatprep.subr.mxu0 0.0
      %1968 = vmatpush1.msra.mxu0 0.0
      %1969 = vmatprep.subr.mxu0 0.0
      %1970 = vmatpush1.msra.mxu0 0.0
      %1971 = vmatprep.subr.mxu0 0.0
      %1972 = vmatpush1.msra.mxu0 0.0
      %1973 = vmatprep.subr.mxu0 0.0
      %1974 = vmatpush1.msra.mxu0 0.0
      %1975 = vmatprep.subr.mxu0 0.0
      %1976 = vmatpush1.msra.mxu0 0.0
      %1977 = vmatprep.subr.mxu0 0.0
      %1978 = vmatpush1.msra.mxu0 0.0
      %1979 = vmatprep.subr.mxu0 0.0
      %1980 = vmatpush1.msra.mxu0 0.0
      %1981 = vmatprep.subr.mxu0 0.0
      %1982 = vmatpush1.msra.mxu0 0.0
      %1983 = vmatprep.subr.mxu0 0.0
      %1984 = vmatpush1.msra.mxu0 0.0
      %1985 = vmatprep.subr.mxu0 0.0
      %1986 = vmatpush1.msra.mxu0 0.0
      %1987 = vmatprep.subr.mxu0 0.0
      %1988 = vmatpush1.msra.mxu0 0.0
      %1989 = vmatprep.subr.mxu0 0.0
      %1990 = vmatpush1.msra.mxu0 0.0
      %1991 = vmatprep.subr.mxu0 0.0
      %1992 = vmatpush1.msra.mxu0 0.0
      %1993 = vmatprep.subr.mxu0 0.0
      %1994 = vmatpush1.msra.mxu0 0.0
      %1995 = vmatprep.subr.mxu0 0.0
      %1996 = vmatpush1.msra.mxu0 0.0
      %1997 = vmatprep.subr.mxu0 0.0
      %1998 = vmatpush1.msra.mxu0 0.0
      %1999 = vmatprep.subr.mxu0 0.0
      %2000 = vmatpush1.msra.mxu0 0.0
      %2001 = vmatprep.subr.mxu0 0.0
      %2002 = vmatpush1.msra.mxu0 0.0
      %2003 = vmatprep.subr.mxu0 0.0
      %2004 = vmatpush1.msra.mxu0 0.0
      %2005 = vmatprep.subr.mxu0 0.0
      %2006 = vmatpush1.msra.mxu0 0.0
      %2007 = vmatprep.subr.mxu0 0.0
      %2008 = vmatpush1.msra.mxu0 0.0
      %2009 = vmatprep.subr.mxu0 0.0
      %2010 = vmatpush1.msra.mxu0 0.0
      %2011 = vmatprep.subr.mxu0 0.0
      %2012 = vmatpush1.msra.mxu0 0.0
      %2013 = vmatprep.subr.mxu0 0.0
      %2014 = vmatpush1.msra.mxu0 0.0
      %2015 = vmatprep.mubr.f32.mxu0 0.0
      %2016 = vmatmul.mubr.f32.gmra.mrb[0].mxu0 %v1366
      %v2017 = vpop.f32.mrb[0].mxu0
      %v2018 = vadd.f32 %v983, %v2017
      %v2019 = vpop.f32.mrb[0].mxu0
      %v2020 = vadd.f32 %v985, %v2019
      %2021 = vmatprep.mubr.f32.mxu0 0.0
      %2022 = vmatmul.mubr.f32.gmra.mrb[0].mxu0 %v1369
      %v2023 = vpop.f32.mrb[0].mxu0
      %v2024 = vadd.f32 %v989, %v2023
      %v2025 = vpop.f32.mrb[0].mxu0
      %v2026 = vadd.f32 %v991, %v2025
      %2027 = vmatprep.mubr.f32.mxu0 0.0
      %2028 = vmatmul.mubr.f32.gmra.mrb[0].mxu0 %v1372
      %v2029 = vpop.f32.mrb[0].mxu0
      %v2030 = vadd.f32 %v995, %v2029
      %v2031 = vpop.f32.mrb[0].mxu0
      %v2032 = vadd.f32 %v997, %v2031
      %2033 = vmatprep.mubr.f32.mxu0 0.0
      %2034 = vmatmul.mubr.f32.gmra.mrb[0].mxu0 %v1375
      %v2035 = vpop.f32.mrb[0].mxu0
      %v2036 = vadd.f32 %v1001, %v2035
      %v2037 = vpop.f32.mrb[0].mxu0
      %v2038 = vadd.f32 %v1003, %v2037
      %2039 = vmatprep.mubr.f32.mxu0 0.0
      %2040 = vmatmul.mubr.f32.gmra.mrb[0].mxu0 %v1378
      %v2041 = vpop.f32.mrb[0].mxu0
      %v2042 = vadd.f32 %v1007, %v2041
      %v2043 = vpop.f32.mrb[0].mxu0
      %v2044 = vadd.f32 %v1009, %v2043
      %2045 = vmatprep.mubr.f32.mxu0 0.0
      %2046 = vmatmul.mubr.f32.gmra.mrb[0].mxu0 %v1381
      %v2047 = vpop.f32.mrb[0].mxu0
      %v2048 = vadd.f32 %v1013, %v2047
      %v2049 = vpop.f32.mrb[0].mxu0
      %v2050 = vadd.f32 %v1015, %v2049
      %2051 = vmatprep.mubr.f32.mxu0 0.0
      %2052 = vmatmul.mubr.f32.gmra.mrb[0].mxu0 %v1384
      %v2053 = vpop.f32.mrb[0].mxu0
      %v2054 = vadd.f32 %v1019, %v2053
      %v2055 = vpop.f32.mrb[0].mxu0
      %v2056 = vadd.f32 %v1021, %v2055
      %2057 = vmatprep.mubr.f32.mxu0 0.0
      %2058 = vmatmul.mubr.f32.gmra.mrb[0].mxu0 %v1387
      %v2059 = vpop.f32.mrb[0].mxu0
      %v2060 = vadd.f32 %v1025, %v2059
      %v2061 = vpop.f32.mrb[0].mxu0
      %v2062 = vadd.f32 %v1027, %v2061
      %2063 = vmatprep.mubr.f32.mxu0 0.0
      %2064 = vmatmul.mubr.f32.gmra.mrb[0].mxu0 %v1390
      %v2065 = vpop.f32.mrb[0].mxu0
      %v2066 = vadd.f32 %v1031, %v2065
      %v2067 = vpop.f32.mrb[0].mxu0
      %v2068 = vadd.f32 %v1033, %v2067
      %2069 = vmatprep.mubr.f32.mxu0 0.0
      %2070 = vmatmul.mubr.f32.gmra.mrb[0].mxu0 %v1393
      %v2071 = vpop.f32.mrb[0].mxu0
      %v2072 = vadd.f32 %v1037, %v2071
      %v2073 = vpop.f32.mrb[0].mxu0
      %v2074 = vadd.f32 %v1039, %v2073
      %2075 = vmatprep.mubr.f32.mxu0 0.0
      %2076 = vmatmul.mubr.f32.gmra.mrb[0].mxu0 %v1396
      %v2077 = vpop.f32.mrb[0].mxu0
      %v2078 = vadd.f32 %v1043, %v2077
      %v2079 = vpop.f32.mrb[0].mxu0
      %v2080 = vadd.f32 %v1045, %v2079
      %2081 = vmatprep.mubr.f32.mxu0 0.0
      %2082 = vmatmul.mubr.f32.gmra.mrb[0].mxu0 %v1399
      %v2083 = vpop.f32.mrb[0].mxu0
      %v2084 = vadd.f32 %v1049, %v2083
      %v2085 = vpop.f32.mrb[0].mxu0
      %v2086 = vadd.f32 %v1051, %v2085
      %2087 = vmatprep.mubr.f32.mxu0 0.0
      %2088 = vmatmul.mubr.f32.gmra.mrb[0].mxu0 %v1402
      %v2089 = vpop.f32.mrb[0].mxu0
      %v2090 = vadd.f32 %v1055, %v2089
      %v2091 = vpop.f32.mrb[0].mxu0
      %v2092 = vadd.f32 %v1057, %v2091
      %2093 = vmatprep.mubr.f32.mxu0 0.0
      %2094 = vmatmul.mubr.f32.gmra.mrb[0].mxu0 %v1405
      %v2095 = vpop.f32.mrb[0].mxu0
      %v2096 = vadd.f32 %v1061, %v2095
      %v2097 = vpop.f32.mrb[0].mxu0
      %v2098 = vadd.f32 %v1063, %v2097
      %2099 = vmatprep.mubr.f32.mxu0 0.0
      %2100 = vmatmul.mubr.f32.gmra.mrb[0].mxu0 %v1408
      %v2101 = vpop.f32.mrb[0].mxu0
      %v2102 = vadd.f32 %v1067, %v2101
      %v2103 = vpop.f32.mrb[0].mxu0
      %v2104 = vadd.f32 %v1069, %v2103
      %2105 = vmatprep.mubr.f32.mxu0 0.0
      %2106 = vmatmul.mubr.f32.gmra.mrb[0].mxu0 %v1411
      %v2107 = vpop.f32.mrb[0].mxu0
      %v2108 = vadd.f32 %v1073, %v2107
      %v2109 = vpop.f32.mrb[0].mxu0
      %v2110 = vadd.f32 %v1075, %v2109
      %2111 = vmatprep.mubr.f32.mxu0 0.0
      %2112 = vmatmul.mubr.f32.gmra.mrb[0].mxu0 %v1414
      %v2113 = vpop.f32.mrb[0].mxu0
      %v2114 = vadd.f32 %v1079, %v2113
      %v2115 = vpop.f32.mrb[0].mxu0
      %v2116 = vadd.f32 %v1081, %v2115
      %2117 = vmatprep.mubr.f32.mxu0 0.0
      %2118 = vmatmul.mubr.f32.gmra.mrb[0].mxu0 %v1417
      %v2119 = vpop.f32.mrb[0].mxu0
      %v2120 = vadd.f32 %v1085, %v2119
      %v2121 = vpop.f32.mrb[0].mxu0
      %v2122 = vadd.f32 %v1087, %v2121
      %2123 = vmatprep.mubr.f32.mxu0 0.0
      %2124 = vmatmul.mubr.f32.gmra.mrb[0].mxu0 %v1420
      %v2125 = vpop.f32.mrb[0].mxu0
      %v2126 = vadd.f32 %v1091, %v2125
      %v2127 = vpop.f32.mrb[0].mxu0
      %v2128 = vadd.f32 %v1093, %v2127
      %2129 = vmatprep.mubr.f32.mxu0 0.0
      %2130 = vmatmul.mubr.f32.gmra.mrb[0].mxu0 %v1423
      %v2131 = vpop.f32.mrb[0].mxu0
      %v2132 = vadd.f32 %v1097, %v2131
      %v2133 = vpop.f32.mrb[0].mxu0
      %v2134 = vadd.f32 %v1099, %v2133
      %2135 = vmatprep.mubr.f32.mxu0 0.0
      %2136 = vmatmul.mubr.f32.gmra.mrb[0].mxu0 %v1426
      %v2137 = vpop.f32.mrb[0].mxu0
      %v2138 = vadd.f32 %v1103, %v2137
      %v2139 = vpop.f32.mrb[0].mxu0
      %v2140 = vadd.f32 %v1105, %v2139
      %2141 = vmatprep.mubr.f32.mxu0 0.0
      %2142 = vmatmul.mubr.f32.gmra.mrb[0].mxu0 %v1429
      %v2143 = vpop.f32.mrb[0].mxu0
      %v2144 = vadd.f32 %v1109, %v2143
      %v2145 = vpop.f32.mrb[0].mxu0
      %v2146 = vadd.f32 %v1111, %v2145
      %2147 = vmatprep.mubr.f32.mxu0 0.0
      %2148 = vmatmul.mubr.f32.gmra.mrb[0].mxu0 %v1432
      %v2149 = vpop.f32.mrb[0].mxu0
      %v2150 = vadd.f32 %v1115, %v2149
      %v2151 = vpop.f32.mrb[0].mxu0
      %v2152 = vadd.f32 %v1117, %v2151
      %2153 = vmatprep.mubr.f32.mxu0 0.0
      %2154 = vmatmul.mubr.f32.gmra.mrb[0].mxu0 %v1435
      %v2155 = vpop.f32.mrb[0].mxu0
      %v2156 = vadd.f32 %v1121, %v2155
      %v2157 = vpop.f32.mrb[0].mxu0
      %v2158 = vadd.f32 %v1123, %v2157
      %2159 = vmatprep.mubr.f32.mxu0 0.0
      %2160 = vmatmul.mubr.f32.gmra.mrb[0].mxu0 %v1438
      %v2161 = vpop.f32.mrb[0].mxu0
      %v2162 = vadd.f32 %v1127, %v2161
      %v2163 = vpop.f32.mrb[0].mxu0
      %v2164 = vadd.f32 %v1129, %v2163
      %2165 = vmatprep.mubr.f32.mxu0 0.0
      %2166 = vmatmul.mubr.f32.gmra.mrb[0].mxu0 %v1441
      %v2167 = vpop.f32.mrb[0].mxu0
      %v2168 = vadd.f32 %v1133, %v2167
      %v2169 = vpop.f32.mrb[0].mxu0
      %v2170 = vadd.f32 %v1135, %v2169
      %2171 = vmatprep.mubr.f32.mxu0 0.0
      %2172 = vmatmul.mubr.f32.gmra.mrb[0].mxu0 %v1444
      %v2173 = vpop.f32.mrb[0].mxu0
      %v2174 = vadd.f32 %v1139, %v2173
      %v2175 = vpop.f32.mrb[0].mxu0
      %v2176 = vadd.f32 %v1141, %v2175
      %2177 = vmatprep.mubr.f32.mxu0 0.0
      %2178 = vmatmul.mubr.f32.gmra.mrb[0].mxu0 %v1447
      %v2179 = vpop.f32.mrb[0].mxu0
      %v2180 = vadd.f32 %v1145, %v2179
      %v2181 = vpop.f32.mrb[0].mxu0
      %v2182 = vadd.f32 %v1147, %v2181
      %2183 = vmatprep.mubr.f32.mxu0 0.0
      %2184 = vmatmul.mubr.f32.gmra.mrb[0].mxu0 %v1450
      %v2185 = vpop.f32.mrb[0].mxu0
      %v2186 = vadd.f32 %v1151, %v2185
      %v2187 = vpop.f32.mrb[0].mxu0
      %v2188 = vadd.f32 %v1153, %v2187
      %2189 = vdwg.mxu0
      %2190 = vmatprep.subr.mxu0 0.0
      %2191 = vmatpush1.msra.mxu0 %v206
      %2192 = vmatprep.subr.mxu0 0.0
      %2193 = vmatpush1.msra.mxu0 %v213
      %2194 = vmatprep.subr.mxu0 0.0
      %2195 = vmatpush1.msra.mxu0 %v220
      %2196 = vmatprep.subr.mxu0 0.0
      %2197 = vmatpush1.msra.mxu0 %v227
      %2198 = vmatprep.subr.mxu0 0.0
      %2199 = vmatpush1.msra.mxu0 %v234
      %2200 = vmatprep.subr.mxu0 0.0
      %2201 = vmatpush1.msra.mxu0 %v241
      %2202 = vmatprep.subr.mxu0 0.0
      %2203 = vmatpush1.msra.mxu0 %v1471
      %2204 = vmatprep.subr.mxu0 0.0
      %2205 = vmatpush1.msra.mxu0 0.0
      %2206 = vmatprep.subr.mxu0 0.0
      %2207 = vmatpush1.msra.mxu0 0.0
      %2208 = vmatprep.subr.mxu0 0.0
      %2209 = vmatpush1.msra.mxu0 0.0
      %2210 = vmatprep.subr.mxu0 0.0
      %2211 = vmatpush1.msra.mxu0 0.0
      %2212 = vmatprep.subr.mxu0 0.0
      %2213 = vmatpush1.msra.mxu0 0.0
      %2214 = vmatprep.subr.mxu0 0.0
      %2215 = vmatpush1.msra.mxu0 0.0
      %2216 = vmatprep.subr.mxu0 0.0
      %2217 = vmatpush1.msra.mxu0 0.0
      %2218 = vmatprep.subr.mxu0 0.0
      %2219 = vmatpush1.msra.mxu0 0.0
      %2220 = vmatprep.subr.mxu0 0.0
      %2221 = vmatpush1.msra.mxu0 0.0
      %2222 = vmatprep.subr.mxu0 0.0
      %2223 = vmatpush1.msra.mxu0 0.0
      %2224 = vmatprep.subr.mxu0 0.0
      %2225 = vmatpush1.msra.mxu0 0.0
      %2226 = vmatprep.subr.mxu0 0.0
      %2227 = vmatpush1.msra.mxu0 0.0
      %2228 = vmatprep.subr.mxu0 0.0
      %2229 = vmatpush1.msra.mxu0 0.0
      %2230 = vmatprep.subr.mxu0 0.0
      %2231 = vmatpush1.msra.mxu0 0.0
      %2232 = vmatprep.subr.mxu0 0.0
      %2233 = vmatpush1.msra.mxu0 0.0
      %2234 = vmatprep.subr.mxu0 0.0
      %2235 = vmatpush1.msra.mxu0 0.0
      %2236 = vmatprep.subr.mxu0 0.0
      %2237 = vmatpush1.msra.mxu0 0.0
      %2238 = vmatprep.subr.mxu0 0.0
      %2239 = vmatpush1.msra.mxu0 0.0
      %2240 = vmatprep.subr.mxu0 0.0
      %2241 = vmatpush1.msra.mxu0 0.0
      %2242 = vmatprep.subr.mxu0 0.0
      %2243 = vmatpush1.msra.mxu0 0.0
      %2244 = vmatprep.subr.mxu0 0.0
      %2245 = vmatpush1.msra.mxu0 0.0
      %2246 = vmatprep.subr.mxu0 0.0
      %2247 = vmatpush1.msra.mxu0 0.0
      %2248 = vmatprep.subr.mxu0 0.0
      %2249 = vmatpush1.msra.mxu0 0.0
      %2250 = vmatprep.subr.mxu0 0.0
      %2251 = vmatpush1.msra.mxu0 0.0
      %2252 = vmatprep.subr.mxu0 0.0
      %2253 = vmatpush1.msra.mxu0 0.0
      %2254 = vmatprep.mubr.f32.mxu0 0.0
      %2255 = vmatmul.mubr.f32.gmra.mrb[0].mxu0 %v1366
      %v2256 = vpop.f32.mrb[0].mxu0
      %v2257 = vadd.f32 %v1222, %v2256
      %v2258 = vpop.f32.mrb[0].mxu0
      %2259 = vmatprep.mubr.f32.mxu0 0.0
      %2260 = vmatmul.mubr.f32.gmra.mrb[0].mxu0 %v1369
      %v2261 = vpop.f32.mrb[0].mxu0
      %v2262 = vadd.f32 %v1227, %v2261
      %v2263 = vpop.f32.mrb[0].mxu0
      %2264 = vmatprep.mubr.f32.mxu0 0.0
      %2265 = vmatmul.mubr.f32.gmra.mrb[0].mxu0 %v1372
      %v2266 = vpop.f32.mrb[0].mxu0
      %v2267 = vadd.f32 %v1232, %v2266
      %v2268 = vpop.f32.mrb[0].mxu0
      %2269 = vmatprep.mubr.f32.mxu0 0.0
      %2270 = vmatmul.mubr.f32.gmra.mrb[0].mxu0 %v1375
      %v2271 = vpop.f32.mrb[0].mxu0
      %v2272 = vadd.f32 %v1237, %v2271
      %v2273 = vpop.f32.mrb[0].mxu0
      %2274 = vmatprep.mubr.f32.mxu0 0.0
      %2275 = vmatmul.mubr.f32.gmra.mrb[0].mxu0 %v1378
      %v2276 = vpop.f32.mrb[0].mxu0
      %v2277 = vadd.f32 %v1242, %v2276
      %v2278 = vpop.f32.mrb[0].mxu0
      %2279 = vmatprep.mubr.f32.mxu0 0.0
      %2280 = vmatmul.mubr.f32.gmra.mrb[0].mxu0 %v1381
      %v2281 = vpop.f32.mrb[0].mxu0
      %v2282 = vadd.f32 %v1247, %v2281
      %v2283 = vpop.f32.mrb[0].mxu0
      %2284 = vmatprep.mubr.f32.mxu0 0.0
      %2285 = vmatmul.mubr.f32.gmra.mrb[0].mxu0 %v1384
      %v2286 = vpop.f32.mrb[0].mxu0
      %v2287 = vadd.f32 %v1252, %v2286
      %v2288 = vpop.f32.mrb[0].mxu0
      %2289 = vmatprep.mubr.f32.mxu0 0.0
      %2290 = vmatmul.mubr.f32.gmra.mrb[0].mxu0 %v1387
      %v2291 = vpop.f32.mrb[0].mxu0
      %v2292 = vadd.f32 %v1257, %v2291
      %v2293 = vpop.f32.mrb[0].mxu0
      %2294 = vmatprep.mubr.f32.mxu0 0.0
      %2295 = vmatmul.mubr.f32.gmra.mrb[0].mxu0 %v1390
      %v2296 = vpop.f32.mrb[0].mxu0
      %v2297 = vadd.f32 %v1262, %v2296
      %v2298 = vpop.f32.mrb[0].mxu0
      %2299 = vmatprep.mubr.f32.mxu0 0.0
      %2300 = vmatmul.mubr.f32.gmra.mrb[0].mxu0 %v1393
      %v2301 = vpop.f32.mrb[0].mxu0
      %v2302 = vadd.f32 %v1267, %v2301
      %v2303 = vpop.f32.mrb[0].mxu0
      %2304 = vmatprep.mubr.f32.mxu0 0.0
      %2305 = vmatmul.mubr.f32.gmra.mrb[0].mxu0 %v1396
      %v2306 = vpop.f32.mrb[0].mxu0
      %v2307 = vadd.f32 %v1272, %v2306
      %v2308 = vpop.f32.mrb[0].mxu0
      %2309 = vmatprep.mubr.f32.mxu0 0.0
      %2310 = vmatmul.mubr.f32.gmra.mrb[0].mxu0 %v1399
      %v2311 = vpop.f32.mrb[0].mxu0
      %v2312 = vadd.f32 %v1277, %v2311
      %v2313 = vpop.f32.mrb[0].mxu0
      %2314 = vmatprep.mubr.f32.mxu0 0.0
      %2315 = vmatmul.mubr.f32.gmra.mrb[0].mxu0 %v1402
      %v2316 = vpop.f32.mrb[0].mxu0
      %v2317 = vadd.f32 %v1282, %v2316
      %v2318 = vpop.f32.mrb[0].mxu0
      %2319 = vmatprep.mubr.f32.mxu0 0.0
      %2320 = vmatmul.mubr.f32.gmra.mrb[0].mxu0 %v1405
      %v2321 = vpop.f32.mrb[0].mxu0
      %v2322 = vadd.f32 %v1287, %v2321
      %v2323 = vpop.f32.mrb[0].mxu0
      %2324 = vmatprep.mubr.f32.mxu0 0.0
      %2325 = vmatmul.mubr.f32.gmra.mrb[0].mxu0 %v1408
      %v2326 = vpop.f32.mrb[0].mxu0
      %v2327 = vadd.f32 %v1292, %v2326
      %v2328 = vpop.f32.mrb[0].mxu0
      %2329 = vmatprep.mubr.f32.mxu0 0.0
      %2330 = vmatmul.mubr.f32.gmra.mrb[0].mxu0 %v1411
      %v2331 = vpop.f32.mrb[0].mxu0
      %v2332 = vadd.f32 %v1297, %v2331
      %v2333 = vpop.f32.mrb[0].mxu0
      %2334 = vmatprep.mubr.f32.mxu0 0.0
      %2335 = vmatmul.mubr.f32.gmra.mrb[0].mxu0 %v1414
      %v2336 = vpop.f32.mrb[0].mxu0
      %v2337 = vadd.f32 %v1302, %v2336
      %v2338 = vpop.f32.mrb[0].mxu0
      %2339 = vmatprep.mubr.f32.mxu0 0.0
      %2340 = vmatmul.mubr.f32.gmra.mrb[0].mxu0 %v1417
      %v2341 = vpop.f32.mrb[0].mxu0
      %v2342 = vadd.f32 %v1307, %v2341
      %v2343 = vpop.f32.mrb[0].mxu0
      %2344 = vmatprep.mubr.f32.mxu0 0.0
      %2345 = vmatmul.mubr.f32.gmra.mrb[0].mxu0 %v1420
      %v2346 = vpop.f32.mrb[0].mxu0
      %v2347 = vadd.f32 %v1312, %v2346
      %v2348 = vpop.f32.mrb[0].mxu0
      %2349 = vmatprep.mubr.f32.mxu0 0.0
      %2350 = vmatmul.mubr.f32.gmra.mrb[0].mxu0 %v1423
      %v2351 = vpop.f32.mrb[0].mxu0
      %v2352 = vadd.f32 %v1317, %v2351
      %v2353 = vpop.f32.mrb[0].mxu0
      %2354 = vmatprep.mubr.f32.mxu0 0.0
      %2355 = vmatmul.mubr.f32.gmra.mrb[0].mxu0 %v1426
      %v2356 = vpop.f32.mrb[0].mxu0
      %v2357 = vadd.f32 %v1322, %v2356
      %v2358 = vpop.f32.mrb[0].mxu0
      %2359 = vmatprep.mubr.f32.mxu0 0.0
      %2360 = vmatmul.mubr.f32.gmra.mrb[0].mxu0 %v1429
      %v2361 = vpop.f32.mrb[0].mxu0
      %v2362 = vadd.f32 %v1327, %v2361
      %v2363 = vpop.f32.mrb[0].mxu0
      %2364 = vmatprep.mubr.f32.mxu0 0.0
      %2365 = vmatmul.mubr.f32.gmra.mrb[0].mxu0 %v1432
      %v2366 = vpop.f32.mrb[0].mxu0
      %v2367 = vadd.f32 %v1332, %v2366
      %v2368 = vpop.f32.mrb[0].mxu0
      %2369 = vmatprep.mubr.f32.mxu0 0.0
      %2370 = vmatmul.mubr.f32.gmra.mrb[0].mxu0 %v1435
      %v2371 = vpop.f32.mrb[0].mxu0
      %v2372 = vadd.f32 %v1337, %v2371
      %v2373 = vpop.f32.mrb[0].mxu0
      %2374 = vmatprep.mubr.f32.mxu0 0.0
      %2375 = vmatmul.mubr.f32.gmra.mrb[0].mxu0 %v1438
      %v2376 = vpop.f32.mrb[0].mxu0
      %v2377 = vadd.f32 %v1342, %v2376
      %v2378 = vpop.f32.mrb[0].mxu0
      %2379 = vmatprep.mubr.f32.mxu0 0.0
      %2380 = vmatmul.mubr.f32.gmra.mrb[0].mxu0 %v1441
      %v2381 = vpop.f32.mrb[0].mxu0
      %v2382 = vadd.f32 %v1347, %v2381
      %v2383 = vpop.f32.mrb[0].mxu0
      %2384 = vmatprep.mubr.f32.mxu0 0.0
      %2385 = vmatmul.mubr.f32.gmra.mrb[0].mxu0 %v1444
      %v2386 = vpop.f32.mrb[0].mxu0
      %v2387 = vadd.f32 %v1352, %v2386
      %v2388 = vpop.f32.mrb[0].mxu0
      %2389 = vmatprep.mubr.f32.mxu0 0.0
      %2390 = vmatmul.mubr.f32.gmra.mrb[0].mxu0 %v1447
      %v2391 = vpop.f32.mrb[0].mxu0
      %v2392 = vadd.f32 %v1357, %v2391
      %v2393 = vpop.f32.mrb[0].mxu0
      %2394 = vmatprep.mubr.f32.mxu0 0.0
      %2395 = vmatmul.mubr.f32.gmra.mrb[0].mxu0 %v1450
      %v2396 = vpop.f32.mrb[0].mxu0
      %v2397 = vadd.f32 %v1362, %v2396
      %v2398 = vpop.f32.mrb[0].mxu0
      %2399 = vdwg.mxu0
      %v2400 = vld [vmem:[%s165 + $0x2] sm:$0xff]
      %v2401 = vld [vmem:[%s165 + $0xa] sm:$0xff]
      %v2402 = vld [vmem:[%s165 + $0x12] sm:$0xff]
      %v2403 = vld [vmem:[%s165 + $0x1a] sm:$0xff]
      %v2404 = vld [vmem:[%s165 + $0x22] sm:$0xff]
      %v2405 = vld [vmem:[%s165 + $0x2a] sm:$0xff]
      %v2406 = vld [vmem:[%s165 + $0x32] sm:$0xff]
      %v2407 = vld [vmem:[%s165 + $0x3a] sm:$0xff]
      %v2408 = vld [vmem:[%s165 + $0x42] sm:$0xff]
      %v2409 = vld [vmem:[%s165 + $0x4a] sm:$0xff]
      %v2410 = vld [vmem:[%s165 + $0x52] sm:$0xff]
      %v2411 = vld [vmem:[%s165 + $0x5a] sm:$0xff]
      %v2412 = vld [vmem:[%s165 + $0x62] sm:$0xff]
      %v2413 = vld [vmem:[%s165 + $0x6a] sm:$0xff]
      %v2414 = vld [vmem:[%s165 + $0x72] sm:$0xff]
      %v2415 = vld [vmem:[%s165 + $0x7a] sm:$0xff]
      %v2416 = vld [vmem:[%s165 + $0x82] sm:$0xff]
      %v2417 = vld [vmem:[%s165 + $0x8a] sm:$0xff]
      %v2418 = vld [vmem:[%s165 + $0x92] sm:$0xff]
      %v2419 = vld [vmem:[%s165 + $0x9a] sm:$0xff]
      %v2420 = vld [vmem:[%s165 + $0xa2] sm:$0xff]
      %v2421 = vld [vmem:[%s165 + $0xaa] sm:$0xff]
      %v2422 = vld [vmem:[%s165 + $0xb2] sm:$0xff]
      %v2423 = vld [vmem:[%s165 + $0xba] sm:$0xff]
      %v2424 = vld [vmem:[%s165 + $0xc2] sm:$0xff]
      %v2425 = vld [vmem:[%s165 + $0xca] sm:$0xff]
      %v2426 = vld [vmem:[%s165 + $0xd2] sm:$0xff]
      %v2427 = vld [vmem:[%s165 + $0xda] sm:$0xff]
      %v2428 = vld [vmem:[%s165 + $0xe2] sm:$0x7]
      %s2429 = scalar_lea.vmem %s1, 784
      %v2430 = vld [vmem:[%s2429] sm:$0xff]
      %v2431 = vld [vmem:[%s2429 + $0x8] sm:$0xff]
      %v2432 = vld [vmem:[%s2429 + $0x10] sm:$0xff]
      %v2433 = vld [vmem:[%s2429 + $0x18] sm:$0xff]
      %v2434 = vld [vmem:[%s2429 + $0x20] sm:$0xff]
      %v2435 = vld [vmem:[%s2429 + $0x28] sm:$0xff]
      %v2436 = vld [vmem:[%s2429 + $0x30] sm:$0xff]
      %v2437 = vld [vmem:[%s2429 + $0x38] sm:$0xff]
      %v2438 = vld [vmem:[%s2429 + $0x40] sm:$0xff]
      %v2439 = vld [vmem:[%s2429 + $0x48] sm:$0xff]
      %v2440 = vld [vmem:[%s2429 + $0x50] sm:$0xff]
      %v2441 = vld [vmem:[%s2429 + $0x58] sm:$0xff]
      %v2442 = vld [vmem:[%s2429 + $0x60] sm:$0xff]
      %v2443 = vld [vmem:[%s2429 + $0x68] sm:$0xff]
      %v2444 = vld [vmem:[%s2429 + $0x70] sm:$0xff]
      %v2445 = vld [vmem:[%s2429 + $0x78] sm:$0xff]
      %v2446 = vld [vmem:[%s2429 + $0x80] sm:$0xff]
      %v2447 = vld [vmem:[%s2429 + $0x88] sm:$0xff]
      %v2448 = vld [vmem:[%s2429 + $0x90] sm:$0xff]
      %v2449 = vld [vmem:[%s2429 + $0x98] sm:$0xff]
      %v2450 = vld [vmem:[%s2429 + $0xa0] sm:$0xff]
      %v2451 = vld [vmem:[%s2429 + $0xa8] sm:$0xff]
      %v2452 = vld [vmem:[%s2429 + $0xb0] sm:$0xff]
      %v2453 = vld [vmem:[%s2429 + $0xb8] sm:$0xff]
      %v2454 = vld [vmem:[%s2429 + $0xc0] sm:$0xff]
      %v2455 = vld [vmem:[%s2429 + $0xc8] sm:$0xff]
      %v2456 = vld [vmem:[%s2429 + $0xd0] sm:$0xff]
      %v2457 = vld [vmem:[%s2429 + $0xd8] sm:$0xff]
      %v2458 = vld [vmem:[%s2429 + $0xe0] sm:$0xff]
      %v2459 = vld [vmem:[%s2429 + $0xe8] sm:$0xff]
      %v2460 = vld [vmem:[%s2429 + $0xf0] sm:$0xff]
      %v2461 = vld [vmem:[%s2429 + $0xf8] sm:$0xff]
      %v2462 = vld [vmem:[%s2429 + $0x100] sm:$0xff]
      %v2463 = vld [vmem:[%s2429 + $0x108] sm:$0xff]
      %v2464 = vld [vmem:[%s2429 + $0x110] sm:$0xff]
      %v2465 = vld [vmem:[%s2429 + $0x118] sm:$0xff]
      %v2466 = vld [vmem:[%s2429 + $0x120] sm:$0xff]
      %v2467 = vld [vmem:[%s2429 + $0x128] sm:$0xff]
      %v2468 = vld [vmem:[%s2429 + $0x130] sm:$0xff]
      %v2469 = vld [vmem:[%s2429 + $0x138] sm:$0xff]
      %v2470 = vld [vmem:[%s2429 + $0x140] sm:$0xff]
      %v2471 = vld [vmem:[%s2429 + $0x148] sm:$0xff]
      %v2472 = vld [vmem:[%s2429 + $0x150] sm:$0xf]
      %v2473 = vld [vmem:[%s2429 + $0x158] sm:$0xf]
      %v2474 = vld [vmem:[%s2429 + $0x160] sm:$0xf]
      %v2475 = vld [vmem:[%s2429 + $0x168] sm:$0xf]
      %v2476 = vld [vmem:[%s2429 + $0x170] sm:$0xf]
      %v2477 = vld [vmem:[%s2429 + $0x178] sm:$0xf]
      %v2478 = vld [vmem:[%s2429 + $0x180] sm:$0xf]
      %v2480 = vsel %vm328, %v2400, 0
      %v2483 = vsel %vm328, %v2401, 0
      %v2486 = vsel %vm328, %v2402, 0
      %v2489 = vsel %vm328, %v2403, 0
      %v2492 = vsel %vm328, %v2404, 0
      %v2495 = vsel %vm328, %v2405, 0
      %v2498 = vsel %vm328, %v2406, 0
      %v2501 = vsel %vm328, %v2407, 0
      %v2504 = vsel %vm328, %v2408, 0
      %v2507 = vsel %vm328, %v2409, 0
      %v2510 = vsel %vm328, %v2410, 0
      %v2513 = vsel %vm328, %v2411, 0
      %v2516 = vsel %vm328, %v2412, 0
      %v2519 = vsel %vm328, %v2413, 0
      %v2522 = vsel %vm328, %v2414, 0
      %v2525 = vsel %vm328, %v2415, 0
      %v2528 = vsel %vm328, %v2416, 0
      %v2531 = vsel %vm328, %v2417, 0
      %v2534 = vsel %vm328, %v2418, 0
      %v2537 = vsel %vm328, %v2419, 0
      %v2540 = vsel %vm328, %v2420, 0
      %v2543 = vsel %vm328, %v2421, 0
      %v2546 = vsel %vm328, %v2422, 0
      %v2549 = vsel %vm328, %v2423, 0
      %v2552 = vsel %vm328, %v2424, 0
      %v2555 = vsel %vm328, %v2425, 0
      %v2558 = vsel %vm328, %v2426, 0
      %v2561 = vsel %vm328, %v2427, 0
      %v2564 = vsel %vm328, %v2428, 0
      %v2567 = vsel %vm416, %v2472, 0
      %v2570 = vsel %vm416, %v2473, 0
      %v2573 = vsel %vm416, %v2474, 0
      %v2576 = vsel %vm416, %v2475, 0
      %v2579 = vsel %vm416, %v2476, 0
      %v2582 = vsel %vm416, %v2477, 0
      %v2585 = vsel %vm416, %v2478, 0
      %2587 = vmatprep.subr.mxu0 %v2431
      %2588 = vmatpush1.msra.mxu0 %v2430
      %2589 = vmatprep.subr.mxu0 %v2438
      %2590 = vmatpush1.msra.mxu0 %v2437
      %2591 = vmatprep.subr.mxu0 %v2445
      %2592 = vmatpush1.msra.mxu0 %v2444
      %2593 = vmatprep.subr.mxu0 %v2452
      %2594 = vmatpush1.msra.mxu0 %v2451
      %2595 = vmatprep.subr.mxu0 %v2459
      %2596 = vmatpush1.msra.mxu0 %v2458
      %2597 = vmatprep.subr.mxu0 %v2466
      %2598 = vmatpush1.msra.mxu0 %v2465
      %2599 = vmatprep.subr.mxu0 %v2570
      %2600 = vmatpush1.msra.mxu0 %v2567
      %2601 = vmatprep.subr.mxu0 0.0
      %2602 = vmatpush1.msra.mxu0 0.0
      %2603 = vmatprep.subr.mxu0 0.0
      %2604 = vmatpush1.msra.mxu0 0.0
      %2605 = vmatprep.subr.mxu0 0.0
      %2606 = vmatpush1.msra.mxu0 0.0
      %2607 = vmatprep.subr.mxu0 0.0
      %2608 = vmatpush1.msra.mxu0 0.0
      %2609 = vmatprep.subr.mxu0 0.0
      %2610 = vmatpush1.msra.mxu0 0.0
      %2611 = vmatprep.subr.mxu0 0.0
      %2612 = vmatpush1.msra.mxu0 0.0
      %2613 = vmatprep.subr.mxu0 0.0
      %2614 = vmatpush1.msra.mxu0 0.0
      %2615 = vmatprep.subr.mxu0 0.0
      %2616 = vmatpush1.msra.mxu0 0.0
      %2617 = vmatprep.subr.mxu0 0.0
      %2618 = vmatpush1.msra.mxu0 0.0
      %2619 = vmatprep.subr.mxu0 0.0
      %2620 = vmatpush1.msra.mxu0 0.0
      %2621 = vmatprep.subr.mxu0 0.0
      %2622 = vmatpush1.msra.mxu0 0.0
      %2623 = vmatprep.subr.mxu0 0.0
      %2624 = vmatpush1.msra.mxu0 0.0
      %2625 = vmatprep.subr.mxu0 0.0
      %2626 = vmatpush1.msra.mxu0 0.0
      %2627 = vmatprep.subr.mxu0 0.0
      %2628 = vmatpush1.msra.mxu0 0.0
      %2629 = vmatprep.subr.mxu0 0.0
      %2630 = vmatpush1.msra.mxu0 0.0
      %2631 = vmatprep.subr.mxu0 0.0
      %2632 = vmatpush1.msra.mxu0 0.0
      %2633 = vmatprep.subr.mxu0 0.0
      %2634 = vmatpush1.msra.mxu0 0.0
      %2635 = vmatprep.subr.mxu0 0.0
      %2636 = vmatpush1.msra.mxu0 0.0
      %2637 = vmatprep.subr.mxu0 0.0
      %2638 = vmatpush1.msra.mxu0 0.0
      %2639 = vmatprep.subr.mxu0 0.0
      %2640 = vmatpush1.msra.mxu0 0.0
      %2641 = vmatprep.subr.mxu0 0.0
      %2642 = vmatpush1.msra.mxu0 0.0
      %2643 = vmatprep.subr.mxu0 0.0
      %2644 = vmatpush1.msra.mxu0 0.0
      %2645 = vmatprep.subr.mxu0 0.0
      %2646 = vmatpush1.msra.mxu0 0.0
      %2647 = vmatprep.subr.mxu0 0.0
      %2648 = vmatpush1.msra.mxu0 0.0
      %2649 = vmatprep.subr.mxu0 0.0
      %2650 = vmatpush1.msra.mxu0 0.0
      %2651 = vmatprep.mubr.f32.mxu0 0.0
      %2652 = vmatmul.mubr.f32.gmra.mrb[0].mxu0 %v2480
      %v2653 = vpop.f32.mrb[0].mxu0
      %v2654 = vadd.f32 0.0, %v2653
      %v2655 = vpop.f32.mrb[0].mxu0
      %v2656 = vadd.f32 0.0, %v2655
      %2657 = vmatprep.mubr.f32.mxu0 0.0
      %2658 = vmatmul.mubr.f32.gmra.mrb[0].mxu0 %v2483
      %v2659 = vpop.f32.mrb[0].mxu0
      %v2660 = vadd.f32 0.0, %v2659
      %v2661 = vpop.f32.mrb[0].mxu0
      %v2662 = vadd.f32 0.0, %v2661
      %2663 = vmatprep.mubr.f32.mxu0 0.0
      %2664 = vmatmul.mubr.f32.gmra.mrb[0].mxu0 %v2486
      %v2665 = vpop.f32.mrb[0].mxu0
      %v2666 = vadd.f32 0.0, %v2665
      %v2667 = vpop.f32.mrb[0].mxu0
      %v2668 = vadd.f32 0.0, %v2667
      %2669 = vmatprep.mubr.f32.mxu0 0.0
      %2670 = vmatmul.mubr.f32.gmra.mrb[0].mxu0 %v2489
      %v2671 = vpop.f32.mrb[0].mxu0
      %v2672 = vadd.f32 0.0, %v2671
      %v2673 = vpop.f32.mrb[0].mxu0
      %v2674 = vadd.f32 0.0, %v2673
      %2675 = vmatprep.mubr.f32.mxu0 0.0
      %2676 = vmatmul.mubr.f32.gmra.mrb[0].mxu0 %v2492
      %v2677 = vpop.f32.mrb[0].mxu0
      %v2678 = vadd.f32 0.0, %v2677
      %v2679 = vpop.f32.mrb[0].mxu0
      %v2680 = vadd.f32 0.0, %v2679
      %2681 = vmatprep.mubr.f32.mxu0 0.0
      %2682 = vmatmul.mubr.f32.gmra.mrb[0].mxu0 %v2495
      %v2683 = vpop.f32.mrb[0].mxu0
      %v2684 = vadd.f32 0.0, %v2683
      %v2685 = vpop.f32.mrb[0].mxu0
      %v2686 = vadd.f32 0.0, %v2685
      %2687 = vmatprep.mubr.f32.mxu0 0.0
      %2688 = vmatmul.mubr.f32.gmra.mrb[0].mxu0 %v2498
      %v2689 = vpop.f32.mrb[0].mxu0
      %v2690 = vadd.f32 0.0, %v2689
      %v2691 = vpop.f32.mrb[0].mxu0
      %v2692 = vadd.f32 0.0, %v2691
      %2693 = vmatprep.mubr.f32.mxu0 0.0
      %2694 = vmatmul.mubr.f32.gmra.mrb[0].mxu0 %v2501
      %v2695 = vpop.f32.mrb[0].mxu0
      %v2696 = vadd.f32 0.0, %v2695
      %v2697 = vpop.f32.mrb[0].mxu0
      %v2698 = vadd.f32 0.0, %v2697
      %2699 = vmatprep.mubr.f32.mxu0 0.0
      %2700 = vmatmul.mubr.f32.gmra.mrb[0].mxu0 %v2504
      %v2701 = vpop.f32.mrb[0].mxu0
      %v2702 = vadd.f32 0.0, %v2701
      %v2703 = vpop.f32.mrb[0].mxu0
      %v2704 = vadd.f32 0.0, %v2703
      %2705 = vmatprep.mubr.f32.mxu0 0.0
      %2706 = vmatmul.mubr.f32.gmra.mrb[0].mxu0 %v2507
      %v2707 = vpop.f32.mrb[0].mxu0
      %v2708 = vadd.f32 0.0, %v2707
      %v2709 = vpop.f32.mrb[0].mxu0
      %v2710 = vadd.f32 0.0, %v2709
      %2711 = vmatprep.mubr.f32.mxu0 0.0
      %2712 = vmatmul.mubr.f32.gmra.mrb[0].mxu0 %v2510
      %v2713 = vpop.f32.mrb[0].mxu0
      %v2714 = vadd.f32 0.0, %v2713
      %v2715 = vpop.f32.mrb[0].mxu0
      %v2716 = vadd.f32 0.0, %v2715
      %2717 = vmatprep.mubr.f32.mxu0 0.0
      %2718 = vmatmul.mubr.f32.gmra.mrb[0].mxu0 %v2513
      %v2719 = vpop.f32.mrb[0].mxu0
      %v2720 = vadd.f32 0.0, %v2719
      %v2721 = vpop.f32.mrb[0].mxu0
      %v2722 = vadd.f32 0.0, %v2721
      %2723 = vmatprep.mubr.f32.mxu0 0.0
      %2724 = vmatmul.mubr.f32.gmra.mrb[0].mxu0 %v2516
      %v2725 = vpop.f32.mrb[0].mxu0
      %v2726 = vadd.f32 0.0, %v2725
      %v2727 = vpop.f32.mrb[0].mxu0
      %v2728 = vadd.f32 0.0, %v2727
      %2729 = vmatprep.mubr.f32.mxu0 0.0
      %2730 = vmatmul.mubr.f32.gmra.mrb[0].mxu0 %v2519
      %v2731 = vpop.f32.mrb[0].mxu0
      %v2732 = vadd.f32 0.0, %v2731
      %v2733 = vpop.f32.mrb[0].mxu0
      %v2734 = vadd.f32 0.0, %v2733
      %2735 = vmatprep.mubr.f32.mxu0 0.0
      %2736 = vmatmul.mubr.f32.gmra.mrb[0].mxu0 %v2522
      %v2737 = vpop.f32.mrb[0].mxu0
      %v2738 = vadd.f32 0.0, %v2737
      %v2739 = vpop.f32.mrb[0].mxu0
      %v2740 = vadd.f32 0.0, %v2739
      %2741 = vmatprep.mubr.f32.mxu0 0.0
      %2742 = vmatmul.mubr.f32.gmra.mrb[0].mxu0 %v2525
      %v2743 = vpop.f32.mrb[0].mxu0
      %v2744 = vadd.f32 0.0, %v2743
      %v2745 = vpop.f32.mrb[0].mxu0
      %v2746 = vadd.f32 0.0, %v2745
      %2747 = vmatprep.mubr.f32.mxu0 0.0
      %2748 = vmatmul.mubr.f32.gmra.mrb[0].mxu0 %v2528
      %v2749 = vpop.f32.mrb[0].mxu0
      %v2750 = vadd.f32 0.0, %v2749
      %v2751 = vpop.f32.mrb[0].mxu0
      %v2752 = vadd.f32 0.0, %v2751
      %2753 = vmatprep.mubr.f32.mxu0 0.0
      %2754 = vmatmul.mubr.f32.gmra.mrb[0].mxu0 %v2531
      %v2755 = vpop.f32.mrb[0].mxu0
      %v2756 = vadd.f32 0.0, %v2755
      %v2757 = vpop.f32.mrb[0].mxu0
      %v2758 = vadd.f32 0.0, %v2757
      %2759 = vmatprep.mubr.f32.mxu0 0.0
      %2760 = vmatmul.mubr.f32.gmra.mrb[0].mxu0 %v2534
      %v2761 = vpop.f32.mrb[0].mxu0
      %v2762 = vadd.f32 0.0, %v2761
      %v2763 = vpop.f32.mrb[0].mxu0
      %v2764 = vadd.f32 0.0, %v2763
      %2765 = vmatprep.mubr.f32.mxu0 0.0
      %2766 = vmatmul.mubr.f32.gmra.mrb[0].mxu0 %v2537
      %v2767 = vpop.f32.mrb[0].mxu0
      %v2768 = vadd.f32 0.0, %v2767
      %v2769 = vpop.f32.mrb[0].mxu0
      %v2770 = vadd.f32 0.0, %v2769
      %2771 = vmatprep.mubr.f32.mxu0 0.0
      %2772 = vmatmul.mubr.f32.gmra.mrb[0].mxu0 %v2540
      %v2773 = vpop.f32.mrb[0].mxu0
      %v2774 = vadd.f32 0.0, %v2773
      %v2775 = vpop.f32.mrb[0].mxu0
      %v2776 = vadd.f32 0.0, %v2775
      %2777 = vmatprep.mubr.f32.mxu0 0.0
      %2778 = vmatmul.mubr.f32.gmra.mrb[0].mxu0 %v2543
      %v2779 = vpop.f32.mrb[0].mxu0
      %v2780 = vadd.f32 0.0, %v2779
      %v2781 = vpop.f32.mrb[0].mxu0
      %v2782 = vadd.f32 0.0, %v2781
      %2783 = vmatprep.mubr.f32.mxu0 0.0
      %2784 = vmatmul.mubr.f32.gmra.mrb[0].mxu0 %v2546
      %v2785 = vpop.f32.mrb[0].mxu0
      %v2786 = vadd.f32 0.0, %v2785
      %v2787 = vpop.f32.mrb[0].mxu0
      %v2788 = vadd.f32 0.0, %v2787
      %2789 = vmatprep.mubr.f32.mxu0 0.0
      %2790 = vmatmul.mubr.f32.gmra.mrb[0].mxu0 %v2549
      %v2791 = vpop.f32.mrb[0].mxu0
      %v2792 = vadd.f32 0.0, %v2791
      %v2793 = vpop.f32.mrb[0].mxu0
      %v2794 = vadd.f32 0.0, %v2793
      %2795 = vmatprep.mubr.f32.mxu0 0.0
      %2796 = vmatmul.mubr.f32.gmra.mrb[0].mxu0 %v2552
      %v2797 = vpop.f32.mrb[0].mxu0
      %v2798 = vadd.f32 0.0, %v2797
      %v2799 = vpop.f32.mrb[0].mxu0
      %v2800 = vadd.f32 0.0, %v2799
      %2801 = vmatprep.mubr.f32.mxu0 0.0
      %2802 = vmatmul.mubr.f32.gmra.mrb[0].mxu0 %v2555
      %v2803 = vpop.f32.mrb[0].mxu0
      %v2804 = vadd.f32 0.0, %v2803
      %v2805 = vpop.f32.mrb[0].mxu0
      %v2806 = vadd.f32 0.0, %v2805
      %2807 = vmatprep.mubr.f32.mxu0 0.0
      %2808 = vmatmul.mubr.f32.gmra.mrb[0].mxu0 %v2558
      %v2809 = vpop.f32.mrb[0].mxu0
      %v2810 = vadd.f32 0.0, %v2809
      %v2811 = vpop.f32.mrb[0].mxu0
      %v2812 = vadd.f32 0.0, %v2811
      %2813 = vmatprep.mubr.f32.mxu0 0.0
      %2814 = vmatmul.mubr.f32.gmra.mrb[0].mxu0 %v2561
      %v2815 = vpop.f32.mrb[0].mxu0
      %v2816 = vadd.f32 0.0, %v2815
      %v2817 = vpop.f32.mrb[0].mxu0
      %v2818 = vadd.f32 0.0, %v2817
      %2819 = vmatprep.mubr.f32.mxu0 0.0
      %2820 = vmatmul.mubr.f32.gmra.mrb[0].mxu0 %v2564
      %v2821 = vpop.f32.mrb[0].mxu0
      %v2822 = vadd.f32 0.0, %v2821
      %v2823 = vpop.f32.mrb[0].mxu0
      %v2824 = vadd.f32 0.0, %v2823
      %2825 = vdwg.mxu0
      %2826 = vmatprep.subr.mxu0 %v2433
      %2827 = vmatpush1.msra.mxu0 %v2432
      %2828 = vmatprep.subr.mxu0 %v2440
      %2829 = vmatpush1.msra.mxu0 %v2439
      %2830 = vmatprep.subr.mxu0 %v2447
      %2831 = vmatpush1.msra.mxu0 %v2446
      %2832 = vmatprep.subr.mxu0 %v2454
      %2833 = vmatpush1.msra.mxu0 %v2453
      %2834 = vmatprep.subr.mxu0 %v2461
      %2835 = vmatpush1.msra.mxu0 %v2460
      %2836 = vmatprep.subr.mxu0 %v2468
      %2837 = vmatpush1.msra.mxu0 %v2467
      %2838 = vmatprep.subr.mxu0 %v2576
      %2839 = vmatpush1.msra.mxu0 %v2573
      %2840 = vmatprep.subr.mxu0 0.0
      %2841 = vmatpush1.msra.mxu0 0.0
      %2842 = vmatprep.subr.mxu0 0.0
      %2843 = vmatpush1.msra.mxu0 0.0
      %2844 = vmatprep.subr.mxu0 0.0
      %2845 = vmatpush1.msra.mxu0 0.0
      %2846 = vmatprep.subr.mxu0 0.0
      %2847 = vmatpush1.msra.mxu0 0.0
      %2848 = vmatprep.subr.mxu0 0.0
      %2849 = vmatpush1.msra.mxu0 0.0
      %2850 = vmatprep.subr.mxu0 0.0
      %2851 = vmatpush1.msra.mxu0 0.0
      %2852 = vmatprep.subr.mxu0 0.0
      %2853 = vmatpush1.msra.mxu0 0.0
      %2854 = vmatprep.subr.mxu0 0.0
      %2855 = vmatpush1.msra.mxu0 0.0
      %2856 = vmatprep.subr.mxu0 0.0
      %2857 = vmatpush1.msra.mxu0 0.0
      %2858 = vmatprep.subr.mxu0 0.0
      %2859 = vmatpush1.msra.mxu0 0.0
      %2860 = vmatprep.subr.mxu0 0.0
      %2861 = vmatpush1.msra.mxu0 0.0
      %2862 = vmatprep.subr.mxu0 0.0
      %2863 = vmatpush1.msra.mxu0 0.0
      %2864 = vmatprep.subr.mxu0 0.0
      %2865 = vmatpush1.msra.mxu0 0.0
      %2866 = vmatprep.subr.mxu0 0.0
      %2867 = vmatpush1.msra.mxu0 0.0
      %2868 = vmatprep.subr.mxu0 0.0
      %2869 = vmatpush1.msra.mxu0 0.0
      %2870 = vmatprep.subr.mxu0 0.0
      %2871 = vmatpush1.msra.mxu0 0.0
      %2872 = vmatprep.subr.mxu0 0.0
      %2873 = vmatpush1.msra.mxu0 0.0
      %2874 = vmatprep.subr.mxu0 0.0
      %2875 = vmatpush1.msra.mxu0 0.0
      %2876 = vmatprep.subr.mxu0 0.0
      %2877 = vmatpush1.msra.mxu0 0.0
      %2878 = vmatprep.subr.mxu0 0.0
      %2879 = vmatpush1.msra.mxu0 0.0
      %2880 = vmatprep.subr.mxu0 0.0
      %2881 = vmatpush1.msra.mxu0 0.0
      %2882 = vmatprep.subr.mxu0 0.0
      %2883 = vmatpush1.msra.mxu0 0.0
      %2884 = vmatprep.subr.mxu0 0.0
      %2885 = vmatpush1.msra.mxu0 0.0
      %2886 = vmatprep.subr.mxu0 0.0
      %2887 = vmatpush1.msra.mxu0 0.0
      %2888 = vmatprep.subr.mxu0 0.0
      %2889 = vmatpush1.msra.mxu0 0.0
      %2890 = vmatprep.mubr.f32.mxu0 0.0
      %2891 = vmatmul.mubr.f32.gmra.mrb[0].mxu0 %v2480
      %v2892 = vpop.f32.mrb[0].mxu0
      %v2893 = vadd.f32 0.0, %v2892
      %v2894 = vpop.f32.mrb[0].mxu0
      %v2895 = vadd.f32 0.0, %v2894
      %2896 = vmatprep.mubr.f32.mxu0 0.0
      %2897 = vmatmul.mubr.f32.gmra.mrb[0].mxu0 %v2483
      %v2898 = vpop.f32.mrb[0].mxu0
      %v2899 = vadd.f32 0.0, %v2898
      %v2900 = vpop.f32.mrb[0].mxu0
      %v2901 = vadd.f32 0.0, %v2900
      %2902 = vmatprep.mubr.f32.mxu0 0.0
      %2903 = vmatmul.mubr.f32.gmra.mrb[0].mxu0 %v2486
      %v2904 = vpop.f32.mrb[0].mxu0
      %v2905 = vadd.f32 0.0, %v2904
      %v2906 = vpop.f32.mrb[0].mxu0
      %v2907 = vadd.f32 0.0, %v2906
      %2908 = vmatprep.mubr.f32.mxu0 0.0
      %2909 = vmatmul.mubr.f32.gmra.mrb[0].mxu0 %v2489
      %v2910 = vpop.f32.mrb[0].mxu0
      %v2911 = vadd.f32 0.0, %v2910
      %v2912 = vpop.f32.mrb[0].mxu0
      %v2913 = vadd.f32 0.0, %v2912
      %2914 = vmatprep.mubr.f32.mxu0 0.0
      %2915 = vmatmul.mubr.f32.gmra.mrb[0].mxu0 %v2492
      %v2916 = vpop.f32.mrb[0].mxu0
      %v2917 = vadd.f32 0.0, %v2916
      %v2918 = vpop.f32.mrb[0].mxu0
      %v2919 = vadd.f32 0.0, %v2918
      %2920 = vmatprep.mubr.f32.mxu0 0.0
      %2921 = vmatmul.mubr.f32.gmra.mrb[0].mxu0 %v2495
      %v2922 = vpop.f32.mrb[0].mxu0
      %v2923 = vadd.f32 0.0, %v2922
      %v2924 = vpop.f32.mrb[0].mxu0
      %v2925 = vadd.f32 0.0, %v2924
      %2926 = vmatprep.mubr.f32.mxu0 0.0
      %2927 = vmatmul.mubr.f32.gmra.mrb[0].mxu0 %v2498
      %v2928 = vpop.f32.mrb[0].mxu0
      %v2929 = vadd.f32 0.0, %v2928
      %v2930 = vpop.f32.mrb[0].mxu0
      %v2931 = vadd.f32 0.0, %v2930
      %2932 = vmatprep.mubr.f32.mxu0 0.0
      %2933 = vmatmul.mubr.f32.gmra.mrb[0].mxu0 %v2501
      %v2934 = vpop.f32.mrb[0].mxu0
      %v2935 = vadd.f32 0.0, %v2934
      %v2936 = vpop.f32.mrb[0].mxu0
      %v2937 = vadd.f32 0.0, %v2936
      %2938 = vmatprep.mubr.f32.mxu0 0.0
      %2939 = vmatmul.mubr.f32.gmra.mrb[0].mxu0 %v2504
      %v2940 = vpop.f32.mrb[0].mxu0
      %v2941 = vadd.f32 0.0, %v2940
      %v2942 = vpop.f32.mrb[0].mxu0
      %v2943 = vadd.f32 0.0, %v2942
      %2944 = vmatprep.mubr.f32.mxu0 0.0
      %2945 = vmatmul.mubr.f32.gmra.mrb[0].mxu0 %v2507
      %v2946 = vpop.f32.mrb[0].mxu0
      %v2947 = vadd.f32 0.0, %v2946
      %v2948 = vpop.f32.mrb[0].mxu0
      %v2949 = vadd.f32 0.0, %v2948
      %2950 = vmatprep.mubr.f32.mxu0 0.0
      %2951 = vmatmul.mubr.f32.gmra.mrb[0].mxu0 %v2510
      %v2952 = vpop.f32.mrb[0].mxu0
      %v2953 = vadd.f32 0.0, %v2952
      %v2954 = vpop.f32.mrb[0].mxu0
      %v2955 = vadd.f32 0.0, %v2954
      %2956 = vmatprep.mubr.f32.mxu0 0.0
      %2957 = vmatmul.mubr.f32.gmra.mrb[0].mxu0 %v2513
      %v2958 = vpop.f32.mrb[0].mxu0
      %v2959 = vadd.f32 0.0, %v2958
      %v2960 = vpop.f32.mrb[0].mxu0
      %v2961 = vadd.f32 0.0, %v2960
      %2962 = vmatprep.mubr.f32.mxu0 0.0
      %2963 = vmatmul.mubr.f32.gmra.mrb[0].mxu0 %v2516
      %v2964 = vpop.f32.mrb[0].mxu0
      %v2965 = vadd.f32 0.0, %v2964
      %v2966 = vpop.f32.mrb[0].mxu0
      %v2967 = vadd.f32 0.0, %v2966
      %2968 = vmatprep.mubr.f32.mxu0 0.0
      %2969 = vmatmul.mubr.f32.gmra.mrb[0].mxu0 %v2519
      %v2970 = vpop.f32.mrb[0].mxu0
      %v2971 = vadd.f32 0.0, %v2970
      %v2972 = vpop.f32.mrb[0].mxu0
      %v2973 = vadd.f32 0.0, %v2972
      %2974 = vmatprep.mubr.f32.mxu0 0.0
      %2975 = vmatmul.mubr.f32.gmra.mrb[0].mxu0 %v2522
      %v2976 = vpop.f32.mrb[0].mxu0
      %v2977 = vadd.f32 0.0, %v2976
      %v2978 = vpop.f32.mrb[0].mxu0
      %v2979 = vadd.f32 0.0, %v2978
      %2980 = vmatprep.mubr.f32.mxu0 0.0
      %2981 = vmatmul.mubr.f32.gmra.mrb[0].mxu0 %v2525
      %v2982 = vpop.f32.mrb[0].mxu0
      %v2983 = vadd.f32 0.0, %v2982
      %v2984 = vpop.f32.mrb[0].mxu0
      %v2985 = vadd.f32 0.0, %v2984
      %2986 = vmatprep.mubr.f32.mxu0 0.0
      %2987 = vmatmul.mubr.f32.gmra.mrb[0].mxu0 %v2528
      %v2988 = vpop.f32.mrb[0].mxu0
      %v2989 = vadd.f32 0.0, %v2988
      %v2990 = vpop.f32.mrb[0].mxu0
      %v2991 = vadd.f32 0.0, %v2990
      %2992 = vmatprep.mubr.f32.mxu0 0.0
      %2993 = vmatmul.mubr.f32.gmra.mrb[0].mxu0 %v2531
      %v2994 = vpop.f32.mrb[0].mxu0
      %v2995 = vadd.f32 0.0, %v2994
      %v2996 = vpop.f32.mrb[0].mxu0
      %v2997 = vadd.f32 0.0, %v2996
      %2998 = vmatprep.mubr.f32.mxu0 0.0
      %2999 = vmatmul.mubr.f32.gmra.mrb[0].mxu0 %v2534
      %v3000 = vpop.f32.mrb[0].mxu0
      %v3001 = vadd.f32 0.0, %v3000
      %v3002 = vpop.f32.mrb[0].mxu0
      %v3003 = vadd.f32 0.0, %v3002
      %3004 = vmatprep.mubr.f32.mxu0 0.0
      %3005 = vmatmul.mubr.f32.gmra.mrb[0].mxu0 %v2537
      %v3006 = vpop.f32.mrb[0].mxu0
      %v3007 = vadd.f32 0.0, %v3006
      %v3008 = vpop.f32.mrb[0].mxu0
      %v3009 = vadd.f32 0.0, %v3008
      %3010 = vmatprep.mubr.f32.mxu0 0.0
      %3011 = vmatmul.mubr.f32.gmra.mrb[0].mxu0 %v2540
      %v3012 = vpop.f32.mrb[0].mxu0
      %v3013 = vadd.f32 0.0, %v3012
      %v3014 = vpop.f32.mrb[0].mxu0
      %v3015 = vadd.f32 0.0, %v3014
      %3016 = vmatprep.mubr.f32.mxu0 0.0
      %3017 = vmatmul.mubr.f32.gmra.mrb[0].mxu0 %v2543
      %v3018 = vpop.f32.mrb[0].mxu0
      %v3019 = vadd.f32 0.0, %v3018
      %v3020 = vpop.f32.mrb[0].mxu0
      %v3021 = vadd.f32 0.0, %v3020
      %3022 = vmatprep.mubr.f32.mxu0 0.0
      %3023 = vmatmul.mubr.f32.gmra.mrb[0].mxu0 %v2546
      %v3024 = vpop.f32.mrb[0].mxu0
      %v3025 = vadd.f32 0.0, %v3024
      %v3026 = vpop.f32.mrb[0].mxu0
      %v3027 = vadd.f32 0.0, %v3026
      %3028 = vmatprep.mubr.f32.mxu0 0.0
      %3029 = vmatmul.mubr.f32.gmra.mrb[0].mxu0 %v2549
      %v3030 = vpop.f32.mrb[0].mxu0
      %v3031 = vadd.f32 0.0, %v3030
      %v3032 = vpop.f32.mrb[0].mxu0
      %v3033 = vadd.f32 0.0, %v3032
      %3034 = vmatprep.mubr.f32.mxu0 0.0
      %3035 = vmatmul.mubr.f32.gmra.mrb[0].mxu0 %v2552
      %v3036 = vpop.f32.mrb[0].mxu0
      %v3037 = vadd.f32 0.0, %v3036
      %v3038 = vpop.f32.mrb[0].mxu0
      %v3039 = vadd.f32 0.0, %v3038
      %3040 = vmatprep.mubr.f32.mxu0 0.0
      %3041 = vmatmul.mubr.f32.gmra.mrb[0].mxu0 %v2555
      %v3042 = vpop.f32.mrb[0].mxu0
      %v3043 = vadd.f32 0.0, %v3042
      %v3044 = vpop.f32.mrb[0].mxu0
      %v3045 = vadd.f32 0.0, %v3044
      %3046 = vmatprep.mubr.f32.mxu0 0.0
      %3047 = vmatmul.mubr.f32.gmra.mrb[0].mxu0 %v2558
      %v3048 = vpop.f32.mrb[0].mxu0
      %v3049 = vadd.f32 0.0, %v3048
      %v3050 = vpop.f32.mrb[0].mxu0
      %v3051 = vadd.f32 0.0, %v3050
      %3052 = vmatprep.mubr.f32.mxu0 0.0
      %3053 = vmatmul.mubr.f32.gmra.mrb[0].mxu0 %v2561
      %v3054 = vpop.f32.mrb[0].mxu0
      %v3055 = vadd.f32 0.0, %v3054
      %v3056 = vpop.f32.mrb[0].mxu0
      %v3057 = vadd.f32 0.0, %v3056
      %3058 = vmatprep.mubr.f32.mxu0 0.0
      %3059 = vmatmul.mubr.f32.gmra.mrb[0].mxu0 %v2564
      %v3060 = vpop.f32.mrb[0].mxu0
      %v3061 = vadd.f32 0.0, %v3060
      %v3062 = vpop.f32.mrb[0].mxu0
      %v3063 = vadd.f32 0.0, %v3062
      %3064 = vdwg.mxu0
      %3065 = vmatprep.subr.mxu0 %v2435
      %3066 = vmatpush1.msra.mxu0 %v2434
      %3067 = vmatprep.subr.mxu0 %v2442
      %3068 = vmatpush1.msra.mxu0 %v2441
      %3069 = vmatprep.subr.mxu0 %v2449
      %3070 = vmatpush1.msra.mxu0 %v2448
      %3071 = vmatprep.subr.mxu0 %v2456
      %3072 = vmatpush1.msra.mxu0 %v2455
      %3073 = vmatprep.subr.mxu0 %v2463
      %3074 = vmatpush1.msra.mxu0 %v2462
      %3075 = vmatprep.subr.mxu0 %v2470
      %3076 = vmatpush1.msra.mxu0 %v2469
      %3077 = vmatprep.subr.mxu0 %v2582
      %3078 = vmatpush1.msra.mxu0 %v2579
      %3079 = vmatprep.subr.mxu0 0.0
      %3080 = vmatpush1.msra.mxu0 0.0
      %3081 = vmatprep.subr.mxu0 0.0
      %3082 = vmatpush1.msra.mxu0 0.0
      %3083 = vmatprep.subr.mxu0 0.0
      %3084 = vmatpush1.msra.mxu0 0.0
      %3085 = vmatprep.subr.mxu0 0.0
      %3086 = vmatpush1.msra.mxu0 0.0
      %3087 = vmatprep.subr.mxu0 0.0
      %3088 = vmatpush1.msra.mxu0 0.0
      %3089 = vmatprep.subr.mxu0 0.0
      %3090 = vmatpush1.msra.mxu0 0.0
      %3091 = vmatprep.subr.mxu0 0.0
      %3092 = vmatpush1.msra.mxu0 0.0
      %3093 = vmatprep.subr.mxu0 0.0
      %3094 = vmatpush1.msra.mxu0 0.0
      %3095 = vmatprep.subr.mxu0 0.0
      %3096 = vmatpush1.msra.mxu0 0.0
      %3097 = vmatprep.subr.mxu0 0.0
      %3098 = vmatpush1.msra.mxu0 0.0
      %3099 = vmatprep.subr.mxu0 0.0
      %3100 = vmatpush1.msra.mxu0 0.0
      %3101 = vmatprep.subr.mxu0 0.0
      %3102 = vmatpush1.msra.mxu0 0.0
      %3103 = vmatprep.subr.mxu0 0.0
      %3104 = vmatpush1.msra.mxu0 0.0
      %3105 = vmatprep.subr.mxu0 0.0
      %3106 = vmatpush1.msra.mxu0 0.0
      %3107 = vmatprep.subr.mxu0 0.0
      %3108 = vmatpush1.msra.mxu0 0.0
      %3109 = vmatprep.subr.mxu0 0.0
      %3110 = vmatpush1.msra.mxu0 0.0
      %3111 = vmatprep.subr.mxu0 0.0
      %3112 = vmatpush1.msra.mxu0 0.0
      %3113 = vmatprep.subr.mxu0 0.0
      %3114 = vmatpush1.msra.mxu0 0.0
      %3115 = vmatprep.subr.mxu0 0.0
      %3116 = vmatpush1.msra.mxu0 0.0
      %3117 = vmatprep.subr.mxu0 0.0
      %3118 = vmatpush1.msra.mxu0 0.0
      %3119 = vmatprep.subr.mxu0 0.0
      %3120 = vmatpush1.msra.mxu0 0.0
      %3121 = vmatprep.subr.mxu0 0.0
      %3122 = vmatpush1.msra.mxu0 0.0
      %3123 = vmatprep.subr.mxu0 0.0
      %3124 = vmatpush1.msra.mxu0 0.0
      %3125 = vmatprep.subr.mxu0 0.0
      %3126 = vmatpush1.msra.mxu0 0.0
      %3127 = vmatprep.subr.mxu0 0.0
      %3128 = vmatpush1.msra.mxu0 0.0
      %3129 = vmatprep.mubr.f32.mxu0 0.0
      %3130 = vmatmul.mubr.f32.gmra.mrb[0].mxu0 %v2480
      %v3131 = vpop.f32.mrb[0].mxu0
      %v3132 = vadd.f32 0.0, %v3131
      %v3133 = vpop.f32.mrb[0].mxu0
      %v3134 = vadd.f32 0.0, %v3133
      %3135 = vmatprep.mubr.f32.mxu0 0.0
      %3136 = vmatmul.mubr.f32.gmra.mrb[0].mxu0 %v2483
      %v3137 = vpop.f32.mrb[0].mxu0
      %v3138 = vadd.f32 0.0, %v3137
      %v3139 = vpop.f32.mrb[0].mxu0
      %v3140 = vadd.f32 0.0, %v3139
      %3141 = vmatprep.mubr.f32.mxu0 0.0
      %3142 = vmatmul.mubr.f32.gmra.mrb[0].mxu0 %v2486
      %v3143 = vpop.f32.mrb[0].mxu0
      %v3144 = vadd.f32 0.0, %v3143
      %v3145 = vpop.f32.mrb[0].mxu0
      %v3146 = vadd.f32 0.0, %v3145
      %3147 = vmatprep.mubr.f32.mxu0 0.0
      %3148 = vmatmul.mubr.f32.gmra.mrb[0].mxu0 %v2489
      %v3149 = vpop.f32.mrb[0].mxu0
      %v3150 = vadd.f32 0.0, %v3149
      %v3151 = vpop.f32.mrb[0].mxu0
      %v3152 = vadd.f32 0.0, %v3151
      %3153 = vmatprep.mubr.f32.mxu0 0.0
      %3154 = vmatmul.mubr.f32.gmra.mrb[0].mxu0 %v2492
      %v3155 = vpop.f32.mrb[0].mxu0
      %v3156 = vadd.f32 0.0, %v3155
      %v3157 = vpop.f32.mrb[0].mxu0
      %v3158 = vadd.f32 0.0, %v3157
      %3159 = vmatprep.mubr.f32.mxu0 0.0
      %3160 = vmatmul.mubr.f32.gmra.mrb[0].mxu0 %v2495
      %v3161 = vpop.f32.mrb[0].mxu0
      %v3162 = vadd.f32 0.0, %v3161
      %v3163 = vpop.f32.mrb[0].mxu0
      %v3164 = vadd.f32 0.0, %v3163
      %3165 = vmatprep.mubr.f32.mxu0 0.0
      %3166 = vmatmul.mubr.f32.gmra.mrb[0].mxu0 %v2498
      %v3167 = vpop.f32.mrb[0].mxu0
      %v3168 = vadd.f32 0.0, %v3167
      %v3169 = vpop.f32.mrb[0].mxu0
      %v3170 = vadd.f32 0.0, %v3169
      %3171 = vmatprep.mubr.f32.mxu0 0.0
      %3172 = vmatmul.mubr.f32.gmra.mrb[0].mxu0 %v2501
      %v3173 = vpop.f32.mrb[0].mxu0
      %v3174 = vadd.f32 0.0, %v3173
      %v3175 = vpop.f32.mrb[0].mxu0
      %v3176 = vadd.f32 0.0, %v3175
      %3177 = vmatprep.mubr.f32.mxu0 0.0
      %3178 = vmatmul.mubr.f32.gmra.mrb[0].mxu0 %v2504
      %v3179 = vpop.f32.mrb[0].mxu0
      %v3180 = vadd.f32 0.0, %v3179
      %v3181 = vpop.f32.mrb[0].mxu0
      %v3182 = vadd.f32 0.0, %v3181
      %3183 = vmatprep.mubr.f32.mxu0 0.0
      %3184 = vmatmul.mubr.f32.gmra.mrb[0].mxu0 %v2507
      %v3185 = vpop.f32.mrb[0].mxu0
      %v3186 = vadd.f32 0.0, %v3185
      %v3187 = vpop.f32.mrb[0].mxu0
      %v3188 = vadd.f32 0.0, %v3187
      %3189 = vmatprep.mubr.f32.mxu0 0.0
      %3190 = vmatmul.mubr.f32.gmra.mrb[0].mxu0 %v2510
      %v3191 = vpop.f32.mrb[0].mxu0
      %v3192 = vadd.f32 0.0, %v3191
      %v3193 = vpop.f32.mrb[0].mxu0
      %v3194 = vadd.f32 0.0, %v3193
      %3195 = vmatprep.mubr.f32.mxu0 0.0
      %3196 = vmatmul.mubr.f32.gmra.mrb[0].mxu0 %v2513
      %v3197 = vpop.f32.mrb[0].mxu0
      %v3198 = vadd.f32 0.0, %v3197
      %v3199 = vpop.f32.mrb[0].mxu0
      %v3200 = vadd.f32 0.0, %v3199
      %3201 = vmatprep.mubr.f32.mxu0 0.0
      %3202 = vmatmul.mubr.f32.gmra.mrb[0].mxu0 %v2516
      %v3203 = vpop.f32.mrb[0].mxu0
      %v3204 = vadd.f32 0.0, %v3203
      %v3205 = vpop.f32.mrb[0].mxu0
      %v3206 = vadd.f32 0.0, %v3205
      %3207 = vmatprep.mubr.f32.mxu0 0.0
      %3208 = vmatmul.mubr.f32.gmra.mrb[0].mxu0 %v2519
      %v3209 = vpop.f32.mrb[0].mxu0
      %v3210 = vadd.f32 0.0, %v3209
      %v3211 = vpop.f32.mrb[0].mxu0
      %v3212 = vadd.f32 0.0, %v3211
      %3213 = vmatprep.mubr.f32.mxu0 0.0
      %3214 = vmatmul.mubr.f32.gmra.mrb[0].mxu0 %v2522
      %v3215 = vpop.f32.mrb[0].mxu0
      %v3216 = vadd.f32 0.0, %v3215
      %v3217 = vpop.f32.mrb[0].mxu0
      %v3218 = vadd.f32 0.0, %v3217
      %3219 = vmatprep.mubr.f32.mxu0 0.0
      %3220 = vmatmul.mubr.f32.gmra.mrb[0].mxu0 %v2525
      %v3221 = vpop.f32.mrb[0].mxu0
      %v3222 = vadd.f32 0.0, %v3221
      %v3223 = vpop.f32.mrb[0].mxu0
      %v3224 = vadd.f32 0.0, %v3223
      %3225 = vmatprep.mubr.f32.mxu0 0.0
      %3226 = vmatmul.mubr.f32.gmra.mrb[0].mxu0 %v2528
      %v3227 = vpop.f32.mrb[0].mxu0
      %v3228 = vadd.f32 0.0, %v3227
      %v3229 = vpop.f32.mrb[0].mxu0
      %v3230 = vadd.f32 0.0, %v3229
      %3231 = vmatprep.mubr.f32.mxu0 0.0
      %3232 = vmatmul.mubr.f32.gmra.mrb[0].mxu0 %v2531
      %v3233 = vpop.f32.mrb[0].mxu0
      %v3234 = vadd.f32 0.0, %v3233
      %v3235 = vpop.f32.mrb[0].mxu0
      %v3236 = vadd.f32 0.0, %v3235
      %3237 = vmatprep.mubr.f32.mxu0 0.0
      %3238 = vmatmul.mubr.f32.gmra.mrb[0].mxu0 %v2534
      %v3239 = vpop.f32.mrb[0].mxu0
      %v3240 = vadd.f32 0.0, %v3239
      %v3241 = vpop.f32.mrb[0].mxu0
      %v3242 = vadd.f32 0.0, %v3241
      %3243 = vmatprep.mubr.f32.mxu0 0.0
      %3244 = vmatmul.mubr.f32.gmra.mrb[0].mxu0 %v2537
      %v3245 = vpop.f32.mrb[0].mxu0
      %v3246 = vadd.f32 0.0, %v3245
      %v3247 = vpop.f32.mrb[0].mxu0
      %v3248 = vadd.f32 0.0, %v3247
      %3249 = vmatprep.mubr.f32.mxu0 0.0
      %3250 = vmatmul.mubr.f32.gmra.mrb[0].mxu0 %v2540
      %v3251 = vpop.f32.mrb[0].mxu0
      %v3252 = vadd.f32 0.0, %v3251
      %v3253 = vpop.f32.mrb[0].mxu0
      %v3254 = vadd.f32 0.0, %v3253
      %3255 = vmatprep.mubr.f32.mxu0 0.0
      %3256 = vmatmul.mubr.f32.gmra.mrb[0].mxu0 %v2543
      %v3257 = vpop.f32.mrb[0].mxu0
      %v3258 = vadd.f32 0.0, %v3257
      %v3259 = vpop.f32.mrb[0].mxu0
      %v3260 = vadd.f32 0.0, %v3259
      %3261 = vmatprep.mubr.f32.mxu0 0.0
      %3262 = vmatmul.mubr.f32.gmra.mrb[0].mxu0 %v2546
      %v3263 = vpop.f32.mrb[0].mxu0
      %v3264 = vadd.f32 0.0, %v3263
      %v3265 = vpop.f32.mrb[0].mxu0
      %v3266 = vadd.f32 0.0, %v3265
      %3267 = vmatprep.mubr.f32.mxu0 0.0
      %3268 = vmatmul.mubr.f32.gmra.mrb[0].mxu0 %v2549
      %v3269 = vpop.f32.mrb[0].mxu0
      %v3270 = vadd.f32 0.0, %v3269
      %v3271 = vpop.f32.mrb[0].mxu0
      %v3272 = vadd.f32 0.0, %v3271
      %3273 = vmatprep.mubr.f32.mxu0 0.0
      %3274 = vmatmul.mubr.f32.gmra.mrb[0].mxu0 %v2552
      %v3275 = vpop.f32.mrb[0].mxu0
      %v3276 = vadd.f32 0.0, %v3275
      %v3277 = vpop.f32.mrb[0].mxu0
      %v3278 = vadd.f32 0.0, %v3277
      %3279 = vmatprep.mubr.f32.mxu0 0.0
      %3280 = vmatmul.mubr.f32.gmra.mrb[0].mxu0 %v2555
      %v3281 = vpop.f32.mrb[0].mxu0
      %v3282 = vadd.f32 0.0, %v3281
      %v3283 = vpop.f32.mrb[0].mxu0
      %v3284 = vadd.f32 0.0, %v3283
      %3285 = vmatprep.mubr.f32.mxu0 0.0
      %3286 = vmatmul.mubr.f32.gmra.mrb[0].mxu0 %v2558
      %v3287 = vpop.f32.mrb[0].mxu0
      %v3288 = vadd.f32 0.0, %v3287
      %v3289 = vpop.f32.mrb[0].mxu0
      %v3290 = vadd.f32 0.0, %v3289
      %3291 = vmatprep.mubr.f32.mxu0 0.0
      %3292 = vmatmul.mubr.f32.gmra.mrb[0].mxu0 %v2561
      %v3293 = vpop.f32.mrb[0].mxu0
      %v3294 = vadd.f32 0.0, %v3293
      %v3295 = vpop.f32.mrb[0].mxu0
      %v3296 = vadd.f32 0.0, %v3295
      %3297 = vmatprep.mubr.f32.mxu0 0.0
      %3298 = vmatmul.mubr.f32.gmra.mrb[0].mxu0 %v2564
      %v3299 = vpop.f32.mrb[0].mxu0
      %v3300 = vadd.f32 0.0, %v3299
      %v3301 = vpop.f32.mrb[0].mxu0
      %v3302 = vadd.f32 0.0, %v3301
      %3303 = vdwg.mxu0
      %3304 = vmatprep.subr.mxu0 0.0
      %3305 = vmatpush1.msra.mxu0 %v2436
      %3306 = vmatprep.subr.mxu0 0.0
      %3307 = vmatpush1.msra.mxu0 %v2443
      %3308 = vmatprep.subr.mxu0 0.0
      %3309 = vmatpush1.msra.mxu0 %v2450
      %3310 = vmatprep.subr.mxu0 0.0
      %3311 = vmatpush1.msra.mxu0 %v2457
      %3312 = vmatprep.subr.mxu0 0.0
      %3313 = vmatpush1.msra.mxu0 %v2464
      %3314 = vmatprep.subr.mxu0 0.0
      %3315 = vmatpush1.msra.mxu0 %v2471
      %3316 = vmatprep.subr.mxu0 0.0
      %3317 = vmatpush1.msra.mxu0 %v2585
      %3318 = vmatprep.subr.mxu0 0.0
      %3319 = vmatpush1.msra.mxu0 0.0
      %3320 = vmatprep.subr.mxu0 0.0
      %3321 = vmatpush1.msra.mxu0 0.0
      %3322 = vmatprep.subr.mxu0 0.0
      %3323 = vmatpush1.msra.mxu0 0.0
      %3324 = vmatprep.subr.mxu0 0.0
      %3325 = vmatpush1.msra.mxu0 0.0
      %3326 = vmatprep.subr.mxu0 0.0
      %3327 = vmatpush1.msra.mxu0 0.0
      %3328 = vmatprep.subr.mxu0 0.0
      %3329 = vmatpush1.msra.mxu0 0.0
      %3330 = vmatprep.subr.mxu0 0.0
      %3331 = vmatpush1.msra.mxu0 0.0
      %3332 = vmatprep.subr.mxu0 0.0
      %3333 = vmatpush1.msra.mxu0 0.0
      %3334 = vmatprep.subr.mxu0 0.0
      %3335 = vmatpush1.msra.mxu0 0.0
      %3336 = vmatprep.subr.mxu0 0.0
      %3337 = vmatpush1.msra.mxu0 0.0
      %3338 = vmatprep.subr.mxu0 0.0
      %3339 = vmatpush1.msra.mxu0 0.0
      %3340 = vmatprep.subr.mxu0 0.0
      %3341 = vmatpush1.msra.mxu0 0.0
      %3342 = vmatprep.subr.mxu0 0.0
      %3343 = vmatpush1.msra.mxu0 0.0
      %3344 = vmatprep.subr.mxu0 0.0
      %3345 = vmatpush1.msra.mxu0 0.0
      %3346 = vmatprep.subr.mxu0 0.0
      %3347 = vmatpush1.msra.mxu0 0.0
      %3348 = vmatprep.subr.mxu0 0.0
      %3349 = vmatpush1.msra.mxu0 0.0
      %3350 = vmatprep.subr.mxu0 0.0
      %3351 = vmatpush1.msra.mxu0 0.0
      %3352 = vmatprep.subr.mxu0 0.0
      %3353 = vmatpush1.msra.mxu0 0.0
      %3354 = vmatprep.subr.mxu0 0.0
      %3355 = vmatpush1.msra.mxu0 0.0
      %3356 = vmatprep.subr.mxu0 0.0
      %3357 = vmatpush1.msra.mxu0 0.0
      %3358 = vmatprep.subr.mxu0 0.0
      %3359 = vmatpush1.msra.mxu0 0.0
      %3360 = vmatprep.subr.mxu0 0.0
      %3361 = vmatpush1.msra.mxu0 0.0
      %3362 = vmatprep.subr.mxu0 0.0
      %3363 = vmatpush1.msra.mxu0 0.0
      %3364 = vmatprep.subr.mxu0 0.0
      %3365 = vmatpush1.msra.mxu0 0.0
      %3366 = vmatprep.subr.mxu0 0.0
      %3367 = vmatpush1.msra.mxu0 0.0
      %3368 = vmatprep.mubr.f32.mxu0 0.0
      %3369 = vmatmul.mubr.f32.gmra.mrb[0].mxu0 %v2480
      %v3370 = vpop.f32.mrb[0].mxu0
      %v3371 = vadd.f32 0.0, %v3370
      %v3372 = vpop.f32.mrb[0].mxu0
      %3373 = vmatprep.mubr.f32.mxu0 0.0
      %3374 = vmatmul.mubr.f32.gmra.mrb[0].mxu0 %v2483
      %v3375 = vpop.f32.mrb[0].mxu0
      %v3376 = vadd.f32 0.0, %v3375
      %v3377 = vpop.f32.mrb[0].mxu0
      %3378 = vmatprep.mubr.f32.mxu0 0.0
      %3379 = vmatmul.mubr.f32.gmra.mrb[0].mxu0 %v2486
      %v3380 = vpop.f32.mrb[0].mxu0
      %v3381 = vadd.f32 0.0, %v3380
      %v3382 = vpop.f32.mrb[0].mxu0
      %3383 = vmatprep.mubr.f32.mxu0 0.0
      %3384 = vmatmul.mubr.f32.gmra.mrb[0].mxu0 %v2489
      %v3385 = vpop.f32.mrb[0].mxu0
      %v3386 = vadd.f32 0.0, %v3385
      %v3387 = vpop.f32.mrb[0].mxu0
      %3388 = vmatprep.mubr.f32.mxu0 0.0
      %3389 = vmatmul.mubr.f32.gmra.mrb[0].mxu0 %v2492
      %v3390 = vpop.f32.mrb[0].mxu0
      %v3391 = vadd.f32 0.0, %v3390
      %v3392 = vpop.f32.mrb[0].mxu0
      %3393 = vmatprep.mubr.f32.mxu0 0.0
      %3394 = vmatmul.mubr.f32.gmra.mrb[0].mxu0 %v2495
      %v3395 = vpop.f32.mrb[0].mxu0
      %v3396 = vadd.f32 0.0, %v3395
      %v3397 = vpop.f32.mrb[0].mxu0
      %3398 = vmatprep.mubr.f32.mxu0 0.0
      %3399 = vmatmul.mubr.f32.gmra.mrb[0].mxu0 %v2498
      %v3400 = vpop.f32.mrb[0].mxu0
      %v3401 = vadd.f32 0.0, %v3400
      %v3402 = vpop.f32.mrb[0].mxu0
      %3403 = vmatprep.mubr.f32.mxu0 0.0
      %3404 = vmatmul.mubr.f32.gmra.mrb[0].mxu0 %v2501
      %v3405 = vpop.f32.mrb[0].mxu0
      %v3406 = vadd.f32 0.0, %v3405
      %v3407 = vpop.f32.mrb[0].mxu0
      %3408 = vmatprep.mubr.f32.mxu0 0.0
      %3409 = vmatmul.mubr.f32.gmra.mrb[0].mxu0 %v2504
      %v3410 = vpop.f32.mrb[0].mxu0
      %v3411 = vadd.f32 0.0, %v3410
      %v3412 = vpop.f32.mrb[0].mxu0
      %3413 = vmatprep.mubr.f32.mxu0 0.0
      %3414 = vmatmul.mubr.f32.gmra.mrb[0].mxu0 %v2507
      %v3415 = vpop.f32.mrb[0].mxu0
      %v3416 = vadd.f32 0.0, %v3415
      %v3417 = vpop.f32.mrb[0].mxu0
      %3418 = vmatprep.mubr.f32.mxu0 0.0
      %3419 = vmatmul.mubr.f32.gmra.mrb[0].mxu0 %v2510
      %v3420 = vpop.f32.mrb[0].mxu0
      %v3421 = vadd.f32 0.0, %v3420
      %v3422 = vpop.f32.mrb[0].mxu0
      %3423 = vmatprep.mubr.f32.mxu0 0.0
      %3424 = vmatmul.mubr.f32.gmra.mrb[0].mxu0 %v2513
      %v3425 = vpop.f32.mrb[0].mxu0
      %v3426 = vadd.f32 0.0, %v3425
      %v3427 = vpop.f32.mrb[0].mxu0
      %3428 = vmatprep.mubr.f32.mxu0 0.0
      %3429 = vmatmul.mubr.f32.gmra.mrb[0].mxu0 %v2516
      %v3430 = vpop.f32.mrb[0].mxu0
      %v3431 = vadd.f32 0.0, %v3430
      %v3432 = vpop.f32.mrb[0].mxu0
      %3433 = vmatprep.mubr.f32.mxu0 0.0
      %3434 = vmatmul.mubr.f32.gmra.mrb[0].mxu0 %v2519
      %v3435 = vpop.f32.mrb[0].mxu0
      %v3436 = vadd.f32 0.0, %v3435
      %v3437 = vpop.f32.mrb[0].mxu0
      %3438 = vmatprep.mubr.f32.mxu0 0.0
      %3439 = vmatmul.mubr.f32.gmra.mrb[0].mxu0 %v2522
      %v3440 = vpop.f32.mrb[0].mxu0
      %v3441 = vadd.f32 0.0, %v3440
      %v3442 = vpop.f32.mrb[0].mxu0
      %3443 = vmatprep.mubr.f32.mxu0 0.0
      %3444 = vmatmul.mubr.f32.gmra.mrb[0].mxu0 %v2525
      %v3445 = vpop.f32.mrb[0].mxu0
      %v3446 = vadd.f32 0.0, %v3445
      %v3447 = vpop.f32.mrb[0].mxu0
      %3448 = vmatprep.mubr.f32.mxu0 0.0
      %3449 = vmatmul.mubr.f32.gmra.mrb[0].mxu0 %v2528
      %v3450 = vpop.f32.mrb[0].mxu0
      %v3451 = vadd.f32 0.0, %v3450
      %v3452 = vpop.f32.mrb[0].mxu0
      %3453 = vmatprep.mubr.f32.mxu0 0.0
      %3454 = vmatmul.mubr.f32.gmra.mrb[0].mxu0 %v2531
      %v3455 = vpop.f32.mrb[0].mxu0
      %v3456 = vadd.f32 0.0, %v3455
      %v3457 = vpop.f32.mrb[0].mxu0
      %3458 = vmatprep.mubr.f32.mxu0 0.0
      %3459 = vmatmul.mubr.f32.gmra.mrb[0].mxu0 %v2534
      %v3460 = vpop.f32.mrb[0].mxu0
      %v3461 = vadd.f32 0.0, %v3460
      %v3462 = vpop.f32.mrb[0].mxu0
      %3463 = vmatprep.mubr.f32.mxu0 0.0
      %3464 = vmatmul.mubr.f32.gmra.mrb[0].mxu0 %v2537
      %v3465 = vpop.f32.mrb[0].mxu0
      %v3466 = vadd.f32 0.0, %v3465
      %v3467 = vpop.f32.mrb[0].mxu0
      %3468 = vmatprep.mubr.f32.mxu0 0.0
      %3469 = vmatmul.mubr.f32.gmra.mrb[0].mxu0 %v2540
      %v3470 = vpop.f32.mrb[0].mxu0
      %v3471 = vadd.f32 0.0, %v3470
      %v3472 = vpop.f32.mrb[0].mxu0
      %3473 = vmatprep.mubr.f32.mxu0 0.0
      %3474 = vmatmul.mubr.f32.gmra.mrb[0].mxu0 %v2543
      %v3475 = vpop.f32.mrb[0].mxu0
      %v3476 = vadd.f32 0.0, %v3475
      %v3477 = vpop.f32.mrb[0].mxu0
      %3478 = vmatprep.mubr.f32.mxu0 0.0
      %3479 = vmatmul.mubr.f32.gmra.mrb[0].mxu0 %v2546
      %v3480 = vpop.f32.mrb[0].mxu0
      %v3481 = vadd.f32 0.0, %v3480
      %v3482 = vpop.f32.mrb[0].mxu0
      %3483 = vmatprep.mubr.f32.mxu0 0.0
      %3484 = vmatmul.mubr.f32.gmra.mrb[0].mxu0 %v2549
      %v3485 = vpop.f32.mrb[0].mxu0
      %v3486 = vadd.f32 0.0, %v3485
      %v3487 = vpop.f32.mrb[0].mxu0
      %3488 = vmatprep.mubr.f32.mxu0 0.0
      %3489 = vmatmul.mubr.f32.gmra.mrb[0].mxu0 %v2552
      %v3490 = vpop.f32.mrb[0].mxu0
      %v3491 = vadd.f32 0.0, %v3490
      %v3492 = vpop.f32.mrb[0].mxu0
      %3493 = vmatprep.mubr.f32.mxu0 0.0
      %3494 = vmatmul.mubr.f32.gmra.mrb[0].mxu0 %v2555
      %v3495 = vpop.f32.mrb[0].mxu0
      %v3496 = vadd.f32 0.0, %v3495
      %v3497 = vpop.f32.mrb[0].mxu0
      %3498 = vmatprep.mubr.f32.mxu0 0.0
      %3499 = vmatmul.mubr.f32.gmra.mrb[0].mxu0 %v2558
      %v3500 = vpop.f32.mrb[0].mxu0
      %v3501 = vadd.f32 0.0, %v3500
      %v3502 = vpop.f32.mrb[0].mxu0
      %3503 = vmatprep.mubr.f32.mxu0 0.0
      %3504 = vmatmul.mubr.f32.gmra.mrb[0].mxu0 %v2561
      %v3505 = vpop.f32.mrb[0].mxu0
      %v3506 = vadd.f32 0.0, %v3505
      %v3507 = vpop.f32.mrb[0].mxu0
      %3508 = vmatprep.mubr.f32.mxu0 0.0
      %3509 = vmatmul.mubr.f32.gmra.mrb[0].mxu0 %v2564
      %v3510 = vpop.f32.mrb[0].mxu0
      %v3511 = vadd.f32 0.0, %v3510
      %v3512 = vpop.f32.mrb[0].mxu0
      %3513 = vdwg.mxu0
      %v3514 = vadd.f32 %v1540, %v2654
      %v3515 = vadd.f32 %v1542, %v2656
      %v3516 = vadd.f32 %v1779, %v2893
      %v3517 = vadd.f32 %v1781, %v2895
      %v3518 = vadd.f32 %v2018, %v3132
      %v3519 = vadd.f32 %v2020, %v3134
      %v3520 = vadd.f32 %v2257, %v3371
      %v3521 = vadd.f32 %v1546, %v2660
      %v3522 = vadd.f32 %v1548, %v2662
      %v3523 = vadd.f32 %v1785, %v2899
      %v3524 = vadd.f32 %v1787, %v2901
      %v3525 = vadd.f32 %v2024, %v3138
      %v3526 = vadd.f32 %v2026, %v3140
      %v3527 = vadd.f32 %v2262, %v3376
      %v3528 = vadd.f32 %v1552, %v2666
      %v3529 = vadd.f32 %v1554, %v2668
      %v3530 = vadd.f32 %v1791, %v2905
      %v3531 = vadd.f32 %v1793, %v2907
      %v3532 = vadd.f32 %v2030, %v3144
      %v3533 = vadd.f32 %v2032, %v3146
      %v3534 = vadd.f32 %v2267, %v3381
      %v3535 = vadd.f32 %v1558, %v2672
      %v3536 = vadd.f32 %v1560, %v2674
      %v3537 = vadd.f32 %v1797, %v2911
      %v3538 = vadd.f32 %v1799, %v2913
      %v3539 = vadd.f32 %v2036, %v3150
      %v3540 = vadd.f32 %v2038, %v3152
      %v3541 = vadd.f32 %v2272, %v3386
      %v3542 = vadd.f32 %v1564, %v2678
      %v3543 = vadd.f32 %v1566, %v2680
      %v3544 = vadd.f32 %v1803, %v2917
      %v3545 = vadd.f32 %v1805, %v2919
      %v3546 = vadd.f32 %v2042, %v3156
      %v3547 = vadd.f32 %v2044, %v3158
      %v3548 = vadd.f32 %v2277, %v3391
      %v3549 = vadd.f32 %v1570, %v2684
      %v3550 = vadd.f32 %v1572, %v2686
      %v3551 = vadd.f32 %v1809, %v2923
      %v3552 = vadd.f32 %v1811, %v2925
      %v3553 = vadd.f32 %v2048, %v3162
      %v3554 = vadd.f32 %v2050, %v3164
      %v3555 = vadd.f32 %v2282, %v3396
      %v3556 = vadd.f32 %v1576, %v2690
      %v3557 = vadd.f32 %v1578, %v2692
      %v3558 = vadd.f32 %v1815, %v2929
      %v3559 = vadd.f32 %v1817, %v2931
      %v3560 = vadd.f32 %v2054, %v3168
      %v3561 = vadd.f32 %v2056, %v3170
      %v3562 = vadd.f32 %v2287, %v3401
      %v3563 = vadd.f32 %v1582, %v2696
      %v3564 = vadd.f32 %v1584, %v2698
      %v3565 = vadd.f32 %v1821, %v2935
      %v3566 = vadd.f32 %v1823, %v2937
      %v3567 = vadd.f32 %v2060, %v3174
      %v3568 = vadd.f32 %v2062, %v3176
      %v3569 = vadd.f32 %v2292, %v3406
      %v3570 = vadd.f32 %v1588, %v2702
      %v3571 = vadd.f32 %v1590, %v2704
      %v3572 = vadd.f32 %v1827, %v2941
      %v3573 = vadd.f32 %v1829, %v2943
      %v3574 = vadd.f32 %v2066, %v3180
      %v3575 = vadd.f32 %v2068, %v3182
      %v3576 = vadd.f32 %v2297, %v3411
      %v3577 = vadd.f32 %v1594, %v2708
      %v3578 = vadd.f32 %v1596, %v2710
      %v3579 = vadd.f32 %v1833, %v2947
      %v3580 = vadd.f32 %v1835, %v2949
      %v3581 = vadd.f32 %v2072, %v3186
      %v3582 = vadd.f32 %v2074, %v3188
      %v3583 = vadd.f32 %v2302, %v3416
      %v3584 = vadd.f32 %v1600, %v2714
      %v3585 = vadd.f32 %v1602, %v2716
      %v3586 = vadd.f32 %v1839, %v2953
      %v3587 = vadd.f32 %v1841, %v2955
      %v3588 = vadd.f32 %v2078, %v3192
      %v3589 = vadd.f32 %v2080, %v3194
      %v3590 = vadd.f32 %v2307, %v3421
      %v3591 = vadd.f32 %v1606, %v2720
      %v3592 = vadd.f32 %v1608, %v2722
      %v3593 = vadd.f32 %v1845, %v2959
      %v3594 = vadd.f32 %v1847, %v2961
      %v3595 = vadd.f32 %v2084, %v3198
      %v3596 = vadd.f32 %v2086, %v3200
      %v3597 = vadd.f32 %v2312, %v3426
      %v3598 = vadd.f32 %v1612, %v2726
      %v3599 = vadd.f32 %v1614, %v2728
      %v3600 = vadd.f32 %v1851, %v2965
      %v3601 = vadd.f32 %v1853, %v2967
      %v3602 = vadd.f32 %v2090, %v3204
      %v3603 = vadd.f32 %v2092, %v3206
      %v3604 = vadd.f32 %v2317, %v3431
      %v3605 = vadd.f32 %v1618, %v2732
      %v3606 = vadd.f32 %v1620, %v2734
      %v3607 = vadd.f32 %v1857, %v2971
      %v3608 = vadd.f32 %v1859, %v2973
      %v3609 = vadd.f32 %v2096, %v3210
      %v3610 = vadd.f32 %v2098, %v3212
      %v3611 = vadd.f32 %v2322, %v3436
      %v3612 = vadd.f32 %v1624, %v2738
      %v3613 = vadd.f32 %v1626, %v2740
      %v3614 = vadd.f32 %v1863, %v2977
      %v3615 = vadd.f32 %v1865, %v2979
      %v3616 = vadd.f32 %v2102, %v3216
      %v3617 = vadd.f32 %v2104, %v3218
      %v3618 = vadd.f32 %v2327, %v3441
      %v3619 = vadd.f32 %v1630, %v2744
      %v3620 = vadd.f32 %v1632, %v2746
      %v3621 = vadd.f32 %v1869, %v2983
      %v3622 = vadd.f32 %v1871, %v2985
      %v3623 = vadd.f32 %v2108, %v3222
      %v3624 = vadd.f32 %v2110, %v3224
      %v3625 = vadd.f32 %v2332, %v3446
      %v3626 = vadd.f32 %v1636, %v2750
      %v3627 = vadd.f32 %v1638, %v2752
      %v3628 = vadd.f32 %v1875, %v2989
      %v3629 = vadd.f32 %v1877, %v2991
      %v3630 = vadd.f32 %v2114, %v3228
      %v3631 = vadd.f32 %v2116, %v3230
      %v3632 = vadd.f32 %v2337, %v3451
      %v3633 = vadd.f32 %v1642, %v2756
      %v3634 = vadd.f32 %v1644, %v2758
      %v3635 = vadd.f32 %v1881, %v2995
      %v3636 = vadd.f32 %v1883, %v2997
      %v3637 = vadd.f32 %v2120, %v3234
      %v3638 = vadd.f32 %v2122, %v3236
      %v3639 = vadd.f32 %v2342, %v3456
      %v3640 = vadd.f32 %v1648, %v2762
      %v3641 = vadd.f32 %v1650, %v2764
      %v3642 = vadd.f32 %v1887, %v3001
      %v3643 = vadd.f32 %v1889, %v3003
      %v3644 = vadd.f32 %v2126, %v3240
      %v3645 = vadd.f32 %v2128, %v3242
      %v3646 = vadd.f32 %v2347, %v3461
      %v3647 = vadd.f32 %v1654, %v2768
      %v3648 = vadd.f32 %v1656, %v2770
      %v3649 = vadd.f32 %v1893, %v3007
      %v3650 = vadd.f32 %v1895, %v3009
      %v3651 = vadd.f32 %v2132, %v3246
      %v3652 = vadd.f32 %v2134, %v3248
      %v3653 = vadd.f32 %v2352, %v3466
      %v3654 = vadd.f32 %v1660, %v2774
      %v3655 = vadd.f32 %v1662, %v2776
      %v3656 = vadd.f32 %v1899, %v3013
      %v3657 = vadd.f32 %v1901, %v3015
      %v3658 = vadd.f32 %v2138, %v3252
      %v3659 = vadd.f32 %v2140, %v3254
      %v3660 = vadd.f32 %v2357, %v3471
      %v3661 = vadd.f32 %v1666, %v2780
      %v3662 = vadd.f32 %v1668, %v2782
      %v3663 = vadd.f32 %v1905, %v3019
      %v3664 = vadd.f32 %v1907, %v3021
      %v3665 = vadd.f32 %v2144, %v3258
      %v3666 = vadd.f32 %v2146, %v3260
      %v3667 = vadd.f32 %v2362, %v3476
      %v3668 = vadd.f32 %v1672, %v2786
      %v3669 = vadd.f32 %v1674, %v2788
      %v3670 = vadd.f32 %v1911, %v3025
      %v3671 = vadd.f32 %v1913, %v3027
      %v3672 = vadd.f32 %v2150, %v3264
      %v3673 = vadd.f32 %v2152, %v3266
      %v3674 = vadd.f32 %v2367, %v3481
      %v3675 = vadd.f32 %v1678, %v2792
      %v3676 = vadd.f32 %v1680, %v2794
      %v3677 = vadd.f32 %v1917, %v3031
      %v3678 = vadd.f32 %v1919, %v3033
      %v3679 = vadd.f32 %v2156, %v3270
      %v3680 = vadd.f32 %v2158, %v3272
      %v3681 = vadd.f32 %v2372, %v3486
      %v3682 = vadd.f32 %v1684, %v2798
      %v3683 = vadd.f32 %v1686, %v2800
      %v3684 = vadd.f32 %v1923, %v3037
      %v3685 = vadd.f32 %v1925, %v3039
      %v3686 = vadd.f32 %v2162, %v3276
      %v3687 = vadd.f32 %v2164, %v3278
      %v3688 = vadd.f32 %v2377, %v3491
      %v3689 = vadd.f32 %v1690, %v2804
      %v3690 = vadd.f32 %v1692, %v2806
      %v3691 = vadd.f32 %v1929, %v3043
      %v3692 = vadd.f32 %v1931, %v3045
      %v3693 = vadd.f32 %v2168, %v3282
      %v3694 = vadd.f32 %v2170, %v3284
      %v3695 = vadd.f32 %v2382, %v3496
      %v3696 = vadd.f32 %v1696, %v2810
      %v3697 = vadd.f32 %v1698, %v2812
      %v3698 = vadd.f32 %v1935, %v3049
      %v3699 = vadd.f32 %v1937, %v3051
      %v3700 = vadd.f32 %v2174, %v3288
      %v3701 = vadd.f32 %v2176, %v3290
      %v3702 = vadd.f32 %v2387, %v3501
      %v3703 = vadd.f32 %v1702, %v2816
      %v3704 = vadd.f32 %v1704, %v2818
      %v3705 = vadd.f32 %v1941, %v3055
      %v3706 = vadd.f32 %v1943, %v3057
      %v3707 = vadd.f32 %v2180, %v3294
      %v3708 = vadd.f32 %v2182, %v3296
      %v3709 = vadd.f32 %v2392, %v3506
      %v3710 = vadd.f32 %v1708, %v2822
      %v3711 = vadd.f32 %v1710, %v2824
      %v3712 = vadd.f32 %v1947, %v3061
      %v3713 = vadd.f32 %v1949, %v3063
      %v3714 = vadd.f32 %v2186, %v3300
      %v3715 = vadd.f32 %v2188, %v3302
      %v3716 = vadd.f32 %v2397, %v3511
      %v3717 = vld [vmem:[%s165 + $0x3] sm:$0xff]
      %v3718 = vld [vmem:[%s165 + $0xb] sm:$0xff]
      %v3719 = vld [vmem:[%s165 + $0x13] sm:$0xff]
      %v3720 = vld [vmem:[%s165 + $0x1b] sm:$0xff]
      %v3721 = vld [vmem:[%s165 + $0x23] sm:$0xff]
      %v3722 = vld [vmem:[%s165 + $0x2b] sm:$0xff]
      %v3723 = vld [vmem:[%s165 + $0x33] sm:$0xff]
      %v3724 = vld [vmem:[%s165 + $0x3b] sm:$0xff]
      %v3725 = vld [vmem:[%s165 + $0x43] sm:$0xff]
      %v3726 = vld [vmem:[%s165 + $0x4b] sm:$0xff]
      %v3727 = vld [vmem:[%s165 + $0x53] sm:$0xff]
      %v3728 = vld [vmem:[%s165 + $0x5b] sm:$0xff]
      %v3729 = vld [vmem:[%s165 + $0x63] sm:$0xff]
      %v3730 = vld [vmem:[%s165 + $0x6b] sm:$0xff]
      %v3731 = vld [vmem:[%s165 + $0x73] sm:$0xff]
      %v3732 = vld [vmem:[%s165 + $0x7b] sm:$0xff]
      %v3733 = vld [vmem:[%s165 + $0x83] sm:$0xff]
      %v3734 = vld [vmem:[%s165 + $0x8b] sm:$0xff]
      %v3735 = vld [vmem:[%s165 + $0x93] sm:$0xff]
      %v3736 = vld [vmem:[%s165 + $0x9b] sm:$0xff]
      %v3737 = vld [vmem:[%s165 + $0xa3] sm:$0xff]
      %v3738 = vld [vmem:[%s165 + $0xab] sm:$0xff]
      %v3739 = vld [vmem:[%s165 + $0xb3] sm:$0xff]
      %v3740 = vld [vmem:[%s165 + $0xbb] sm:$0xff]
      %v3741 = vld [vmem:[%s165 + $0xc3] sm:$0xff]
      %v3742 = vld [vmem:[%s165 + $0xcb] sm:$0xff]
      %v3743 = vld [vmem:[%s165 + $0xd3] sm:$0xff]
      %v3744 = vld [vmem:[%s165 + $0xdb] sm:$0xff]
      %v3745 = vld [vmem:[%s165 + $0xe3] sm:$0x7]
      %s3746 = scalar_lea.vmem %s1, 1176
      %v3747 = vld [vmem:[%s3746] sm:$0xff]
      %v3748 = vld [vmem:[%s3746 + $0x8] sm:$0xff]
      %v3749 = vld [vmem:[%s3746 + $0x10] sm:$0xff]
      %v3750 = vld [vmem:[%s3746 + $0x18] sm:$0xff]
      %v3751 = vld [vmem:[%s3746 + $0x20] sm:$0xff]
      %v3752 = vld [vmem:[%s3746 + $0x28] sm:$0xff]
      %v3753 = vld [vmem:[%s3746 + $0x30] sm:$0xff]
      %v3754 = vld [vmem:[%s3746 + $0x38] sm:$0xff]
      %v3755 = vld [vmem:[%s3746 + $0x40] sm:$0xff]
      %v3756 = vld [vmem:[%s3746 + $0x48] sm:$0xff]
      %v3757 = vld [vmem:[%s3746 + $0x50] sm:$0xff]
      %v3758 = vld [vmem:[%s3746 + $0x58] sm:$0xff]
      %v3759 = vld [vmem:[%s3746 + $0x60] sm:$0xff]
      %v3760 = vld [vmem:[%s3746 + $0x68] sm:$0xff]
      %v3761 = vld [vmem:[%s3746 + $0x70] sm:$0xff]
      %v3762 = vld [vmem:[%s3746 + $0x78] sm:$0xff]
      %v3763 = vld [vmem:[%s3746 + $0x80] sm:$0xff]
      %v3764 = vld [vmem:[%s3746 + $0x88] sm:$0xff]
      %v3765 = vld [vmem:[%s3746 + $0x90] sm:$0xff]
      %v3766 = vld [vmem:[%s3746 + $0x98] sm:$0xff]
      %v3767 = vld [vmem:[%s3746 + $0xa0] sm:$0xff]
      %v3768 = vld [vmem:[%s3746 + $0xa8] sm:$0xff]
      %v3769 = vld [vmem:[%s3746 + $0xb0] sm:$0xff]
      %v3770 = vld [vmem:[%s3746 + $0xb8] sm:$0xff]
      %v3771 = vld [vmem:[%s3746 + $0xc0] sm:$0xff]
      %v3772 = vld [vmem:[%s3746 + $0xc8] sm:$0xff]
      %v3773 = vld [vmem:[%s3746 + $0xd0] sm:$0xff]
      %v3774 = vld [vmem:[%s3746 + $0xd8] sm:$0xff]
      %v3775 = vld [vmem:[%s3746 + $0xe0] sm:$0xff]
      %v3776 = vld [vmem:[%s3746 + $0xe8] sm:$0xff]
      %v3777 = vld [vmem:[%s3746 + $0xf0] sm:$0xff]
      %v3778 = vld [vmem:[%s3746 + $0xf8] sm:$0xff]
      %v3779 = vld [vmem:[%s3746 + $0x100] sm:$0xff]
      %v3780 = vld [vmem:[%s3746 + $0x108] sm:$0xff]
      %v3781 = vld [vmem:[%s3746 + $0x110] sm:$0xff]
      %v3782 = vld [vmem:[%s3746 + $0x118] sm:$0xff]
      %v3783 = vld [vmem:[%s3746 + $0x120] sm:$0xff]
      %v3784 = vld [vmem:[%s3746 + $0x128] sm:$0xff]
      %v3785 = vld [vmem:[%s3746 + $0x130] sm:$0xff]
      %v3786 = vld [vmem:[%s3746 + $0x138] sm:$0xff]
      %v3787 = vld [vmem:[%s3746 + $0x140] sm:$0xff]
      %v3788 = vld [vmem:[%s3746 + $0x148] sm:$0xff]
      %v3789 = vld [vmem:[%s3746 + $0x150] sm:$0xf]
      %v3790 = vld [vmem:[%s3746 + $0x158] sm:$0xf]
      %v3791 = vld [vmem:[%s3746 + $0x160] sm:$0xf]
      %v3792 = vld [vmem:[%s3746 + $0x168] sm:$0xf]
      %v3793 = vld [vmem:[%s3746 + $0x170] sm:$0xf]
      %v3794 = vld [vmem:[%s3746 + $0x178] sm:$0xf]
      %v3795 = vld [vmem:[%s3746 + $0x180] sm:$0xf]
      %v3797 = vsel %vm328, %v3717, 0
      %v3800 = vsel %vm328, %v3718, 0
      %v3803 = vsel %vm328, %v3719, 0
      %v3806 = vsel %vm328, %v3720, 0
      %v3809 = vsel %vm328, %v3721, 0
      %v3812 = vsel %vm328, %v3722, 0
      %v3815 = vsel %vm328, %v3723, 0
      %v3818 = vsel %vm328, %v3724, 0
      %v3821 = vsel %vm328, %v3725, 0
      %v3824 = vsel %vm328, %v3726, 0
      %v3827 = vsel %vm328, %v3727, 0
      %v3830 = vsel %vm328, %v3728, 0
      %v3833 = vsel %vm328, %v3729, 0
      %v3836 = vsel %vm328, %v3730, 0
      %v3839 = vsel %vm328, %v3731, 0
      %v3842 = vsel %vm328, %v3732, 0
      %v3845 = vsel %vm328, %v3733, 0
      %v3848 = vsel %vm328, %v3734, 0
      %v3851 = vsel %vm328, %v3735, 0
      %v3854 = vsel %vm328, %v3736, 0
      %v3857 = vsel %vm328, %v3737, 0
      %v3860 = vsel %vm328, %v3738, 0
      %v3863 = vsel %vm328, %v3739, 0
      %v3866 = vsel %vm328, %v3740, 0
      %v3869 = vsel %vm328, %v3741, 0
      %v3872 = vsel %vm328, %v3742, 0
      %v3875 = vsel %vm328, %v3743, 0
      %v3878 = vsel %vm328, %v3744, 0
      %v3881 = vsel %vm328, %v3745, 0
      %v3884 = vsel %vm416, %v3789, 0
      %v3887 = vsel %vm416, %v3790, 0
      %v3890 = vsel %vm416, %v3791, 0
      %v3893 = vsel %vm416, %v3792, 0
      %v3896 = vsel %vm416, %v3793, 0
      %v3899 = vsel %vm416, %v3794, 0
      %v3902 = vsel %vm416, %v3795, 0
      %3904 = vmatprep.subr.mxu0 %v3748
      %3905 = vmatpush1.msra.mxu0 %v3747
      %3906 = vmatprep.subr.mxu0 %v3755
      %3907 = vmatpush1.msra.mxu0 %v3754
      %3908 = vmatprep.subr.mxu0 %v3762
      %3909 = vmatpush1.msra.mxu0 %v3761
      %3910 = vmatprep.subr.mxu0 %v3769
      %3911 = vmatpush1.msra.mxu0 %v3768
      %3912 = vmatprep.subr.mxu0 %v3776
      %3913 = vmatpush1.msra.mxu0 %v3775
      %3914 = vmatprep.subr.mxu0 %v3783
      %3915 = vmatpush1.msra.mxu0 %v3782
      %3916 = vmatprep.subr.mxu0 %v3887
      %3917 = vmatpush1.msra.mxu0 %v3884
      %3918 = vmatprep.subr.mxu0 0.0
      %3919 = vmatpush1.msra.mxu0 0.0
      %3920 = vmatprep.subr.mxu0 0.0
      %3921 = vmatpush1.msra.mxu0 0.0
      %3922 = vmatprep.subr.mxu0 0.0
      %3923 = vmatpush1.msra.mxu0 0.0
      %3924 = vmatprep.subr.mxu0 0.0
      %3925 = vmatpush1.msra.mxu0 0.0
      %3926 = vmatprep.subr.mxu0 0.0
      %3927 = vmatpush1.msra.mxu0 0.0
      %3928 = vmatprep.subr.mxu0 0.0
      %3929 = vmatpush1.msra.mxu0 0.0
      %3930 = vmatprep.subr.mxu0 0.0
      %3931 = vmatpush1.msra.mxu0 0.0
      %3932 = vmatprep.subr.mxu0 0.0
      %3933 = vmatpush1.msra.mxu0 0.0
      %3934 = vmatprep.subr.mxu0 0.0
      %3935 = vmatpush1.msra.mxu0 0.0
      %3936 = vmatprep.subr.mxu0 0.0
      %3937 = vmatpush1.msra.mxu0 0.0
      %3938 = vmatprep.subr.mxu0 0.0
      %3939 = vmatpush1.msra.mxu0 0.0
      %3940 = vmatprep.subr.mxu0 0.0
      %3941 = vmatpush1.msra.mxu0 0.0
      %3942 = vmatprep.subr.mxu0 0.0
      %3943 = vmatpush1.msra.mxu0 0.0
      %3944 = vmatprep.subr.mxu0 0.0
      %3945 = vmatpush1.msra.mxu0 0.0
      %3946 = vmatprep.subr.mxu0 0.0
      %3947 = vmatpush1.msra.mxu0 0.0
      %3948 = vmatprep.subr.mxu0 0.0
      %3949 = vmatpush1.msra.mxu0 0.0
      %3950 = vmatprep.subr.mxu0 0.0
      %3951 = vmatpush1.msra.mxu0 0.0
      %3952 = vmatprep.subr.mxu0 0.0
      %3953 = vmatpush1.msra.mxu0 0.0
      %3954 = vmatprep.subr.mxu0 0.0
      %3955 = vmatpush1.msra.mxu0 0.0
      %3956 = vmatprep.subr.mxu0 0.0
      %3957 = vmatpush1.msra.mxu0 0.0
      %3958 = vmatprep.subr.mxu0 0.0
      %3959 = vmatpush1.msra.mxu0 0.0
      %3960 = vmatprep.subr.mxu0 0.0
      %3961 = vmatpush1.msra.mxu0 0.0
      %3962 = vmatprep.subr.mxu0 0.0
      %3963 = vmatpush1.msra.mxu0 0.0
      %3964 = vmatprep.subr.mxu0 0.0
      %3965 = vmatpush1.msra.mxu0 0.0
      %3966 = vmatprep.subr.mxu0 0.0
      %3967 = vmatpush1.msra.mxu0 0.0
      %3968 = vmatprep.mubr.f32.mxu0 0.0
      %3969 = vmatmul.mubr.f32.gmra.mrb[0].mxu0 %v3797
      %v3970 = vpop.f32.mrb[0].mxu0
      %v3971 = vadd.f32 0.0, %v3970
      %v3972 = vpop.f32.mrb[0].mxu0
      %v3973 = vadd.f32 0.0, %v3972
      %3974 = vmatprep.mubr.f32.mxu0 0.0
      %3975 = vmatmul.mubr.f32.gmra.mrb[0].mxu0 %v3800
      %v3976 = vpop.f32.mrb[0].mxu0
      %v3977 = vadd.f32 0.0, %v3976
      %v3978 = vpop.f32.mrb[0].mxu0
      %v3979 = vadd.f32 0.0, %v3978
      %3980 = vmatprep.mubr.f32.mxu0 0.0
      %3981 = vmatmul.mubr.f32.gmra.mrb[0].mxu0 %v3803
      %v3982 = vpop.f32.mrb[0].mxu0
      %v3983 = vadd.f32 0.0, %v3982
      %v3984 = vpop.f32.mrb[0].mxu0
      %v3985 = vadd.f32 0.0, %v3984
      %3986 = vmatprep.mubr.f32.mxu0 0.0
      %3987 = vmatmul.mubr.f32.gmra.mrb[0].mxu0 %v3806
      %v3988 = vpop.f32.mrb[0].mxu0
      %v3989 = vadd.f32 0.0, %v3988
      %v3990 = vpop.f32.mrb[0].mxu0
      %v3991 = vadd.f32 0.0, %v3990
      %3992 = vmatprep.mubr.f32.mxu0 0.0
      %3993 = vmatmul.mubr.f32.gmra.mrb[0].mxu0 %v3809
      %v3994 = vpop.f32.mrb[0].mxu0
      %v3995 = vadd.f32 0.0, %v3994
      %v3996 = vpop.f32.mrb[0].mxu0
      %v3997 = vadd.f32 0.0, %v3996
      %3998 = vmatprep.mubr.f32.mxu0 0.0
      %3999 = vmatmul.mubr.f32.gmra.mrb[0].mxu0 %v3812
      %v4000 = vpop.f32.mrb[0].mxu0
      %v4001 = vadd.f32 0.0, %v4000
      %v4002 = vpop.f32.mrb[0].mxu0
      %v4003 = vadd.f32 0.0, %v4002
      %4004 = vmatprep.mubr.f32.mxu0 0.0
      %4005 = vmatmul.mubr.f32.gmra.mrb[0].mxu0 %v3815
      %v4006 = vpop.f32.mrb[0].mxu0
      %v4007 = vadd.f32 0.0, %v4006
      %v4008 = vpop.f32.mrb[0].mxu0
      %v4009 = vadd.f32 0.0, %v4008
      %4010 = vmatprep.mubr.f32.mxu0 0.0
      %4011 = vmatmul.mubr.f32.gmra.mrb[0].mxu0 %v3818
      %v4012 = vpop.f32.mrb[0].mxu0
      %v4013 = vadd.f32 0.0, %v4012
      %v4014 = vpop.f32.mrb[0].mxu0
      %v4015 = vadd.f32 0.0, %v4014
      %4016 = vmatprep.mubr.f32.mxu0 0.0
      %4017 = vmatmul.mubr.f32.gmra.mrb[0].mxu0 %v3821
      %v4018 = vpop.f32.mrb[0].mxu0
      %v4019 = vadd.f32 0.0, %v4018
      %v4020 = vpop.f32.mrb[0].mxu0
      %v4021 = vadd.f32 0.0, %v4020
      %4022 = vmatprep.mubr.f32.mxu0 0.0
      %4023 = vmatmul.mubr.f32.gmra.mrb[0].mxu0 %v3824
      %v4024 = vpop.f32.mrb[0].mxu0
      %v4025 = vadd.f32 0.0, %v4024
      %v4026 = vpop.f32.mrb[0].mxu0
      %v4027 = vadd.f32 0.0, %v4026
      %4028 = vmatprep.mubr.f32.mxu0 0.0
      %4029 = vmatmul.mubr.f32.gmra.mrb[0].mxu0 %v3827
      %v4030 = vpop.f32.mrb[0].mxu0
      %v4031 = vadd.f32 0.0, %v4030
      %v4032 = vpop.f32.mrb[0].mxu0
      %v4033 = vadd.f32 0.0, %v4032
      %4034 = vmatprep.mubr.f32.mxu0 0.0
      %4035 = vmatmul.mubr.f32.gmra.mrb[0].mxu0 %v3830
      %v4036 = vpop.f32.mrb[0].mxu0
      %v4037 = vadd.f32 0.0, %v4036
      %v4038 = vpop.f32.mrb[0].mxu0
      %v4039 = vadd.f32 0.0, %v4038
      %4040 = vmatprep.mubr.f32.mxu0 0.0
      %4041 = vmatmul.mubr.f32.gmra.mrb[0].mxu0 %v3833
      %v4042 = vpop.f32.mrb[0].mxu0
      %v4043 = vadd.f32 0.0, %v4042
      %v4044 = vpop.f32.mrb[0].mxu0
      %v4045 = vadd.f32 0.0, %v4044
      %4046 = vmatprep.mubr.f32.mxu0 0.0
      %4047 = vmatmul.mubr.f32.gmra.mrb[0].mxu0 %v3836
      %v4048 = vpop.f32.mrb[0].mxu0
      %v4049 = vadd.f32 0.0, %v4048
      %v4050 = vpop.f32.mrb[0].mxu0
      %v4051 = vadd.f32 0.0, %v4050
      %4052 = vmatprep.mubr.f32.mxu0 0.0
      %4053 = vmatmul.mubr.f32.gmra.mrb[0].mxu0 %v3839
      %v4054 = vpop.f32.mrb[0].mxu0
      %v4055 = vadd.f32 0.0, %v4054
      %v4056 = vpop.f32.mrb[0].mxu0
      %v4057 = vadd.f32 0.0, %v4056
      %4058 = vmatprep.mubr.f32.mxu0 0.0
      %4059 = vmatmul.mubr.f32.gmra.mrb[0].mxu0 %v3842
      %v4060 = vpop.f32.mrb[0].mxu0
      %v4061 = vadd.f32 0.0, %v4060
      %v4062 = vpop.f32.mrb[0].mxu0
      %v4063 = vadd.f32 0.0, %v4062
      %4064 = vmatprep.mubr.f32.mxu0 0.0
      %4065 = vmatmul.mubr.f32.gmra.mrb[0].mxu0 %v3845
      %v4066 = vpop.f32.mrb[0].mxu0
      %v4067 = vadd.f32 0.0, %v4066
      %v4068 = vpop.f32.mrb[0].mxu0
      %v4069 = vadd.f32 0.0, %v4068
      %4070 = vmatprep.mubr.f32.mxu0 0.0
      %4071 = vmatmul.mubr.f32.gmra.mrb[0].mxu0 %v3848
      %v4072 = vpop.f32.mrb[0].mxu0
      %v4073 = vadd.f32 0.0, %v4072
      %v4074 = vpop.f32.mrb[0].mxu0
      %v4075 = vadd.f32 0.0, %v4074
      %4076 = vmatprep.mubr.f32.mxu0 0.0
      %4077 = vmatmul.mubr.f32.gmra.mrb[0].mxu0 %v3851
      %v4078 = vpop.f32.mrb[0].mxu0
      %v4079 = vadd.f32 0.0, %v4078
      %v4080 = vpop.f32.mrb[0].mxu0
      %v4081 = vadd.f32 0.0, %v4080
      %4082 = vmatprep.mubr.f32.mxu0 0.0
      %4083 = vmatmul.mubr.f32.gmra.mrb[0].mxu0 %v3854
      %v4084 = vpop.f32.mrb[0].mxu0
      %v4085 = vadd.f32 0.0, %v4084
      %v4086 = vpop.f32.mrb[0].mxu0
      %v4087 = vadd.f32 0.0, %v4086
      %4088 = vmatprep.mubr.f32.mxu0 0.0
      %4089 = vmatmul.mubr.f32.gmra.mrb[0].mxu0 %v3857
      %v4090 = vpop.f32.mrb[0].mxu0
      %v4091 = vadd.f32 0.0, %v4090
      %v4092 = vpop.f32.mrb[0].mxu0
      %v4093 = vadd.f32 0.0, %v4092
      %4094 = vmatprep.mubr.f32.mxu0 0.0
      %4095 = vmatmul.mubr.f32.gmra.mrb[0].mxu0 %v3860
      %v4096 = vpop.f32.mrb[0].mxu0
      %v4097 = vadd.f32 0.0, %v4096
      %v4098 = vpop.f32.mrb[0].mxu0
      %v4099 = vadd.f32 0.0, %v4098
      %4100 = vmatprep.mubr.f32.mxu0 0.0
      %4101 = vmatmul.mubr.f32.gmra.mrb[0].mxu0 %v3863
      %v4102 = vpop.f32.mrb[0].mxu0
      %v4103 = vadd.f32 0.0, %v4102
      %v4104 = vpop.f32.mrb[0].mxu0
      %v4105 = vadd.f32 0.0, %v4104
      %4106 = vmatprep.mubr.f32.mxu0 0.0
      %4107 = vmatmul.mubr.f32.gmra.mrb[0].mxu0 %v3866
      %v4108 = vpop.f32.mrb[0].mxu0
      %v4109 = vadd.f32 0.0, %v4108
      %v4110 = vpop.f32.mrb[0].mxu0
      %v4111 = vadd.f32 0.0, %v4110
      %4112 = vmatprep.mubr.f32.mxu0 0.0
      %4113 = vmatmul.mubr.f32.gmra.mrb[0].mxu0 %v3869
      %v4114 = vpop.f32.mrb[0].mxu0
      %v4115 = vadd.f32 0.0, %v4114
      %v4116 = vpop.f32.mrb[0].mxu0
      %v4117 = vadd.f32 0.0, %v4116
      %4118 = vmatprep.mubr.f32.mxu0 0.0
      %4119 = vmatmul.mubr.f32.gmra.mrb[0].mxu0 %v3872
      %v4120 = vpop.f32.mrb[0].mxu0
      %v4121 = vadd.f32 0.0, %v4120
      %v4122 = vpop.f32.mrb[0].mxu0
      %v4123 = vadd.f32 0.0, %v4122
      %4124 = vmatprep.mubr.f32.mxu0 0.0
      %4125 = vmatmul.mubr.f32.gmra.mrb[0].mxu0 %v3875
      %v4126 = vpop.f32.mrb[0].mxu0
      %v4127 = vadd.f32 0.0, %v4126
      %v4128 = vpop.f32.mrb[0].mxu0
      %v4129 = vadd.f32 0.0, %v4128
      %4130 = vmatprep.mubr.f32.mxu0 0.0
      %4131 = vmatmul.mubr.f32.gmra.mrb[0].mxu0 %v3878
      %v4132 = vpop.f32.mrb[0].mxu0
      %v4133 = vadd.f32 0.0, %v4132
      %v4134 = vpop.f32.mrb[0].mxu0
      %v4135 = vadd.f32 0.0, %v4134
      %4136 = vmatprep.mubr.f32.mxu0 0.0
      %4137 = vmatmul.mubr.f32.gmra.mrb[0].mxu0 %v3881
      %v4138 = vpop.f32.mrb[0].mxu0
      %v4139 = vadd.f32 0.0, %v4138
      %v4140 = vpop.f32.mrb[0].mxu0
      %v4141 = vadd.f32 0.0, %v4140
      %4142 = vdwg.mxu0
      %4143 = vmatprep.subr.mxu0 %v3750
      %4144 = vmatpush1.msra.mxu0 %v3749
      %4145 = vmatprep.subr.mxu0 %v3757
      %4146 = vmatpush1.msra.mxu0 %v3756
      %4147 = vmatprep.subr.mxu0 %v3764
      %4148 = vmatpush1.msra.mxu0 %v3763
      %4149 = vmatprep.subr.mxu0 %v3771
      %4150 = vmatpush1.msra.mxu0 %v3770
      %4151 = vmatprep.subr.mxu0 %v3778
      %4152 = vmatpush1.msra.mxu0 %v3777
      %4153 = vmatprep.subr.mxu0 %v3785
      %4154 = vmatpush1.msra.mxu0 %v3784
      %4155 = vmatprep.subr.mxu0 %v3893
      %4156 = vmatpush1.msra.mxu0 %v3890
      %4157 = vmatprep.subr.mxu0 0.0
      %4158 = vmatpush1.msra.mxu0 0.0
      %4159 = vmatprep.subr.mxu0 0.0
      %4160 = vmatpush1.msra.mxu0 0.0
      %4161 = vmatprep.subr.mxu0 0.0
      %4162 = vmatpush1.msra.mxu0 0.0
      %4163 = vmatprep.subr.mxu0 0.0
      %4164 = vmatpush1.msra.mxu0 0.0
      %4165 = vmatprep.subr.mxu0 0.0
      %4166 = vmatpush1.msra.mxu0 0.0
      %4167 = vmatprep.subr.mxu0 0.0
      %4168 = vmatpush1.msra.mxu0 0.0
      %4169 = vmatprep.subr.mxu0 0.0
      %4170 = vmatpush1.msra.mxu0 0.0
      %4171 = vmatprep.subr.mxu0 0.0
      %4172 = vmatpush1.msra.mxu0 0.0
      %4173 = vmatprep.subr.mxu0 0.0
      %4174 = vmatpush1.msra.mxu0 0.0
      %4175 = vmatprep.subr.mxu0 0.0
      %4176 = vmatpush1.msra.mxu0 0.0
      %4177 = vmatprep.subr.mxu0 0.0
      %4178 = vmatpush1.msra.mxu0 0.0
      %4179 = vmatprep.subr.mxu0 0.0
      %4180 = vmatpush1.msra.mxu0 0.0
      %4181 = vmatprep.subr.mxu0 0.0
      %4182 = vmatpush1.msra.mxu0 0.0
      %4183 = vmatprep.subr.mxu0 0.0
      %4184 = vmatpush1.msra.mxu0 0.0
      %4185 = vmatprep.subr.mxu0 0.0
      %4186 = vmatpush1.msra.mxu0 0.0
      %4187 = vmatprep.subr.mxu0 0.0
      %4188 = vmatpush1.msra.mxu0 0.0
      %4189 = vmatprep.subr.mxu0 0.0
      %4190 = vmatpush1.msra.mxu0 0.0
      %4191 = vmatprep.subr.mxu0 0.0
      %4192 = vmatpush1.msra.mxu0 0.0
      %4193 = vmatprep.subr.mxu0 0.0
      %4194 = vmatpush1.msra.mxu0 0.0
      %4195 = vmatprep.subr.mxu0 0.0
      %4196 = vmatpush1.msra.mxu0 0.0
      %4197 = vmatprep.subr.mxu0 0.0
      %4198 = vmatpush1.msra.mxu0 0.0
      %4199 = vmatprep.subr.mxu0 0.0
      %4200 = vmatpush1.msra.mxu0 0.0
      %4201 = vmatprep.subr.mxu0 0.0
      %4202 = vmatpush1.msra.mxu0 0.0
      %4203 = vmatprep.subr.mxu0 0.0
      %4204 = vmatpush1.msra.mxu0 0.0
      %4205 = vmatprep.subr.mxu0 0.0
      %4206 = vmatpush1.msra.mxu0 0.0
      %4207 = vmatprep.mubr.f32.mxu0 0.0
      %4208 = vmatmul.mubr.f32.gmra.mrb[0].mxu0 %v3797
      %v4209 = vpop.f32.mrb[0].mxu0
      %v4210 = vadd.f32 0.0, %v4209
      %v4211 = vpop.f32.mrb[0].mxu0
      %v4212 = vadd.f32 0.0, %v4211
      %4213 = vmatprep.mubr.f32.mxu0 0.0
      %4214 = vmatmul.mubr.f32.gmra.mrb[0].mxu0 %v3800
      %v4215 = vpop.f32.mrb[0].mxu0
      %v4216 = vadd.f32 0.0, %v4215
      %v4217 = vpop.f32.mrb[0].mxu0
      %v4218 = vadd.f32 0.0, %v4217
      %4219 = vmatprep.mubr.f32.mxu0 0.0
      %4220 = vmatmul.mubr.f32.gmra.mrb[0].mxu0 %v3803
      %v4221 = vpop.f32.mrb[0].mxu0
      %v4222 = vadd.f32 0.0, %v4221
      %v4223 = vpop.f32.mrb[0].mxu0
      %v4224 = vadd.f32 0.0, %v4223
      %4225 = vmatprep.mubr.f32.mxu0 0.0
      %4226 = vmatmul.mubr.f32.gmra.mrb[0].mxu0 %v3806
      %v4227 = vpop.f32.mrb[0].mxu0
      %v4228 = vadd.f32 0.0, %v4227
      %v4229 = vpop.f32.mrb[0].mxu0
      %v4230 = vadd.f32 0.0, %v4229
      %4231 = vmatprep.mubr.f32.mxu0 0.0
      %4232 = vmatmul.mubr.f32.gmra.mrb[0].mxu0 %v3809
      %v4233 = vpop.f32.mrb[0].mxu0
      %v4234 = vadd.f32 0.0, %v4233
      %v4235 = vpop.f32.mrb[0].mxu0
      %v4236 = vadd.f32 0.0, %v4235
      %4237 = vmatprep.mubr.f32.mxu0 0.0
      %4238 = vmatmul.mubr.f32.gmra.mrb[0].mxu0 %v3812
      %v4239 = vpop.f32.mrb[0].mxu0
      %v4240 = vadd.f32 0.0, %v4239
      %v4241 = vpop.f32.mrb[0].mxu0
      %v4242 = vadd.f32 0.0, %v4241
      %4243 = vmatprep.mubr.f32.mxu0 0.0
      %4244 = vmatmul.mubr.f32.gmra.mrb[0].mxu0 %v3815
      %v4245 = vpop.f32.mrb[0].mxu0
      %v4246 = vadd.f32 0.0, %v4245
      %v4247 = vpop.f32.mrb[0].mxu0
      %v4248 = vadd.f32 0.0, %v4247
      %4249 = vmatprep.mubr.f32.mxu0 0.0
      %4250 = vmatmul.mubr.f32.gmra.mrb[0].mxu0 %v3818
      %v4251 = vpop.f32.mrb[0].mxu0
      %v4252 = vadd.f32 0.0, %v4251
      %v4253 = vpop.f32.mrb[0].mxu0
      %v4254 = vadd.f32 0.0, %v4253
      %4255 = vmatprep.mubr.f32.mxu0 0.0
      %4256 = vmatmul.mubr.f32.gmra.mrb[0].mxu0 %v3821
      %v4257 = vpop.f32.mrb[0].mxu0
      %v4258 = vadd.f32 0.0, %v4257
      %v4259 = vpop.f32.mrb[0].mxu0
      %v4260 = vadd.f32 0.0, %v4259
      %4261 = vmatprep.mubr.f32.mxu0 0.0
      %4262 = vmatmul.mubr.f32.gmra.mrb[0].mxu0 %v3824
      %v4263 = vpop.f32.mrb[0].mxu0
      %v4264 = vadd.f32 0.0, %v4263
      %v4265 = vpop.f32.mrb[0].mxu0
      %v4266 = vadd.f32 0.0, %v4265
      %4267 = vmatprep.mubr.f32.mxu0 0.0
      %4268 = vmatmul.mubr.f32.gmra.mrb[0].mxu0 %v3827
      %v4269 = vpop.f32.mrb[0].mxu0
      %v4270 = vadd.f32 0.0, %v4269
      %v4271 = vpop.f32.mrb[0].mxu0
      %v4272 = vadd.f32 0.0, %v4271
      %4273 = vmatprep.mubr.f32.mxu0 0.0
      %4274 = vmatmul.mubr.f32.gmra.mrb[0].mxu0 %v3830
      %v4275 = vpop.f32.mrb[0].mxu0
      %v4276 = vadd.f32 0.0, %v4275
      %v4277 = vpop.f32.mrb[0].mxu0
      %v4278 = vadd.f32 0.0, %v4277
      %4279 = vmatprep.mubr.f32.mxu0 0.0
      %4280 = vmatmul.mubr.f32.gmra.mrb[0].mxu0 %v3833
      %v4281 = vpop.f32.mrb[0].mxu0
      %v4282 = vadd.f32 0.0, %v4281
      %v4283 = vpop.f32.mrb[0].mxu0
      %v4284 = vadd.f32 0.0, %v4283
      %4285 = vmatprep.mubr.f32.mxu0 0.0
      %4286 = vmatmul.mubr.f32.gmra.mrb[0].mxu0 %v3836
      %v4287 = vpop.f32.mrb[0].mxu0
      %v4288 = vadd.f32 0.0, %v4287
      %v4289 = vpop.f32.mrb[0].mxu0
      %v4290 = vadd.f32 0.0, %v4289
      %4291 = vmatprep.mubr.f32.mxu0 0.0
      %4292 = vmatmul.mubr.f32.gmra.mrb[0].mxu0 %v3839
      %v4293 = vpop.f32.mrb[0].mxu0
      %v4294 = vadd.f32 0.0, %v4293
      %v4295 = vpop.f32.mrb[0].mxu0
      %v4296 = vadd.f32 0.0, %v4295
      %4297 = vmatprep.mubr.f32.mxu0 0.0
      %4298 = vmatmul.mubr.f32.gmra.mrb[0].mxu0 %v3842
      %v4299 = vpop.f32.mrb[0].mxu0
      %v4300 = vadd.f32 0.0, %v4299
      %v4301 = vpop.f32.mrb[0].mxu0
      %v4302 = vadd.f32 0.0, %v4301
      %4303 = vmatprep.mubr.f32.mxu0 0.0
      %4304 = vmatmul.mubr.f32.gmra.mrb[0].mxu0 %v3845
      %v4305 = vpop.f32.mrb[0].mxu0
      %v4306 = vadd.f32 0.0, %v4305
      %v4307 = vpop.f32.mrb[0].mxu0
      %v4308 = vadd.f32 0.0, %v4307
      %4309 = vmatprep.mubr.f32.mxu0 0.0
      %4310 = vmatmul.mubr.f32.gmra.mrb[0].mxu0 %v3848
      %v4311 = vpop.f32.mrb[0].mxu0
      %v4312 = vadd.f32 0.0, %v4311
      %v4313 = vpop.f32.mrb[0].mxu0
      %v4314 = vadd.f32 0.0, %v4313
      %4315 = vmatprep.mubr.f32.mxu0 0.0
      %4316 = vmatmul.mubr.f32.gmra.mrb[0].mxu0 %v3851
      %v4317 = vpop.f32.mrb[0].mxu0
      %v4318 = vadd.f32 0.0, %v4317
      %v4319 = vpop.f32.mrb[0].mxu0
      %v4320 = vadd.f32 0.0, %v4319
      %4321 = vmatprep.mubr.f32.mxu0 0.0
      %4322 = vmatmul.mubr.f32.gmra.mrb[0].mxu0 %v3854
      %v4323 = vpop.f32.mrb[0].mxu0
      %v4324 = vadd.f32 0.0, %v4323
      %v4325 = vpop.f32.mrb[0].mxu0
      %v4326 = vadd.f32 0.0, %v4325
      %4327 = vmatprep.mubr.f32.mxu0 0.0
      %4328 = vmatmul.mubr.f32.gmra.mrb[0].mxu0 %v3857
      %v4329 = vpop.f32.mrb[0].mxu0
      %v4330 = vadd.f32 0.0, %v4329
      %v4331 = vpop.f32.mrb[0].mxu0
      %v4332 = vadd.f32 0.0, %v4331
      %4333 = vmatprep.mubr.f32.mxu0 0.0
      %4334 = vmatmul.mubr.f32.gmra.mrb[0].mxu0 %v3860
      %v4335 = vpop.f32.mrb[0].mxu0
      %v4336 = vadd.f32 0.0, %v4335
      %v4337 = vpop.f32.mrb[0].mxu0
      %v4338 = vadd.f32 0.0, %v4337
      %4339 = vmatprep.mubr.f32.mxu0 0.0
      %4340 = vmatmul.mubr.f32.gmra.mrb[0].mxu0 %v3863
      %v4341 = vpop.f32.mrb[0].mxu0
      %v4342 = vadd.f32 0.0, %v4341
      %v4343 = vpop.f32.mrb[0].mxu0
      %v4344 = vadd.f32 0.0, %v4343
      %4345 = vmatprep.mubr.f32.mxu0 0.0
      %4346 = vmatmul.mubr.f32.gmra.mrb[0].mxu0 %v3866
      %v4347 = vpop.f32.mrb[0].mxu0
      %v4348 = vadd.f32 0.0, %v4347
      %v4349 = vpop.f32.mrb[0].mxu0
      %v4350 = vadd.f32 0.0, %v4349
      %4351 = vmatprep.mubr.f32.mxu0 0.0
      %4352 = vmatmul.mubr.f32.gmra.mrb[0].mxu0 %v3869
      %v4353 = vpop.f32.mrb[0].mxu0
      %v4354 = vadd.f32 0.0, %v4353
      %v4355 = vpop.f32.mrb[0].mxu0
      %v4356 = vadd.f32 0.0, %v4355
      %4357 = vmatprep.mubr.f32.mxu0 0.0
      %4358 = vmatmul.mubr.f32.gmra.mrb[0].mxu0 %v3872
      %v4359 = vpop.f32.mrb[0].mxu0
      %v4360 = vadd.f32 0.0, %v4359
      %v4361 = vpop.f32.mrb[0].mxu0
      %v4362 = vadd.f32 0.0, %v4361
      %4363 = vmatprep.mubr.f32.mxu0 0.0
      %4364 = vmatmul.mubr.f32.gmra.mrb[0].mxu0 %v3875
      %v4365 = vpop.f32.mrb[0].mxu0
      %v4366 = vadd.f32 0.0, %v4365
      %v4367 = vpop.f32.mrb[0].mxu0
      %v4368 = vadd.f32 0.0, %v4367
      %4369 = vmatprep.mubr.f32.mxu0 0.0
      %4370 = vmatmul.mubr.f32.gmra.mrb[0].mxu0 %v3878
      %v4371 = vpop.f32.mrb[0].mxu0
      %v4372 = vadd.f32 0.0, %v4371
      %v4373 = vpop.f32.mrb[0].mxu0
      %v4374 = vadd.f32 0.0, %v4373
      %4375 = vmatprep.mubr.f32.mxu0 0.0
      %4376 = vmatmul.mubr.f32.gmra.mrb[0].mxu0 %v3881
      %v4377 = vpop.f32.mrb[0].mxu0
      %v4378 = vadd.f32 0.0, %v4377
      %v4379 = vpop.f32.mrb[0].mxu0
      %v4380 = vadd.f32 0.0, %v4379
      %4381 = vdwg.mxu0
      %4382 = vmatprep.subr.mxu0 %v3752
      %4383 = vmatpush1.msra.mxu0 %v3751
      %4384 = vmatprep.subr.mxu0 %v3759
      %4385 = vmatpush1.msra.mxu0 %v3758
      %4386 = vmatprep.subr.mxu0 %v3766
      %4387 = vmatpush1.msra.mxu0 %v3765
      %4388 = vmatprep.subr.mxu0 %v3773
      %4389 = vmatpush1.msra.mxu0 %v3772
      %4390 = vmatprep.subr.mxu0 %v3780
      %4391 = vmatpush1.msra.mxu0 %v3779
      %4392 = vmatprep.subr.mxu0 %v3787
      %4393 = vmatpush1.msra.mxu0 %v3786
      %4394 = vmatprep.subr.mxu0 %v3899
      %4395 = vmatpush1.msra.mxu0 %v3896
      %4396 = vmatprep.subr.mxu0 0.0
      %4397 = vmatpush1.msra.mxu0 0.0
      %4398 = vmatprep.subr.mxu0 0.0
      %4399 = vmatpush1.msra.mxu0 0.0
      %4400 = vmatprep.subr.mxu0 0.0
      %4401 = vmatpush1.msra.mxu0 0.0
      %4402 = vmatprep.subr.mxu0 0.0
      %4403 = vmatpush1.msra.mxu0 0.0
      %4404 = vmatprep.subr.mxu0 0.0
      %4405 = vmatpush1.msra.mxu0 0.0
      %4406 = vmatprep.subr.mxu0 0.0
      %4407 = vmatpush1.msra.mxu0 0.0
      %4408 = vmatprep.subr.mxu0 0.0
      %4409 = vmatpush1.msra.mxu0 0.0
      %4410 = vmatprep.subr.mxu0 0.0
      %4411 = vmatpush1.msra.mxu0 0.0
      %4412 = vmatprep.subr.mxu0 0.0
      %4413 = vmatpush1.msra.mxu0 0.0
      %4414 = vmatprep.subr.mxu0 0.0
      %4415 = vmatpush1.msra.mxu0 0.0
      %4416 = vmatprep.subr.mxu0 0.0
      %4417 = vmatpush1.msra.mxu0 0.0
      %4418 = vmatprep.subr.mxu0 0.0
      %4419 = vmatpush1.msra.mxu0 0.0
      %4420 = vmatprep.subr.mxu0 0.0
      %4421 = vmatpush1.msra.mxu0 0.0
      %4422 = vmatprep.subr.mxu0 0.0
      %4423 = vmatpush1.msra.mxu0 0.0
      %4424 = vmatprep.subr.mxu0 0.0
      %4425 = vmatpush1.msra.mxu0 0.0
      %4426 = vmatprep.subr.mxu0 0.0
      %4427 = vmatpush1.msra.mxu0 0.0
      %4428 = vmatprep.subr.mxu0 0.0
      %4429 = vmatpush1.msra.mxu0 0.0
      %4430 = vmatprep.subr.mxu0 0.0
      %4431 = vmatpush1.msra.mxu0 0.0
      %4432 = vmatprep.subr.mxu0 0.0
      %4433 = vmatpush1.msra.mxu0 0.0
      %4434 = vmatprep.subr.mxu0 0.0
      %4435 = vmatpush1.msra.mxu0 0.0
      %4436 = vmatprep.subr.mxu0 0.0
      %4437 = vmatpush1.msra.mxu0 0.0
      %4438 = vmatprep.subr.mxu0 0.0
      %4439 = vmatpush1.msra.mxu0 0.0
      %4440 = vmatprep.subr.mxu0 0.0
      %4441 = vmatpush1.msra.mxu0 0.0
      %4442 = vmatprep.subr.mxu0 0.0
      %4443 = vmatpush1.msra.mxu0 0.0
      %4444 = vmatprep.subr.mxu0 0.0
      %4445 = vmatpush1.msra.mxu0 0.0
      %4446 = vmatprep.mubr.f32.mxu0 0.0
      %4447 = vmatmul.mubr.f32.gmra.mrb[0].mxu0 %v3797
      %v4448 = vpop.f32.mrb[0].mxu0
      %v4449 = vadd.f32 0.0, %v4448
      %v4450 = vpop.f32.mrb[0].mxu0
      %v4451 = vadd.f32 0.0, %v4450
      %4452 = vmatprep.mubr.f32.mxu0 0.0
      %4453 = vmatmul.mubr.f32.gmra.mrb[0].mxu0 %v3800
      %v4454 = vpop.f32.mrb[0].mxu0
      %v4455 = vadd.f32 0.0, %v4454
      %v4456 = vpop.f32.mrb[0].mxu0
      %v4457 = vadd.f32 0.0, %v4456
      %4458 = vmatprep.mubr.f32.mxu0 0.0
      %4459 = vmatmul.mubr.f32.gmra.mrb[0].mxu0 %v3803
      %v4460 = vpop.f32.mrb[0].mxu0
      %v4461 = vadd.f32 0.0, %v4460
      %v4462 = vpop.f32.mrb[0].mxu0
      %v4463 = vadd.f32 0.0, %v4462
      %4464 = vmatprep.mubr.f32.mxu0 0.0
      %4465 = vmatmul.mubr.f32.gmra.mrb[0].mxu0 %v3806
      %v4466 = vpop.f32.mrb[0].mxu0
      %v4467 = vadd.f32 0.0, %v4466
      %v4468 = vpop.f32.mrb[0].mxu0
      %v4469 = vadd.f32 0.0, %v4468
      %4470 = vmatprep.mubr.f32.mxu0 0.0
      %4471 = vmatmul.mubr.f32.gmra.mrb[0].mxu0 %v3809
      %v4472 = vpop.f32.mrb[0].mxu0
      %v4473 = vadd.f32 0.0, %v4472
      %v4474 = vpop.f32.mrb[0].mxu0
      %v4475 = vadd.f32 0.0, %v4474
      %4476 = vmatprep.mubr.f32.mxu0 0.0
      %4477 = vmatmul.mubr.f32.gmra.mrb[0].mxu0 %v3812
      %v4478 = vpop.f32.mrb[0].mxu0
      %v4479 = vadd.f32 0.0, %v4478
      %v4480 = vpop.f32.mrb[0].mxu0
      %v4481 = vadd.f32 0.0, %v4480
      %4482 = vmatprep.mubr.f32.mxu0 0.0
      %4483 = vmatmul.mubr.f32.gmra.mrb[0].mxu0 %v3815
      %v4484 = vpop.f32.mrb[0].mxu0
      %v4485 = vadd.f32 0.0, %v4484
      %v4486 = vpop.f32.mrb[0].mxu0
      %v4487 = vadd.f32 0.0, %v4486
      %4488 = vmatprep.mubr.f32.mxu0 0.0
      %4489 = vmatmul.mubr.f32.gmra.mrb[0].mxu0 %v3818
      %v4490 = vpop.f32.mrb[0].mxu0
      %v4491 = vadd.f32 0.0, %v4490
      %v4492 = vpop.f32.mrb[0].mxu0
      %v4493 = vadd.f32 0.0, %v4492
      %4494 = vmatprep.mubr.f32.mxu0 0.0
      %4495 = vmatmul.mubr.f32.gmra.mrb[0].mxu0 %v3821
      %v4496 = vpop.f32.mrb[0].mxu0
      %v4497 = vadd.f32 0.0, %v4496
      %v4498 = vpop.f32.mrb[0].mxu0
      %v4499 = vadd.f32 0.0, %v4498
      %4500 = vmatprep.mubr.f32.mxu0 0.0
      %4501 = vmatmul.mubr.f32.gmra.mrb[0].mxu0 %v3824
      %v4502 = vpop.f32.mrb[0].mxu0
      %v4503 = vadd.f32 0.0, %v4502
      %v4504 = vpop.f32.mrb[0].mxu0
      %v4505 = vadd.f32 0.0, %v4504
      %4506 = vmatprep.mubr.f32.mxu0 0.0
      %4507 = vmatmul.mubr.f32.gmra.mrb[0].mxu0 %v3827
      %v4508 = vpop.f32.mrb[0].mxu0
      %v4509 = vadd.f32 0.0, %v4508
      %v4510 = vpop.f32.mrb[0].mxu0
      %v4511 = vadd.f32 0.0, %v4510
      %4512 = vmatprep.mubr.f32.mxu0 0.0
      %4513 = vmatmul.mubr.f32.gmra.mrb[0].mxu0 %v3830
      %v4514 = vpop.f32.mrb[0].mxu0
      %v4515 = vadd.f32 0.0, %v4514
      %v4516 = vpop.f32.mrb[0].mxu0
      %v4517 = vadd.f32 0.0, %v4516
      %4518 = vmatprep.mubr.f32.mxu0 0.0
      %4519 = vmatmul.mubr.f32.gmra.mrb[0].mxu0 %v3833
      %v4520 = vpop.f32.mrb[0].mxu0
      %v4521 = vadd.f32 0.0, %v4520
      %v4522 = vpop.f32.mrb[0].mxu0
      %v4523 = vadd.f32 0.0, %v4522
      %4524 = vmatprep.mubr.f32.mxu0 0.0
      %4525 = vmatmul.mubr.f32.gmra.mrb[0].mxu0 %v3836
      %v4526 = vpop.f32.mrb[0].mxu0
      %v4527 = vadd.f32 0.0, %v4526
      %v4528 = vpop.f32.mrb[0].mxu0
      %v4529 = vadd.f32 0.0, %v4528
      %4530 = vmatprep.mubr.f32.mxu0 0.0
      %4531 = vmatmul.mubr.f32.gmra.mrb[0].mxu0 %v3839
      %v4532 = vpop.f32.mrb[0].mxu0
      %v4533 = vadd.f32 0.0, %v4532
      %v4534 = vpop.f32.mrb[0].mxu0
      %v4535 = vadd.f32 0.0, %v4534
      %4536 = vmatprep.mubr.f32.mxu0 0.0
      %4537 = vmatmul.mubr.f32.gmra.mrb[0].mxu0 %v3842
      %v4538 = vpop.f32.mrb[0].mxu0
      %v4539 = vadd.f32 0.0, %v4538
      %v4540 = vpop.f32.mrb[0].mxu0
      %v4541 = vadd.f32 0.0, %v4540
      %4542 = vmatprep.mubr.f32.mxu0 0.0
      %4543 = vmatmul.mubr.f32.gmra.mrb[0].mxu0 %v3845
      %v4544 = vpop.f32.mrb[0].mxu0
      %v4545 = vadd.f32 0.0, %v4544
      %v4546 = vpop.f32.mrb[0].mxu0
      %v4547 = vadd.f32 0.0, %v4546
      %4548 = vmatprep.mubr.f32.mxu0 0.0
      %4549 = vmatmul.mubr.f32.gmra.mrb[0].mxu0 %v3848
      %v4550 = vpop.f32.mrb[0].mxu0
      %v4551 = vadd.f32 0.0, %v4550
      %v4552 = vpop.f32.mrb[0].mxu0
      %v4553 = vadd.f32 0.0, %v4552
      %4554 = vmatprep.mubr.f32.mxu0 0.0
      %4555 = vmatmul.mubr.f32.gmra.mrb[0].mxu0 %v3851
      %v4556 = vpop.f32.mrb[0].mxu0
      %v4557 = vadd.f32 0.0, %v4556
      %v4558 = vpop.f32.mrb[0].mxu0
      %v4559 = vadd.f32 0.0, %v4558
      %4560 = vmatprep.mubr.f32.mxu0 0.0
      %4561 = vmatmul.mubr.f32.gmra.mrb[0].mxu0 %v3854
      %v4562 = vpop.f32.mrb[0].mxu0
      %v4563 = vadd.f32 0.0, %v4562
      %v4564 = vpop.f32.mrb[0].mxu0
      %v4565 = vadd.f32 0.0, %v4564
      %4566 = vmatprep.mubr.f32.mxu0 0.0
      %4567 = vmatmul.mubr.f32.gmra.mrb[0].mxu0 %v3857
      %v4568 = vpop.f32.mrb[0].mxu0
      %v4569 = vadd.f32 0.0, %v4568
      %v4570 = vpop.f32.mrb[0].mxu0
      %v4571 = vadd.f32 0.0, %v4570
      %4572 = vmatprep.mubr.f32.mxu0 0.0
      %4573 = vmatmul.mubr.f32.gmra.mrb[0].mxu0 %v3860
      %v4574 = vpop.f32.mrb[0].mxu0
      %v4575 = vadd.f32 0.0, %v4574
      %v4576 = vpop.f32.mrb[0].mxu0
      %v4577 = vadd.f32 0.0, %v4576
      %4578 = vmatprep.mubr.f32.mxu0 0.0
      %4579 = vmatmul.mubr.f32.gmra.mrb[0].mxu0 %v3863
      %v4580 = vpop.f32.mrb[0].mxu0
      %v4581 = vadd.f32 0.0, %v4580
      %v4582 = vpop.f32.mrb[0].mxu0
      %v4583 = vadd.f32 0.0, %v4582
      %4584 = vmatprep.mubr.f32.mxu0 0.0
      %4585 = vmatmul.mubr.f32.gmra.mrb[0].mxu0 %v3866
      %v4586 = vpop.f32.mrb[0].mxu0
      %v4587 = vadd.f32 0.0, %v4586
      %v4588 = vpop.f32.mrb[0].mxu0
      %v4589 = vadd.f32 0.0, %v4588
      %4590 = vmatprep.mubr.f32.mxu0 0.0
      %4591 = vmatmul.mubr.f32.gmra.mrb[0].mxu0 %v3869
      %v4592 = vpop.f32.mrb[0].mxu0
      %v4593 = vadd.f32 0.0, %v4592
      %v4594 = vpop.f32.mrb[0].mxu0
      %v4595 = vadd.f32 0.0, %v4594
      %4596 = vmatprep.mubr.f32.mxu0 0.0
      %4597 = vmatmul.mubr.f32.gmra.mrb[0].mxu0 %v3872
      %v4598 = vpop.f32.mrb[0].mxu0
      %v4599 = vadd.f32 0.0, %v4598
      %v4600 = vpop.f32.mrb[0].mxu0
      %v4601 = vadd.f32 0.0, %v4600
      %4602 = vmatprep.mubr.f32.mxu0 0.0
      %4603 = vmatmul.mubr.f32.gmra.mrb[0].mxu0 %v3875
      %v4604 = vpop.f32.mrb[0].mxu0
      %v4605 = vadd.f32 0.0, %v4604
      %v4606 = vpop.f32.mrb[0].mxu0
      %v4607 = vadd.f32 0.0, %v4606
      %4608 = vmatprep.mubr.f32.mxu0 0.0
      %4609 = vmatmul.mubr.f32.gmra.mrb[0].mxu0 %v3878
      %v4610 = vpop.f32.mrb[0].mxu0
      %v4611 = vadd.f32 0.0, %v4610
      %v4612 = vpop.f32.mrb[0].mxu0
      %v4613 = vadd.f32 0.0, %v4612
      %4614 = vmatprep.mubr.f32.mxu0 0.0
      %4615 = vmatmul.mubr.f32.gmra.mrb[0].mxu0 %v3881
      %v4616 = vpop.f32.mrb[0].mxu0
      %v4617 = vadd.f32 0.0, %v4616
      %v4618 = vpop.f32.mrb[0].mxu0
      %v4619 = vadd.f32 0.0, %v4618
      %4620 = vdwg.mxu0
      %4621 = vmatprep.subr.mxu0 0.0
      %4622 = vmatpush1.msra.mxu0 %v3753
      %4623 = vmatprep.subr.mxu0 0.0
      %4624 = vmatpush1.msra.mxu0 %v3760
      %4625 = vmatprep.subr.mxu0 0.0
      %4626 = vmatpush1.msra.mxu0 %v3767
      %4627 = vmatprep.subr.mxu0 0.0
      %4628 = vmatpush1.msra.mxu0 %v3774
      %4629 = vmatprep.subr.mxu0 0.0
      %4630 = vmatpush1.msra.mxu0 %v3781
      %4631 = vmatprep.subr.mxu0 0.0
      %4632 = vmatpush1.msra.mxu0 %v3788
      %4633 = vmatprep.subr.mxu0 0.0
      %4634 = vmatpush1.msra.mxu0 %v3902
      %4635 = vmatprep.subr.mxu0 0.0
      %4636 = vmatpush1.msra.mxu0 0.0
      %4637 = vmatprep.subr.mxu0 0.0
      %4638 = vmatpush1.msra.mxu0 0.0
      %4639 = vmatprep.subr.mxu0 0.0
      %4640 = vmatpush1.msra.mxu0 0.0
      %4641 = vmatprep.subr.mxu0 0.0
      %4642 = vmatpush1.msra.mxu0 0.0
      %4643 = vmatprep.subr.mxu0 0.0
      %4644 = vmatpush1.msra.mxu0 0.0
      %4645 = vmatprep.subr.mxu0 0.0
      %4646 = vmatpush1.msra.mxu0 0.0
      %4647 = vmatprep.subr.mxu0 0.0
      %4648 = vmatpush1.msra.mxu0 0.0
      %4649 = vmatprep.subr.mxu0 0.0
      %4650 = vmatpush1.msra.mxu0 0.0
      %4651 = vmatprep.subr.mxu0 0.0
      %4652 = vmatpush1.msra.mxu0 0.0
      %4653 = vmatprep.subr.mxu0 0.0
      %4654 = vmatpush1.msra.mxu0 0.0
      %4655 = vmatprep.subr.mxu0 0.0
      %4656 = vmatpush1.msra.mxu0 0.0
      %4657 = vmatprep.subr.mxu0 0.0
      %4658 = vmatpush1.msra.mxu0 0.0
      %4659 = vmatprep.subr.mxu0 0.0
      %4660 = vmatpush1.msra.mxu0 0.0
      %4661 = vmatprep.subr.mxu0 0.0
      %4662 = vmatpush1.msra.mxu0 0.0
      %4663 = vmatprep.subr.mxu0 0.0
      %4664 = vmatpush1.msra.mxu0 0.0
      %4665 = vmatprep.subr.mxu0 0.0
      %4666 = vmatpush1.msra.mxu0 0.0
      %4667 = vmatprep.subr.mxu0 0.0
      %4668 = vmatpush1.msra.mxu0 0.0
      %4669 = vmatprep.subr.mxu0 0.0
      %4670 = vmatpush1.msra.mxu0 0.0
      %4671 = vmatprep.subr.mxu0 0.0
      %4672 = vmatpush1.msra.mxu0 0.0
      %4673 = vmatprep.subr.mxu0 0.0
      %4674 = vmatpush1.msra.mxu0 0.0
      %4675 = vmatprep.subr.mxu0 0.0
      %4676 = vmatpush1.msra.mxu0 0.0
      %4677 = vmatprep.subr.mxu0 0.0
      %4678 = vmatpush1.msra.mxu0 0.0
      %4679 = vmatprep.subr.mxu0 0.0
      %4680 = vmatpush1.msra.mxu0 0.0
      %4681 = vmatprep.subr.mxu0 0.0
      %4682 = vmatpush1.msra.mxu0 0.0
      %4683 = vmatprep.subr.mxu0 0.0
      %4684 = vmatpush1.msra.mxu0 0.0
      %4685 = vmatprep.mubr.f32.mxu0 0.0
      %4686 = vmatmul.mubr.f32.gmra.mrb[0].mxu0 %v3797
      %v4687 = vpop.f32.mrb[0].mxu0
      %v4688 = vadd.f32 0.0, %v4687
      %v4689 = vpop.f32.mrb[0].mxu0
      %4690 = vmatprep.mubr.f32.mxu0 0.0
      %4691 = vmatmul.mubr.f32.gmra.mrb[0].mxu0 %v3800
      %v4692 = vpop.f32.mrb[0].mxu0
      %v4693 = vadd.f32 0.0, %v4692
      %v4694 = vpop.f32.mrb[0].mxu0
      %4695 = vmatprep.mubr.f32.mxu0 0.0
      %4696 = vmatmul.mubr.f32.gmra.mrb[0].mxu0 %v3803
      %v4697 = vpop.f32.mrb[0].mxu0
      %v4698 = vadd.f32 0.0, %v4697
      %v4699 = vpop.f32.mrb[0].mxu0
      %4700 = vmatprep.mubr.f32.mxu0 0.0
      %4701 = vmatmul.mubr.f32.gmra.mrb[0].mxu0 %v3806
      %v4702 = vpop.f32.mrb[0].mxu0
      %v4703 = vadd.f32 0.0, %v4702
      %v4704 = vpop.f32.mrb[0].mxu0
      %4705 = vmatprep.mubr.f32.mxu0 0.0
      %4706 = vmatmul.mubr.f32.gmra.mrb[0].mxu0 %v3809
      %v4707 = vpop.f32.mrb[0].mxu0
      %v4708 = vadd.f32 0.0, %v4707
      %v4709 = vpop.f32.mrb[0].mxu0
      %4710 = vmatprep.mubr.f32.mxu0 0.0
      %4711 = vmatmul.mubr.f32.gmra.mrb[0].mxu0 %v3812
      %v4712 = vpop.f32.mrb[0].mxu0
      %v4713 = vadd.f32 0.0, %v4712
      %v4714 = vpop.f32.mrb[0].mxu0
      %4715 = vmatprep.mubr.f32.mxu0 0.0
      %4716 = vmatmul.mubr.f32.gmra.mrb[0].mxu0 %v3815
      %v4717 = vpop.f32.mrb[0].mxu0
      %v4718 = vadd.f32 0.0, %v4717
      %v4719 = vpop.f32.mrb[0].mxu0
      %4720 = vmatprep.mubr.f32.mxu0 0.0
      %4721 = vmatmul.mubr.f32.gmra.mrb[0].mxu0 %v3818
      %v4722 = vpop.f32.mrb[0].mxu0
      %v4723 = vadd.f32 0.0, %v4722
      %v4724 = vpop.f32.mrb[0].mxu0
      %4725 = vmatprep.mubr.f32.mxu0 0.0
      %4726 = vmatmul.mubr.f32.gmra.mrb[0].mxu0 %v3821
      %v4727 = vpop.f32.mrb[0].mxu0
      %v4728 = vadd.f32 0.0, %v4727
      %v4729 = vpop.f32.mrb[0].mxu0
      %4730 = vmatprep.mubr.f32.mxu0 0.0
      %4731 = vmatmul.mubr.f32.gmra.mrb[0].mxu0 %v3824
      %v4732 = vpop.f32.mrb[0].mxu0
      %v4733 = vadd.f32 0.0, %v4732
      %v4734 = vpop.f32.mrb[0].mxu0
      %4735 = vmatprep.mubr.f32.mxu0 0.0
      %4736 = vmatmul.mubr.f32.gmra.mrb[0].mxu0 %v3827
      %v4737 = vpop.f32.mrb[0].mxu0
      %v4738 = vadd.f32 0.0, %v4737
      %v4739 = vpop.f32.mrb[0].mxu0
      %4740 = vmatprep.mubr.f32.mxu0 0.0
      %4741 = vmatmul.mubr.f32.gmra.mrb[0].mxu0 %v3830
      %v4742 = vpop.f32.mrb[0].mxu0
      %v4743 = vadd.f32 0.0, %v4742
      %v4744 = vpop.f32.mrb[0].mxu0
      %4745 = vmatprep.mubr.f32.mxu0 0.0
      %4746 = vmatmul.mubr.f32.gmra.mrb[0].mxu0 %v3833
      %v4747 = vpop.f32.mrb[0].mxu0
      %v4748 = vadd.f32 0.0, %v4747
      %v4749 = vpop.f32.mrb[0].mxu0
      %4750 = vmatprep.mubr.f32.mxu0 0.0
      %4751 = vmatmul.mubr.f32.gmra.mrb[0].mxu0 %v3836
      %v4752 = vpop.f32.mrb[0].mxu0
      %v4753 = vadd.f32 0.0, %v4752
      %v4754 = vpop.f32.mrb[0].mxu0
      %4755 = vmatprep.mubr.f32.mxu0 0.0
      %4756 = vmatmul.mubr.f32.gmra.mrb[0].mxu0 %v3839
      %v4757 = vpop.f32.mrb[0].mxu0
      %v4758 = vadd.f32 0.0, %v4757
      %v4759 = vpop.f32.mrb[0].mxu0
      %4760 = vmatprep.mubr.f32.mxu0 0.0
      %4761 = vmatmul.mubr.f32.gmra.mrb[0].mxu0 %v3842
      %v4762 = vpop.f32.mrb[0].mxu0
      %v4763 = vadd.f32 0.0, %v4762
      %v4764 = vpop.f32.mrb[0].mxu0
      %4765 = vmatprep.mubr.f32.mxu0 0.0
      %4766 = vmatmul.mubr.f32.gmra.mrb[0].mxu0 %v3845
      %v4767 = vpop.f32.mrb[0].mxu0
      %v4768 = vadd.f32 0.0, %v4767
      %v4769 = vpop.f32.mrb[0].mxu0
      %4770 = vmatprep.mubr.f32.mxu0 0.0
      %4771 = vmatmul.mubr.f32.gmra.mrb[0].mxu0 %v3848
      %v4772 = vpop.f32.mrb[0].mxu0
      %v4773 = vadd.f32 0.0, %v4772
      %v4774 = vpop.f32.mrb[0].mxu0
      %4775 = vmatprep.mubr.f32.mxu0 0.0
      %4776 = vmatmul.mubr.f32.gmra.mrb[0].mxu0 %v3851
      %v4777 = vpop.f32.mrb[0].mxu0
      %v4778 = vadd.f32 0.0, %v4777
      %v4779 = vpop.f32.mrb[0].mxu0
      %4780 = vmatprep.mubr.f32.mxu0 0.0
      %4781 = vmatmul.mubr.f32.gmra.mrb[0].mxu0 %v3854
      %v4782 = vpop.f32.mrb[0].mxu0
      %v4783 = vadd.f32 0.0, %v4782
      %v4784 = vpop.f32.mrb[0].mxu0
      %4785 = vmatprep.mubr.f32.mxu0 0.0
      %4786 = vmatmul.mubr.f32.gmra.mrb[0].mxu0 %v3857
      %v4787 = vpop.f32.mrb[0].mxu0
      %v4788 = vadd.f32 0.0, %v4787
      %v4789 = vpop.f32.mrb[0].mxu0
      %4790 = vmatprep.mubr.f32.mxu0 0.0
      %4791 = vmatmul.mubr.f32.gmra.mrb[0].mxu0 %v3860
      %v4792 = vpop.f32.mrb[0].mxu0
      %v4793 = vadd.f32 0.0, %v4792
      %v4794 = vpop.f32.mrb[0].mxu0
      %4795 = vmatprep.mubr.f32.mxu0 0.0
      %4796 = vmatmul.mubr.f32.gmra.mrb[0].mxu0 %v3863
      %v4797 = vpop.f32.mrb[0].mxu0
      %v4798 = vadd.f32 0.0, %v4797
      %v4799 = vpop.f32.mrb[0].mxu0
      %4800 = vmatprep.mubr.f32.mxu0 0.0
      %4801 = vmatmul.mubr.f32.gmra.mrb[0].mxu0 %v3866
      %v4802 = vpop.f32.mrb[0].mxu0
      %v4803 = vadd.f32 0.0, %v4802
      %v4804 = vpop.f32.mrb[0].mxu0
      %4805 = vmatprep.mubr.f32.mxu0 0.0
      %4806 = vmatmul.mubr.f32.gmra.mrb[0].mxu0 %v3869
      %v4807 = vpop.f32.mrb[0].mxu0
      %v4808 = vadd.f32 0.0, %v4807
      %v4809 = vpop.f32.mrb[0].mxu0
      %4810 = vmatprep.mubr.f32.mxu0 0.0
      %4811 = vmatmul.mubr.f32.gmra.mrb[0].mxu0 %v3872
      %v4812 = vpop.f32.mrb[0].mxu0
      %v4813 = vadd.f32 0.0, %v4812
      %v4814 = vpop.f32.mrb[0].mxu0
      %4815 = vmatprep.mubr.f32.mxu0 0.0
      %4816 = vmatmul.mubr.f32.gmra.mrb[0].mxu0 %v3875
      %v4817 = vpop.f32.mrb[0].mxu0
      %v4818 = vadd.f32 0.0, %v4817
      %v4819 = vpop.f32.mrb[0].mxu0
      %4820 = vmatprep.mubr.f32.mxu0 0.0
      %4821 = vmatmul.mubr.f32.gmra.mrb[0].mxu0 %v3878
      %v4822 = vpop.f32.mrb[0].mxu0
      %v4823 = vadd.f32 0.0, %v4822
      %v4824 = vpop.f32.mrb[0].mxu0
      %4825 = vmatprep.mubr.f32.mxu0 0.0
      %4826 = vmatmul.mubr.f32.gmra.mrb[0].mxu0 %v3881
      %v4827 = vpop.f32.mrb[0].mxu0
      %v4828 = vadd.f32 0.0, %v4827
      %v4829 = vpop.f32.mrb[0].mxu0
      %4830 = vdwg.mxu0
      %v4831 = vadd.f32 %v3514, %v3971
      %v4832 = vadd.f32 %v3515, %v3973
      %v4833 = vadd.f32 %v3516, %v4210
      %v4834 = vadd.f32 %v3517, %v4212
      %v4835 = vadd.f32 %v3518, %v4449
      %v4836 = vadd.f32 %v3519, %v4451
      %v4837 = vadd.f32 %v3520, %v4688
      %v4838 = vadd.f32 %v3521, %v3977
      %v4839 = vadd.f32 %v3522, %v3979
      %v4840 = vadd.f32 %v3523, %v4216
      %v4841 = vadd.f32 %v3524, %v4218
      %v4842 = vadd.f32 %v3525, %v4455
      %v4843 = vadd.f32 %v3526, %v4457
      %v4844 = vadd.f32 %v3527, %v4693
      %v4845 = vadd.f32 %v3528, %v3983
      %v4846 = vadd.f32 %v3529, %v3985
      %v4847 = vadd.f32 %v3530, %v4222
      %v4848 = vadd.f32 %v3531, %v4224
      %v4849 = vadd.f32 %v3532, %v4461
      %v4850 = vadd.f32 %v3533, %v4463
      %v4851 = vadd.f32 %v3534, %v4698
      %v4852 = vadd.f32 %v3535, %v3989
      %v4853 = vadd.f32 %v3536, %v3991
      %v4854 = vadd.f32 %v3537, %v4228
      %v4855 = vadd.f32 %v3538, %v4230
      %v4856 = vadd.f32 %v3539, %v4467
      %v4857 = vadd.f32 %v3540, %v4469
      %v4858 = vadd.f32 %v3541, %v4703
      %v4859 = vadd.f32 %v3542, %v3995
      %v4860 = vadd.f32 %v3543, %v3997
      %v4861 = vadd.f32 %v3544, %v4234
      %v4862 = vadd.f32 %v3545, %v4236
      %v4863 = vadd.f32 %v3546, %v4473
      %v4864 = vadd.f32 %v3547, %v4475
      %v4865 = vadd.f32 %v3548, %v4708
      %v4866 = vadd.f32 %v3549, %v4001
      %v4867 = vadd.f32 %v3550, %v4003
      %v4868 = vadd.f32 %v3551, %v4240
      %v4869 = vadd.f32 %v3552, %v4242
      %v4870 = vadd.f32 %v3553, %v4479
      %v4871 = vadd.f32 %v3554, %v4481
      %v4872 = vadd.f32 %v3555, %v4713
      %v4873 = vadd.f32 %v3556, %v4007
      %v4874 = vadd.f32 %v3557, %v4009
      %v4875 = vadd.f32 %v3558, %v4246
      %v4876 = vadd.f32 %v3559, %v4248
      %v4877 = vadd.f32 %v3560, %v4485
      %v4878 = vadd.f32 %v3561, %v4487
      %v4879 = vadd.f32 %v3562, %v4718
      %v4880 = vadd.f32 %v3563, %v4013
      %v4881 = vadd.f32 %v3564, %v4015
      %v4882 = vadd.f32 %v3565, %v4252
      %v4883 = vadd.f32 %v3566, %v4254
      %v4884 = vadd.f32 %v3567, %v4491
      %v4885 = vadd.f32 %v3568, %v4493
      %v4886 = vadd.f32 %v3569, %v4723
      %v4887 = vadd.f32 %v3570, %v4019
      %v4888 = vadd.f32 %v3571, %v4021
      %v4889 = vadd.f32 %v3572, %v4258
      %v4890 = vadd.f32 %v3573, %v4260
      %v4891 = vadd.f32 %v3574, %v4497
      %v4892 = vadd.f32 %v3575, %v4499
      %v4893 = vadd.f32 %v3576, %v4728
      %v4894 = vadd.f32 %v3577, %v4025
      %v4895 = vadd.f32 %v3578, %v4027
      %v4896 = vadd.f32 %v3579, %v4264
      %v4897 = vadd.f32 %v3580, %v4266
      %v4898 = vadd.f32 %v3581, %v4503
      %v4899 = vadd.f32 %v3582, %v4505
      %v4900 = vadd.f32 %v3583, %v4733
      %v4901 = vadd.f32 %v3584, %v4031
      %v4902 = vadd.f32 %v3585, %v4033
      %v4903 = vadd.f32 %v3586, %v4270
      %v4904 = vadd.f32 %v3587, %v4272
      %v4905 = vadd.f32 %v3588, %v4509
      %v4906 = vadd.f32 %v3589, %v4511
      %v4907 = vadd.f32 %v3590, %v4738
      %v4908 = vadd.f32 %v3591, %v4037
      %v4909 = vadd.f32 %v3592, %v4039
      %v4910 = vadd.f32 %v3593, %v4276
      %v4911 = vadd.f32 %v3594, %v4278
      %v4912 = vadd.f32 %v3595, %v4515
      %v4913 = vadd.f32 %v3596, %v4517
      %v4914 = vadd.f32 %v3597, %v4743
      %v4915 = vadd.f32 %v3598, %v4043
      %v4916 = vadd.f32 %v3599, %v4045
      %v4917 = vadd.f32 %v3600, %v4282
      %v4918 = vadd.f32 %v3601, %v4284
      %v4919 = vadd.f32 %v3602, %v4521
      %v4920 = vadd.f32 %v3603, %v4523
      %v4921 = vadd.f32 %v3604, %v4748
      %v4922 = vadd.f32 %v3605, %v4049
      %v4923 = vadd.f32 %v3606, %v4051
      %v4924 = vadd.f32 %v3607, %v4288
      %v4925 = vadd.f32 %v3608, %v4290
      %v4926 = vadd.f32 %v3609, %v4527
      %v4927 = vadd.f32 %v3610, %v4529
      %v4928 = vadd.f32 %v3611, %v4753
      %v4929 = vadd.f32 %v3612, %v4055
      %v4930 = vadd.f32 %v3613, %v4057
      %v4931 = vadd.f32 %v3614, %v4294
      %v4932 = vadd.f32 %v3615, %v4296
      %v4933 = vadd.f32 %v3616, %v4533
      %v4934 = vadd.f32 %v3617, %v4535
      %v4935 = vadd.f32 %v3618, %v4758
      %v4936 = vadd.f32 %v3619, %v4061
      %v4937 = vadd.f32 %v3620, %v4063
      %v4938 = vadd.f32 %v3621, %v4300
      %v4939 = vadd.f32 %v3622, %v4302
      %v4940 = vadd.f32 %v3623, %v4539
      %v4941 = vadd.f32 %v3624, %v4541
      %v4942 = vadd.f32 %v3625, %v4763
      %v4943 = vadd.f32 %v3626, %v4067
      %v4944 = vadd.f32 %v3627, %v4069
      %v4945 = vadd.f32 %v3628, %v4306
      %v4946 = vadd.f32 %v3629, %v4308
      %v4947 = vadd.f32 %v3630, %v4545
      %v4948 = vadd.f32 %v3631, %v4547
      %v4949 = vadd.f32 %v3632, %v4768
      %v4950 = vadd.f32 %v3633, %v4073
      %v4951 = vadd.f32 %v3634, %v4075
      %v4952 = vadd.f32 %v3635, %v4312
      %v4953 = vadd.f32 %v3636, %v4314
      %v4954 = vadd.f32 %v3637, %v4551
      %v4955 = vadd.f32 %v3638, %v4553
      %v4956 = vadd.f32 %v3639, %v4773
      %v4957 = vadd.f32 %v3640, %v4079
      %v4958 = vadd.f32 %v3641, %v4081
      %v4959 = vadd.f32 %v3642, %v4318
      %v4960 = vadd.f32 %v3643, %v4320
      %v4961 = vadd.f32 %v3644, %v4557
      %v4962 = vadd.f32 %v3645, %v4559
      %v4963 = vadd.f32 %v3646, %v4778
      %v4964 = vadd.f32 %v3647, %v4085
      %v4965 = vadd.f32 %v3648, %v4087
      %v4966 = vadd.f32 %v3649, %v4324
      %v4967 = vadd.f32 %v3650, %v4326
      %v4968 = vadd.f32 %v3651, %v4563
      %v4969 = vadd.f32 %v3652, %v4565
      %v4970 = vadd.f32 %v3653, %v4783
      %v4971 = vadd.f32 %v3654, %v4091
      %v4972 = vadd.f32 %v3655, %v4093
      %v4973 = vadd.f32 %v3656, %v4330
      %v4974 = vadd.f32 %v3657, %v4332
      %v4975 = vadd.f32 %v3658, %v4569
      %v4976 = vadd.f32 %v3659, %v4571
      %v4977 = vadd.f32 %v3660, %v4788
      %v4978 = vadd.f32 %v3661, %v4097
      %v4979 = vadd.f32 %v3662, %v4099
      %v4980 = vadd.f32 %v3663, %v4336
      %v4981 = vadd.f32 %v3664, %v4338
      %v4982 = vadd.f32 %v3665, %v4575
      %v4983 = vadd.f32 %v3666, %v4577
      %v4984 = vadd.f32 %v3667, %v4793
      %v4985 = vadd.f32 %v3668, %v4103
      %v4986 = vadd.f32 %v3669, %v4105
      %v4987 = vadd.f32 %v3670, %v4342
      %v4988 = vadd.f32 %v3671, %v4344
      %v4989 = vadd.f32 %v3672, %v4581
      %v4990 = vadd.f32 %v3673, %v4583
      %v4991 = vadd.f32 %v3674, %v4798
      %v4992 = vadd.f32 %v3675, %v4109
      %v4993 = vadd.f32 %v3676, %v4111
      %v4994 = vadd.f32 %v3677, %v4348
      %v4995 = vadd.f32 %v3678, %v4350
      %v4996 = vadd.f32 %v3679, %v4587
      %v4997 = vadd.f32 %v3680, %v4589
      %v4998 = vadd.f32 %v3681, %v4803
      %v4999 = vadd.f32 %v3682, %v4115
      %v5000 = vadd.f32 %v3683, %v4117
      %v5001 = vadd.f32 %v3684, %v4354
      %v5002 = vadd.f32 %v3685, %v4356
      %v5003 = vadd.f32 %v3686, %v4593
      %v5004 = vadd.f32 %v3687, %v4595
      %v5005 = vadd.f32 %v3688, %v4808
      %v5006 = vadd.f32 %v3689, %v4121
      %v5007 = vadd.f32 %v3690, %v4123
      %v5008 = vadd.f32 %v3691, %v4360
      %v5009 = vadd.f32 %v3692, %v4362
      %v5010 = vadd.f32 %v3693, %v4599
      %v5011 = vadd.f32 %v3694, %v4601
      %v5012 = vadd.f32 %v3695, %v4813
      %v5013 = vadd.f32 %v3696, %v4127
      %v5014 = vadd.f32 %v3697, %v4129
      %v5015 = vadd.f32 %v3698, %v4366
      %v5016 = vadd.f32 %v3699, %v4368
      %v5017 = vadd.f32 %v3700, %v4605
      %v5018 = vadd.f32 %v3701, %v4607
      %v5019 = vadd.f32 %v3702, %v4818
      %v5020 = vadd.f32 %v3703, %v4133
      %v5021 = vadd.f32 %v3704, %v4135
      %v5022 = vadd.f32 %v3705, %v4372
      %v5023 = vadd.f32 %v3706, %v4374
      %v5024 = vadd.f32 %v3707, %v4611
      %v5025 = vadd.f32 %v3708, %v4613
      %v5026 = vadd.f32 %v3709, %v4823
      %v5027 = vadd.f32 %v3710, %v4139
      %v5028 = vadd.f32 %v3711, %v4141
      %v5029 = vadd.f32 %v3712, %v4378
      %v5030 = vadd.f32 %v3713, %v4380
      %v5031 = vadd.f32 %v3714, %v4617
      %v5032 = vadd.f32 %v3715, %v4619
      %v5033 = vadd.f32 %v3716, %v4828
      %v5034 = vld [vmem:[%s165 + $0x4] sm:$0xff]
      %v5035 = vld [vmem:[%s165 + $0xc] sm:$0xff]
      %v5036 = vld [vmem:[%s165 + $0x14] sm:$0xff]
      %v5037 = vld [vmem:[%s165 + $0x1c] sm:$0xff]
      %v5038 = vld [vmem:[%s165 + $0x24] sm:$0xff]
      %v5039 = vld [vmem:[%s165 + $0x2c] sm:$0xff]
      %v5040 = vld [vmem:[%s165 + $0x34] sm:$0xff]
      %v5041 = vld [vmem:[%s165 + $0x3c] sm:$0xff]
      %v5042 = vld [vmem:[%s165 + $0x44] sm:$0xff]
      %v5043 = vld [vmem:[%s165 + $0x4c] sm:$0xff]
      %v5044 = vld [vmem:[%s165 + $0x54] sm:$0xff]
      %v5045 = vld [vmem:[%s165 + $0x5c] sm:$0xff]
      %v5046 = vld [vmem:[%s165 + $0x64] sm:$0xff]
      %v5047 = vld [vmem:[%s165 + $0x6c] sm:$0xff]
      %v5048 = vld [vmem:[%s165 + $0x74] sm:$0xff]
      %v5049 = vld [vmem:[%s165 + $0x7c] sm:$0xff]
      %v5050 = vld [vmem:[%s165 + $0x84] sm:$0xff]
      %v5051 = vld [vmem:[%s165 + $0x8c] sm:$0xff]
      %v5052 = vld [vmem:[%s165 + $0x94] sm:$0xff]
      %v5053 = vld [vmem:[%s165 + $0x9c] sm:$0xff]
      %v5054 = vld [vmem:[%s165 + $0xa4] sm:$0xff]
      %v5055 = vld [vmem:[%s165 + $0xac] sm:$0xff]
      %v5056 = vld [vmem:[%s165 + $0xb4] sm:$0xff]
      %v5057 = vld [vmem:[%s165 + $0xbc] sm:$0xff]
      %v5058 = vld [vmem:[%s165 + $0xc4] sm:$0xff]
      %v5059 = vld [vmem:[%s165 + $0xcc] sm:$0xff]
      %v5060 = vld [vmem:[%s165 + $0xd4] sm:$0xff]
      %v5061 = vld [vmem:[%s165 + $0xdc] sm:$0xff]
      %v5062 = vld [vmem:[%s165 + $0xe4] sm:$0x7]
      %s5063 = scalar_lea.vmem %s1, 1568
      %v5064 = vld [vmem:[%s5063] sm:$0xff]
      %v5065 = vld [vmem:[%s5063 + $0x8] sm:$0xff]
      %v5066 = vld [vmem:[%s5063 + $0x10] sm:$0xff]
      %v5067 = vld [vmem:[%s5063 + $0x18] sm:$0xff]
      %v5068 = vld [vmem:[%s5063 + $0x20] sm:$0xff]
      %v5069 = vld [vmem:[%s5063 + $0x28] sm:$0xff]
      %v5070 = vld [vmem:[%s5063 + $0x30] sm:$0xff]
      %v5071 = vld [vmem:[%s5063 + $0x38] sm:$0xff]
      %v5072 = vld [vmem:[%s5063 + $0x40] sm:$0xff]
      %v5073 = vld [vmem:[%s5063 + $0x48] sm:$0xff]
      %v5074 = vld [vmem:[%s5063 + $0x50] sm:$0xff]
      %v5075 = vld [vmem:[%s5063 + $0x58] sm:$0xff]
      %v5076 = vld [vmem:[%s5063 + $0x60] sm:$0xff]
      %v5077 = vld [vmem:[%s5063 + $0x68] sm:$0xff]
      %v5078 = vld [vmem:[%s5063 + $0x70] sm:$0xff]
      %v5079 = vld [vmem:[%s5063 + $0x78] sm:$0xff]
      %v5080 = vld [vmem:[%s5063 + $0x80] sm:$0xff]
      %v5081 = vld [vmem:[%s5063 + $0x88] sm:$0xff]
      %v5082 = vld [vmem:[%s5063 + $0x90] sm:$0xff]
      %v5083 = vld [vmem:[%s5063 + $0x98] sm:$0xff]
      %v5084 = vld [vmem:[%s5063 + $0xa0] sm:$0xff]
      %v5085 = vld [vmem:[%s5063 + $0xa8] sm:$0xff]
      %v5086 = vld [vmem:[%s5063 + $0xb0] sm:$0xff]
      %v5087 = vld [vmem:[%s5063 + $0xb8] sm:$0xff]
      %v5088 = vld [vmem:[%s5063 + $0xc0] sm:$0xff]
      %v5089 = vld [vmem:[%s5063 + $0xc8] sm:$0xff]
      %v5090 = vld [vmem:[%s5063 + $0xd0] sm:$0xff]
      %v5091 = vld [vmem:[%s5063 + $0xd8] sm:$0xff]
      %v5092 = vld [vmem:[%s5063 + $0xe0] sm:$0xff]
      %v5093 = vld [vmem:[%s5063 + $0xe8] sm:$0xff]
      %v5094 = vld [vmem:[%s5063 + $0xf0] sm:$0xff]
      %v5095 = vld [vmem:[%s5063 + $0xf8] sm:$0xff]
      %v5096 = vld [vmem:[%s5063 + $0x100] sm:$0xff]
      %v5097 = vld [vmem:[%s5063 + $0x108] sm:$0xff]
      %v5098 = vld [vmem:[%s5063 + $0x110] sm:$0xff]
      %v5099 = vld [vmem:[%s5063 + $0x118] sm:$0xff]
      %v5100 = vld [vmem:[%s5063 + $0x120] sm:$0xff]
      %v5101 = vld [vmem:[%s5063 + $0x128] sm:$0xff]
      %v5102 = vld [vmem:[%s5063 + $0x130] sm:$0xff]
      %v5103 = vld [vmem:[%s5063 + $0x138] sm:$0xff]
      %v5104 = vld [vmem:[%s5063 + $0x140] sm:$0xff]
      %v5105 = vld [vmem:[%s5063 + $0x148] sm:$0xff]
      %v5106 = vld [vmem:[%s5063 + $0x150] sm:$0xf]
      %v5107 = vld [vmem:[%s5063 + $0x158] sm:$0xf]
      %v5108 = vld [vmem:[%s5063 + $0x160] sm:$0xf]
      %v5109 = vld [vmem:[%s5063 + $0x168] sm:$0xf]
      %v5110 = vld [vmem:[%s5063 + $0x170] sm:$0xf]
      %v5111 = vld [vmem:[%s5063 + $0x178] sm:$0xf]
      %v5112 = vld [vmem:[%s5063 + $0x180] sm:$0xf]
      %v5114 = vsel %vm328, %v5034, 0
      %v5117 = vsel %vm328, %v5035, 0
      %v5120 = vsel %vm328, %v5036, 0
      %v5123 = vsel %vm328, %v5037, 0
      %v5126 = vsel %vm328, %v5038, 0
      %v5129 = vsel %vm328, %v5039, 0
      %v5132 = vsel %vm328, %v5040, 0
      %v5135 = vsel %vm328, %v5041, 0
      %v5138 = vsel %vm328, %v5042, 0
      %v5141 = vsel %vm328, %v5043, 0
      %v5144 = vsel %vm328, %v5044, 0
      %v5147 = vsel %vm328, %v5045, 0
      %v5150 = vsel %vm328, %v5046, 0
      %v5153 = vsel %vm328, %v5047, 0
      %v5156 = vsel %vm328, %v5048, 0
      %v5159 = vsel %vm328, %v5049, 0
      %v5162 = vsel %vm328, %v5050, 0
      %v5165 = vsel %vm328, %v5051, 0
      %v5168 = vsel %vm328, %v5052, 0
      %v5171 = vsel %vm328, %v5053, 0
      %v5174 = vsel %vm328, %v5054, 0
      %v5177 = vsel %vm328, %v5055, 0
      %v5180 = vsel %vm328, %v5056, 0
      %v5183 = vsel %vm328, %v5057, 0
      %v5186 = vsel %vm328, %v5058, 0
      %v5189 = vsel %vm328, %v5059, 0
      %v5192 = vsel %vm328, %v5060, 0
      %v5195 = vsel %vm328, %v5061, 0
      %v5198 = vsel %vm328, %v5062, 0
      %v5201 = vsel %vm416, %v5106, 0
      %v5204 = vsel %vm416, %v5107, 0
      %v5207 = vsel %vm416, %v5108, 0
      %v5210 = vsel %vm416, %v5109, 0
      %v5213 = vsel %vm416, %v5110, 0
      %v5216 = vsel %vm416, %v5111, 0
      %v5219 = vsel %vm416, %v5112, 0
      %5221 = vmatprep.subr.mxu0 %v5065
      %5222 = vmatpush1.msra.mxu0 %v5064
      %5223 = vmatprep.subr.mxu0 %v5072
      %5224 = vmatpush1.msra.mxu0 %v5071
      %5225 = vmatprep.subr.mxu0 %v5079
      %5226 = vmatpush1.msra.mxu0 %v5078
      %5227 = vmatprep.subr.mxu0 %v5086
      %5228 = vmatpush1.msra.mxu0 %v5085
      %5229 = vmatprep.subr.mxu0 %v5093
      %5230 = vmatpush1.msra.mxu0 %v5092
      %5231 = vmatprep.subr.mxu0 %v5100
      %5232 = vmatpush1.msra.mxu0 %v5099
      %5233 = vmatprep.subr.mxu0 %v5204
      %5234 = vmatpush1.msra.mxu0 %v5201
      %5235 = vmatprep.subr.mxu0 0.0
      %5236 = vmatpush1.msra.mxu0 0.0
      %5237 = vmatprep.subr.mxu0 0.0
      %5238 = vmatpush1.msra.mxu0 0.0
      %5239 = vmatprep.subr.mxu0 0.0
      %5240 = vmatpush1.msra.mxu0 0.0
      %5241 = vmatprep.subr.mxu0 0.0
      %5242 = vmatpush1.msra.mxu0 0.0
      %5243 = vmatprep.subr.mxu0 0.0
      %5244 = vmatpush1.msra.mxu0 0.0
      %5245 = vmatprep.subr.mxu0 0.0
      %5246 = vmatpush1.msra.mxu0 0.0
      %5247 = vmatprep.subr.mxu0 0.0
      %5248 = vmatpush1.msra.mxu0 0.0
      %5249 = vmatprep.subr.mxu0 0.0
      %5250 = vmatpush1.msra.mxu0 0.0
      %5251 = vmatprep.subr.mxu0 0.0
      %5252 = vmatpush1.msra.mxu0 0.0
      %5253 = vmatprep.subr.mxu0 0.0
      %5254 = vmatpush1.msra.mxu0 0.0
      %5255 = vmatprep.subr.mxu0 0.0
      %5256 = vmatpush1.msra.mxu0 0.0
      %5257 = vmatprep.subr.mxu0 0.0
      %5258 = vmatpush1.msra.mxu0 0.0
      %5259 = vmatprep.subr.mxu0 0.0
      %5260 = vmatpush1.msra.mxu0 0.0
      %5261 = vmatprep.subr.mxu0 0.0
      %5262 = vmatpush1.msra.mxu0 0.0
      %5263 = vmatprep.subr.mxu0 0.0
      %5264 = vmatpush1.msra.mxu0 0.0
      %5265 = vmatprep.subr.mxu0 0.0
      %5266 = vmatpush1.msra.mxu0 0.0
      %5267 = vmatprep.subr.mxu0 0.0
      %5268 = vmatpush1.msra.mxu0 0.0
      %5269 = vmatprep.subr.mxu0 0.0
      %5270 = vmatpush1.msra.mxu0 0.0
      %5271 = vmatprep.subr.mxu0 0.0
      %5272 = vmatpush1.msra.mxu0 0.0
      %5273 = vmatprep.subr.mxu0 0.0
      %5274 = vmatpush1.msra.mxu0 0.0
      %5275 = vmatprep.subr.mxu0 0.0
      %5276 = vmatpush1.msra.mxu0 0.0
      %5277 = vmatprep.subr.mxu0 0.0
      %5278 = vmatpush1.msra.mxu0 0.0
      %5279 = vmatprep.subr.mxu0 0.0
      %5280 = vmatpush1.msra.mxu0 0.0
      %5281 = vmatprep.subr.mxu0 0.0
      %5282 = vmatpush1.msra.mxu0 0.0
      %5283 = vmatprep.subr.mxu0 0.0
      %5284 = vmatpush1.msra.mxu0 0.0
      %5285 = vmatprep.mubr.f32.mxu0 0.0
      %5286 = vmatmul.mubr.f32.gmra.mrb[0].mxu0 %v5114
      %v5287 = vpop.f32.mrb[0].mxu0
      %v5288 = vadd.f32 0.0, %v5287
      %v5289 = vpop.f32.mrb[0].mxu0
      %v5290 = vadd.f32 0.0, %v5289
      %5291 = vmatprep.mubr.f32.mxu0 0.0
      %5292 = vmatmul.mubr.f32.gmra.mrb[0].mxu0 %v5117
      %v5293 = vpop.f32.mrb[0].mxu0
      %v5294 = vadd.f32 0.0, %v5293
      %v5295 = vpop.f32.mrb[0].mxu0
      %v5296 = vadd.f32 0.0, %v5295
      %5297 = vmatprep.mubr.f32.mxu0 0.0
      %5298 = vmatmul.mubr.f32.gmra.mrb[0].mxu0 %v5120
      %v5299 = vpop.f32.mrb[0].mxu0
      %v5300 = vadd.f32 0.0, %v5299
      %v5301 = vpop.f32.mrb[0].mxu0
      %v5302 = vadd.f32 0.0, %v5301
      %5303 = vmatprep.mubr.f32.mxu0 0.0
      %5304 = vmatmul.mubr.f32.gmra.mrb[0].mxu0 %v5123
      %v5305 = vpop.f32.mrb[0].mxu0
      %v5306 = vadd.f32 0.0, %v5305
      %v5307 = vpop.f32.mrb[0].mxu0
      %v5308 = vadd.f32 0.0, %v5307
      %5309 = vmatprep.mubr.f32.mxu0 0.0
      %5310 = vmatmul.mubr.f32.gmra.mrb[0].mxu0 %v5126
      %v5311 = vpop.f32.mrb[0].mxu0
      %v5312 = vadd.f32 0.0, %v5311
      %v5313 = vpop.f32.mrb[0].mxu0
      %v5314 = vadd.f32 0.0, %v5313
      %5315 = vmatprep.mubr.f32.mxu0 0.0
      %5316 = vmatmul.mubr.f32.gmra.mrb[0].mxu0 %v5129
      %v5317 = vpop.f32.mrb[0].mxu0
      %v5318 = vadd.f32 0.0, %v5317
      %v5319 = vpop.f32.mrb[0].mxu0
      %v5320 = vadd.f32 0.0, %v5319
      %5321 = vmatprep.mubr.f32.mxu0 0.0
      %5322 = vmatmul.mubr.f32.gmra.mrb[0].mxu0 %v5132
      %v5323 = vpop.f32.mrb[0].mxu0
      %v5324 = vadd.f32 0.0, %v5323
      %v5325 = vpop.f32.mrb[0].mxu0
      %v5326 = vadd.f32 0.0, %v5325
      %5327 = vmatprep.mubr.f32.mxu0 0.0
      %5328 = vmatmul.mubr.f32.gmra.mrb[0].mxu0 %v5135
      %v5329 = vpop.f32.mrb[0].mxu0
      %v5330 = vadd.f32 0.0, %v5329
      %v5331 = vpop.f32.mrb[0].mxu0
      %v5332 = vadd.f32 0.0, %v5331
      %5333 = vmatprep.mubr.f32.mxu0 0.0
      %5334 = vmatmul.mubr.f32.gmra.mrb[0].mxu0 %v5138
      %v5335 = vpop.f32.mrb[0].mxu0
      %v5336 = vadd.f32 0.0, %v5335
      %v5337 = vpop.f32.mrb[0].mxu0
      %v5338 = vadd.f32 0.0, %v5337
      %5339 = vmatprep.mubr.f32.mxu0 0.0
      %5340 = vmatmul.mubr.f32.gmra.mrb[0].mxu0 %v5141
      %v5341 = vpop.f32.mrb[0].mxu0
      %v5342 = vadd.f32 0.0, %v5341
      %v5343 = vpop.f32.mrb[0].mxu0
      %v5344 = vadd.f32 0.0, %v5343
      %5345 = vmatprep.mubr.f32.mxu0 0.0
      %5346 = vmatmul.mubr.f32.gmra.mrb[0].mxu0 %v5144
      %v5347 = vpop.f32.mrb[0].mxu0
      %v5348 = vadd.f32 0.0, %v5347
      %v5349 = vpop.f32.mrb[0].mxu0
      %v5350 = vadd.f32 0.0, %v5349
      %5351 = vmatprep.mubr.f32.mxu0 0.0
      %5352 = vmatmul.mubr.f32.gmra.mrb[0].mxu0 %v5147
      %v5353 = vpop.f32.mrb[0].mxu0
      %v5354 = vadd.f32 0.0, %v5353
      %v5355 = vpop.f32.mrb[0].mxu0
      %v5356 = vadd.f32 0.0, %v5355
      %5357 = vmatprep.mubr.f32.mxu0 0.0
      %5358 = vmatmul.mubr.f32.gmra.mrb[0].mxu0 %v5150
      %v5359 = vpop.f32.mrb[0].mxu0
      %v5360 = vadd.f32 0.0, %v5359
      %v5361 = vpop.f32.mrb[0].mxu0
      %v5362 = vadd.f32 0.0, %v5361
      %5363 = vmatprep.mubr.f32.mxu0 0.0
      %5364 = vmatmul.mubr.f32.gmra.mrb[0].mxu0 %v5153
      %v5365 = vpop.f32.mrb[0].mxu0
      %v5366 = vadd.f32 0.0, %v5365
      %v5367 = vpop.f32.mrb[0].mxu0
      %v5368 = vadd.f32 0.0, %v5367
      %5369 = vmatprep.mubr.f32.mxu0 0.0
      %5370 = vmatmul.mubr.f32.gmra.mrb[0].mxu0 %v5156
      %v5371 = vpop.f32.mrb[0].mxu0
      %v5372 = vadd.f32 0.0, %v5371
      %v5373 = vpop.f32.mrb[0].mxu0
      %v5374 = vadd.f32 0.0, %v5373
      %5375 = vmatprep.mubr.f32.mxu0 0.0
      %5376 = vmatmul.mubr.f32.gmra.mrb[0].mxu0 %v5159
      %v5377 = vpop.f32.mrb[0].mxu0
      %v5378 = vadd.f32 0.0, %v5377
      %v5379 = vpop.f32.mrb[0].mxu0
      %v5380 = vadd.f32 0.0, %v5379
      %5381 = vmatprep.mubr.f32.mxu0 0.0
      %5382 = vmatmul.mubr.f32.gmra.mrb[0].mxu0 %v5162
      %v5383 = vpop.f32.mrb[0].mxu0
      %v5384 = vadd.f32 0.0, %v5383
      %v5385 = vpop.f32.mrb[0].mxu0
      %v5386 = vadd.f32 0.0, %v5385
      %5387 = vmatprep.mubr.f32.mxu0 0.0
      %5388 = vmatmul.mubr.f32.gmra.mrb[0].mxu0 %v5165
      %v5389 = vpop.f32.mrb[0].mxu0
      %v5390 = vadd.f32 0.0, %v5389
      %v5391 = vpop.f32.mrb[0].mxu0
      %v5392 = vadd.f32 0.0, %v5391
      %5393 = vmatprep.mubr.f32.mxu0 0.0
      %5394 = vmatmul.mubr.f32.gmra.mrb[0].mxu0 %v5168
      %v5395 = vpop.f32.mrb[0].mxu0
      %v5396 = vadd.f32 0.0, %v5395
      %v5397 = vpop.f32.mrb[0].mxu0
      %v5398 = vadd.f32 0.0, %v5397
      %5399 = vmatprep.mubr.f32.mxu0 0.0
      %5400 = vmatmul.mubr.f32.gmra.mrb[0].mxu0 %v5171
      %v5401 = vpop.f32.mrb[0].mxu0
      %v5402 = vadd.f32 0.0, %v5401
      %v5403 = vpop.f32.mrb[0].mxu0
      %v5404 = vadd.f32 0.0, %v5403
      %5405 = vmatprep.mubr.f32.mxu0 0.0
      %5406 = vmatmul.mubr.f32.gmra.mrb[0].mxu0 %v5174
      %v5407 = vpop.f32.mrb[0].mxu0
      %v5408 = vadd.f32 0.0, %v5407
      %v5409 = vpop.f32.mrb[0].mxu0
      %v5410 = vadd.f32 0.0, %v5409
      %5411 = vmatprep.mubr.f32.mxu0 0.0
      %5412 = vmatmul.mubr.f32.gmra.mrb[0].mxu0 %v5177
      %v5413 = vpop.f32.mrb[0].mxu0
      %v5414 = vadd.f32 0.0, %v5413
      %v5415 = vpop.f32.mrb[0].mxu0
      %v5416 = vadd.f32 0.0, %v5415
      %5417 = vmatprep.mubr.f32.mxu0 0.0
      %5418 = vmatmul.mubr.f32.gmra.mrb[0].mxu0 %v5180
      %v5419 = vpop.f32.mrb[0].mxu0
      %v5420 = vadd.f32 0.0, %v5419
      %v5421 = vpop.f32.mrb[0].mxu0
      %v5422 = vadd.f32 0.0, %v5421
      %5423 = vmatprep.mubr.f32.mxu0 0.0
      %5424 = vmatmul.mubr.f32.gmra.mrb[0].mxu0 %v5183
      %v5425 = vpop.f32.mrb[0].mxu0
      %v5426 = vadd.f32 0.0, %v5425
      %v5427 = vpop.f32.mrb[0].mxu0
      %v5428 = vadd.f32 0.0, %v5427
      %5429 = vmatprep.mubr.f32.mxu0 0.0
      %5430 = vmatmul.mubr.f32.gmra.mrb[0].mxu0 %v5186
      %v5431 = vpop.f32.mrb[0].mxu0
      %v5432 = vadd.f32 0.0, %v5431
      %v5433 = vpop.f32.mrb[0].mxu0
      %v5434 = vadd.f32 0.0, %v5433
      %5435 = vmatprep.mubr.f32.mxu0 0.0
      %5436 = vmatmul.mubr.f32.gmra.mrb[0].mxu0 %v5189
      %v5437 = vpop.f32.mrb[0].mxu0
      %v5438 = vadd.f32 0.0, %v5437
      %v5439 = vpop.f32.mrb[0].mxu0
      %v5440 = vadd.f32 0.0, %v5439
      %5441 = vmatprep.mubr.f32.mxu0 0.0
      %5442 = vmatmul.mubr.f32.gmra.mrb[0].mxu0 %v5192
      %v5443 = vpop.f32.mrb[0].mxu0
      %v5444 = vadd.f32 0.0, %v5443
      %v5445 = vpop.f32.mrb[0].mxu0
      %v5446 = vadd.f32 0.0, %v5445
      %5447 = vmatprep.mubr.f32.mxu0 0.0
      %5448 = vmatmul.mubr.f32.gmra.mrb[0].mxu0 %v5195
      %v5449 = vpop.f32.mrb[0].mxu0
      %v5450 = vadd.f32 0.0, %v5449
      %v5451 = vpop.f32.mrb[0].mxu0
      %v5452 = vadd.f32 0.0, %v5451
      %5453 = vmatprep.mubr.f32.mxu0 0.0
      %5454 = vmatmul.mubr.f32.gmra.mrb[0].mxu0 %v5198
      %v5455 = vpop.f32.mrb[0].mxu0
      %v5456 = vadd.f32 0.0, %v5455
      %v5457 = vpop.f32.mrb[0].mxu0
      %v5458 = vadd.f32 0.0, %v5457
      %5459 = vdwg.mxu0
      %5460 = vmatprep.subr.mxu0 %v5067
      %5461 = vmatpush1.msra.mxu0 %v5066
      %5462 = vmatprep.subr.mxu0 %v5074
      %5463 = vmatpush1.msra.mxu0 %v5073
      %5464 = vmatprep.subr.mxu0 %v5081
      %5465 = vmatpush1.msra.mxu0 %v5080
      %5466 = vmatprep.subr.mxu0 %v5088
      %5467 = vmatpush1.msra.mxu0 %v5087
      %5468 = vmatprep.subr.mxu0 %v5095
      %5469 = vmatpush1.msra.mxu0 %v5094
      %5470 = vmatprep.subr.mxu0 %v5102
      %5471 = vmatpush1.msra.mxu0 %v5101
      %5472 = vmatprep.subr.mxu0 %v5210
      %5473 = vmatpush1.msra.mxu0 %v5207
      %5474 = vmatprep.subr.mxu0 0.0
      %5475 = vmatpush1.msra.mxu0 0.0
      %5476 = vmatprep.subr.mxu0 0.0
      %5477 = vmatpush1.msra.mxu0 0.0
      %5478 = vmatprep.subr.mxu0 0.0
      %5479 = vmatpush1.msra.mxu0 0.0
      %5480 = vmatprep.subr.mxu0 0.0
      %5481 = vmatpush1.msra.mxu0 0.0
      %5482 = vmatprep.subr.mxu0 0.0
      %5483 = vmatpush1.msra.mxu0 0.0
      %5484 = vmatprep.subr.mxu0 0.0
      %5485 = vmatpush1.msra.mxu0 0.0
      %5486 = vmatprep.subr.mxu0 0.0
      %5487 = vmatpush1.msra.mxu0 0.0
      %5488 = vmatprep.subr.mxu0 0.0
      %5489 = vmatpush1.msra.mxu0 0.0
      %5490 = vmatprep.subr.mxu0 0.0
      %5491 = vmatpush1.msra.mxu0 0.0
      %5492 = vmatprep.subr.mxu0 0.0
      %5493 = vmatpush1.msra.mxu0 0.0
      %5494 = vmatprep.subr.mxu0 0.0
      %5495 = vmatpush1.msra.mxu0 0.0
      %5496 = vmatprep.subr.mxu0 0.0
      %5497 = vmatpush1.msra.mxu0 0.0
      %5498 = vmatprep.subr.mxu0 0.0
      %5499 = vmatpush1.msra.mxu0 0.0
      %5500 = vmatprep.subr.mxu0 0.0
      %5501 = vmatpush1.msra.mxu0 0.0
      %5502 = vmatprep.subr.mxu0 0.0
      %5503 = vmatpush1.msra.mxu0 0.0
      %5504 = vmatprep.subr.mxu0 0.0
      %5505 = vmatpush1.msra.mxu0 0.0
      %5506 = vmatprep.subr.mxu0 0.0
      %5507 = vmatpush1.msra.mxu0 0.0
      %5508 = vmatprep.subr.mxu0 0.0
      %5509 = vmatpush1.msra.mxu0 0.0
      %5510 = vmatprep.subr.mxu0 0.0
      %5511 = vmatpush1.msra.mxu0 0.0
      %5512 = vmatprep.subr.mxu0 0.0
      %5513 = vmatpush1.msra.mxu0 0.0
      %5514 = vmatprep.subr.mxu0 0.0
      %5515 = vmatpush1.msra.mxu0 0.0
      %5516 = vmatprep.subr.mxu0 0.0
      %5517 = vmatpush1.msra.mxu0 0.0
      %5518 = vmatprep.subr.mxu0 0.0
      %5519 = vmatpush1.msra.mxu0 0.0
      %5520 = vmatprep.subr.mxu0 0.0
      %5521 = vmatpush1.msra.mxu0 0.0
      %5522 = vmatprep.subr.mxu0 0.0
      %5523 = vmatpush1.msra.mxu0 0.0
      %5524 = vmatprep.mubr.f32.mxu0 0.0
      %5525 = vmatmul.mubr.f32.gmra.mrb[0].mxu0 %v5114
      %v5526 = vpop.f32.mrb[0].mxu0
      %v5527 = vadd.f32 0.0, %v5526
      %v5528 = vpop.f32.mrb[0].mxu0
      %v5529 = vadd.f32 0.0, %v5528
      %5530 = vmatprep.mubr.f32.mxu0 0.0
      %5531 = vmatmul.mubr.f32.gmra.mrb[0].mxu0 %v5117
      %v5532 = vpop.f32.mrb[0].mxu0
      %v5533 = vadd.f32 0.0, %v5532
      %v5534 = vpop.f32.mrb[0].mxu0
      %v5535 = vadd.f32 0.0, %v5534
      %5536 = vmatprep.mubr.f32.mxu0 0.0
      %5537 = vmatmul.mubr.f32.gmra.mrb[0].mxu0 %v5120
      %v5538 = vpop.f32.mrb[0].mxu0
      %v5539 = vadd.f32 0.0, %v5538
      %v5540 = vpop.f32.mrb[0].mxu0
      %v5541 = vadd.f32 0.0, %v5540
      %5542 = vmatprep.mubr.f32.mxu0 0.0
      %5543 = vmatmul.mubr.f32.gmra.mrb[0].mxu0 %v5123
      %v5544 = vpop.f32.mrb[0].mxu0
      %v5545 = vadd.f32 0.0, %v5544
      %v5546 = vpop.f32.mrb[0].mxu0
      %v5547 = vadd.f32 0.0, %v5546
      %5548 = vmatprep.mubr.f32.mxu0 0.0
      %5549 = vmatmul.mubr.f32.gmra.mrb[0].mxu0 %v5126
      %v5550 = vpop.f32.mrb[0].mxu0
      %v5551 = vadd.f32 0.0, %v5550
      %v5552 = vpop.f32.mrb[0].mxu0
      %v5553 = vadd.f32 0.0, %v5552
      %5554 = vmatprep.mubr.f32.mxu0 0.0
      %5555 = vmatmul.mubr.f32.gmra.mrb[0].mxu0 %v5129
      %v5556 = vpop.f32.mrb[0].mxu0
      %v5557 = vadd.f32 0.0, %v5556
      %v5558 = vpop.f32.mrb[0].mxu0
      %v5559 = vadd.f32 0.0, %v5558
      %5560 = vmatprep.mubr.f32.mxu0 0.0
      %5561 = vmatmul.mubr.f32.gmra.mrb[0].mxu0 %v5132
      %v5562 = vpop.f32.mrb[0].mxu0
      %v5563 = vadd.f32 0.0, %v5562
      %v5564 = vpop.f32.mrb[0].mxu0
      %v5565 = vadd.f32 0.0, %v5564
      %5566 = vmatprep.mubr.f32.mxu0 0.0
      %5567 = vmatmul.mubr.f32.gmra.mrb[0].mxu0 %v5135
      %v5568 = vpop.f32.mrb[0].mxu0
      %v5569 = vadd.f32 0.0, %v5568
      %v5570 = vpop.f32.mrb[0].mxu0
      %v5571 = vadd.f32 0.0, %v5570
      %5572 = vmatprep.mubr.f32.mxu0 0.0
      %5573 = vmatmul.mubr.f32.gmra.mrb[0].mxu0 %v5138
      %v5574 = vpop.f32.mrb[0].mxu0
      %v5575 = vadd.f32 0.0, %v5574
      %v5576 = vpop.f32.mrb[0].mxu0
      %v5577 = vadd.f32 0.0, %v5576
      %5578 = vmatprep.mubr.f32.mxu0 0.0
      %5579 = vmatmul.mubr.f32.gmra.mrb[0].mxu0 %v5141
      %v5580 = vpop.f32.mrb[0].mxu0
      %v5581 = vadd.f32 0.0, %v5580
      %v5582 = vpop.f32.mrb[0].mxu0
      %v5583 = vadd.f32 0.0, %v5582
      %5584 = vmatprep.mubr.f32.mxu0 0.0
      %5585 = vmatmul.mubr.f32.gmra.mrb[0].mxu0 %v5144
      %v5586 = vpop.f32.mrb[0].mxu0
      %v5587 = vadd.f32 0.0, %v5586
      %v5588 = vpop.f32.mrb[0].mxu0
      %v5589 = vadd.f32 0.0, %v5588
      %5590 = vmatprep.mubr.f32.mxu0 0.0
      %5591 = vmatmul.mubr.f32.gmra.mrb[0].mxu0 %v5147
      %v5592 = vpop.f32.mrb[0].mxu0
      %v5593 = vadd.f32 0.0, %v5592
      %v5594 = vpop.f32.mrb[0].mxu0
      %v5595 = vadd.f32 0.0, %v5594
      %5596 = vmatprep.mubr.f32.mxu0 0.0
      %5597 = vmatmul.mubr.f32.gmra.mrb[0].mxu0 %v5150
      %v5598 = vpop.f32.mrb[0].mxu0
      %v5599 = vadd.f32 0.0, %v5598
      %v5600 = vpop.f32.mrb[0].mxu0
      %v5601 = vadd.f32 0.0, %v5600
      %5602 = vmatprep.mubr.f32.mxu0 0.0
      %5603 = vmatmul.mubr.f32.gmra.mrb[0].mxu0 %v5153
      %v5604 = vpop.f32.mrb[0].mxu0
      %v5605 = vadd.f32 0.0, %v5604
      %v5606 = vpop.f32.mrb[0].mxu0
      %v5607 = vadd.f32 0.0, %v5606
      %5608 = vmatprep.mubr.f32.mxu0 0.0
      %5609 = vmatmul.mubr.f32.gmra.mrb[0].mxu0 %v5156
      %v5610 = vpop.f32.mrb[0].mxu0
      %v5611 = vadd.f32 0.0, %v5610
      %v5612 = vpop.f32.mrb[0].mxu0
      %v5613 = vadd.f32 0.0, %v5612
      %5614 = vmatprep.mubr.f32.mxu0 0.0
      %5615 = vmatmul.mubr.f32.gmra.mrb[0].mxu0 %v5159
      %v5616 = vpop.f32.mrb[0].mxu0
      %v5617 = vadd.f32 0.0, %v5616
      %v5618 = vpop.f32.mrb[0].mxu0
      %v5619 = vadd.f32 0.0, %v5618
      %5620 = vmatprep.mubr.f32.mxu0 0.0
      %5621 = vmatmul.mubr.f32.gmra.mrb[0].mxu0 %v5162
      %v5622 = vpop.f32.mrb[0].mxu0
      %v5623 = vadd.f32 0.0, %v5622
      %v5624 = vpop.f32.mrb[0].mxu0
      %v5625 = vadd.f32 0.0, %v5624
      %5626 = vmatprep.mubr.f32.mxu0 0.0
      %5627 = vmatmul.mubr.f32.gmra.mrb[0].mxu0 %v5165
      %v5628 = vpop.f32.mrb[0].mxu0
      %v5629 = vadd.f32 0.0, %v5628
      %v5630 = vpop.f32.mrb[0].mxu0
      %v5631 = vadd.f32 0.0, %v5630
      %5632 = vmatprep.mubr.f32.mxu0 0.0
      %5633 = vmatmul.mubr.f32.gmra.mrb[0].mxu0 %v5168
      %v5634 = vpop.f32.mrb[0].mxu0
      %v5635 = vadd.f32 0.0, %v5634
      %v5636 = vpop.f32.mrb[0].mxu0
      %v5637 = vadd.f32 0.0, %v5636
      %5638 = vmatprep.mubr.f32.mxu0 0.0
      %5639 = vmatmul.mubr.f32.gmra.mrb[0].mxu0 %v5171
      %v5640 = vpop.f32.mrb[0].mxu0
      %v5641 = vadd.f32 0.0, %v5640
      %v5642 = vpop.f32.mrb[0].mxu0
      %v5643 = vadd.f32 0.0, %v5642
      %5644 = vmatprep.mubr.f32.mxu0 0.0
      %5645 = vmatmul.mubr.f32.gmra.mrb[0].mxu0 %v5174
      %v5646 = vpop.f32.mrb[0].mxu0
      %v5647 = vadd.f32 0.0, %v5646
      %v5648 = vpop.f32.mrb[0].mxu0
      %v5649 = vadd.f32 0.0, %v5648
      %5650 = vmatprep.mubr.f32.mxu0 0.0
      %5651 = vmatmul.mubr.f32.gmra.mrb[0].mxu0 %v5177
      %v5652 = vpop.f32.mrb[0].mxu0
      %v5653 = vadd.f32 0.0, %v5652
      %v5654 = vpop.f32.mrb[0].mxu0
      %v5655 = vadd.f32 0.0, %v5654
      %5656 = vmatprep.mubr.f32.mxu0 0.0
      %5657 = vmatmul.mubr.f32.gmra.mrb[0].mxu0 %v5180
      %v5658 = vpop.f32.mrb[0].mxu0
      %v5659 = vadd.f32 0.0, %v5658
      %v5660 = vpop.f32.mrb[0].mxu0
      %v5661 = vadd.f32 0.0, %v5660
      %5662 = vmatprep.mubr.f32.mxu0 0.0
      %5663 = vmatmul.mubr.f32.gmra.mrb[0].mxu0 %v5183
      %v5664 = vpop.f32.mrb[0].mxu0
      %v5665 = vadd.f32 0.0, %v5664
      %v5666 = vpop.f32.mrb[0].mxu0
      %v5667 = vadd.f32 0.0, %v5666
      %5668 = vmatprep.mubr.f32.mxu0 0.0
      %5669 = vmatmul.mubr.f32.gmra.mrb[0].mxu0 %v5186
      %v5670 = vpop.f32.mrb[0].mxu0
      %v5671 = vadd.f32 0.0, %v5670
      %v5672 = vpop.f32.mrb[0].mxu0
      %v5673 = vadd.f32 0.0, %v5672
      %5674 = vmatprep.mubr.f32.mxu0 0.0
      %5675 = vmatmul.mubr.f32.gmra.mrb[0].mxu0 %v5189
      %v5676 = vpop.f32.mrb[0].mxu0
      %v5677 = vadd.f32 0.0, %v5676
      %v5678 = vpop.f32.mrb[0].mxu0
      %v5679 = vadd.f32 0.0, %v5678
      %5680 = vmatprep.mubr.f32.mxu0 0.0
      %5681 = vmatmul.mubr.f32.gmra.mrb[0].mxu0 %v5192
      %v5682 = vpop.f32.mrb[0].mxu0
      %v5683 = vadd.f32 0.0, %v5682
      %v5684 = vpop.f32.mrb[0].mxu0
      %v5685 = vadd.f32 0.0, %v5684
      %5686 = vmatprep.mubr.f32.mxu0 0.0
      %5687 = vmatmul.mubr.f32.gmra.mrb[0].mxu0 %v5195
      %v5688 = vpop.f32.mrb[0].mxu0
      %v5689 = vadd.f32 0.0, %v5688
      %v5690 = vpop.f32.mrb[0].mxu0
      %v5691 = vadd.f32 0.0, %v5690
      %5692 = vmatprep.mubr.f32.mxu0 0.0
      %5693 = vmatmul.mubr.f32.gmra.mrb[0].mxu0 %v5198
      %v5694 = vpop.f32.mrb[0].mxu0
      %v5695 = vadd.f32 0.0, %v5694
      %v5696 = vpop.f32.mrb[0].mxu0
      %v5697 = vadd.f32 0.0, %v5696
      %5698 = vdwg.mxu0
      %5699 = vmatprep.subr.mxu0 %v5069
      %5700 = vmatpush1.msra.mxu0 %v5068
      %5701 = vmatprep.subr.mxu0 %v5076
      %5702 = vmatpush1.msra.mxu0 %v5075
      %5703 = vmatprep.subr.mxu0 %v5083
      %5704 = vmatpush1.msra.mxu0 %v5082
      %5705 = vmatprep.subr.mxu0 %v5090
      %5706 = vmatpush1.msra.mxu0 %v5089
      %5707 = vmatprep.subr.mxu0 %v5097
      %5708 = vmatpush1.msra.mxu0 %v5096
      %5709 = vmatprep.subr.mxu0 %v5104
      %5710 = vmatpush1.msra.mxu0 %v5103
      %5711 = vmatprep.subr.mxu0 %v5216
      %5712 = vmatpush1.msra.mxu0 %v5213
      %5713 = vmatprep.subr.mxu0 0.0
      %5714 = vmatpush1.msra.mxu0 0.0
      %5715 = vmatprep.subr.mxu0 0.0
      %5716 = vmatpush1.msra.mxu0 0.0
      %5717 = vmatprep.subr.mxu0 0.0
      %5718 = vmatpush1.msra.mxu0 0.0
      %5719 = vmatprep.subr.mxu0 0.0
      %5720 = vmatpush1.msra.mxu0 0.0
      %5721 = vmatprep.subr.mxu0 0.0
      %5722 = vmatpush1.msra.mxu0 0.0
      %5723 = vmatprep.subr.mxu0 0.0
      %5724 = vmatpush1.msra.mxu0 0.0
      %5725 = vmatprep.subr.mxu0 0.0
      %5726 = vmatpush1.msra.mxu0 0.0
      %5727 = vmatprep.subr.mxu0 0.0
      %5728 = vmatpush1.msra.mxu0 0.0
      %5729 = vmatprep.subr.mxu0 0.0
      %5730 = vmatpush1.msra.mxu0 0.0
      %5731 = vmatprep.subr.mxu0 0.0
      %5732 = vmatpush1.msra.mxu0 0.0
      %5733 = vmatprep.subr.mxu0 0.0
      %5734 = vmatpush1.msra.mxu0 0.0
      %5735 = vmatprep.subr.mxu0 0.0
      %5736 = vmatpush1.msra.mxu0 0.0
      %5737 = vmatprep.subr.mxu0 0.0
      %5738 = vmatpush1.msra.mxu0 0.0
      %5739 = vmatprep.subr.mxu0 0.0
      %5740 = vmatpush1.msra.mxu0 0.0
      %5741 = vmatprep.subr.mxu0 0.0
      %5742 = vmatpush1.msra.mxu0 0.0
      %5743 = vmatprep.subr.mxu0 0.0
      %5744 = vmatpush1.msra.mxu0 0.0
      %5745 = vmatprep.subr.mxu0 0.0
      %5746 = vmatpush1.msra.mxu0 0.0
      %5747 = vmatprep.subr.mxu0 0.0
      %5748 = vmatpush1.msra.mxu0 0.0
      %5749 = vmatprep.subr.mxu0 0.0
      %5750 = vmatpush1.msra.mxu0 0.0
      %5751 = vmatprep.subr.mxu0 0.0
      %5752 = vmatpush1.msra.mxu0 0.0
      %5753 = vmatprep.subr.mxu0 0.0
      %5754 = vmatpush1.msra.mxu0 0.0
      %5755 = vmatprep.subr.mxu0 0.0
      %5756 = vmatpush1.msra.mxu0 0.0
      %5757 = vmatprep.subr.mxu0 0.0
      %5758 = vmatpush1.msra.mxu0 0.0
      %5759 = vmatprep.subr.mxu0 0.0
      %5760 = vmatpush1.msra.mxu0 0.0
      %5761 = vmatprep.subr.mxu0 0.0
      %5762 = vmatpush1.msra.mxu0 0.0
      %5763 = vmatprep.mubr.f32.mxu0 0.0
      %5764 = vmatmul.mubr.f32.gmra.mrb[0].mxu0 %v5114
      %v5765 = vpop.f32.mrb[0].mxu0
      %v5766 = vadd.f32 0.0, %v5765
      %v5767 = vpop.f32.mrb[0].mxu0
      %v5768 = vadd.f32 0.0, %v5767
      %5769 = vmatprep.mubr.f32.mxu0 0.0
      %5770 = vmatmul.mubr.f32.gmra.mrb[0].mxu0 %v5117
      %v5771 = vpop.f32.mrb[0].mxu0
      %v5772 = vadd.f32 0.0, %v5771
      %v5773 = vpop.f32.mrb[0].mxu0
      %v5774 = vadd.f32 0.0, %v5773
      %5775 = vmatprep.mubr.f32.mxu0 0.0
      %5776 = vmatmul.mubr.f32.gmra.mrb[0].mxu0 %v5120
      %v5777 = vpop.f32.mrb[0].mxu0
      %v5778 = vadd.f32 0.0, %v5777
      %v5779 = vpop.f32.mrb[0].mxu0
      %v5780 = vadd.f32 0.0, %v5779
      %5781 = vmatprep.mubr.f32.mxu0 0.0
      %5782 = vmatmul.mubr.f32.gmra.mrb[0].mxu0 %v5123
      %v5783 = vpop.f32.mrb[0].mxu0
      %v5784 = vadd.f32 0.0, %v5783
      %v5785 = vpop.f32.mrb[0].mxu0
      %v5786 = vadd.f32 0.0, %v5785
      %5787 = vmatprep.mubr.f32.mxu0 0.0
      %5788 = vmatmul.mubr.f32.gmra.mrb[0].mxu0 %v5126
      %v5789 = vpop.f32.mrb[0].mxu0
      %v5790 = vadd.f32 0.0, %v5789
      %v5791 = vpop.f32.mrb[0].mxu0
      %v5792 = vadd.f32 0.0, %v5791
      %5793 = vmatprep.mubr.f32.mxu0 0.0
      %5794 = vmatmul.mubr.f32.gmra.mrb[0].mxu0 %v5129
      %v5795 = vpop.f32.mrb[0].mxu0
      %v5796 = vadd.f32 0.0, %v5795
      %v5797 = vpop.f32.mrb[0].mxu0
      %v5798 = vadd.f32 0.0, %v5797
      %5799 = vmatprep.mubr.f32.mxu0 0.0
      %5800 = vmatmul.mubr.f32.gmra.mrb[0].mxu0 %v5132
      %v5801 = vpop.f32.mrb[0].mxu0
      %v5802 = vadd.f32 0.0, %v5801
      %v5803 = vpop.f32.mrb[0].mxu0
      %v5804 = vadd.f32 0.0, %v5803
      %5805 = vmatprep.mubr.f32.mxu0 0.0
      %5806 = vmatmul.mubr.f32.gmra.mrb[0].mxu0 %v5135
      %v5807 = vpop.f32.mrb[0].mxu0
      %v5808 = vadd.f32 0.0, %v5807
      %v5809 = vpop.f32.mrb[0].mxu0
      %v5810 = vadd.f32 0.0, %v5809
      %5811 = vmatprep.mubr.f32.mxu0 0.0
      %5812 = vmatmul.mubr.f32.gmra.mrb[0].mxu0 %v5138
      %v5813 = vpop.f32.mrb[0].mxu0
      %v5814 = vadd.f32 0.0, %v5813
      %v5815 = vpop.f32.mrb[0].mxu0
      %v5816 = vadd.f32 0.0, %v5815
      %5817 = vmatprep.mubr.f32.mxu0 0.0
      %5818 = vmatmul.mubr.f32.gmra.mrb[0].mxu0 %v5141
      %v5819 = vpop.f32.mrb[0].mxu0
      %v5820 = vadd.f32 0.0, %v5819
      %v5821 = vpop.f32.mrb[0].mxu0
      %v5822 = vadd.f32 0.0, %v5821
      %5823 = vmatprep.mubr.f32.mxu0 0.0
      %5824 = vmatmul.mubr.f32.gmra.mrb[0].mxu0 %v5144
      %v5825 = vpop.f32.mrb[0].mxu0
      %v5826 = vadd.f32 0.0, %v5825
      %v5827 = vpop.f32.mrb[0].mxu0
      %v5828 = vadd.f32 0.0, %v5827
      %5829 = vmatprep.mubr.f32.mxu0 0.0
      %5830 = vmatmul.mubr.f32.gmra.mrb[0].mxu0 %v5147
      %v5831 = vpop.f32.mrb[0].mxu0
      %v5832 = vadd.f32 0.0, %v5831
      %v5833 = vpop.f32.mrb[0].mxu0
      %v5834 = vadd.f32 0.0, %v5833
      %5835 = vmatprep.mubr.f32.mxu0 0.0
      %5836 = vmatmul.mubr.f32.gmra.mrb[0].mxu0 %v5150
      %v5837 = vpop.f32.mrb[0].mxu0
      %v5838 = vadd.f32 0.0, %v5837
      %v5839 = vpop.f32.mrb[0].mxu0
      %v5840 = vadd.f32 0.0, %v5839
      %5841 = vmatprep.mubr.f32.mxu0 0.0
      %5842 = vmatmul.mubr.f32.gmra.mrb[0].mxu0 %v5153
      %v5843 = vpop.f32.mrb[0].mxu0
      %v5844 = vadd.f32 0.0, %v5843
      %v5845 = vpop.f32.mrb[0].mxu0
      %v5846 = vadd.f32 0.0, %v5845
      %5847 = vmatprep.mubr.f32.mxu0 0.0
      %5848 = vmatmul.mubr.f32.gmra.mrb[0].mxu0 %v5156
      %v5849 = vpop.f32.mrb[0].mxu0
      %v5850 = vadd.f32 0.0, %v5849
      %v5851 = vpop.f32.mrb[0].mxu0
      %v5852 = vadd.f32 0.0, %v5851
      %5853 = vmatprep.mubr.f32.mxu0 0.0
      %5854 = vmatmul.mubr.f32.gmra.mrb[0].mxu0 %v5159
      %v5855 = vpop.f32.mrb[0].mxu0
      %v5856 = vadd.f32 0.0, %v5855
      %v5857 = vpop.f32.mrb[0].mxu0
      %v5858 = vadd.f32 0.0, %v5857
      %5859 = vmatprep.mubr.f32.mxu0 0.0
      %5860 = vmatmul.mubr.f32.gmra.mrb[0].mxu0 %v5162
      %v5861 = vpop.f32.mrb[0].mxu0
      %v5862 = vadd.f32 0.0, %v5861
      %v5863 = vpop.f32.mrb[0].mxu0
      %v5864 = vadd.f32 0.0, %v5863
      %5865 = vmatprep.mubr.f32.mxu0 0.0
      %5866 = vmatmul.mubr.f32.gmra.mrb[0].mxu0 %v5165
      %v5867 = vpop.f32.mrb[0].mxu0
      %v5868 = vadd.f32 0.0, %v5867
      %v5869 = vpop.f32.mrb[0].mxu0
      %v5870 = vadd.f32 0.0, %v5869
      %5871 = vmatprep.mubr.f32.mxu0 0.0
      %5872 = vmatmul.mubr.f32.gmra.mrb[0].mxu0 %v5168
      %v5873 = vpop.f32.mrb[0].mxu0
      %v5874 = vadd.f32 0.0, %v5873
      %v5875 = vpop.f32.mrb[0].mxu0
      %v5876 = vadd.f32 0.0, %v5875
      %5877 = vmatprep.mubr.f32.mxu0 0.0
      %5878 = vmatmul.mubr.f32.gmra.mrb[0].mxu0 %v5171
      %v5879 = vpop.f32.mrb[0].mxu0
      %v5880 = vadd.f32 0.0, %v5879
      %v5881 = vpop.f32.mrb[0].mxu0
      %v5882 = vadd.f32 0.0, %v5881
      %5883 = vmatprep.mubr.f32.mxu0 0.0
      %5884 = vmatmul.mubr.f32.gmra.mrb[0].mxu0 %v5174
      %v5885 = vpop.f32.mrb[0].mxu0
      %v5886 = vadd.f32 0.0, %v5885
      %v5887 = vpop.f32.mrb[0].mxu0
      %v5888 = vadd.f32 0.0, %v5887
      %5889 = vmatprep.mubr.f32.mxu0 0.0
      %5890 = vmatmul.mubr.f32.gmra.mrb[0].mxu0 %v5177
      %v5891 = vpop.f32.mrb[0].mxu0
      %v5892 = vadd.f32 0.0, %v5891
      %v5893 = vpop.f32.mrb[0].mxu0
      %v5894 = vadd.f32 0.0, %v5893
      %5895 = vmatprep.mubr.f32.mxu0 0.0
      %5896 = vmatmul.mubr.f32.gmra.mrb[0].mxu0 %v5180
      %v5897 = vpop.f32.mrb[0].mxu0
      %v5898 = vadd.f32 0.0, %v5897
      %v5899 = vpop.f32.mrb[0].mxu0
      %v5900 = vadd.f32 0.0, %v5899
      %5901 = vmatprep.mubr.f32.mxu0 0.0
      %5902 = vmatmul.mubr.f32.gmra.mrb[0].mxu0 %v5183
      %v5903 = vpop.f32.mrb[0].mxu0
      %v5904 = vadd.f32 0.0, %v5903
      %v5905 = vpop.f32.mrb[0].mxu0
      %v5906 = vadd.f32 0.0, %v5905
      %5907 = vmatprep.mubr.f32.mxu0 0.0
      %5908 = vmatmul.mubr.f32.gmra.mrb[0].mxu0 %v5186
      %v5909 = vpop.f32.mrb[0].mxu0
      %v5910 = vadd.f32 0.0, %v5909
      %v5911 = vpop.f32.mrb[0].mxu0
      %v5912 = vadd.f32 0.0, %v5911
      %5913 = vmatprep.mubr.f32.mxu0 0.0
      %5914 = vmatmul.mubr.f32.gmra.mrb[0].mxu0 %v5189
      %v5915 = vpop.f32.mrb[0].mxu0
      %v5916 = vadd.f32 0.0, %v5915
      %v5917 = vpop.f32.mrb[0].mxu0
      %v5918 = vadd.f32 0.0, %v5917
      %5919 = vmatprep.mubr.f32.mxu0 0.0
      %5920 = vmatmul.mubr.f32.gmra.mrb[0].mxu0 %v5192
      %v5921 = vpop.f32.mrb[0].mxu0
      %v5922 = vadd.f32 0.0, %v5921
      %v5923 = vpop.f32.mrb[0].mxu0
      %v5924 = vadd.f32 0.0, %v5923
      %5925 = vmatprep.mubr.f32.mxu0 0.0
      %5926 = vmatmul.mubr.f32.gmra.mrb[0].mxu0 %v5195
      %v5927 = vpop.f32.mrb[0].mxu0
      %v5928 = vadd.f32 0.0, %v5927
      %v5929 = vpop.f32.mrb[0].mxu0
      %v5930 = vadd.f32 0.0, %v5929
      %5931 = vmatprep.mubr.f32.mxu0 0.0
      %5932 = vmatmul.mubr.f32.gmra.mrb[0].mxu0 %v5198
      %v5933 = vpop.f32.mrb[0].mxu0
      %v5934 = vadd.f32 0.0, %v5933
      %v5935 = vpop.f32.mrb[0].mxu0
      %v5936 = vadd.f32 0.0, %v5935
      %5937 = vdwg.mxu0
      %5938 = vmatprep.subr.mxu0 0.0
      %5939 = vmatpush1.msra.mxu0 %v5070
      %5940 = vmatprep.subr.mxu0 0.0
      %5941 = vmatpush1.msra.mxu0 %v5077
      %5942 = vmatprep.subr.mxu0 0.0
      %5943 = vmatpush1.msra.mxu0 %v5084
      %5944 = vmatprep.subr.mxu0 0.0
      %5945 = vmatpush1.msra.mxu0 %v5091
      %5946 = vmatprep.subr.mxu0 0.0
      %5947 = vmatpush1.msra.mxu0 %v5098
      %5948 = vmatprep.subr.mxu0 0.0
      %5949 = vmatpush1.msra.mxu0 %v5105
      %5950 = vmatprep.subr.mxu0 0.0
      %5951 = vmatpush1.msra.mxu0 %v5219
      %5952 = vmatprep.subr.mxu0 0.0
      %5953 = vmatpush1.msra.mxu0 0.0
      %5954 = vmatprep.subr.mxu0 0.0
      %5955 = vmatpush1.msra.mxu0 0.0
      %5956 = vmatprep.subr.mxu0 0.0
      %5957 = vmatpush1.msra.mxu0 0.0
      %5958 = vmatprep.subr.mxu0 0.0
      %5959 = vmatpush1.msra.mxu0 0.0
      %5960 = vmatprep.subr.mxu0 0.0
      %5961 = vmatpush1.msra.mxu0 0.0
      %5962 = vmatprep.subr.mxu0 0.0
      %5963 = vmatpush1.msra.mxu0 0.0
      %5964 = vmatprep.subr.mxu0 0.0
      %5965 = vmatpush1.msra.mxu0 0.0
      %5966 = vmatprep.subr.mxu0 0.0
      %5967 = vmatpush1.msra.mxu0 0.0
      %5968 = vmatprep.subr.mxu0 0.0
      %5969 = vmatpush1.msra.mxu0 0.0
      %5970 = vmatprep.subr.mxu0 0.0
      %5971 = vmatpush1.msra.mxu0 0.0
      %5972 = vmatprep.subr.mxu0 0.0
      %5973 = vmatpush1.msra.mxu0 0.0
      %5974 = vmatprep.subr.mxu0 0.0
      %5975 = vmatpush1.msra.mxu0 0.0
      %5976 = vmatprep.subr.mxu0 0.0
      %5977 = vmatpush1.msra.mxu0 0.0
      %5978 = vmatprep.subr.mxu0 0.0
      %5979 = vmatpush1.msra.mxu0 0.0
      %5980 = vmatprep.subr.mxu0 0.0
      %5981 = vmatpush1.msra.mxu0 0.0
      %5982 = vmatprep.subr.mxu0 0.0
      %5983 = vmatpush1.msra.mxu0 0.0
      %5984 = vmatprep.subr.mxu0 0.0
      %5985 = vmatpush1.msra.mxu0 0.0
      %5986 = vmatprep.subr.mxu0 0.0
      %5987 = vmatpush1.msra.mxu0 0.0
      %5988 = vmatprep.subr.mxu0 0.0
      %5989 = vmatpush1.msra.mxu0 0.0
      %5990 = vmatprep.subr.mxu0 0.0
      %5991 = vmatpush1.msra.mxu0 0.0
      %5992 = vmatprep.subr.mxu0 0.0
      %5993 = vmatpush1.msra.mxu0 0.0
      %5994 = vmatprep.subr.mxu0 0.0
      %5995 = vmatpush1.msra.mxu0 0.0
      %5996 = vmatprep.subr.mxu0 0.0
      %5997 = vmatpush1.msra.mxu0 0.0
      %5998 = vmatprep.subr.mxu0 0.0
      %5999 = vmatpush1.msra.mxu0 0.0
      %6000 = vmatprep.subr.mxu0 0.0
      %6001 = vmatpush1.msra.mxu0 0.0
      %6002 = vmatprep.mubr.f32.mxu0 0.0
      %6003 = vmatmul.mubr.f32.gmra.mrb[0].mxu0 %v5114
      %v6004 = vpop.f32.mrb[0].mxu0
      %v6005 = vadd.f32 0.0, %v6004
      %v6006 = vpop.f32.mrb[0].mxu0
      %6007 = vmatprep.mubr.f32.mxu0 0.0
      %6008 = vmatmul.mubr.f32.gmra.mrb[0].mxu0 %v5117
      %v6009 = vpop.f32.mrb[0].mxu0
      %v6010 = vadd.f32 0.0, %v6009
      %v6011 = vpop.f32.mrb[0].mxu0
      %6012 = vmatprep.mubr.f32.mxu0 0.0
      %6013 = vmatmul.mubr.f32.gmra.mrb[0].mxu0 %v5120
      %v6014 = vpop.f32.mrb[0].mxu0
      %v6015 = vadd.f32 0.0, %v6014
      %v6016 = vpop.f32.mrb[0].mxu0
      %6017 = vmatprep.mubr.f32.mxu0 0.0
      %6018 = vmatmul.mubr.f32.gmra.mrb[0].mxu0 %v5123
      %v6019 = vpop.f32.mrb[0].mxu0
      %v6020 = vadd.f32 0.0, %v6019
      %v6021 = vpop.f32.mrb[0].mxu0
      %6022 = vmatprep.mubr.f32.mxu0 0.0
      %6023 = vmatmul.mubr.f32.gmra.mrb[0].mxu0 %v5126
      %v6024 = vpop.f32.mrb[0].mxu0
      %v6025 = vadd.f32 0.0, %v6024
      %v6026 = vpop.f32.mrb[0].mxu0
      %6027 = vmatprep.mubr.f32.mxu0 0.0
      %6028 = vmatmul.mubr.f32.gmra.mrb[0].mxu0 %v5129
      %v6029 = vpop.f32.mrb[0].mxu0
      %v6030 = vadd.f32 0.0, %v6029
      %v6031 = vpop.f32.mrb[0].mxu0
      %6032 = vmatprep.mubr.f32.mxu0 0.0
      %6033 = vmatmul.mubr.f32.gmra.mrb[0].mxu0 %v5132
      %v6034 = vpop.f32.mrb[0].mxu0
      %v6035 = vadd.f32 0.0, %v6034
      %v6036 = vpop.f32.mrb[0].mxu0
      %6037 = vmatprep.mubr.f32.mxu0 0.0
      %6038 = vmatmul.mubr.f32.gmra.mrb[0].mxu0 %v5135
      %v6039 = vpop.f32.mrb[0].mxu0
      %v6040 = vadd.f32 0.0, %v6039
      %v6041 = vpop.f32.mrb[0].mxu0
      %6042 = vmatprep.mubr.f32.mxu0 0.0
      %6043 = vmatmul.mubr.f32.gmra.mrb[0].mxu0 %v5138
      %v6044 = vpop.f32.mrb[0].mxu0
      %v6045 = vadd.f32 0.0, %v6044
      %v6046 = vpop.f32.mrb[0].mxu0
      %6047 = vmatprep.mubr.f32.mxu0 0.0
      %6048 = vmatmul.mubr.f32.gmra.mrb[0].mxu0 %v5141
      %v6049 = vpop.f32.mrb[0].mxu0
      %v6050 = vadd.f32 0.0, %v6049
      %v6051 = vpop.f32.mrb[0].mxu0
      %6052 = vmatprep.mubr.f32.mxu0 0.0
      %6053 = vmatmul.mubr.f32.gmra.mrb[0].mxu0 %v5144
      %v6054 = vpop.f32.mrb[0].mxu0
      %v6055 = vadd.f32 0.0, %v6054
      %v6056 = vpop.f32.mrb[0].mxu0
      %6057 = vmatprep.mubr.f32.mxu0 0.0
      %6058 = vmatmul.mubr.f32.gmra.mrb[0].mxu0 %v5147
      %v6059 = vpop.f32.mrb[0].mxu0
      %v6060 = vadd.f32 0.0, %v6059
      %v6061 = vpop.f32.mrb[0].mxu0
      %6062 = vmatprep.mubr.f32.mxu0 0.0
      %6063 = vmatmul.mubr.f32.gmra.mrb[0].mxu0 %v5150
      %v6064 = vpop.f32.mrb[0].mxu0
      %v6065 = vadd.f32 0.0, %v6064
      %v6066 = vpop.f32.mrb[0].mxu0
      %6067 = vmatprep.mubr.f32.mxu0 0.0
      %6068 = vmatmul.mubr.f32.gmra.mrb[0].mxu0 %v5153
      %v6069 = vpop.f32.mrb[0].mxu0
      %v6070 = vadd.f32 0.0, %v6069
      %v6071 = vpop.f32.mrb[0].mxu0
      %6072 = vmatprep.mubr.f32.mxu0 0.0
      %6073 = vmatmul.mubr.f32.gmra.mrb[0].mxu0 %v5156
      %v6074 = vpop.f32.mrb[0].mxu0
      %v6075 = vadd.f32 0.0, %v6074
      %v6076 = vpop.f32.mrb[0].mxu0
      %6077 = vmatprep.mubr.f32.mxu0 0.0
      %6078 = vmatmul.mubr.f32.gmra.mrb[0].mxu0 %v5159
      %v6079 = vpop.f32.mrb[0].mxu0
      %v6080 = vadd.f32 0.0, %v6079
      %v6081 = vpop.f32.mrb[0].mxu0
      %6082 = vmatprep.mubr.f32.mxu0 0.0
      %6083 = vmatmul.mubr.f32.gmra.mrb[0].mxu0 %v5162
      %v6084 = vpop.f32.mrb[0].mxu0
      %v6085 = vadd.f32 0.0, %v6084
      %v6086 = vpop.f32.mrb[0].mxu0
      %6087 = vmatprep.mubr.f32.mxu0 0.0
      %6088 = vmatmul.mubr.f32.gmra.mrb[0].mxu0 %v5165
      %v6089 = vpop.f32.mrb[0].mxu0
      %v6090 = vadd.f32 0.0, %v6089
      %v6091 = vpop.f32.mrb[0].mxu0
      %6092 = vmatprep.mubr.f32.mxu0 0.0
      %6093 = vmatmul.mubr.f32.gmra.mrb[0].mxu0 %v5168
      %v6094 = vpop.f32.mrb[0].mxu0
      %v6095 = vadd.f32 0.0, %v6094
      %v6096 = vpop.f32.mrb[0].mxu0
      %6097 = vmatprep.mubr.f32.mxu0 0.0
      %6098 = vmatmul.mubr.f32.gmra.mrb[0].mxu0 %v5171
      %v6099 = vpop.f32.mrb[0].mxu0
      %v6100 = vadd.f32 0.0, %v6099
      %v6101 = vpop.f32.mrb[0].mxu0
      %6102 = vmatprep.mubr.f32.mxu0 0.0
      %6103 = vmatmul.mubr.f32.gmra.mrb[0].mxu0 %v5174
      %v6104 = vpop.f32.mrb[0].mxu0
      %v6105 = vadd.f32 0.0, %v6104
      %v6106 = vpop.f32.mrb[0].mxu0
      %6107 = vmatprep.mubr.f32.mxu0 0.0
      %6108 = vmatmul.mubr.f32.gmra.mrb[0].mxu0 %v5177
      %v6109 = vpop.f32.mrb[0].mxu0
      %v6110 = vadd.f32 0.0, %v6109
      %v6111 = vpop.f32.mrb[0].mxu0
      %6112 = vmatprep.mubr.f32.mxu0 0.0
      %6113 = vmatmul.mubr.f32.gmra.mrb[0].mxu0 %v5180
      %v6114 = vpop.f32.mrb[0].mxu0
      %v6115 = vadd.f32 0.0, %v6114
      %v6116 = vpop.f32.mrb[0].mxu0
      %6117 = vmatprep.mubr.f32.mxu0 0.0
      %6118 = vmatmul.mubr.f32.gmra.mrb[0].mxu0 %v5183
      %v6119 = vpop.f32.mrb[0].mxu0
      %v6120 = vadd.f32 0.0, %v6119
      %v6121 = vpop.f32.mrb[0].mxu0
      %6122 = vmatprep.mubr.f32.mxu0 0.0
      %6123 = vmatmul.mubr.f32.gmra.mrb[0].mxu0 %v5186
      %v6124 = vpop.f32.mrb[0].mxu0
      %v6125 = vadd.f32 0.0, %v6124
      %v6126 = vpop.f32.mrb[0].mxu0
      %6127 = vmatprep.mubr.f32.mxu0 0.0
      %6128 = vmatmul.mubr.f32.gmra.mrb[0].mxu0 %v5189
      %v6129 = vpop.f32.mrb[0].mxu0
      %v6130 = vadd.f32 0.0, %v6129
      %v6131 = vpop.f32.mrb[0].mxu0
      %6132 = vmatprep.mubr.f32.mxu0 0.0
      %6133 = vmatmul.mubr.f32.gmra.mrb[0].mxu0 %v5192
      %v6134 = vpop.f32.mrb[0].mxu0
      %v6135 = vadd.f32 0.0, %v6134
      %v6136 = vpop.f32.mrb[0].mxu0
      %6137 = vmatprep.mubr.f32.mxu0 0.0
      %6138 = vmatmul.mubr.f32.gmra.mrb[0].mxu0 %v5195
      %v6139 = vpop.f32.mrb[0].mxu0
      %v6140 = vadd.f32 0.0, %v6139
      %v6141 = vpop.f32.mrb[0].mxu0
      %6142 = vmatprep.mubr.f32.mxu0 0.0
      %6143 = vmatmul.mubr.f32.gmra.mrb[0].mxu0 %v5198
      %v6144 = vpop.f32.mrb[0].mxu0
      %v6145 = vadd.f32 0.0, %v6144
      %v6146 = vpop.f32.mrb[0].mxu0
      %6147 = vdwg.mxu0
      %v6148 = vadd.f32 %v4831, %v5288
      %v6149 = vadd.f32 %v4832, %v5290
      %v6150 = vadd.f32 %v4833, %v5527
      %v6151 = vadd.f32 %v4834, %v5529
      %v6152 = vadd.f32 %v4835, %v5766
      %v6153 = vadd.f32 %v4836, %v5768
      %v6154 = vadd.f32 %v4837, %v6005
      %v6155 = vadd.f32 %v4838, %v5294
      %v6156 = vadd.f32 %v4839, %v5296
      %v6157 = vadd.f32 %v4840, %v5533
      %v6158 = vadd.f32 %v4841, %v5535
      %v6159 = vadd.f32 %v4842, %v5772
      %v6160 = vadd.f32 %v4843, %v5774
      %v6161 = vadd.f32 %v4844, %v6010
      %v6162 = vadd.f32 %v4845, %v5300
      %v6163 = vadd.f32 %v4846, %v5302
      %v6164 = vadd.f32 %v4847, %v5539
      %v6165 = vadd.f32 %v4848, %v5541
      %v6166 = vadd.f32 %v4849, %v5778
      %v6167 = vadd.f32 %v4850, %v5780
      %v6168 = vadd.f32 %v4851, %v6015
      %v6169 = vadd.f32 %v4852, %v5306
      %v6170 = vadd.f32 %v4853, %v5308
      %v6171 = vadd.f32 %v4854, %v5545
      %v6172 = vadd.f32 %v4855, %v5547
      %v6173 = vadd.f32 %v4856, %v5784
      %v6174 = vadd.f32 %v4857, %v5786
      %v6175 = vadd.f32 %v4858, %v6020
      %v6176 = vadd.f32 %v4859, %v5312
      %v6177 = vadd.f32 %v4860, %v5314
      %v6178 = vadd.f32 %v4861, %v5551
      %v6179 = vadd.f32 %v4862, %v5553
      %v6180 = vadd.f32 %v4863, %v5790
      %v6181 = vadd.f32 %v4864, %v5792
      %v6182 = vadd.f32 %v4865, %v6025
      %v6183 = vadd.f32 %v4866, %v5318
      %v6184 = vadd.f32 %v4867, %v5320
      %v6185 = vadd.f32 %v4868, %v5557
      %v6186 = vadd.f32 %v4869, %v5559
      %v6187 = vadd.f32 %v4870, %v5796
      %v6188 = vadd.f32 %v4871, %v5798
      %v6189 = vadd.f32 %v4872, %v6030
      %v6190 = vadd.f32 %v4873, %v5324
      %v6191 = vadd.f32 %v4874, %v5326
      %v6192 = vadd.f32 %v4875, %v5563
      %v6193 = vadd.f32 %v4876, %v5565
      %v6194 = vadd.f32 %v4877, %v5802
      %v6195 = vadd.f32 %v4878, %v5804
      %v6196 = vadd.f32 %v4879, %v6035
      %v6197 = vadd.f32 %v4880, %v5330
      %v6198 = vadd.f32 %v4881, %v5332
      %v6199 = vadd.f32 %v4882, %v5569
      %v6200 = vadd.f32 %v4883, %v5571
      %v6201 = vadd.f32 %v4884, %v5808
      %v6202 = vadd.f32 %v4885, %v5810
      %v6203 = vadd.f32 %v4886, %v6040
      %v6204 = vadd.f32 %v4887, %v5336
      %v6205 = vadd.f32 %v4888, %v5338
      %v6206 = vadd.f32 %v4889, %v5575
      %v6207 = vadd.f32 %v4890, %v5577
      %v6208 = vadd.f32 %v4891, %v5814
      %v6209 = vadd.f32 %v4892, %v5816
      %v6210 = vadd.f32 %v4893, %v6045
      %v6211 = vadd.f32 %v4894, %v5342
      %v6212 = vadd.f32 %v4895, %v5344
      %v6213 = vadd.f32 %v4896, %v5581
      %v6214 = vadd.f32 %v4897, %v5583
      %v6215 = vadd.f32 %v4898, %v5820
      %v6216 = vadd.f32 %v4899, %v5822
      %v6217 = vadd.f32 %v4900, %v6050
      %v6218 = vadd.f32 %v4901, %v5348
      %v6219 = vadd.f32 %v4902, %v5350
      %v6220 = vadd.f32 %v4903, %v5587
      %v6221 = vadd.f32 %v4904, %v5589
      %v6222 = vadd.f32 %v4905, %v5826
      %v6223 = vadd.f32 %v4906, %v5828
      %v6224 = vadd.f32 %v4907, %v6055
      %v6225 = vadd.f32 %v4908, %v5354
      %v6226 = vadd.f32 %v4909, %v5356
      %v6227 = vadd.f32 %v4910, %v5593
      %v6228 = vadd.f32 %v4911, %v5595
      %v6229 = vadd.f32 %v4912, %v5832
      %v6230 = vadd.f32 %v4913, %v5834
      %v6231 = vadd.f32 %v4914, %v6060
      %v6232 = vadd.f32 %v4915, %v5360
      %v6233 = vadd.f32 %v4916, %v5362
      %v6234 = vadd.f32 %v4917, %v5599
      %v6235 = vadd.f32 %v4918, %v5601
      %v6236 = vadd.f32 %v4919, %v5838
      %v6237 = vadd.f32 %v4920, %v5840
      %v6238 = vadd.f32 %v4921, %v6065
      %v6239 = vadd.f32 %v4922, %v5366
      %v6240 = vadd.f32 %v4923, %v5368
      %v6241 = vadd.f32 %v4924, %v5605
      %v6242 = vadd.f32 %v4925, %v5607
      %v6243 = vadd.f32 %v4926, %v5844
      %v6244 = vadd.f32 %v4927, %v5846
      %v6245 = vadd.f32 %v4928, %v6070
      %v6246 = vadd.f32 %v4929, %v5372
      %v6247 = vadd.f32 %v4930, %v5374
      %v6248 = vadd.f32 %v4931, %v5611
      %v6249 = vadd.f32 %v4932, %v5613
      %v6250 = vadd.f32 %v4933, %v5850
      %v6251 = vadd.f32 %v4934, %v5852
      %v6252 = vadd.f32 %v4935, %v6075
      %v6253 = vadd.f32 %v4936, %v5378
      %v6254 = vadd.f32 %v4937, %v5380
      %v6255 = vadd.f32 %v4938, %v5617
      %v6256 = vadd.f32 %v4939, %v5619
      %v6257 = vadd.f32 %v4940, %v5856
      %v6258 = vadd.f32 %v4941, %v5858
      %v6259 = vadd.f32 %v4942, %v6080
      %v6260 = vadd.f32 %v4943, %v5384
      %v6261 = vadd.f32 %v4944, %v5386
      %v6262 = vadd.f32 %v4945, %v5623
      %v6263 = vadd.f32 %v4946, %v5625
      %v6264 = vadd.f32 %v4947, %v5862
      %v6265 = vadd.f32 %v4948, %v5864
      %v6266 = vadd.f32 %v4949, %v6085
      %v6267 = vadd.f32 %v4950, %v5390
      %v6268 = vadd.f32 %v4951, %v5392
      %v6269 = vadd.f32 %v4952, %v5629
      %v6270 = vadd.f32 %v4953, %v5631
      %v6271 = vadd.f32 %v4954, %v5868
      %v6272 = vadd.f32 %v4955, %v5870
      %v6273 = vadd.f32 %v4956, %v6090
      %v6274 = vadd.f32 %v4957, %v5396
      %v6275 = vadd.f32 %v4958, %v5398
      %v6276 = vadd.f32 %v4959, %v5635
      %v6277 = vadd.f32 %v4960, %v5637
      %v6278 = vadd.f32 %v4961, %v5874
      %v6279 = vadd.f32 %v4962, %v5876
      %v6280 = vadd.f32 %v4963, %v6095
      %v6281 = vadd.f32 %v4964, %v5402
      %v6282 = vadd.f32 %v4965, %v5404
      %v6283 = vadd.f32 %v4966, %v5641
      %v6284 = vadd.f32 %v4967, %v5643
      %v6285 = vadd.f32 %v4968, %v5880
      %v6286 = vadd.f32 %v4969, %v5882
      %v6287 = vadd.f32 %v4970, %v6100
      %v6288 = vadd.f32 %v4971, %v5408
      %v6289 = vadd.f32 %v4972, %v5410
      %v6290 = vadd.f32 %v4973, %v5647
      %v6291 = vadd.f32 %v4974, %v5649
      %v6292 = vadd.f32 %v4975, %v5886
      %v6293 = vadd.f32 %v4976, %v5888
      %v6294 = vadd.f32 %v4977, %v6105
      %v6295 = vadd.f32 %v4978, %v5414
      %v6296 = vadd.f32 %v4979, %v5416
      %v6297 = vadd.f32 %v4980, %v5653
      %v6298 = vadd.f32 %v4981, %v5655
      %v6299 = vadd.f32 %v4982, %v5892
      %v6300 = vadd.f32 %v4983, %v5894
      %v6301 = vadd.f32 %v4984, %v6110
      %v6302 = vadd.f32 %v4985, %v5420
      %v6303 = vadd.f32 %v4986, %v5422
      %v6304 = vadd.f32 %v4987, %v5659
      %v6305 = vadd.f32 %v4988, %v5661
      %v6306 = vadd.f32 %v4989, %v5898
      %v6307 = vadd.f32 %v4990, %v5900
      %v6308 = vadd.f32 %v4991, %v6115
      %v6309 = vadd.f32 %v4992, %v5426
      %v6310 = vadd.f32 %v4993, %v5428
      %v6311 = vadd.f32 %v4994, %v5665
      %v6312 = vadd.f32 %v4995, %v5667
      %v6313 = vadd.f32 %v4996, %v5904
      %v6314 = vadd.f32 %v4997, %v5906
      %v6315 = vadd.f32 %v4998, %v6120
      %v6316 = vadd.f32 %v4999, %v5432
      %v6317 = vadd.f32 %v5000, %v5434
      %v6318 = vadd.f32 %v5001, %v5671
      %v6319 = vadd.f32 %v5002, %v5673
      %v6320 = vadd.f32 %v5003, %v5910
      %v6321 = vadd.f32 %v5004, %v5912
      %v6322 = vadd.f32 %v5005, %v6125
      %v6323 = vadd.f32 %v5006, %v5438
      %v6324 = vadd.f32 %v5007, %v5440
      %v6325 = vadd.f32 %v5008, %v5677
      %v6326 = vadd.f32 %v5009, %v5679
      %v6327 = vadd.f32 %v5010, %v5916
      %v6328 = vadd.f32 %v5011, %v5918
      %v6329 = vadd.f32 %v5012, %v6130
      %v6330 = vadd.f32 %v5013, %v5444
      %v6331 = vadd.f32 %v5014, %v5446
      %v6332 = vadd.f32 %v5015, %v5683
      %v6333 = vadd.f32 %v5016, %v5685
      %v6334 = vadd.f32 %v5017, %v5922
      %v6335 = vadd.f32 %v5018, %v5924
      %v6336 = vadd.f32 %v5019, %v6135
      %v6337 = vadd.f32 %v5020, %v5450
      %v6338 = vadd.f32 %v5021, %v5452
      %v6339 = vadd.f32 %v5022, %v5689
      %v6340 = vadd.f32 %v5023, %v5691
      %v6341 = vadd.f32 %v5024, %v5928
      %v6342 = vadd.f32 %v5025, %v5930
      %v6343 = vadd.f32 %v5026, %v6140
      %v6344 = vadd.f32 %v5027, %v5456
      %v6345 = vadd.f32 %v5028, %v5458
      %v6346 = vadd.f32 %v5029, %v5695
      %v6347 = vadd.f32 %v5030, %v5697
      %v6348 = vadd.f32 %v5031, %v5934
      %v6349 = vadd.f32 %v5032, %v5936
      %v6350 = vadd.f32 %v5033, %v6145
      %6380 = vrot.lane.b32.xlu0 %v6148, 64
      %v6381 = vpop.permute.xlu0 %6380
      %6382 = vrot.lane.b32.xlu0 %v6155, 64
      %v6383 = vpop.permute.xlu0 %6382
      %6384 = vrot.lane.b32.xlu0 %v6162, 64
      %v6385 = vpop.permute.xlu0 %6384
      %6386 = vrot.lane.b32.xlu0 %v6169, 64
      %v6387 = vpop.permute.xlu0 %6386
      %6388 = vrot.lane.b32.xlu0 %v6176, 64
      %v6389 = vpop.permute.xlu0 %6388
      %6390 = vrot.lane.b32.xlu0 %v6183, 64
      %v6391 = vpop.permute.xlu0 %6390
      %6392 = vrot.lane.b32.xlu0 %v6190, 64
      %v6393 = vpop.permute.xlu0 %6392
      %6394 = vrot.lane.b32.xlu0 %v6197, 64
      %v6395 = vpop.permute.xlu0 %6394
      %6396 = vrot.lane.b32.xlu0 %v6204, 64
      %v6397 = vpop.permute.xlu0 %6396
      %6398 = vrot.lane.b32.xlu0 %v6211, 64
      %v6399 = vpop.permute.xlu0 %6398
      %6400 = vrot.lane.b32.xlu0 %v6218, 64
      %v6401 = vpop.permute.xlu0 %6400
      %6402 = vrot.lane.b32.xlu0 %v6225, 64
      %v6403 = vpop.permute.xlu0 %6402
      %6404 = vrot.lane.b32.xlu0 %v6232, 64
      %v6405 = vpop.permute.xlu0 %6404
      %6406 = vrot.lane.b32.xlu0 %v6239, 64
      %v6407 = vpop.permute.xlu0 %6406
      %6408 = vrot.lane.b32.xlu0 %v6246, 64
      %v6409 = vpop.permute.xlu0 %6408
      %6410 = vrot.lane.b32.xlu0 %v6253, 64
      %v6411 = vpop.permute.xlu0 %6410
      %6412 = vrot.lane.b32.xlu0 %v6260, 64
      %v6413 = vpop.permute.xlu0 %6412
      %6414 = vrot.lane.b32.xlu0 %v6267, 64
      %v6415 = vpop.permute.xlu0 %6414
      %6416 = vrot.lane.b32.xlu0 %v6274, 64
      %v6417 = vpop.permute.xlu0 %6416
      %6418 = vrot.lane.b32.xlu0 %v6281, 64
      %v6419 = vpop.permute.xlu0 %6418
      %6420 = vrot.lane.b32.xlu0 %v6288, 64
      %v6421 = vpop.permute.xlu0 %6420
      %6422 = vrot.lane.b32.xlu0 %v6295, 64
      %v6423 = vpop.permute.xlu0 %6422
      %6424 = vrot.lane.b32.xlu0 %v6302, 64
      %v6425 = vpop.permute.xlu0 %6424
      %6426 = vrot.lane.b32.xlu0 %v6309, 64
      %v6427 = vpop.permute.xlu0 %6426
      %6428 = vrot.lane.b32.xlu0 %v6316, 64
      %v6429 = vpop.permute.xlu0 %6428
      %6430 = vrot.lane.b32.xlu0 %v6323, 64
      %v6431 = vpop.permute.xlu0 %6430
      %6432 = vrot.lane.b32.xlu0 %v6330, 64
      %v6433 = vpop.permute.xlu0 %6432
      %6434 = vrot.lane.b32.xlu0 %v6337, 64
      %v6435 = vpop.permute.xlu0 %6434
      %6436 = vrot.lane.b32.xlu0 %v6344, 64
      %v6437 = vpop.permute.xlu0 %6436
      %v6467 = vmax.f32 %v6148, %v6381
      %v6468 = vmax.f32 %v6155, %v6383
      %v6469 = vmax.f32 %v6162, %v6385
      %v6470 = vmax.f32 %v6169, %v6387
      %v6471 = vmax.f32 %v6176, %v6389
      %v6472 = vmax.f32 %v6183, %v6391
      %v6473 = vmax.f32 %v6190, %v6393
      %v6474 = vmax.f32 %v6197, %v6395
      %v6475 = vmax.f32 %v6204, %v6397
      %v6476 = vmax.f32 %v6211, %v6399
      %v6477 = vmax.f32 %v6218, %v6401
      %v6478 = vmax.f32 %v6225, %v6403
      %v6479 = vmax.f32 %v6232, %v6405
      %v6480 = vmax.f32 %v6239, %v6407
      %v6481 = vmax.f32 %v6246, %v6409
      %v6482 = vmax.f32 %v6253, %v6411
      %v6483 = vmax.f32 %v6260, %v6413
      %v6484 = vmax.f32 %v6267, %v6415
      %v6485 = vmax.f32 %v6274, %v6417
      %v6486 = vmax.f32 %v6281, %v6419
      %v6487 = vmax.f32 %v6288, %v6421
      %v6488 = vmax.f32 %v6295, %v6423
      %v6489 = vmax.f32 %v6302, %v6425
      %v6490 = vmax.f32 %v6309, %v6427
      %v6491 = vmax.f32 %v6316, %v6429
      %v6492 = vmax.f32 %v6323, %v6431
      %v6493 = vmax.f32 %v6330, %v6433
      %v6494 = vmax.f32 %v6337, %v6435
      %v6495 = vmax.f32 %v6344, %v6437
      %v6496 = vmax.f32 %v6467, %v6149
      %v6497 = vmax.f32 %v6468, %v6156
      %v6498 = vmax.f32 %v6469, %v6163
      %v6499 = vmax.f32 %v6470, %v6170
      %v6500 = vmax.f32 %v6471, %v6177
      %v6501 = vmax.f32 %v6472, %v6184
      %v6502 = vmax.f32 %v6473, %v6191
      %v6503 = vmax.f32 %v6474, %v6198
      %v6504 = vmax.f32 %v6475, %v6205
      %v6505 = vmax.f32 %v6476, %v6212
      %v6506 = vmax.f32 %v6477, %v6219
      %v6507 = vmax.f32 %v6478, %v6226
      %v6508 = vmax.f32 %v6479, %v6233
      %v6509 = vmax.f32 %v6480, %v6240
      %v6510 = vmax.f32 %v6481, %v6247
      %v6511 = vmax.f32 %v6482, %v6254
      %v6512 = vmax.f32 %v6483, %v6261
      %v6513 = vmax.f32 %v6484, %v6268
      %v6514 = vmax.f32 %v6485, %v6275
      %v6515 = vmax.f32 %v6486, %v6282
      %v6516 = vmax.f32 %v6487, %v6289
      %v6517 = vmax.f32 %v6488, %v6296
      %v6518 = vmax.f32 %v6489, %v6303
      %v6519 = vmax.f32 %v6490, %v6310
      %v6520 = vmax.f32 %v6491, %v6317
      %v6521 = vmax.f32 %v6492, %v6324
      %v6522 = vmax.f32 %v6493, %v6331
      %v6523 = vmax.f32 %v6494, %v6338
      %v6524 = vmax.f32 %v6495, %v6345
      %6554 = vrot.lane.b32.xlu0 %v6149, 64
      %v6555 = vpop.permute.xlu0 %6554
      %6556 = vrot.lane.b32.xlu0 %v6156, 64
      %v6557 = vpop.permute.xlu0 %6556
      %6558 = vrot.lane.b32.xlu0 %v6163, 64
      %v6559 = vpop.permute.xlu0 %6558
      %6560 = vrot.lane.b32.xlu0 %v6170, 64
      %v6561 = vpop.permute.xlu0 %6560
      %6562 = vrot.lane.b32.xlu0 %v6177, 64
      %v6563 = vpop.permute.xlu0 %6562
      %6564 = vrot.lane.b32.xlu0 %v6184, 64
      %v6565 = vpop.permute.xlu0 %6564
      %6566 = vrot.lane.b32.xlu0 %v6191, 64
      %v6567 = vpop.permute.xlu0 %6566
      %6568 = vrot.lane.b32.xlu0 %v6198, 64
      %v6569 = vpop.permute.xlu0 %6568
      %6570 = vrot.lane.b32.xlu0 %v6205, 64
      %v6571 = vpop.permute.xlu0 %6570
      %6572 = vrot.lane.b32.xlu0 %v6212, 64
      %v6573 = vpop.permute.xlu0 %6572
      %6574 = vrot.lane.b32.xlu0 %v6219, 64
      %v6575 = vpop.permute.xlu0 %6574
      %6576 = vrot.lane.b32.xlu0 %v6226, 64
      %v6577 = vpop.permute.xlu0 %6576
      %6578 = vrot.lane.b32.xlu0 %v6233, 64
      %v6579 = vpop.permute.xlu0 %6578
      %6580 = vrot.lane.b32.xlu0 %v6240, 64
      %v6581 = vpop.permute.xlu0 %6580
      %6582 = vrot.lane.b32.xlu0 %v6247, 64
      %v6583 = vpop.permute.xlu0 %6582
      %6584 = vrot.lane.b32.xlu0 %v6254, 64
      %v6585 = vpop.permute.xlu0 %6584
      %6586 = vrot.lane.b32.xlu0 %v6261, 64
      %v6587 = vpop.permute.xlu0 %6586
      %6588 = vrot.lane.b32.xlu0 %v6268, 64
      %v6589 = vpop.permute.xlu0 %6588
      %6590 = vrot.lane.b32.xlu0 %v6275, 64
      %v6591 = vpop.permute.xlu0 %6590
      %6592 = vrot.lane.b32.xlu0 %v6282, 64
      %v6593 = vpop.permute.xlu0 %6592
      %6594 = vrot.lane.b32.xlu0 %v6289, 64
      %v6595 = vpop.permute.xlu0 %6594
      %6596 = vrot.lane.b32.xlu0 %v6296, 64
      %v6597 = vpop.permute.xlu0 %6596
      %6598 = vrot.lane.b32.xlu0 %v6303, 64
      %v6599 = vpop.permute.xlu0 %6598
      %6600 = vrot.lane.b32.xlu0 %v6310, 64
      %v6601 = vpop.permute.xlu0 %6600
      %6602 = vrot.lane.b32.xlu0 %v6317, 64
      %v6603 = vpop.permute.xlu0 %6602
      %6604 = vrot.lane.b32.xlu0 %v6324, 64
      %v6605 = vpop.permute.xlu0 %6604
      %6606 = vrot.lane.b32.xlu0 %v6331, 64
      %v6607 = vpop.permute.xlu0 %6606
      %6608 = vrot.lane.b32.xlu0 %v6338, 64
      %v6609 = vpop.permute.xlu0 %6608
      %6610 = vrot.lane.b32.xlu0 %v6345, 64
      %v6611 = vpop.permute.xlu0 %6610
      %v6641 = vmax.f32 %v6496, %v6555
      %v6642 = vmax.f32 %v6497, %v6557
      %v6643 = vmax.f32 %v6498, %v6559
      %v6644 = vmax.f32 %v6499, %v6561
      %v6645 = vmax.f32 %v6500, %v6563
      %v6646 = vmax.f32 %v6501, %v6565
      %v6647 = vmax.f32 %v6502, %v6567
      %v6648 = vmax.f32 %v6503, %v6569
      %v6649 = vmax.f32 %v6504, %v6571
      %v6650 = vmax.f32 %v6505, %v6573
      %v6651 = vmax.f32 %v6506, %v6575
      %v6652 = vmax.f32 %v6507, %v6577
      %v6653 = vmax.f32 %v6508, %v6579
      %v6654 = vmax.f32 %v6509, %v6581
      %v6655 = vmax.f32 %v6510, %v6583
      %v6656 = vmax.f32 %v6511, %v6585
      %v6657 = vmax.f32 %v6512, %v6587
      %v6658 = vmax.f32 %v6513, %v6589
      %v6659 = vmax.f32 %v6514, %v6591
      %v6660 = vmax.f32 %v6515, %v6593
      %v6661 = vmax.f32 %v6516, %v6595
      %v6662 = vmax.f32 %v6517, %v6597
      %v6663 = vmax.f32 %v6518, %v6599
      %v6664 = vmax.f32 %v6519, %v6601
      %v6665 = vmax.f32 %v6520, %v6603
      %v6666 = vmax.f32 %v6521, %v6605
      %v6667 = vmax.f32 %v6522, %v6607
      %v6668 = vmax.f32 %v6523, %v6609
      %v6669 = vmax.f32 %v6524, %v6611
      %v6670 = vmax.f32 %v6641, %v6150
      %v6671 = vmax.f32 %v6642, %v6157
      %v6672 = vmax.f32 %v6643, %v6164
      %v6673 = vmax.f32 %v6644, %v6171
      %v6674 = vmax.f32 %v6645, %v6178
      %v6675 = vmax.f32 %v6646, %v6185
      %v6676 = vmax.f32 %v6647, %v6192
      %v6677 = vmax.f32 %v6648, %v6199
      %v6678 = vmax.f32 %v6649, %v6206
      %v6679 = vmax.f32 %v6650, %v6213
      %v6680 = vmax.f32 %v6651, %v6220
      %v6681 = vmax.f32 %v6652, %v6227
      %v6682 = vmax.f32 %v6653, %v6234
      %v6683 = vmax.f32 %v6654, %v6241
      %v6684 = vmax.f32 %v6655, %v6248
      %v6685 = vmax.f32 %v6656, %v6255
      %v6686 = vmax.f32 %v6657, %v6262
      %v6687 = vmax.f32 %v6658, %v6269
      %v6688 = vmax.f32 %v6659, %v6276
      %v6689 = vmax.f32 %v6660, %v6283
      %v6690 = vmax.f32 %v6661, %v6290
      %v6691 = vmax.f32 %v6662, %v6297
      %v6692 = vmax.f32 %v6663, %v6304
      %v6693 = vmax.f32 %v6664, %v6311
      %v6694 = vmax.f32 %v6665, %v6318
      %v6695 = vmax.f32 %v6666, %v6325
      %v6696 = vmax.f32 %v6667, %v6332
      %v6697 = vmax.f32 %v6668, %v6339
      %v6698 = vmax.f32 %v6669, %v6346
      %6728 = vrot.lane.b32.xlu0 %v6150, 64
      %v6729 = vpop.permute.xlu0 %6728
      %6730 = vrot.lane.b32.xlu0 %v6157, 64
      %v6731 = vpop.permute.xlu0 %6730
      %6732 = vrot.lane.b32.xlu0 %v6164, 64
      %v6733 = vpop.permute.xlu0 %6732
      %6734 = vrot.lane.b32.xlu0 %v6171, 64
      %v6735 = vpop.permute.xlu0 %6734
      %6736 = vrot.lane.b32.xlu0 %v6178, 64
      %v6737 = vpop.permute.xlu0 %6736
      %6738 = vrot.lane.b32.xlu0 %v6185, 64
      %v6739 = vpop.permute.xlu0 %6738
      %6740 = vrot.lane.b32.xlu0 %v6192, 64
      %v6741 = vpop.permute.xlu0 %6740
      %6742 = vrot.lane.b32.xlu0 %v6199, 64
      %v6743 = vpop.permute.xlu0 %6742
      %6744 = vrot.lane.b32.xlu0 %v6206, 64
      %v6745 = vpop.permute.xlu0 %6744
      %6746 = vrot.lane.b32.xlu0 %v6213, 64
      %v6747 = vpop.permute.xlu0 %6746
      %6748 = vrot.lane.b32.xlu0 %v6220, 64
      %v6749 = vpop.permute.xlu0 %6748
      %6750 = vrot.lane.b32.xlu0 %v6227, 64
      %v6751 = vpop.permute.xlu0 %6750
      %6752 = vrot.lane.b32.xlu0 %v6234, 64
      %v6753 = vpop.permute.xlu0 %6752
      %6754 = vrot.lane.b32.xlu0 %v6241, 64
      %v6755 = vpop.permute.xlu0 %6754
      %6756 = vrot.lane.b32.xlu0 %v6248, 64
      %v6757 = vpop.permute.xlu0 %6756
      %6758 = vrot.lane.b32.xlu0 %v6255, 64
      %v6759 = vpop.permute.xlu0 %6758
      %6760 = vrot.lane.b32.xlu0 %v6262, 64
      %v6761 = vpop.permute.xlu0 %6760
      %6762 = vrot.lane.b32.xlu0 %v6269, 64
      %v6763 = vpop.permute.xlu0 %6762
      %6764 = vrot.lane.b32.xlu0 %v6276, 64
      %v6765 = vpop.permute.xlu0 %6764
      %6766 = vrot.lane.b32.xlu0 %v6283, 64
      %v6767 = vpop.permute.xlu0 %6766
      %6768 = vrot.lane.b32.xlu0 %v6290, 64
      %v6769 = vpop.permute.xlu0 %6768
      %6770 = vrot.lane.b32.xlu0 %v6297, 64
      %v6771 = vpop.permute.xlu0 %6770
      %6772 = vrot.lane.b32.xlu0 %v6304, 64
      %v6773 = vpop.permute.xlu0 %6772
      %6774 = vrot.lane.b32.xlu0 %v6311, 64
      %v6775 = vpop.permute.xlu0 %6774
      %6776 = vrot.lane.b32.xlu0 %v6318, 64
      %v6777 = vpop.permute.xlu0 %6776
      %6778 = vrot.lane.b32.xlu0 %v6325, 64
      %v6779 = vpop.permute.xlu0 %6778
      %6780 = vrot.lane.b32.xlu0 %v6332, 64
      %v6781 = vpop.permute.xlu0 %6780
      %6782 = vrot.lane.b32.xlu0 %v6339, 64
      %v6783 = vpop.permute.xlu0 %6782
      %6784 = vrot.lane.b32.xlu0 %v6346, 64
      %v6785 = vpop.permute.xlu0 %6784
      %v6815 = vmax.f32 %v6670, %v6729
      %v6816 = vmax.f32 %v6671, %v6731
      %v6817 = vmax.f32 %v6672, %v6733
      %v6818 = vmax.f32 %v6673, %v6735
      %v6819 = vmax.f32 %v6674, %v6737
      %v6820 = vmax.f32 %v6675, %v6739
      %v6821 = vmax.f32 %v6676, %v6741
      %v6822 = vmax.f32 %v6677, %v6743
      %v6823 = vmax.f32 %v6678, %v6745
      %v6824 = vmax.f32 %v6679, %v6747
      %v6825 = vmax.f32 %v6680, %v6749
      %v6826 = vmax.f32 %v6681, %v6751
      %v6827 = vmax.f32 %v6682, %v6753
      %v6828 = vmax.f32 %v6683, %v6755
      %v6829 = vmax.f32 %v6684, %v6757
      %v6830 = vmax.f32 %v6685, %v6759
      %v6831 = vmax.f32 %v6686, %v6761
      %v6832 = vmax.f32 %v6687, %v6763
      %v6833 = vmax.f32 %v6688, %v6765
      %v6834 = vmax.f32 %v6689, %v6767
      %v6835 = vmax.f32 %v6690, %v6769
      %v6836 = vmax.f32 %v6691, %v6771
      %v6837 = vmax.f32 %v6692, %v6773
      %v6838 = vmax.f32 %v6693, %v6775
      %v6839 = vmax.f32 %v6694, %v6777
      %v6840 = vmax.f32 %v6695, %v6779
      %v6841 = vmax.f32 %v6696, %v6781
      %v6842 = vmax.f32 %v6697, %v6783
      %v6843 = vmax.f32 %v6698, %v6785
      %v6844 = vmax.f32 %v6815, %v6151
      %v6845 = vmax.f32 %v6816, %v6158
      %v6846 = vmax.f32 %v6817, %v6165
      %v6847 = vmax.f32 %v6818, %v6172
      %v6848 = vmax.f32 %v6819, %v6179
      %v6849 = vmax.f32 %v6820, %v6186
      %v6850 = vmax.f32 %v6821, %v6193
      %v6851 = vmax.f32 %v6822, %v6200
      %v6852 = vmax.f32 %v6823, %v6207
      %v6853 = vmax.f32 %v6824, %v6214
      %v6854 = vmax.f32 %v6825, %v6221
      %v6855 = vmax.f32 %v6826, %v6228
      %v6856 = vmax.f32 %v6827, %v6235
      %v6857 = vmax.f32 %v6828, %v6242
      %v6858 = vmax.f32 %v6829, %v6249
      %v6859 = vmax.f32 %v6830, %v6256
      %v6860 = vmax.f32 %v6831, %v6263
      %v6861 = vmax.f32 %v6832, %v6270
      %v6862 = vmax.f32 %v6833, %v6277
      %v6863 = vmax.f32 %v6834, %v6284
      %v6864 = vmax.f32 %v6835, %v6291
      %v6865 = vmax.f32 %v6836, %v6298
      %v6866 = vmax.f32 %v6837, %v6305
      %v6867 = vmax.f32 %v6838, %v6312
      %v6868 = vmax.f32 %v6839, %v6319
      %v6869 = vmax.f32 %v6840, %v6326
      %v6870 = vmax.f32 %v6841, %v6333
      %v6871 = vmax.f32 %v6842, %v6340
      %v6872 = vmax.f32 %v6843, %v6347
      %6902 = vrot.lane.b32.xlu0 %v6151, 64
      %v6903 = vpop.permute.xlu0 %6902
      %6904 = vrot.lane.b32.xlu0 %v6158, 64
      %v6905 = vpop.permute.xlu0 %6904
      %6906 = vrot.lane.b32.xlu0 %v6165, 64
      %v6907 = vpop.permute.xlu0 %6906
      %6908 = vrot.lane.b32.xlu0 %v6172, 64
      %v6909 = vpop.permute.xlu0 %6908
      %6910 = vrot.lane.b32.xlu0 %v6179, 64
      %v6911 = vpop.permute.xlu0 %6910
      %6912 = vrot.lane.b32.xlu0 %v6186, 64
      %v6913 = vpop.permute.xlu0 %6912
      %6914 = vrot.lane.b32.xlu0 %v6193, 64
      %v6915 = vpop.permute.xlu0 %6914
      %6916 = vrot.lane.b32.xlu0 %v6200, 64
      %v6917 = vpop.permute.xlu0 %6916
      %6918 = vrot.lane.b32.xlu0 %v6207, 64
      %v6919 = vpop.permute.xlu0 %6918
      %6920 = vrot.lane.b32.xlu0 %v6214, 64
      %v6921 = vpop.permute.xlu0 %6920
      %6922 = vrot.lane.b32.xlu0 %v6221, 64
      %v6923 = vpop.permute.xlu0 %6922
      %6924 = vrot.lane.b32.xlu0 %v6228, 64
      %v6925 = vpop.permute.xlu0 %6924
      %6926 = vrot.lane.b32.xlu0 %v6235, 64
      %v6927 = vpop.permute.xlu0 %6926
      %6928 = vrot.lane.b32.xlu0 %v6242, 64
      %v6929 = vpop.permute.xlu0 %6928
      %6930 = vrot.lane.b32.xlu0 %v6249, 64
      %v6931 = vpop.permute.xlu0 %6930
      %6932 = vrot.lane.b32.xlu0 %v6256, 64
      %v6933 = vpop.permute.xlu0 %6932
      %6934 = vrot.lane.b32.xlu0 %v6263, 64
      %v6935 = vpop.permute.xlu0 %6934
      %6936 = vrot.lane.b32.xlu0 %v6270, 64
      %v6937 = vpop.permute.xlu0 %6936
      %6938 = vrot.lane.b32.xlu0 %v6277, 64
      %v6939 = vpop.permute.xlu0 %6938
      %6940 = vrot.lane.b32.xlu0 %v6284, 64
      %v6941 = vpop.permute.xlu0 %6940
      %6942 = vrot.lane.b32.xlu0 %v6291, 64
      %v6943 = vpop.permute.xlu0 %6942
      %6944 = vrot.lane.b32.xlu0 %v6298, 64
      %v6945 = vpop.permute.xlu0 %6944
      %6946 = vrot.lane.b32.xlu0 %v6305, 64
      %v6947 = vpop.permute.xlu0 %6946
      %6948 = vrot.lane.b32.xlu0 %v6312, 64
      %v6949 = vpop.permute.xlu0 %6948
      %6950 = vrot.lane.b32.xlu0 %v6319, 64
      %v6951 = vpop.permute.xlu0 %6950
      %6952 = vrot.lane.b32.xlu0 %v6326, 64
      %v6953 = vpop.permute.xlu0 %6952
      %6954 = vrot.lane.b32.xlu0 %v6333, 64
      %v6955 = vpop.permute.xlu0 %6954
      %6956 = vrot.lane.b32.xlu0 %v6340, 64
      %v6957 = vpop.permute.xlu0 %6956
      %6958 = vrot.lane.b32.xlu0 %v6347, 64
      %v6959 = vpop.permute.xlu0 %6958
      %v6989 = vmax.f32 %v6844, %v6903
      %v6990 = vmax.f32 %v6845, %v6905
      %v6991 = vmax.f32 %v6846, %v6907
      %v6992 = vmax.f32 %v6847, %v6909
      %v6993 = vmax.f32 %v6848, %v6911
      %v6994 = vmax.f32 %v6849, %v6913
      %v6995 = vmax.f32 %v6850, %v6915
      %v6996 = vmax.f32 %v6851, %v6917
      %v6997 = vmax.f32 %v6852, %v6919
      %v6998 = vmax.f32 %v6853, %v6921
      %v6999 = vmax.f32 %v6854, %v6923
      %v7000 = vmax.f32 %v6855, %v6925
      %v7001 = vmax.f32 %v6856, %v6927
      %v7002 = vmax.f32 %v6857, %v6929
      %v7003 = vmax.f32 %v6858, %v6931
      %v7004 = vmax.f32 %v6859, %v6933
      %v7005 = vmax.f32 %v6860, %v6935
      %v7006 = vmax.f32 %v6861, %v6937
      %v7007 = vmax.f32 %v6862, %v6939
      %v7008 = vmax.f32 %v6863, %v6941
      %v7009 = vmax.f32 %v6864, %v6943
      %v7010 = vmax.f32 %v6865, %v6945
      %v7011 = vmax.f32 %v6866, %v6947
      %v7012 = vmax.f32 %v6867, %v6949
      %v7013 = vmax.f32 %v6868, %v6951
      %v7014 = vmax.f32 %v6869, %v6953
      %v7015 = vmax.f32 %v6870, %v6955
      %v7016 = vmax.f32 %v6871, %v6957
      %v7017 = vmax.f32 %v6872, %v6959
      %v7018 = vmax.f32 %v6989, %v6152
      %v7019 = vmax.f32 %v6990, %v6159
      %v7020 = vmax.f32 %v6991, %v6166
      %v7021 = vmax.f32 %v6992, %v6173
      %v7022 = vmax.f32 %v6993, %v6180
      %v7023 = vmax.f32 %v6994, %v6187
      %v7024 = vmax.f32 %v6995, %v6194
      %v7025 = vmax.f32 %v6996, %v6201
      %v7026 = vmax.f32 %v6997, %v6208
      %v7027 = vmax.f32 %v6998, %v6215
      %v7028 = vmax.f32 %v6999, %v6222
      %v7029 = vmax.f32 %v7000, %v6229
      %v7030 = vmax.f32 %v7001, %v6236
      %v7031 = vmax.f32 %v7002, %v6243
      %v7032 = vmax.f32 %v7003, %v6250
      %v7033 = vmax.f32 %v7004, %v6257
      %v7034 = vmax.f32 %v7005, %v6264
      %v7035 = vmax.f32 %v7006, %v6271
      %v7036 = vmax.f32 %v7007, %v6278
      %v7037 = vmax.f32 %v7008, %v6285
      %v7038 = vmax.f32 %v7009, %v6292
      %v7039 = vmax.f32 %v7010, %v6299
      %v7040 = vmax.f32 %v7011, %v6306
      %v7041 = vmax.f32 %v7012, %v6313
      %v7042 = vmax.f32 %v7013, %v6320
      %v7043 = vmax.f32 %v7014, %v6327
      %v7044 = vmax.f32 %v7015, %v6334
      %v7045 = vmax.f32 %v7016, %v6341
      %v7046 = vmax.f32 %v7017, %v6348
      %7076 = vrot.lane.b32.xlu0 %v6152, 64
      %v7077 = vpop.permute.xlu0 %7076
      %7078 = vrot.lane.b32.xlu0 %v6159, 64
      %v7079 = vpop.permute.xlu0 %7078
      %7080 = vrot.lane.b32.xlu0 %v6166, 64
      %v7081 = vpop.permute.xlu0 %7080
      %7082 = vrot.lane.b32.xlu0 %v6173, 64
      %v7083 = vpop.permute.xlu0 %7082
      %7084 = vrot.lane.b32.xlu0 %v6180, 64
      %v7085 = vpop.permute.xlu0 %7084
      %7086 = vrot.lane.b32.xlu0 %v6187, 64
      %v7087 = vpop.permute.xlu0 %7086
      %7088 = vrot.lane.b32.xlu0 %v6194, 64
      %v7089 = vpop.permute.xlu0 %7088
      %7090 = vrot.lane.b32.xlu0 %v6201, 64
      %v7091 = vpop.permute.xlu0 %7090
      %7092 = vrot.lane.b32.xlu0 %v6208, 64
      %v7093 = vpop.permute.xlu0 %7092
      %7094 = vrot.lane.b32.xlu0 %v6215, 64
      %v7095 = vpop.permute.xlu0 %7094
      %7096 = vrot.lane.b32.xlu0 %v6222, 64
      %v7097 = vpop.permute.xlu0 %7096
      %7098 = vrot.lane.b32.xlu0 %v6229, 64
      %v7099 = vpop.permute.xlu0 %7098
      %7100 = vrot.lane.b32.xlu0 %v6236, 64
      %v7101 = vpop.permute.xlu0 %7100
      %7102 = vrot.lane.b32.xlu0 %v6243, 64
      %v7103 = vpop.permute.xlu0 %7102
      %7104 = vrot.lane.b32.xlu0 %v6250, 64
      %v7105 = vpop.permute.xlu0 %7104
      %7106 = vrot.lane.b32.xlu0 %v6257, 64
      %v7107 = vpop.permute.xlu0 %7106
      %7108 = vrot.lane.b32.xlu0 %v6264, 64
      %v7109 = vpop.permute.xlu0 %7108
      %7110 = vrot.lane.b32.xlu0 %v6271, 64
      %v7111 = vpop.permute.xlu0 %7110
      %7112 = vrot.lane.b32.xlu0 %v6278, 64
      %v7113 = vpop.permute.xlu0 %7112
      %7114 = vrot.lane.b32.xlu0 %v6285, 64
      %v7115 = vpop.permute.xlu0 %7114
      %7116 = vrot.lane.b32.xlu0 %v6292, 64
      %v7117 = vpop.permute.xlu0 %7116
      %7118 = vrot.lane.b32.xlu0 %v6299, 64
      %v7119 = vpop.permute.xlu0 %7118
      %7120 = vrot.lane.b32.xlu0 %v6306, 64
      %v7121 = vpop.permute.xlu0 %7120
      %7122 = vrot.lane.b32.xlu0 %v6313, 64
      %v7123 = vpop.permute.xlu0 %7122
      %7124 = vrot.lane.b32.xlu0 %v6320, 64
      %v7125 = vpop.permute.xlu0 %7124
      %7126 = vrot.lane.b32.xlu0 %v6327, 64
      %v7127 = vpop.permute.xlu0 %7126
      %7128 = vrot.lane.b32.xlu0 %v6334, 64
      %v7129 = vpop.permute.xlu0 %7128
      %7130 = vrot.lane.b32.xlu0 %v6341, 64
      %v7131 = vpop.permute.xlu0 %7130
      %7132 = vrot.lane.b32.xlu0 %v6348, 64
      %v7133 = vpop.permute.xlu0 %7132
      %v7163 = vmax.f32 %v7018, %v7077
      %v7164 = vmax.f32 %v7019, %v7079
      %v7165 = vmax.f32 %v7020, %v7081
      %v7166 = vmax.f32 %v7021, %v7083
      %v7167 = vmax.f32 %v7022, %v7085
      %v7168 = vmax.f32 %v7023, %v7087
      %v7169 = vmax.f32 %v7024, %v7089
      %v7170 = vmax.f32 %v7025, %v7091
      %v7171 = vmax.f32 %v7026, %v7093
      %v7172 = vmax.f32 %v7027, %v7095
      %v7173 = vmax.f32 %v7028, %v7097
      %v7174 = vmax.f32 %v7029, %v7099
      %v7175 = vmax.f32 %v7030, %v7101
      %v7176 = vmax.f32 %v7031, %v7103
      %v7177 = vmax.f32 %v7032, %v7105
      %v7178 = vmax.f32 %v7033, %v7107
      %v7179 = vmax.f32 %v7034, %v7109
      %v7180 = vmax.f32 %v7035, %v7111
      %v7181 = vmax.f32 %v7036, %v7113
      %v7182 = vmax.f32 %v7037, %v7115
      %v7183 = vmax.f32 %v7038, %v7117
      %v7184 = vmax.f32 %v7039, %v7119
      %v7185 = vmax.f32 %v7040, %v7121
      %v7186 = vmax.f32 %v7041, %v7123
      %v7187 = vmax.f32 %v7042, %v7125
      %v7188 = vmax.f32 %v7043, %v7127
      %v7189 = vmax.f32 %v7044, %v7129
      %v7190 = vmax.f32 %v7045, %v7131
      %v7191 = vmax.f32 %v7046, %v7133
      %v7192 = vmax.f32 %v7163, %v6153
      %v7193 = vmax.f32 %v7164, %v6160
      %v7194 = vmax.f32 %v7165, %v6167
      %v7195 = vmax.f32 %v7166, %v6174
      %v7196 = vmax.f32 %v7167, %v6181
      %v7197 = vmax.f32 %v7168, %v6188
      %v7198 = vmax.f32 %v7169, %v6195
      %v7199 = vmax.f32 %v7170, %v6202
      %v7200 = vmax.f32 %v7171, %v6209
      %v7201 = vmax.f32 %v7172, %v6216
      %v7202 = vmax.f32 %v7173, %v6223
      %v7203 = vmax.f32 %v7174, %v6230
      %v7204 = vmax.f32 %v7175, %v6237
      %v7205 = vmax.f32 %v7176, %v6244
      %v7206 = vmax.f32 %v7177, %v6251
      %v7207 = vmax.f32 %v7178, %v6258
      %v7208 = vmax.f32 %v7179, %v6265
      %v7209 = vmax.f32 %v7180, %v6272
      %v7210 = vmax.f32 %v7181, %v6279
      %v7211 = vmax.f32 %v7182, %v6286
      %v7212 = vmax.f32 %v7183, %v6293
      %v7213 = vmax.f32 %v7184, %v6300
      %v7214 = vmax.f32 %v7185, %v6307
      %v7215 = vmax.f32 %v7186, %v6314
      %v7216 = vmax.f32 %v7187, %v6321
      %v7217 = vmax.f32 %v7188, %v6328
      %v7218 = vmax.f32 %v7189, %v6335
      %v7219 = vmax.f32 %v7190, %v6342
      %v7220 = vmax.f32 %v7191, %v6349
      %7250 = vrot.lane.b32.xlu0 %v6153, 64
      %v7251 = vpop.permute.xlu0 %7250
      %7252 = vrot.lane.b32.xlu0 %v6160, 64
      %v7253 = vpop.permute.xlu0 %7252
      %7254 = vrot.lane.b32.xlu0 %v6167, 64
      %v7255 = vpop.permute.xlu0 %7254
      %7256 = vrot.lane.b32.xlu0 %v6174, 64
      %v7257 = vpop.permute.xlu0 %7256
      %7258 = vrot.lane.b32.xlu0 %v6181, 64
      %v7259 = vpop.permute.xlu0 %7258
      %7260 = vrot.lane.b32.xlu0 %v6188, 64
      %v7261 = vpop.permute.xlu0 %7260
      %7262 = vrot.lane.b32.xlu0 %v6195, 64
      %v7263 = vpop.permute.xlu0 %7262
      %7264 = vrot.lane.b32.xlu0 %v6202, 64
      %v7265 = vpop.permute.xlu0 %7264
      %7266 = vrot.lane.b32.xlu0 %v6209, 64
      %v7267 = vpop.permute.xlu0 %7266
      %7268 = vrot.lane.b32.xlu0 %v6216, 64
      %v7269 = vpop.permute.xlu0 %7268
      %7270 = vrot.lane.b32.xlu0 %v6223, 64
      %v7271 = vpop.permute.xlu0 %7270
      %7272 = vrot.lane.b32.xlu0 %v6230, 64
      %v7273 = vpop.permute.xlu0 %7272
      %7274 = vrot.lane.b32.xlu0 %v6237, 64
      %v7275 = vpop.permute.xlu0 %7274
      %7276 = vrot.lane.b32.xlu0 %v6244, 64
      %v7277 = vpop.permute.xlu0 %7276
      %7278 = vrot.lane.b32.xlu0 %v6251, 64
      %v7279 = vpop.permute.xlu0 %7278
      %7280 = vrot.lane.b32.xlu0 %v6258, 64
      %v7281 = vpop.permute.xlu0 %7280
      %7282 = vrot.lane.b32.xlu0 %v6265, 64
      %v7283 = vpop.permute.xlu0 %7282
      %7284 = vrot.lane.b32.xlu0 %v6272, 64
      %v7285 = vpop.permute.xlu0 %7284
      %7286 = vrot.lane.b32.xlu0 %v6279, 64
      %v7287 = vpop.permute.xlu0 %7286
      %7288 = vrot.lane.b32.xlu0 %v6286, 64
      %v7289 = vpop.permute.xlu0 %7288
      %7290 = vrot.lane.b32.xlu0 %v6293, 64
      %v7291 = vpop.permute.xlu0 %7290
      %7292 = vrot.lane.b32.xlu0 %v6300, 64
      %v7293 = vpop.permute.xlu0 %7292
      %7294 = vrot.lane.b32.xlu0 %v6307, 64
      %v7295 = vpop.permute.xlu0 %7294
      %7296 = vrot.lane.b32.xlu0 %v6314, 64
      %v7297 = vpop.permute.xlu0 %7296
      %7298 = vrot.lane.b32.xlu0 %v6321, 64
      %v7299 = vpop.permute.xlu0 %7298
      %7300 = vrot.lane.b32.xlu0 %v6328, 64
      %v7301 = vpop.permute.xlu0 %7300
      %7302 = vrot.lane.b32.xlu0 %v6335, 64
      %v7303 = vpop.permute.xlu0 %7302
      %7304 = vrot.lane.b32.xlu0 %v6342, 64
      %v7305 = vpop.permute.xlu0 %7304
      %7306 = vrot.lane.b32.xlu0 %v6349, 64
      %v7307 = vpop.permute.xlu0 %7306
      %v7337 = vmax.f32 %v7192, %v7251
      %v7338 = vmax.f32 %v7193, %v7253
      %v7339 = vmax.f32 %v7194, %v7255
      %v7340 = vmax.f32 %v7195, %v7257
      %v7341 = vmax.f32 %v7196, %v7259
      %v7342 = vmax.f32 %v7197, %v7261
      %v7343 = vmax.f32 %v7198, %v7263
      %v7344 = vmax.f32 %v7199, %v7265
      %v7345 = vmax.f32 %v7200, %v7267
      %v7346 = vmax.f32 %v7201, %v7269
      %v7347 = vmax.f32 %v7202, %v7271
      %v7348 = vmax.f32 %v7203, %v7273
      %v7349 = vmax.f32 %v7204, %v7275
      %v7350 = vmax.f32 %v7205, %v7277
      %v7351 = vmax.f32 %v7206, %v7279
      %v7352 = vmax.f32 %v7207, %v7281
      %v7353 = vmax.f32 %v7208, %v7283
      %v7354 = vmax.f32 %v7209, %v7285
      %v7355 = vmax.f32 %v7210, %v7287
      %v7356 = vmax.f32 %v7211, %v7289
      %v7357 = vmax.f32 %v7212, %v7291
      %v7358 = vmax.f32 %v7213, %v7293
      %v7359 = vmax.f32 %v7214, %v7295
      %v7360 = vmax.f32 %v7215, %v7297
      %v7361 = vmax.f32 %v7216, %v7299
      %v7362 = vmax.f32 %v7217, %v7301
      %v7363 = vmax.f32 %v7218, %v7303
      %v7364 = vmax.f32 %v7219, %v7305
      %v7365 = vmax.f32 %v7220, %v7307
      %v7366 = vmax.f32 %v7337, %v6154
      %v7367 = vmax.f32 %v7338, %v6161
      %v7368 = vmax.f32 %v7339, %v6168
      %v7369 = vmax.f32 %v7340, %v6175
      %v7370 = vmax.f32 %v7341, %v6182
      %v7371 = vmax.f32 %v7342, %v6189
      %v7372 = vmax.f32 %v7343, %v6196
      %v7373 = vmax.f32 %v7344, %v6203
      %v7374 = vmax.f32 %v7345, %v6210
      %v7375 = vmax.f32 %v7346, %v6217
      %v7376 = vmax.f32 %v7347, %v6224
      %v7377 = vmax.f32 %v7348, %v6231
      %v7378 = vmax.f32 %v7349, %v6238
      %v7379 = vmax.f32 %v7350, %v6245
      %v7380 = vmax.f32 %v7351, %v6252
      %v7381 = vmax.f32 %v7352, %v6259
      %v7382 = vmax.f32 %v7353, %v6266
      %v7383 = vmax.f32 %v7354, %v6273
      %v7384 = vmax.f32 %v7355, %v6280
      %v7385 = vmax.f32 %v7356, %v6287
      %v7386 = vmax.f32 %v7357, %v6294
      %v7387 = vmax.f32 %v7358, %v6301
      %v7388 = vmax.f32 %v7359, %v6308
      %v7389 = vmax.f32 %v7360, %v6315
      %v7390 = vmax.f32 %v7361, %v6322
      %v7391 = vmax.f32 %v7362, %v6329
      %v7392 = vmax.f32 %v7363, %v6336
      %v7393 = vmax.f32 %v7364, %v6343
      %v7394 = vmax.f32 %v7365, %v6350
      %v7395 = vld [vmem:[%s2] sm:$0x1]
      %v7396 = vld [vmem:[%s2 + $0x1] sm:$0x1]
      %v7397 = vld [vmem:[%s2 + $0x2] sm:$0x1]
      %v7398 = vlaneseq
      %v7399 = vshrl.u32 %v7398, 7
      %v7400 = vsub.s32 0, %v7399
      %v7401 = vrot.slane %v7395, %v7400
      %v7402 = vadd.f32 %v7366, %v7401
      %v7403 = vadd.f32 %v7367, %v7401
      %v7404 = vadd.f32 %v7368, %v7401
      %v7405 = vadd.f32 %v7369, %v7401
      %v7406 = vadd.f32 %v7370, %v7401
      %v7407 = vadd.f32 %v7371, %v7401
      %v7408 = vadd.f32 %v7372, %v7401
      %v7409 = vadd.f32 %v7373, %v7401
      %v7410 = vadd.f32 %v7374, %v7401
      %v7411 = vadd.f32 %v7375, %v7401
      %v7412 = vadd.f32 %v7376, %v7401
      %v7413 = vadd.f32 %v7377, %v7401
      %v7414 = vadd.f32 %v7378, %v7401
      %v7415 = vadd.f32 %v7379, %v7401
      %v7416 = vadd.f32 %v7380, %v7401
      %v7417 = vadd.f32 %v7381, %v7401
      %v7418 = vadd.f32 %v7382, %v7401
      %v7419 = vadd.f32 %v7383, %v7401
      %v7420 = vadd.f32 %v7384, %v7401
      %v7421 = vadd.f32 %v7385, %v7401
      %v7422 = vadd.f32 %v7386, %v7401
      %v7423 = vadd.f32 %v7387, %v7401
      %v7424 = vadd.f32 %v7388, %v7401
      %v7425 = vadd.f32 %v7389, %v7401
      %v7426 = vadd.f32 %v7390, %v7401
      %v7427 = vadd.f32 %v7391, %v7401
      %v7428 = vadd.f32 %v7392, %v7401
      %v7429 = vadd.f32 %v7393, %v7401
      %v7430 = vadd.f32 %v7394, %v7401
      %v7431 = vmax.f32 %v7402, 0.0
      %v7432 = vmax.f32 %v7403, 0.0
      %v7433 = vmax.f32 %v7404, 0.0
      %v7434 = vmax.f32 %v7405, 0.0
      %v7435 = vmax.f32 %v7406, 0.0
      %v7436 = vmax.f32 %v7407, 0.0
      %v7437 = vmax.f32 %v7408, 0.0
      %v7438 = vmax.f32 %v7409, 0.0
      %v7439 = vmax.f32 %v7410, 0.0
      %v7440 = vmax.f32 %v7411, 0.0
      %v7441 = vmax.f32 %v7412, 0.0
      %v7442 = vmax.f32 %v7413, 0.0
      %v7443 = vmax.f32 %v7414, 0.0
      %v7444 = vmax.f32 %v7415, 0.0
      %v7445 = vmax.f32 %v7416, 0.0
      %v7446 = vmax.f32 %v7417, 0.0
      %v7447 = vmax.f32 %v7418, 0.0
      %v7448 = vmax.f32 %v7419, 0.0
      %v7449 = vmax.f32 %v7420, 0.0
      %v7450 = vmax.f32 %v7421, 0.0
      %v7451 = vmax.f32 %v7422, 0.0
      %v7452 = vmax.f32 %v7423, 0.0
      %v7453 = vmax.f32 %v7424, 0.0
      %v7454 = vmax.f32 %v7425, 0.0
      %v7455 = vmax.f32 %v7426, 0.0
      %v7456 = vmax.f32 %v7427, 0.0
      %v7457 = vmax.f32 %v7428, 0.0
      %v7458 = vmax.f32 %v7429, 0.0
      %v7459 = vmax.f32 %v7430, 0.0
      %v7460 = vlaneseq
      %v7461 = vshrl.u32 %v7460, 7
      %v7462 = vsub.s32 0, %v7461
      %v7463 = vrot.slane %v7396, %v7462
      %v7464 = vmul.f32 %v7431, %v7463
      %v7465 = vmul.f32 %v7432, %v7463
      %v7466 = vmul.f32 %v7433, %v7463
      %v7467 = vmul.f32 %v7434, %v7463
      %v7468 = vmul.f32 %v7435, %v7463
      %v7469 = vmul.f32 %v7436, %v7463
      %v7470 = vmul.f32 %v7437, %v7463
      %v7471 = vmul.f32 %v7438, %v7463
      %v7472 = vmul.f32 %v7439, %v7463
      %v7473 = vmul.f32 %v7440, %v7463
      %v7474 = vmul.f32 %v7441, %v7463
      %v7475 = vmul.f32 %v7442, %v7463
      %v7476 = vmul.f32 %v7443, %v7463
      %v7477 = vmul.f32 %v7444, %v7463
      %v7478 = vmul.f32 %v7445, %v7463
      %v7479 = vmul.f32 %v7446, %v7463
      %v7480 = vmul.f32 %v7447, %v7463
      %v7481 = vmul.f32 %v7448, %v7463
      %v7482 = vmul.f32 %v7449, %v7463
      %v7483 = vmul.f32 %v7450, %v7463
      %v7484 = vmul.f32 %v7451, %v7463
      %v7485 = vmul.f32 %v7452, %v7463
      %v7486 = vmul.f32 %v7453, %v7463
      %v7487 = vmul.f32 %v7454, %v7463
      %v7488 = vmul.f32 %v7455, %v7463
      %v7489 = vmul.f32 %v7456, %v7463
      %v7490 = vmul.f32 %v7457, %v7463
      %v7491 = vmul.f32 %v7458, %v7463
      %v7492 = vmul.f32 %v7459, %v7463
      %v7493 = vlaneseq
      %v7494 = vshrl.u32 %v7493, 7
      %v7495 = vsub.s32 0, %v7494
      %v7496 = vrot.slane %v7397, %v7495
      %v7497 = vadd.f32 %v7464, %v7496
      %v7498 = vadd.f32 %v7465, %v7496
      %v7499 = vadd.f32 %v7466, %v7496
      %v7500 = vadd.f32 %v7467, %v7496
      %v7501 = vadd.f32 %v7468, %v7496
      %v7502 = vadd.f32 %v7469, %v7496
      %v7503 = vadd.f32 %v7470, %v7496
      %v7504 = vadd.f32 %v7471, %v7496
      %v7505 = vadd.f32 %v7472, %v7496
      %v7506 = vadd.f32 %v7473, %v7496
      %v7507 = vadd.f32 %v7474, %v7496
      %v7508 = vadd.f32 %v7475, %v7496
      %v7509 = vadd.f32 %v7476, %v7496
      %v7510 = vadd.f32 %v7477, %v7496
      %v7511 = vadd.f32 %v7478, %v7496
      %v7512 = vadd.f32 %v7479, %v7496
      %v7513 = vadd.f32 %v7480, %v7496
      %v7514 = vadd.f32 %v7481, %v7496
      %v7515 = vadd.f32 %v7482, %v7496
      %v7516 = vadd.f32 %v7483, %v7496
      %v7517 = vadd.f32 %v7484, %v7496
      %v7518 = vadd.f32 %v7485, %v7496
      %v7519 = vadd.f32 %v7486, %v7496
      %v7520 = vadd.f32 %v7487, %v7496
      %v7521 = vadd.f32 %v7488, %v7496
      %v7522 = vadd.f32 %v7489, %v7496
      %v7523 = vadd.f32 %v7490, %v7496
      %v7524 = vadd.f32 %v7491, %v7496
      %v7525 = vadd.f32 %v7492, %v7496
      %vm7526 = vcmask 523264
      %7527 = vst.msk [vmem:[%s170] sm:$0xff] %vm7526, %v7497
      %7528 = vst.msk [vmem:[%s170 + $0x8] sm:$0xff] %vm7526, %v7498
      %7529 = vst.msk [vmem:[%s170 + $0x10] sm:$0xff] %vm7526, %v7499
      %7530 = vst.msk [vmem:[%s170 + $0x18] sm:$0xff] %vm7526, %v7500
      %7531 = vst.msk [vmem:[%s170 + $0x20] sm:$0xff] %vm7526, %v7501
      %7532 = vst.msk [vmem:[%s170 + $0x28] sm:$0xff] %vm7526, %v7502
      %7533 = vst.msk [vmem:[%s170 + $0x30] sm:$0xff] %vm7526, %v7503
      %7534 = vst.msk [vmem:[%s170 + $0x38] sm:$0xff] %vm7526, %v7504
      %7535 = vst.msk [vmem:[%s170 + $0x40] sm:$0xff] %vm7526, %v7505
      %7536 = vst.msk [vmem:[%s170 + $0x48] sm:$0xff] %vm7526, %v7506
      %7537 = vst.msk [vmem:[%s170 + $0x50] sm:$0xff] %vm7526, %v7507
      %7538 = vst.msk [vmem:[%s170 + $0x58] sm:$0xff] %vm7526, %v7508
      %7539 = vst.msk [vmem:[%s170 + $0x60] sm:$0xff] %vm7526, %v7509
      %7540 = vst.msk [vmem:[%s170 + $0x68] sm:$0xff] %vm7526, %v7510
      %7541 = vst.msk [vmem:[%s170 + $0x70] sm:$0xff] %vm7526, %v7511
      %7542 = vst.msk [vmem:[%s170 + $0x78] sm:$0xff] %vm7526, %v7512
      %7543 = vst.msk [vmem:[%s170 + $0x80] sm:$0xff] %vm7526, %v7513
      %7544 = vst.msk [vmem:[%s170 + $0x88] sm:$0xff] %vm7526, %v7514
      %7545 = vst.msk [vmem:[%s170 + $0x90] sm:$0xff] %vm7526, %v7515
      %7546 = vst.msk [vmem:[%s170 + $0x98] sm:$0xff] %vm7526, %v7516
      %7547 = vst.msk [vmem:[%s170 + $0xa0] sm:$0xff] %vm7526, %v7517
      %7548 = vst.msk [vmem:[%s170 + $0xa8] sm:$0xff] %vm7526, %v7518
      %7549 = vst.msk [vmem:[%s170 + $0xb0] sm:$0xff] %vm7526, %v7519
      %7550 = vst.msk [vmem:[%s170 + $0xb8] sm:$0xff] %vm7526, %v7520
      %7551 = vst.msk [vmem:[%s170 + $0xc0] sm:$0xff] %vm7526, %v7521
      %7552 = vst.msk [vmem:[%s170 + $0xc8] sm:$0xff] %vm7526, %v7522
      %7553 = vst.msk [vmem:[%s170 + $0xd0] sm:$0xff] %vm7526, %v7523
      %7554 = vst.msk [vmem:[%s170 + $0xd8] sm:$0xff] %vm7526, %v7524
      %vm7555 = vcmask 518144
      %7556 = vst.msk [vmem:[%s170 + $0xe0] sm:$0x7] %vm7555, %v7525
      %p7557 = scmp.lt.s32.totalorder %s14, 1
      %s7558 = scalar_select %p7557, %s14, 1
      %s7559 = smul.addr %s7558, 29
      %s7560 = smul.addr %s7559, 8
      %s7561 = scalar_lea.vmem %s3, %s7560
      // Predicated region
      $region33: #{stagernet_forward.2} parent=31 // pred_check
        %p7562 = pneg %p100
      $region34: #{stagernet_forward.2} parent=31 // pred_check_branch
        %7564 = sbr.rel (%p7562) target = $region36
      $region35: #{stagernet_forward.2} parent=31 // pred_region
        _
      $region36: #{stagernet_forward.2} parent=31 // pred_fallthru
        _
    $region32: #{stagernet_forward.2} parent=5 // pred_fallthru
      _
    %p7565 = scmp.le.s32.totalorder 2, %s9
    // Predicated region
    $region37: #{stagernet_forward.2} parent=5 // pred_check
      %p7566 = pneg %p7565
    $region38: #{stagernet_forward.2} parent=5 // pred_check_branch
      %7568 = sbr.rel (%p7566) target = $region40
    $region39: #{stagernet_forward.2} parent=5 // pred_region
      %s7569 = ssub.s32 %s9, 2
      // Predicated region
      $region41: #{stagernet_forward.2} parent=39 // pred_check
        %p7570 = pneg %p106
      $region42: #{stagernet_forward.2} parent=39 // pred_check_branch
        %7572 = sbr.rel (%p7570) target = $region44
      $region43: #{stagernet_forward.2} parent=39 // pred_region
        %p7573 = scmp.lt.s32.totalorder %s15, 1
        %s7574 = scalar_select %p7573, %s15, 1
        %s7575 = smul.addr %s7574, 29
        %s7576 = smul.addr %s7575, 8
        %s7577 = scalar_lea.vmem %s3, %s7576
      $region44: #{stagernet_forward.2} parent=39 // pred_fallthru
        _
    $region40: #{stagernet_forward.2} parent=5 // pred_fallthru
      _
  $region6: #{stagernet_forward.2} parent=0 // loop_footer
    %s13 = sadd.s32 1, %s9
  $region7: #{stagernet_forward.2} parent=0 // loop_footer_branch
    %8 = sbr.rel target = $region3
  $region8: #{stagernet_forward.2} parent=0 // loop_exit
    _

// kernel: stagernet_forward.3
$region0: #{stagernet_forward.3}
  #allocation0 [shape = 'u32[]', space=smem, size = 0x4, offset = 0x4, fixed_abs, tag = 'smem constant byte address 0x4 - core index']
  #allocation1 [shape = 'u32[144,128]{1,0:T(1,128)}', space=vmem, size = 0x12000, scoped, tag = 'internal scratch']
  %s0 = inlined_call_operand.vmem [shape: f32[2,68,208], index: 0, kind: input, shape index: {}]
  %s1 = inlined_call_operand.vmem [shape: f32[5,208,208], index: 1, kind: input, shape index: {}]
  %s2 = inlined_call_operand.vmem [shape: f32[3,16], index: 2, kind: input, shape index: {}]
  %s3 = inlined_call_operand.vmem [shape: f32[16,1664], index: 3, kind: input, shape index: {}]
  %s4 = inlined_call_operand.vmem [shape: f32[1,32], index: 4, kind: input, shape index: {}]
  %s5 = inlined_call_operand.hbm [shape: f32[2,1,32], index: 5, kind: output, shape index: {}]
  %s6 = sld [smem:[#allocation0]]
  $region53: #{stagernet_forward.3} parent=0
    _
  %s8 = ssub.s32 1, %s6
  %s9 = scalar_select 0, %s8, %s6
  $region1: #{stagernet_forward.3} parent=0
    #allocation2 [shape = 'u8[1024]{0}', space=vmem, size = 0x400, scoped, tag = 'output window, operand 0']
    #allocation3 [shape = 's32[2]{0}', space=sflag, size = 0x8, scoped, tag = 'scoped memory for stagernet_forward.3']
    %10 = vsyncpa [#allocation3], 0
    %s11 = scalar_lea.sflag [#allocation3], 1
    %12 = vsyncpa %s11, 0
    loop: start=0, step=1, limit=4
    $region2: #{stagernet_forward.3} parent=1 // loop_pre_header
      _
    $region3: #{stagernet_forward.3} parent=1 // loop_header
      %s14 = sphi 0, %s18
      %p15 = scmp.ge.s32.totalorder %s14, 4
      %s24 = sphi 0, %s26
      %s27 = sphi 0, %s24
      %s28 = sphi 0, %s27
      %s44 = sphi 0, %s28
      %s48 = sphi 0, %s48
      %s50 = sphi 0, %s48
      %s51 = sphi 0, %s50
      %s65 = sphi 0, %s51
      %s69 = sphi 0, %s69
      %s71 = sphi 0, %s69
      %s72 = sphi 0, %s71
      %s86 = sphi 0, %s72
      %s90 = sphi 0, %s90
      %s92 = sphi 0, %s90
      %s93 = sphi 0, %s92
      %s107 = sphi 0, %s93
      %s111 = sphi 0, %s111
      %s113 = sphi 0, %s111
      %s114 = sphi 0, %s113
      %s128 = sphi 0, %s114
      %s134 = sphi 0, %s136
      %s137 = sphi 0, %s134
      %s138 = sphi 0, %s137
      %s154 = sphi 0, %s138
    $region4: #{stagernet_forward.3} parent=1 // loop_header_branch
      %17 = sbr.rel (%p15) target = $region8
    $region5: #{stagernet_forward.3} parent=1 // loop_body
      %s19 = ssub.s32 %s14, 1
      %s20 = ssub.s32 %s14, 2
      %s21 = sadd.s32 %s14, 1
      %s22 = ssub.s32 %s14, %s21
      %p23 = scmp.eq.s32.totalorder %s22, 0
      %s25 = sadd.s32 %s24, 1
      %s26 = scalar_select %p23, %s24, %s25
      %p29 = pneg %p23
      %p30 = scmp.eq.s32.totalorder %s14, 1
      %p31 = por %p29, %p30
      %p32 = scmp.ne.s32.totalorder %s24, %s27
      %p33 = scmp.eq.s32.totalorder %s14, 0
      %p34 = por %p32, %p33
      %p35 = scmp.ne.s32.totalorder %s24, %s27
      %p36 = scmp.eq.s32.totalorder %s19, 1
      %p37 = por %p35, %p36
      %p38 = scmp.ne.s32.totalorder %s27, %s28
      %p39 = scmp.eq.s32.totalorder %s19, 0
      %p40 = por %p38, %p39
      %p41 = scmp.ne.s32.totalorder %s27, %s28
      %p42 = scmp.eq.s32.totalorder %s20, 1
      %p43 = por %p41, %p42
      %p45 = scmp.ne.s32.totalorder %s28, %s44
      %p46 = scmp.eq.s32.totalorder %s20, 0
      %p47 = por %p45, %p46
      %s49 = sadd.s32 %s48, 1
      %p52 = scmp.eq.s32.totalorder %s14, 1
      %p53 = scmp.ne.s32.totalorder %s48, %s50
      %p54 = scmp.eq.s32.totalorder %s14, 0
      %p55 = por %p53, %p54
      %p56 = scmp.ne.s32.totalorder %s48, %s50
      %p57 = scmp.eq.s32.totalorder %s19, 1
      %p58 = por %p56, %p57
      %p59 = scmp.ne.s32.totalorder %s50, %s51
      %p60 = scmp.eq.s32.totalorder %s19, 0
      %p61 = por %p59, %p60
      %p62 = scmp.ne.s32.totalorder %s50, %s51
      %p63 = scmp.eq.s32.totalorder %s20, 1
      %p64 = por %p62, %p63
      %p66 = scmp.ne.s32.totalorder %s51, %s65
      %p67 = scmp.eq.s32.totalorder %s20, 0
      %p68 = por %p66, %p67
      %s70 = sadd.s32 %s69, 1
      %p73 = scmp.eq.s32.totalorder %s14, 1
      %p74 = scmp.ne.s32.totalorder %s69, %s71
      %p75 = scmp.eq.s32.totalorder %s14, 0
      %p76 = por %p74, %p75
      %p77 = scmp.ne.s32.totalorder %s69, %s71
      %p78 = scmp.eq.s32.totalorder %s19, 1
      %p79 = por %p77, %p78
      %p80 = scmp.ne.s32.totalorder %s71, %s72
      %p81 = scmp.eq.s32.totalorder %s19, 0
      %p82 = por %p80, %p81
      %p83 = scmp.ne.s32.totalorder %s71, %s72
      %p84 = scmp.eq.s32.totalorder %s20, 1
      %p85 = por %p83, %p84
      %p87 = scmp.ne.s32.totalorder %s72, %s86
      %p88 = scmp.eq.s32.totalorder %s20, 0
      %p89 = por %p87, %p88
      %s91 = sadd.s32 %s90, 1
      %p94 = scmp.eq.s32.totalorder %s14, 1
      %p95 = scmp.ne.s32.totalorder %s90, %s92
      %p96 = scmp.eq.s32.totalorder %s14, 0
      %p97 = por %p95, %p96
      %p98 = scmp.ne.s32.totalorder %s90, %s92
      %p99 = scmp.eq.s32.totalorder %s19, 1
      %p100 = por %p98, %p99
      %p101 = scmp.ne.s32.totalorder %s92, %s93
      %p102 = scmp.eq.s32.totalorder %s19, 0
      %p103 = por %p101, %p102
      %p104 = scmp.ne.s32.totalorder %s92, %s93
      %p105 = scmp.eq.s32.totalorder %s20, 1
      %p106 = por %p104, %p105
      %p108 = scmp.ne.s32.totalorder %s93, %s107
      %p109 = scmp.eq.s32.totalorder %s20, 0
      %p110 = por %p108, %p109
      %s112 = sadd.s32 %s111, 1
      %p115 = scmp.eq.s32.totalorder %s14, 1
      %p116 = scmp.ne.s32.totalorder %s111, %s113
      %p117 = scmp.eq.s32.totalorder %s14, 0
      %p118 = por %p116, %p117
      %p119 = scmp.ne.s32.totalorder %s111, %s113
      %p120 = scmp.eq.s32.totalorder %s19, 1
      %p121 = por %p119, %p120
      %p122 = scmp.ne.s32.totalorder %s113, %s114
      %p123 = scmp.eq.s32.totalorder %s19, 0
      %p124 = por %p122, %p123
      %p125 = scmp.ne.s32.totalorder %s113, %s114
      %p126 = scmp.eq.s32.totalorder %s20, 1
      %p127 = por %p125, %p126
      %p129 = scmp.ne.s32.totalorder %s114, %s128
      %p130 = scmp.eq.s32.totalorder %s20, 0
      %p131 = por %p129, %p130
      %s132 = ssub.s32 %s14, %s21
      %p133 = scmp.eq.s32.totalorder %s132, 0
      %s135 = sadd.s32 %s134, 1
      %s136 = scalar_select %p133, %s134, %s135
      %p139 = pneg %p133
      %p140 = scmp.eq.s32.totalorder %s14, 1
      %p141 = por %p139, %p140
      %p142 = scmp.ne.s32.totalorder %s134, %s137
      %p143 = scmp.eq.s32.totalorder %s14, 0
      %p144 = por %p142, %p143
      %p145 = scmp.ne.s32.totalorder %s134, %s137
      %p146 = scmp.eq.s32.totalorder %s19, 1
      %p147 = por %p145, %p146
      %p148 = scmp.ne.s32.totalorder %s137, %s138
      %p149 = scmp.eq.s32.totalorder %s19, 0
      %p150 = por %p148, %p149
      %p151 = scmp.ne.s32.totalorder %s137, %s138
      %p152 = scmp.eq.s32.totalorder %s20, 1
      %p153 = por %p151, %p152
      %p155 = scmp.ne.s32.totalorder %s138, %s154
      %p156 = scmp.eq.s32.totalorder %s20, 0
      %p157 = por %p155, %p156
      %p158 = scmp.le.s32.totalorder 1, %s14
      %p159 = scmp.lt.s32.totalorder %s14, 3
      %p160 = pnand %p158, %p159
      %p161 = pneg %p160
      // Predicated region
      $region9: #{stagernet_forward.3} parent=5 // pred_check
        _
      $region10: #{stagernet_forward.3} parent=5 // pred_check_branch
        %163 = sbr.rel (%p160) target = $region12
      $region11: #{stagernet_forward.3} parent=5 // pred_region
        %s164 = ssub.s32 %s14, 1
        // Predicated region
        $region13: #{stagernet_forward.3} parent=11 // pred_check
          %p165 = pneg %p61
        $region14: #{stagernet_forward.3} parent=11 // pred_check_branch
          %167 = sbr.rel (%p165) target = $region16
        $region15: #{stagernet_forward.3} parent=11 // pred_region
          _
        $region16: #{stagernet_forward.3} parent=11 // pred_fallthru
          _
        // Predicated region
        $region17: #{stagernet_forward.3} parent=11 // pred_check
          %p168 = pneg %p82
        $region18: #{stagernet_forward.3} parent=11 // pred_check_branch
          %170 = sbr.rel (%p168) target = $region20
        $region19: #{stagernet_forward.3} parent=11 // pred_region
          _
        $region20: #{stagernet_forward.3} parent=11 // pred_fallthru
          _
        // Predicated region
        $region21: #{stagernet_forward.3} parent=11 // pred_check
          %p171 = pneg %p103
        $region22: #{stagernet_forward.3} parent=11 // pred_check_branch
          %173 = sbr.rel (%p171) target = $region24
        $region23: #{stagernet_forward.3} parent=11 // pred_region
          _
        $region24: #{stagernet_forward.3} parent=11 // pred_fallthru
          _
        // Predicated region
        $region25: #{stagernet_forward.3} parent=11 // pred_check
          %p174 = pneg %p124
        $region26: #{stagernet_forward.3} parent=11 // pred_check_branch
          %176 = sbr.rel (%p174) target = $region28
        $region27: #{stagernet_forward.3} parent=11 // pred_region
          _
        $region28: #{stagernet_forward.3} parent=11 // pred_fallthru
          _
      $region12: #{stagernet_forward.3} parent=5 // pred_fallthru
        _
      %p177 = scmp.lt.s32.totalorder %s14, 2
      // Predicated region
      $region29: #{stagernet_forward.3} parent=5 // pred_check
        %p178 = pneg %p177
      $region30: #{stagernet_forward.3} parent=5 // pred_check_branch
        %180 = sbr.rel (%p178) target = $region32
      $region31: #{stagernet_forward.3} parent=5 // pred_region
        // Predicated region
        $region33: #{stagernet_forward.3} parent=31 // pred_check
          %p181 = pneg %p34
        $region34: #{stagernet_forward.3} parent=31 // pred_check_branch
          %183 = sbr.rel (%p181) target = $region36
        $region35: #{stagernet_forward.3} parent=31 // pred_region
          %p184 = scmp.lt.s32.totalorder %s14, 1
          %s185 = scalar_select %p184, %s14, 1
          %s186 = smul.addr %s185, 18
          %s187 = smul.addr %s186, 8
          %s188 = scalar_lea.vmem %s0, %s187
        $region36: #{stagernet_forward.3} parent=31 // pred_fallthru
          _
      $region32: #{stagernet_forward.3} parent=5 // pred_fallthru
        _
      %p189 = scmp.le.s32.totalorder 1, %s14
      %p190 = scmp.lt.s32.totalorder %s14, 3
      %p191 = pnand %p189, %p190
      %p192 = pneg %p191
      // Predicated region
      $region37: #{stagernet_forward.3} parent=5 // pred_check
        _
      $region38: #{stagernet_forward.3} parent=5 // pred_check_branch
        %194 = sbr.rel (%p191) target = $region40
      $region39: #{stagernet_forward.3} parent=5 // pred_region
        %s195 = ssub.s32 %s14, 1
        %p196 = scmp.lt.s32.totalorder %s19, 1
        %s197 = scalar_select %p196, %s19, 1
        %s198 = smul.addr %s197, 18
        %s199 = smul.addr %s198, 8
        %s200 = scalar_lea.vmem %s0, %s199
        %p201 = pneg %p40
        %p202 = pneg %p37
        %p203 = pneg %p61
        %p204 = pneg %p58
        %p205 = pneg %p82
        %p206 = pneg %p79
        %p207 = pneg %p103
        %p208 = pneg %p100
        %p209 = pneg %p124
        %p210 = pneg %p121
        %p211 = pneg %p150
        %p212 = pneg %p147
        %s213 = sand.u32 %s137, 1
        %s214 = scalar_lea.sflag [#allocation3], %s213
        %s215 = sand.u32 %s137, 1
        %s216 = scalar_lea.vmem [#allocation2], %s215
        %p217 = scmp.lt.s32.totalorder %s19, 1
        %s218 = scalar_select %p217, %s19, 1
        %s219 = smul.addr %s218, 18
        %s220 = smul.addr %s219, 8
        %s221 = scalar_lea.vmem %s0, %s220
        %v222 = vld [vmem:[%s221] sm:$0xff]
        %v223 = vld [vmem:[%s221 + $0x8] sm:$0xff]
        %v224 = vld [vmem:[%s221 + $0x10] sm:$0xff]
        %v225 = vld [vmem:[%s221 + $0x18] sm:$0xff]
        %v226 = vld [vmem:[%s221 + $0x20] sm:$0xff]
        %v227 = vld [vmem:[%s221 + $0x28] sm:$0xff]
        %v228 = vld [vmem:[%s221 + $0x30] sm:$0xff]
        %v229 = vld [vmem:[%s221 + $0x38] sm:$0xff]
        %v230 = vld [vmem:[%s221 + $0x40] sm:$0xff]
        %v231 = vld [vmem:[%s221 + $0x48] sm:$0xff]
        %v232 = vld [vmem:[%s221 + $0x50] sm:$0xff]
        %v233 = vld [vmem:[%s221 + $0x58] sm:$0xff]
        %v234 = vld [vmem:[%s221 + $0x60] sm:$0xf]
        %v235 = vld [vmem:[%s221 + $0x68] sm:$0xf]
        %v236 = vld [vmem:[%s1] sm:$0xff]
        %v237 = vld [vmem:[%s1 + $0x8] sm:$0xff]
        %v238 = vld [vmem:[%s1 + $0x10] sm:$0xff]
        %v239 = vld [vmem:[%s1 + $0x18] sm:$0xff]
        %v240 = vld [vmem:[%s1 + $0x20] sm:$0xff]
        %v241 = vld [vmem:[%s1 + $0x28] sm:$0xff]
        %v242 = vld [vmem:[%s1 + $0x30] sm:$0xff]
        %v243 = vld [vmem:[%s1 + $0x38] sm:$0xff]
        %v244 = vld [vmem:[%s1 + $0x40] sm:$0xff]
        %v245 = vld [vmem:[%s1 + $0x48] sm:$0xff]
        %v246 = vld [vmem:[%s1 + $0x50] sm:$0xff]
        %v247 = vld [vmem:[%s1 + $0x58] sm:$0xff]
        %v248 = vld [vmem:[%s1 + $0x60] sm:$0xff]
        %v249 = vld [vmem:[%s1 + $0x68] sm:$0xff]
        %v250 = vld [vmem:[%s1 + $0x70] sm:$0xff]
        %v251 = vld [vmem:[%s1 + $0x78] sm:$0xff]
        %v252 = vld [vmem:[%s1 + $0x80] sm:$0xff]
        %v253 = vld [vmem:[%s1 + $0x88] sm:$0xff]
        %v254 = vld [vmem:[%s1 + $0x90] sm:$0xff]
        %v255 = vld [vmem:[%s1 + $0x98] sm:$0xff]
        %v256 = vld [vmem:[%s1 + $0xa0] sm:$0xff]
        %v257 = vld [vmem:[%s1 + $0xa8] sm:$0xff]
        %v258 = vld [vmem:[%s1 + $0xb0] sm:$0xff]
        %v259 = vld [vmem:[%s1 + $0xb8] sm:$0xff]
        %v260 = vld [vmem:[%s1 + $0xc0] sm:$0xff]
        %v261 = vld [vmem:[%s1 + $0xc8] sm:$0xff]
        %v262 = vld [vmem:[%s1 + $0xd0] sm:$0xff]
        %v263 = vld [vmem:[%s1 + $0xd8] sm:$0xff]
        %v264 = vld [vmem:[%s1 + $0xe0] sm:$0xff]
        %v265 = vld [vmem:[%s1 + $0xe8] sm:$0xff]
        %v266 = vld [vmem:[%s1 + $0xf0] sm:$0xff]
        %v267 = vld [vmem:[%s1 + $0xf8] sm:$0xff]
        %v268 = vld [vmem:[%s1 + $0x100] sm:$0xff]
        %v269 = vld [vmem:[%s1 + $0x108] sm:$0xff]
        %v270 = vld [vmem:[%s1 + $0x110] sm:$0xff]
        %v271 = vld [vmem:[%s1 + $0x118] sm:$0xff]
        %v272 = vld [vmem:[%s1 + $0x120] sm:$0xff]
        %v273 = vld [vmem:[%s1 + $0x128] sm:$0xff]
        %v274 = vld [vmem:[%s1 + $0x130] sm:$0xff]
        %v275 = vld [vmem:[%s1 + $0x138] sm:$0xff]
        %v276 = vld [vmem:[%s1 + $0x140] sm:$0xff]
        %v277 = vld [vmem:[%s1 + $0x148] sm:$0xff]
        %v278 = vld [vmem:[%s1 + $0x150] sm:$0xff]
        %v279 = vld [vmem:[%s1 + $0x158] sm:$0xff]
        %v280 = vld [vmem:[%s1 + $0x160] sm:$0xff]
        %v281 = vld [vmem:[%s1 + $0x168] sm:$0xff]
        %v282 = vld [vmem:[%s1 + $0x170] sm:$0xff]
        %v283 = vld [vmem:[%s1 + $0x178] sm:$0xff]
        %v284 = vld [vmem:[%s1 + $0x180] sm:$0xff]
        %v285 = vld [vmem:[%s1 + $0x188] sm:$0xff]
        %v286 = vld [vmem:[%s1 + $0x190] sm:$0xff]
        %v287 = vld [vmem:[%s1 + $0x198] sm:$0xff]
        %v288 = vld [vmem:[%s221] sm:$0xf0]
        %v289 = vld [vmem:[%s221 + $0x8] sm:$0xf0]
        %v290 = vld [vmem:[%s221 + $0x60] sm:$0xff]
        %v291 = vld [vmem:[%s221 + $0x68] sm:$0xff]
        %s292 = scalar_lea.vmem %s1, 416
        %v293 = vld [vmem:[%s292] sm:$0xff]
        %v294 = vld [vmem:[%s292 + $0x8] sm:$0xff]
        %v295 = vld [vmem:[%s292 + $0x10] sm:$0xff]
        %v296 = vld [vmem:[%s292 + $0x18] sm:$0xff]
        %v297 = vld [vmem:[%s292 + $0x20] sm:$0xff]
        %v298 = vld [vmem:[%s292 + $0x28] sm:$0xff]
        %v299 = vld [vmem:[%s292 + $0x30] sm:$0xff]
        %v300 = vld [vmem:[%s292 + $0x38] sm:$0xff]
        %v301 = vld [vmem:[%s292 + $0x40] sm:$0xff]
        %v302 = vld [vmem:[%s292 + $0x48] sm:$0xff]
        %v303 = vld [vmem:[%s292 + $0x50] sm:$0xff]
        %v304 = vld [vmem:[%s292 + $0x58] sm:$0xff]
        %v305 = vld [vmem:[%s292 + $0x60] sm:$0xff]
        %v306 = vld [vmem:[%s292 + $0x68] sm:$0xff]
        %v307 = vld [vmem:[%s292 + $0x70] sm:$0xff]
        %v308 = vld [vmem:[%s292 + $0x78] sm:$0xff]
        %v309 = vld [vmem:[%s292 + $0x80] sm:$0xff]
        %v310 = vld [vmem:[%s292 + $0x88] sm:$0xff]
        %v311 = vld [vmem:[%s292 + $0x90] sm:$0xff]
        %v312 = vld [vmem:[%s292 + $0x98] sm:$0xff]
        %v313 = vld [vmem:[%s292 + $0xa0] sm:$0xff]
        %v314 = vld [vmem:[%s292 + $0xa8] sm:$0xff]
        %v315 = vld [vmem:[%s292 + $0xb0] sm:$0xff]
        %v316 = vld [vmem:[%s292 + $0xb8] sm:$0xff]
        %v317 = vld [vmem:[%s292 + $0xc0] sm:$0xff]
        %v318 = vld [vmem:[%s292 + $0xc8] sm:$0xff]
        %v319 = vld [vmem:[%s292 + $0xd0] sm:$0xff]
        %v320 = vld [vmem:[%s292 + $0xd8] sm:$0xff]
        %v321 = vld [vmem:[%s292 + $0xe0] sm:$0xff]
        %v322 = vld [vmem:[%s292 + $0xe8] sm:$0xff]
        %v323 = vld [vmem:[%s292 + $0xf0] sm:$0xff]
        %v324 = vld [vmem:[%s292 + $0xf8] sm:$0xff]
        %v325 = vld [vmem:[%s292 + $0x100] sm:$0xff]
        %v326 = vld [vmem:[%s292 + $0x108] sm:$0xff]
        %v327 = vld [vmem:[%s292 + $0x110] sm:$0xff]
        %v328 = vld [vmem:[%s292 + $0x118] sm:$0xff]
        %v329 = vld [vmem:[%s292 + $0x120] sm:$0xff]
        %v330 = vld [vmem:[%s292 + $0x128] sm:$0xff]
        %v331 = vld [vmem:[%s292 + $0x130] sm:$0xff]
        %v332 = vld [vmem:[%s292 + $0x138] sm:$0xff]
        %v333 = vld [vmem:[%s292 + $0x140] sm:$0xff]
        %v334 = vld [vmem:[%s292 + $0x148] sm:$0xff]
        %v335 = vld [vmem:[%s292 + $0x150] sm:$0xff]
        %v336 = vld [vmem:[%s292 + $0x158] sm:$0xff]
        %v337 = vld [vmem:[%s292 + $0x160] sm:$0xff]
        %v338 = vld [vmem:[%s292 + $0x168] sm:$0xff]
        %v339 = vld [vmem:[%s292 + $0x170] sm:$0xff]
        %v340 = vld [vmem:[%s292 + $0x178] sm:$0xff]
        %v341 = vld [vmem:[%s292 + $0x180] sm:$0xff]
        %v342 = vld [vmem:[%s292 + $0x188] sm:$0xff]
        %v343 = vld [vmem:[%s292 + $0x190] sm:$0xff]
        %v344 = vld [vmem:[%s292 + $0x198] sm:$0xff]
        %vm359 = vcmask 1043456
        %v360 = vrot.slane %v288, 4
        %v361 = vrot.slane %v224, 4
        %v362 = vsel %vm359, %v360, %v361
        %v363 = vrot.slane %v289, 4
        %v364 = vrot.slane %v225, 4
        %v365 = vsel %vm359, %v363, %v364
        %v366 = vrot.slane %v226, 4
        %v367 = vsel %vm359, %v361, %v366
        %v368 = vrot.slane %v227, 4
        %v369 = vsel %vm359, %v364, %v368
        %v370 = vrot.slane %v228, 4
        %v371 = vsel %vm359, %v366, %v370
        %v372 = vrot.slane %v229, 4
        %v373 = vsel %vm359, %v368, %v372
        %v374 = vrot.slane %v230, 4
        %v375 = vsel %vm359, %v370, %v374
        %v376 = vrot.slane %v231, 4
        %v377 = vsel %vm359, %v372, %v376
        %v378 = vrot.slane %v232, 4
        %v379 = vsel %vm359, %v374, %v378
        %v380 = vrot.slane %v233, 4
        %v381 = vsel %vm359, %v376, %v380
        %v382 = vrot.slane %v290, 4
        %v383 = vsel %vm359, %v378, %v382
        %v384 = vrot.slane %v291, 4
        %v385 = vsel %vm359, %v380, %v384
        %vm393 = vcmask 654336
        %v394 = vsel %vm393, %v365, 0
        %v396 = vsel %vm393, %v369, 0
        %v398 = vsel %vm393, %v373, 0
        %v400 = vsel %vm393, %v377, 0
        %v402 = vsel %vm393, %v381, 0
        %v404 = vsel %vm393, %v385, 0
        %v406 = vsel %vm393, %v384, 0
        %408 = vmatprep.subr.mxu0 %v294
        %409 = vmatpush1.msra.mxu0 %v293
        %410 = vmatprep.subr.mxu0 %v296
        %411 = vmatpush1.msra.mxu0 %v295
        %412 = vmatprep.subr.mxu0 %v298
        %413 = vmatpush1.msra.mxu0 %v297
        %414 = vmatprep.subr.mxu0 %v300
        %415 = vmatpush1.msra.mxu0 %v299
        %416 = vmatprep.subr.mxu0 %v302
        %417 = vmatpush1.msra.mxu0 %v301
        %418 = vmatprep.subr.mxu0 %v304
        %419 = vmatpush1.msra.mxu0 %v303
        %420 = vmatprep.subr.mxu0 %v306
        %421 = vmatpush1.msra.mxu0 %v305
        %422 = vmatprep.subr.mxu0 %v308
        %423 = vmatpush1.msra.mxu0 %v307
        %424 = vmatprep.subr.mxu0 %v310
        %425 = vmatpush1.msra.mxu0 %v309
        %426 = vmatprep.subr.mxu0 %v312
        %427 = vmatpush1.msra.mxu0 %v311
        %428 = vmatprep.subr.mxu0 %v314
        %429 = vmatpush1.msra.mxu0 %v313
        %430 = vmatprep.subr.mxu0 %v316
        %431 = vmatpush1.msra.mxu0 %v315
        %432 = vmatprep.subr.mxu0 %v318
        %433 = vmatpush1.msra.mxu0 %v317
        %434 = vmatprep.subr.mxu0 %v320
        %435 = vmatpush1.msra.mxu0 %v319
        %436 = vmatprep.subr.mxu0 %v322
        %437 = vmatpush1.msra.mxu0 %v321
        %438 = vmatprep.subr.mxu0 %v324
        %439 = vmatpush1.msra.mxu0 %v323
        %440 = vmatprep.subr.mxu0 %v326
        %441 = vmatpush1.msra.mxu0 %v325
        %442 = vmatprep.subr.mxu0 %v328
        %443 = vmatpush1.msra.mxu0 %v327
        %444 = vmatprep.subr.mxu0 %v330
        %445 = vmatpush1.msra.mxu0 %v329
        %446 = vmatprep.subr.mxu0 %v332
        %447 = vmatpush1.msra.mxu0 %v331
        %448 = vmatprep.subr.mxu0 %v334
        %449 = vmatpush1.msra.mxu0 %v333
        %450 = vmatprep.subr.mxu0 %v336
        %451 = vmatpush1.msra.mxu0 %v335
        %452 = vmatprep.subr.mxu0 %v338
        %453 = vmatpush1.msra.mxu0 %v337
        %454 = vmatprep.subr.mxu0 %v340
        %455 = vmatpush1.msra.mxu0 %v339
        %456 = vmatprep.subr.mxu0 %v342
        %457 = vmatpush1.msra.mxu0 %v341
        %458 = vmatprep.subr.mxu0 %v344
        %459 = vmatpush1.msra.mxu0 %v343
        %460 = vmatprep.subr.mxu0 0.0
        %461 = vmatpush1.msra.mxu0 0.0
        %462 = vmatprep.subr.mxu0 0.0
        %463 = vmatpush1.msra.mxu0 0.0
        %464 = vmatprep.subr.mxu0 0.0
        %465 = vmatpush1.msra.mxu0 0.0
        %466 = vmatprep.subr.mxu0 0.0
        %467 = vmatpush1.msra.mxu0 0.0
        %468 = vmatprep.subr.mxu0 0.0
        %469 = vmatpush1.msra.mxu0 0.0
        %470 = vmatprep.subr.mxu0 0.0
        %471 = vmatpush1.msra.mxu0 0.0
        %472 = vmatprep.mubr.f32.mxu0 %v394
        %473 = vmatmul.mubr.f32.gmra.mrb[0].mxu0 %v362
        %v474 = vpop.f32.mrb[0].mxu0
        %v475 = vadd.f32 0.0, %v474
        %v476 = vpop.f32.mrb[0].mxu0
        %v477 = vadd.f32 0.0, %v476
        %478 = vmatprep.mubr.f32.mxu0 %v396
        %479 = vmatmul.mubr.f32.gmra.mrb[0].mxu0 %v367
        %v480 = vpop.f32.mrb[0].mxu0
        %v481 = vadd.f32 0.0, %v480
        %v482 = vpop.f32.mrb[0].mxu0
        %v483 = vadd.f32 0.0, %v482
        %484 = vmatprep.mubr.f32.mxu0 %v398
        %485 = vmatmul.mubr.f32.gmra.mrb[0].mxu0 %v371
        %v486 = vpop.f32.mrb[0].mxu0
        %v487 = vadd.f32 0.0, %v486
        %v488 = vpop.f32.mrb[0].mxu0
        %v489 = vadd.f32 0.0, %v488
        %490 = vmatprep.mubr.f32.mxu0 %v400
        %491 = vmatmul.mubr.f32.gmra.mrb[0].mxu0 %v375
        %v492 = vpop.f32.mrb[0].mxu0
        %v493 = vadd.f32 0.0, %v492
        %v494 = vpop.f32.mrb[0].mxu0
        %v495 = vadd.f32 0.0, %v494
        %496 = vmatprep.mubr.f32.mxu0 %v402
        %497 = vmatmul.mubr.f32.gmra.mrb[0].mxu0 %v379
        %v498 = vpop.f32.mrb[0].mxu0
        %v499 = vadd.f32 0.0, %v498
        %v500 = vpop.f32.mrb[0].mxu0
        %v501 = vadd.f32 0.0, %v500
        %502 = vmatprep.mubr.f32.mxu0 %v404
        %503 = vmatmul.mubr.f32.gmra.mrb[0].mxu0 %v383
        %v504 = vpop.f32.mrb[0].mxu0
        %v505 = vadd.f32 0.0, %v504
        %v506 = vpop.f32.mrb[0].mxu0
        %v507 = vadd.f32 0.0, %v506
        %508 = vmatprep.mubr.f32.mxu0 %v406
        %509 = vmatmul.mubr.f32.gmra.mrb[0].mxu0 %v382
        %v510 = vpop.f32.mrb[0].mxu0
        %v511 = vadd.f32 0.0, %v510
        %v512 = vpop.f32.mrb[0].mxu0
        %v513 = vadd.f32 0.0, %v512
        %514 = vdwg.mxu0
        %v516 = vsel %vm393, %v223, 0
        %v518 = vsel %vm393, %v225, 0
        %v520 = vsel %vm393, %v227, 0
        %v522 = vsel %vm393, %v229, 0
        %v524 = vsel %vm393, %v231, 0
        %v526 = vsel %vm393, %v233, 0
        %v529 = vsel %vm393, %v235, 0
        %531 = vmatprep.subr.mxu0 %v237
        %532 = vmatpush1.msra.mxu0 %v236
        %533 = vmatprep.subr.mxu0 %v239
        %534 = vmatpush1.msra.mxu0 %v238
        %535 = vmatprep.subr.mxu0 %v241
        %536 = vmatpush1.msra.mxu0 %v240
        %537 = vmatprep.subr.mxu0 %v243
        %538 = vmatpush1.msra.mxu0 %v242
        %539 = vmatprep.subr.mxu0 %v245
        %540 = vmatpush1.msra.mxu0 %v244
        %541 = vmatprep.subr.mxu0 %v247
        %542 = vmatpush1.msra.mxu0 %v246
        %543 = vmatprep.subr.mxu0 %v249
        %544 = vmatpush1.msra.mxu0 %v248
        %545 = vmatprep.subr.mxu0 %v251
        %546 = vmatpush1.msra.mxu0 %v250
        %547 = vmatprep.subr.mxu0 %v253
        %548 = vmatpush1.msra.mxu0 %v252
        %549 = vmatprep.subr.mxu0 %v255
        %550 = vmatpush1.msra.mxu0 %v254
        %551 = vmatprep.subr.mxu0 %v257
        %552 = vmatpush1.msra.mxu0 %v256
        %553 = vmatprep.subr.mxu0 %v259
        %554 = vmatpush1.msra.mxu0 %v258
        %555 = vmatprep.subr.mxu0 %v261
        %556 = vmatpush1.msra.mxu0 %v260
        %557 = vmatprep.subr.mxu0 %v263
        %558 = vmatpush1.msra.mxu0 %v262
        %559 = vmatprep.subr.mxu0 %v265
        %560 = vmatpush1.msra.mxu0 %v264
        %561 = vmatprep.subr.mxu0 %v267
        %562 = vmatpush1.msra.mxu0 %v266
        %563 = vmatprep.subr.mxu0 %v269
        %564 = vmatpush1.msra.mxu0 %v268
        %565 = vmatprep.subr.mxu0 %v271
        %566 = vmatpush1.msra.mxu0 %v270
        %567 = vmatprep.subr.mxu0 %v273
        %568 = vmatpush1.msra.mxu0 %v272
        %569 = vmatprep.subr.mxu0 %v275
        %570 = vmatpush1.msra.mxu0 %v274
        %571 = vmatprep.subr.mxu0 %v277
        %572 = vmatpush1.msra.mxu0 %v276
        %573 = vmatprep.subr.mxu0 %v279
        %574 = vmatpush1.msra.mxu0 %v278
        %575 = vmatprep.subr.mxu0 %v281
        %576 = vmatpush1.msra.mxu0 %v280
        %577 = vmatprep.subr.mxu0 %v283
        %578 = vmatpush1.msra.mxu0 %v282
        %579 = vmatprep.subr.mxu0 %v285
        %580 = vmatpush1.msra.mxu0 %v284
        %581 = vmatprep.subr.mxu0 %v287
        %582 = vmatpush1.msra.mxu0 %v286
        %583 = vmatprep.subr.mxu0 0.0
        %584 = vmatpush1.msra.mxu0 0.0
        %585 = vmatprep.subr.mxu0 0.0
        %586 = vmatpush1.msra.mxu0 0.0
        %587 = vmatprep.subr.mxu0 0.0
        %588 = vmatpush1.msra.mxu0 0.0
        %589 = vmatprep.subr.mxu0 0.0
        %590 = vmatpush1.msra.mxu0 0.0
        %591 = vmatprep.subr.mxu0 0.0
        %592 = vmatpush1.msra.mxu0 0.0
        %593 = vmatprep.subr.mxu0 0.0
        %594 = vmatpush1.msra.mxu0 0.0
        %595 = vmatprep.mubr.f32.mxu0 %v516
        %596 = vmatmul.mubr.f32.gmra.mrb[0].mxu0 %v222
        %v597 = vpop.f32.mrb[0].mxu0
        %v598 = vadd.f32 %v475, %v597
        %v599 = vpop.f32.mrb[0].mxu0
        %v600 = vadd.f32 %v477, %v599
        %601 = vmatprep.mubr.f32.mxu0 %v518
        %602 = vmatmul.mubr.f32.gmra.mrb[0].mxu0 %v224
        %v603 = vpop.f32.mrb[0].mxu0
        %v604 = vadd.f32 %v481, %v603
        %v605 = vpop.f32.mrb[0].mxu0
        %v606 = vadd.f32 %v483, %v605
        %607 = vmatprep.mubr.f32.mxu0 %v520
        %608 = vmatmul.mubr.f32.gmra.mrb[0].mxu0 %v226
        %v609 = vpop.f32.mrb[0].mxu0
        %v610 = vadd.f32 %v487, %v609
        %v611 = vpop.f32.mrb[0].mxu0
        %v612 = vadd.f32 %v489, %v611
        %613 = vmatprep.mubr.f32.mxu0 %v522
        %614 = vmatmul.mubr.f32.gmra.mrb[0].mxu0 %v228
        %v615 = vpop.f32.mrb[0].mxu0
        %v616 = vadd.f32 %v493, %v615
        %v617 = vpop.f32.mrb[0].mxu0
        %v618 = vadd.f32 %v495, %v617
        %619 = vmatprep.mubr.f32.mxu0 %v524
        %620 = vmatmul.mubr.f32.gmra.mrb[0].mxu0 %v230
        %v621 = vpop.f32.mrb[0].mxu0
        %v622 = vadd.f32 %v499, %v621
        %v623 = vpop.f32.mrb[0].mxu0
        %v624 = vadd.f32 %v501, %v623
        %625 = vmatprep.mubr.f32.mxu0 %v526
        %626 = vmatmul.mubr.f32.gmra.mrb[0].mxu0 %v232
        %v627 = vpop.f32.mrb[0].mxu0
        %v628 = vadd.f32 %v505, %v627
        %v629 = vpop.f32.mrb[0].mxu0
        %v630 = vadd.f32 %v507, %v629
        %631 = vmatprep.mubr.f32.mxu0 %v529
        %632 = vmatmul.mubr.f32.gmra.mrb[0].mxu0 %v234
        %v633 = vpop.f32.mrb[0].mxu0
        %v634 = vadd.f32 %v511, %v633
        %v635 = vpop.f32.mrb[0].mxu0
        %v636 = vadd.f32 %v513, %v635
        %637 = vdwg.mxu0
        %v638 = vld [vmem:[%s221 + $0x10] sm:$0xff]
        %v639 = vld [vmem:[%s221 + $0x18] sm:$0xff]
        %v640 = vld [vmem:[%s221 + $0x20] sm:$0xff]
        %v641 = vld [vmem:[%s221 + $0x28] sm:$0xff]
        %v642 = vld [vmem:[%s221 + $0x30] sm:$0xff]
        %v643 = vld [vmem:[%s221 + $0x38] sm:$0xff]
        %v644 = vld [vmem:[%s221 + $0x40] sm:$0xff]
        %v645 = vld [vmem:[%s221 + $0x48] sm:$0xff]
        %v646 = vld [vmem:[%s221 + $0x50] sm:$0xff]
        %v647 = vld [vmem:[%s221 + $0x58] sm:$0xff]
        %v648 = vld [vmem:[%s221 + $0x60] sm:$0xff]
        %v649 = vld [vmem:[%s221 + $0x68] sm:$0xff]
        %v650 = vld [vmem:[%s221 + $0x70] sm:$0xf]
        %v651 = vld [vmem:[%s221 + $0x78] sm:$0xf]
        %s652 = scalar_lea.vmem %s1, 832
        %v653 = vld [vmem:[%s652] sm:$0xff]
        %v654 = vld [vmem:[%s652 + $0x8] sm:$0xff]
        %v655 = vld [vmem:[%s652 + $0x10] sm:$0xff]
        %v656 = vld [vmem:[%s652 + $0x18] sm:$0xff]
        %v657 = vld [vmem:[%s652 + $0x20] sm:$0xff]
        %v658 = vld [vmem:[%s652 + $0x28] sm:$0xff]
        %v659 = vld [vmem:[%s652 + $0x30] sm:$0xff]
        %v660 = vld [vmem:[%s652 + $0x38] sm:$0xff]
        %v661 = vld [vmem:[%s652 + $0x40] sm:$0xff]
        %v662 = vld [vmem:[%s652 + $0x48] sm:$0xff]
        %v663 = vld [vmem:[%s652 + $0x50] sm:$0xff]
        %v664 = vld [vmem:[%s652 + $0x58] sm:$0xff]
        %v665 = vld [vmem:[%s652 + $0x60] sm:$0xff]
        %v666 = vld [vmem:[%s652 + $0x68] sm:$0xff]
        %v667 = vld [vmem:[%s652 + $0x70] sm:$0xff]
        %v668 = vld [vmem:[%s652 + $0x78] sm:$0xff]
        %v669 = vld [vmem:[%s652 + $0x80] sm:$0xff]
        %v670 = vld [vmem:[%s652 + $0x88] sm:$0xff]
        %v671 = vld [vmem:[%s652 + $0x90] sm:$0xff]
        %v672 = vld [vmem:[%s652 + $0x98] sm:$0xff]
        %v673 = vld [vmem:[%s652 + $0xa0] sm:$0xff]
        %v674 = vld [vmem:[%s652 + $0xa8] sm:$0xff]
        %v675 = vld [vmem:[%s652 + $0xb0] sm:$0xff]
        %v676 = vld [vmem:[%s652 + $0xb8] sm:$0xff]
        %v677 = vld [vmem:[%s652 + $0xc0] sm:$0xff]
        %v678 = vld [vmem:[%s652 + $0xc8] sm:$0xff]
        %v679 = vld [vmem:[%s652 + $0xd0] sm:$0xff]
        %v680 = vld [vmem:[%s652 + $0xd8] sm:$0xff]
        %v681 = vld [vmem:[%s652 + $0xe0] sm:$0xff]
        %v682 = vld [vmem:[%s652 + $0xe8] sm:$0xff]
        %v683 = vld [vmem:[%s652 + $0xf0] sm:$0xff]
        %v684 = vld [vmem:[%s652 + $0xf8] sm:$0xff]
        %v685 = vld [vmem:[%s652 + $0x100] sm:$0xff]
        %v686 = vld [vmem:[%s652 + $0x108] sm:$0xff]
        %v687 = vld [vmem:[%s652 + $0x110] sm:$0xff]
        %v688 = vld [vmem:[%s652 + $0x118] sm:$0xff]
        %v689 = vld [vmem:[%s652 + $0x120] sm:$0xff]
        %v690 = vld [vmem:[%s652 + $0x128] sm:$0xff]
        %v691 = vld [vmem:[%s652 + $0x130] sm:$0xff]
        %v692 = vld [vmem:[%s652 + $0x138] sm:$0xff]
        %v693 = vld [vmem:[%s652 + $0x140] sm:$0xff]
        %v694 = vld [vmem:[%s652 + $0x148] sm:$0xff]
        %v695 = vld [vmem:[%s652 + $0x150] sm:$0xff]
        %v696 = vld [vmem:[%s652 + $0x158] sm:$0xff]
        %v697 = vld [vmem:[%s652 + $0x160] sm:$0xff]
        %v698 = vld [vmem:[%s652 + $0x168] sm:$0xff]
        %v699 = vld [vmem:[%s652 + $0x170] sm:$0xff]
        %v700 = vld [vmem:[%s652 + $0x178] sm:$0xff]
        %v701 = vld [vmem:[%s652 + $0x180] sm:$0xff]
        %v702 = vld [vmem:[%s652 + $0x188] sm:$0xff]
        %v703 = vld [vmem:[%s652 + $0x190] sm:$0xff]
        %v704 = vld [vmem:[%s652 + $0x198] sm:$0xff]
        %v706 = vsel %vm393, %v639, 0
        %v709 = vsel %vm393, %v641, 0
        %v712 = vsel %vm393, %v643, 0
        %v715 = vsel %vm393, %v645, 0
        %v718 = vsel %vm393, %v647, 0
        %v721 = vsel %vm393, %v649, 0
        %v724 = vsel %vm393, %v651, 0
        %726 = vmatprep.subr.mxu0 %v654
        %727 = vmatpush1.msra.mxu0 %v653
        %728 = vmatprep.subr.mxu0 %v656
        %729 = vmatpush1.msra.mxu0 %v655
        %730 = vmatprep.subr.mxu0 %v658
        %731 = vmatpush1.msra.mxu0 %v657
        %732 = vmatprep.subr.mxu0 %v660
        %733 = vmatpush1.msra.mxu0 %v659
        %734 = vmatprep.subr.mxu0 %v662
        %735 = vmatpush1.msra.mxu0 %v661
        %736 = vmatprep.subr.mxu0 %v664
        %737 = vmatpush1.msra.mxu0 %v663
        %738 = vmatprep.subr.mxu0 %v666
        %739 = vmatpush1.msra.mxu0 %v665
        %740 = vmatprep.subr.mxu0 %v668
        %741 = vmatpush1.msra.mxu0 %v667
        %742 = vmatprep.subr.mxu0 %v670
        %743 = vmatpush1.msra.mxu0 %v669
        %744 = vmatprep.subr.mxu0 %v672
        %745 = vmatpush1.msra.mxu0 %v671
        %746 = vmatprep.subr.mxu0 %v674
        %747 = vmatpush1.msra.mxu0 %v673
        %748 = vmatprep.subr.mxu0 %v676
        %749 = vmatpush1.msra.mxu0 %v675
        %750 = vmatprep.subr.mxu0 %v678
        %751 = vmatpush1.msra.mxu0 %v677
        %752 = vmatprep.subr.mxu0 %v680
        %753 = vmatpush1.msra.mxu0 %v679
        %754 = vmatprep.subr.mxu0 %v682
        %755 = vmatpush1.msra.mxu0 %v681
        %756 = vmatprep.subr.mxu0 %v684
        %757 = vmatpush1.msra.mxu0 %v683
        %758 = vmatprep.subr.mxu0 %v686
        %759 = vmatpush1.msra.mxu0 %v685
        %760 = vmatprep.subr.mxu0 %v688
        %761 = vmatpush1.msra.mxu0 %v687
        %762 = vmatprep.subr.mxu0 %v690
        %763 = vmatpush1.msra.mxu0 %v689
        %764 = vmatprep.subr.mxu0 %v692
        %765 = vmatpush1.msra.mxu0 %v691
        %766 = vmatprep.subr.mxu0 %v694
        %767 = vmatpush1.msra.mxu0 %v693
        %768 = vmatprep.subr.mxu0 %v696
        %769 = vmatpush1.msra.mxu0 %v695
        %770 = vmatprep.subr.mxu0 %v698
        %771 = vmatpush1.msra.mxu0 %v697
        %772 = vmatprep.subr.mxu0 %v700
        %773 = vmatpush1.msra.mxu0 %v699
        %774 = vmatprep.subr.mxu0 %v702
        %775 = vmatpush1.msra.mxu0 %v701
        %776 = vmatprep.subr.mxu0 %v704
        %777 = vmatpush1.msra.mxu0 %v703
        %778 = vmatprep.subr.mxu0 0.0
        %779 = vmatpush1.msra.mxu0 0.0
        %780 = vmatprep.subr.mxu0 0.0
        %781 = vmatpush1.msra.mxu0 0.0
        %782 = vmatprep.subr.mxu0 0.0
        %783 = vmatpush1.msra.mxu0 0.0
        %784 = vmatprep.subr.mxu0 0.0
        %785 = vmatpush1.msra.mxu0 0.0
        %786 = vmatprep.subr.mxu0 0.0
        %787 = vmatpush1.msra.mxu0 0.0
        %788 = vmatprep.subr.mxu0 0.0
        %789 = vmatpush1.msra.mxu0 0.0
        %790 = vmatprep.mubr.f32.mxu0 %v706
        %791 = vmatmul.mubr.f32.gmra.mrb[0].mxu0 %v638
        %v792 = vpop.f32.mrb[0].mxu0
        %v793 = vadd.f32 0.0, %v792
        %v794 = vpop.f32.mrb[0].mxu0
        %v795 = vadd.f32 0.0, %v794
        %796 = vmatprep.mubr.f32.mxu0 %v709
        %797 = vmatmul.mubr.f32.gmra.mrb[0].mxu0 %v640
        %v798 = vpop.f32.mrb[0].mxu0
        %v799 = vadd.f32 0.0, %v798
        %v800 = vpop.f32.mrb[0].mxu0
        %v801 = vadd.f32 0.0, %v800
        %802 = vmatprep.mubr.f32.mxu0 %v712
        %803 = vmatmul.mubr.f32.gmra.mrb[0].mxu0 %v642
        %v804 = vpop.f32.mrb[0].mxu0
        %v805 = vadd.f32 0.0, %v804
        %v806 = vpop.f32.mrb[0].mxu0
        %v807 = vadd.f32 0.0, %v806
        %808 = vmatprep.mubr.f32.mxu0 %v715
        %809 = vmatmul.mubr.f32.gmra.mrb[0].mxu0 %v644
        %v810 = vpop.f32.mrb[0].mxu0
        %v811 = vadd.f32 0.0, %v810
        %v812 = vpop.f32.mrb[0].mxu0
        %v813 = vadd.f32 0.0, %v812
        %814 = vmatprep.mubr.f32.mxu0 %v718
        %815 = vmatmul.mubr.f32.gmra.mrb[0].mxu0 %v646
        %v816 = vpop.f32.mrb[0].mxu0
        %v817 = vadd.f32 0.0, %v816
        %v818 = vpop.f32.mrb[0].mxu0
        %v819 = vadd.f32 0.0, %v818
        %820 = vmatprep.mubr.f32.mxu0 %v721
        %821 = vmatmul.mubr.f32.gmra.mrb[0].mxu0 %v648
        %v822 = vpop.f32.mrb[0].mxu0
        %v823 = vadd.f32 0.0, %v822
        %v824 = vpop.f32.mrb[0].mxu0
        %v825 = vadd.f32 0.0, %v824
        %826 = vmatprep.mubr.f32.mxu0 %v724
        %827 = vmatmul.mubr.f32.gmra.mrb[0].mxu0 %v650
        %v828 = vpop.f32.mrb[0].mxu0
        %v829 = vadd.f32 0.0, %v828
        %v830 = vpop.f32.mrb[0].mxu0
        %v831 = vadd.f32 0.0, %v830
        %832 = vdwg.mxu0
        %v833 = vadd.f32 %v598, %v793
        %v834 = vadd.f32 %v600, %v795
        %v835 = vadd.f32 %v604, %v799
        %v836 = vadd.f32 %v606, %v801
        %v837 = vadd.f32 %v610, %v805
        %v838 = vadd.f32 %v612, %v807
        %v839 = vadd.f32 %v616, %v811
        %v840 = vadd.f32 %v618, %v813
        %v841 = vadd.f32 %v622, %v817
        %v842 = vadd.f32 %v624, %v819
        %v843 = vadd.f32 %v628, %v823
        %v844 = vadd.f32 %v630, %v825
        %v845 = vadd.f32 %v634, %v829
        %v846 = vadd.f32 %v636, %v831
        %v847 = vld [vmem:[%s221 + $0x10] sm:$0xf0]
        %v848 = vld [vmem:[%s221 + $0x18] sm:$0xf0]
        %v849 = vld [vmem:[%s221 + $0x70] sm:$0xff]
        %v850 = vld [vmem:[%s221 + $0x78] sm:$0xff]
        %s851 = scalar_lea.vmem %s1, 1248
        %v852 = vld [vmem:[%s851] sm:$0xff]
        %v853 = vld [vmem:[%s851 + $0x8] sm:$0xff]
        %v854 = vld [vmem:[%s851 + $0x10] sm:$0xff]
        %v855 = vld [vmem:[%s851 + $0x18] sm:$0xff]
        %v856 = vld [vmem:[%s851 + $0x20] sm:$0xff]
        %v857 = vld [vmem:[%s851 + $0x28] sm:$0xff]
        %v858 = vld [vmem:[%s851 + $0x30] sm:$0xff]
        %v859 = vld [vmem:[%s851 + $0x38] sm:$0xff]
        %v860 = vld [vmem:[%s851 + $0x40] sm:$0xff]
        %v861 = vld [vmem:[%s851 + $0x48] sm:$0xff]
        %v862 = vld [vmem:[%s851 + $0x50] sm:$0xff]
        %v863 = vld [vmem:[%s851 + $0x58] sm:$0xff]
        %v864 = vld [vmem:[%s851 + $0x60] sm:$0xff]
        %v865 = vld [vmem:[%s851 + $0x68] sm:$0xff]
        %v866 = vld [vmem:[%s851 + $0x70] sm:$0xff]
        %v867 = vld [vmem:[%s851 + $0x78] sm:$0xff]
        %v868 = vld [vmem:[%s851 + $0x80] sm:$0xff]
        %v869 = vld [vmem:[%s851 + $0x88] sm:$0xff]
        %v870 = vld [vmem:[%s851 + $0x90] sm:$0xff]
        %v871 = vld [vmem:[%s851 + $0x98] sm:$0xff]
        %v872 = vld [vmem:[%s851 + $0xa0] sm:$0xff]
        %v873 = vld [vmem:[%s851 + $0xa8] sm:$0xff]
        %v874 = vld [vmem:[%s851 + $0xb0] sm:$0xff]
        %v875 = vld [vmem:[%s851 + $0xb8] sm:$0xff]
        %v876 = vld [vmem:[%s851 + $0xc0] sm:$0xff]
        %v877 = vld [vmem:[%s851 + $0xc8] sm:$0xff]
        %v878 = vld [vmem:[%s851 + $0xd0] sm:$0xff]
        %v879 = vld [vmem:[%s851 + $0xd8] sm:$0xff]
        %v880 = vld [vmem:[%s851 + $0xe0] sm:$0xff]
        %v881 = vld [vmem:[%s851 + $0xe8] sm:$0xff]
        %v882 = vld [vmem:[%s851 + $0xf0] sm:$0xff]
        %v883 = vld [vmem:[%s851 + $0xf8] sm:$0xff]
        %v884 = vld [vmem:[%s851 + $0x100] sm:$0xff]
        %v885 = vld [vmem:[%s851 + $0x108] sm:$0xff]
        %v886 = vld [vmem:[%s851 + $0x110] sm:$0xff]
        %v887 = vld [vmem:[%s851 + $0x118] sm:$0xff]
        %v888 = vld [vmem:[%s851 + $0x120] sm:$0xff]
        %v889 = vld [vmem:[%s851 + $0x128] sm:$0xff]
        %v890 = vld [vmem:[%s851 + $0x130] sm:$0xff]
        %v891 = vld [vmem:[%s851 + $0x138] sm:$0xff]
        %v892 = vld [vmem:[%s851 + $0x140] sm:$0xff]
        %v893 = vld [vmem:[%s851 + $0x148] sm:$0xff]
        %v894 = vld [vmem:[%s851 + $0x150] sm:$0xff]
        %v895 = vld [vmem:[%s851 + $0x158] sm:$0xff]
        %v896 = vld [vmem:[%s851 + $0x160] sm:$0xff]
        %v897 = vld [vmem:[%s851 + $0x168] sm:$0xff]
        %v898 = vld [vmem:[%s851 + $0x170] sm:$0xff]
        %v899 = vld [vmem:[%s851 + $0x178] sm:$0xff]
        %v900 = vld [vmem:[%s851 + $0x180] sm:$0xff]
        %v901 = vld [vmem:[%s851 + $0x188] sm:$0xff]
        %v902 = vld [vmem:[%s851 + $0x190] sm:$0xff]
        %v903 = vld [vmem:[%s851 + $0x198] sm:$0xff]
        %v913 = vrot.slane %v847, 4
        %v914 = vrot.slane %v640, 4
        %v915 = vsel %vm359, %v913, %v914
        %v916 = vrot.slane %v848, 4
        %v917 = vrot.slane %v641, 4
        %v918 = vsel %vm359, %v916, %v917
        %v919 = vrot.slane %v642, 4
        %v920 = vsel %vm359, %v914, %v919
        %v921 = vrot.slane %v643, 4
        %v922 = vsel %vm359, %v917, %v921
        %v923 = vrot.slane %v644, 4
        %v924 = vsel %vm359, %v919, %v923
        %v925 = vrot.slane %v645, 4
        %v926 = vsel %vm359, %v921, %v925
        %v927 = vrot.slane %v646, 4
        %v928 = vsel %vm359, %v923, %v927
        %v929 = vrot.slane %v647, 4
        %v930 = vsel %vm359, %v925, %v929
        %v931 = vrot.slane %v648, 4
        %v932 = vsel %vm359, %v927, %v931
        %v933 = vrot.slane %v649, 4
        %v934 = vsel %vm359, %v929, %v933
        %v935 = vrot.slane %v849, 4
        %v936 = vsel %vm359, %v931, %v935
        %v937 = vrot.slane %v850, 4
        %v938 = vsel %vm359, %v933, %v937
        %v946 = vsel %vm393, %v918, 0
        %v948 = vsel %vm393, %v922, 0
        %v950 = vsel %vm393, %v926, 0
        %v952 = vsel %vm393, %v930, 0
        %v954 = vsel %vm393, %v934, 0
        %v956 = vsel %vm393, %v938, 0
        %v958 = vsel %vm393, %v937, 0
        %960 = vmatprep.subr.mxu0 %v853
        %961 = vmatpush1.msra.mxu0 %v852
        %962 = vmatprep.subr.mxu0 %v855
        %963 = vmatpush1.msra.mxu0 %v854
        %964 = vmatprep.subr.mxu0 %v857
        %965 = vmatpush1.msra.mxu0 %v856
        %966 = vmatprep.subr.mxu0 %v859
        %967 = vmatpush1.msra.mxu0 %v858
        %968 = vmatprep.subr.mxu0 %v861
        %969 = vmatpush1.msra.mxu0 %v860
        %970 = vmatprep.subr.mxu0 %v863
        %971 = vmatpush1.msra.mxu0 %v862
        %972 = vmatprep.subr.mxu0 %v865
        %973 = vmatpush1.msra.mxu0 %v864
        %974 = vmatprep.subr.mxu0 %v867
        %975 = vmatpush1.msra.mxu0 %v866
        %976 = vmatprep.subr.mxu0 %v869
        %977 = vmatpush1.msra.mxu0 %v868
        %978 = vmatprep.subr.mxu0 %v871
        %979 = vmatpush1.msra.mxu0 %v870
        %980 = vmatprep.subr.mxu0 %v873
        %981 = vmatpush1.msra.mxu0 %v872
        %982 = vmatprep.subr.mxu0 %v875
        %983 = vmatpush1.msra.mxu0 %v874
        %984 = vmatprep.subr.mxu0 %v877
        %985 = vmatpush1.msra.mxu0 %v876
        %986 = vmatprep.subr.mxu0 %v879
        %987 = vmatpush1.msra.mxu0 %v878
        %988 = vmatprep.subr.mxu0 %v881
        %989 = vmatpush1.msra.mxu0 %v880
        %990 = vmatprep.subr.mxu0 %v883
        %991 = vmatpush1.msra.mxu0 %v882
        %992 = vmatprep.subr.mxu0 %v885
        %993 = vmatpush1.msra.mxu0 %v884
        %994 = vmatprep.subr.mxu0 %v887
        %995 = vmatpush1.msra.mxu0 %v886
        %996 = vmatprep.subr.mxu0 %v889
        %997 = vmatpush1.msra.mxu0 %v888
        %998 = vmatprep.subr.mxu0 %v891
        %999 = vmatpush1.msra.mxu0 %v890
        %1000 = vmatprep.subr.mxu0 %v893
        %1001 = vmatpush1.msra.mxu0 %v892
        %1002 = vmatprep.subr.mxu0 %v895
        %1003 = vmatpush1.msra.mxu0 %v894
        %1004 = vmatprep.subr.mxu0 %v897
        %1005 = vmatpush1.msra.mxu0 %v896
        %1006 = vmatprep.subr.mxu0 %v899
        %1007 = vmatpush1.msra.mxu0 %v898
        %1008 = vmatprep.subr.mxu0 %v901
        %1009 = vmatpush1.msra.mxu0 %v900
        %1010 = vmatprep.subr.mxu0 %v903
        %1011 = vmatpush1.msra.mxu0 %v902
        %1012 = vmatprep.subr.mxu0 0.0
        %1013 = vmatpush1.msra.mxu0 0.0
        %1014 = vmatprep.subr.mxu0 0.0
        %1015 = vmatpush1.msra.mxu0 0.0
        %1016 = vmatprep.subr.mxu0 0.0
        %1017 = vmatpush1.msra.mxu0 0.0
        %1018 = vmatprep.subr.mxu0 0.0
        %1019 = vmatpush1.msra.mxu0 0.0
        %1020 = vmatprep.subr.mxu0 0.0
        %1021 = vmatpush1.msra.mxu0 0.0
        %1022 = vmatprep.subr.mxu0 0.0
        %1023 = vmatpush1.msra.mxu0 0.0
        %1024 = vmatprep.mubr.f32.mxu0 %v946
        %1025 = vmatmul.mubr.f32.gmra.mrb[0].mxu0 %v915
        %v1026 = vpop.f32.mrb[0].mxu0
        %v1027 = vadd.f32 0.0, %v1026
        %v1028 = vpop.f32.mrb[0].mxu0
        %v1029 = vadd.f32 0.0, %v1028
        %1030 = vmatprep.mubr.f32.mxu0 %v948
        %1031 = vmatmul.mubr.f32.gmra.mrb[0].mxu0 %v920
        %v1032 = vpop.f32.mrb[0].mxu0
        %v1033 = vadd.f32 0.0, %v1032
        %v1034 = vpop.f32.mrb[0].mxu0
        %v1035 = vadd.f32 0.0, %v1034
        %1036 = vmatprep.mubr.f32.mxu0 %v950
        %1037 = vmatmul.mubr.f32.gmra.mrb[0].mxu0 %v924
        %v1038 = vpop.f32.mrb[0].mxu0
        %v1039 = vadd.f32 0.0, %v1038
        %v1040 = vpop.f32.mrb[0].mxu0
        %v1041 = vadd.f32 0.0, %v1040
        %1042 = vmatprep.mubr.f32.mxu0 %v952
        %1043 = vmatmul.mubr.f32.gmra.mrb[0].mxu0 %v928
        %v1044 = vpop.f32.mrb[0].mxu0
        %v1045 = vadd.f32 0.0, %v1044
        %v1046 = vpop.f32.mrb[0].mxu0
        %v1047 = vadd.f32 0.0, %v1046
        %1048 = vmatprep.mubr.f32.mxu0 %v954
        %1049 = vmatmul.mubr.f32.gmra.mrb[0].mxu0 %v932
        %v1050 = vpop.f32.mrb[0].mxu0
        %v1051 = vadd.f32 0.0, %v1050
        %v1052 = vpop.f32.mrb[0].mxu0
        %v1053 = vadd.f32 0.0, %v1052
        %1054 = vmatprep.mubr.f32.mxu0 %v956
        %1055 = vmatmul.mubr.f32.gmra.mrb[0].mxu0 %v936
        %v1056 = vpop.f32.mrb[0].mxu0
        %v1057 = vadd.f32 0.0, %v1056
        %v1058 = vpop.f32.mrb[0].mxu0
        %v1059 = vadd.f32 0.0, %v1058
        %1060 = vmatprep.mubr.f32.mxu0 %v958
        %1061 = vmatmul.mubr.f32.gmra.mrb[0].mxu0 %v935
        %v1062 = vpop.f32.mrb[0].mxu0
        %v1063 = vadd.f32 0.0, %v1062
        %v1064 = vpop.f32.mrb[0].mxu0
        %v1065 = vadd.f32 0.0, %v1064
        %1066 = vdwg.mxu0
        %v1067 = vadd.f32 %v833, %v1027
        %v1068 = vadd.f32 %v834, %v1029
        %v1069 = vadd.f32 %v835, %v1033
        %v1070 = vadd.f32 %v836, %v1035
        %v1071 = vadd.f32 %v837, %v1039
        %v1072 = vadd.f32 %v838, %v1041
        %v1073 = vadd.f32 %v839, %v1045
        %v1074 = vadd.f32 %v840, %v1047
        %v1075 = vadd.f32 %v841, %v1051
        %v1076 = vadd.f32 %v842, %v1053
        %v1077 = vadd.f32 %v843, %v1057
        %v1078 = vadd.f32 %v844, %v1059
        %v1079 = vadd.f32 %v845, %v1063
        %v1080 = vadd.f32 %v846, %v1065
        %v1081 = vld [vmem:[%s221 + $0x20] sm:$0xff]
        %v1082 = vld [vmem:[%s221 + $0x28] sm:$0xff]
        %v1083 = vld [vmem:[%s221 + $0x30] sm:$0xff]
        %v1084 = vld [vmem:[%s221 + $0x38] sm:$0xff]
        %v1085 = vld [vmem:[%s221 + $0x40] sm:$0xff]
        %v1086 = vld [vmem:[%s221 + $0x48] sm:$0xff]
        %v1087 = vld [vmem:[%s221 + $0x50] sm:$0xff]
        %v1088 = vld [vmem:[%s221 + $0x58] sm:$0xff]
        %v1089 = vld [vmem:[%s221 + $0x60] sm:$0xff]
        %v1090 = vld [vmem:[%s221 + $0x68] sm:$0xff]
        %v1091 = vld [vmem:[%s221 + $0x70] sm:$0xff]
        %v1092 = vld [vmem:[%s221 + $0x78] sm:$0xff]
        %v1093 = vld [vmem:[%s221 + $0x80] sm:$0xf]
        %v1094 = vld [vmem:[%s221 + $0x88] sm:$0xf]
        %s1095 = scalar_lea.vmem %s1, 1664
        %v1096 = vld [vmem:[%s1095] sm:$0xff]
        %v1097 = vld [vmem:[%s1095 + $0x8] sm:$0xff]
        %v1098 = vld [vmem:[%s1095 + $0x10] sm:$0xff]
        %v1099 = vld [vmem:[%s1095 + $0x18] sm:$0xff]
        %v1100 = vld [vmem:[%s1095 + $0x20] sm:$0xff]
        %v1101 = vld [vmem:[%s1095 + $0x28] sm:$0xff]
        %v1102 = vld [vmem:[%s1095 + $0x30] sm:$0xff]
        %v1103 = vld [vmem:[%s1095 + $0x38] sm:$0xff]
        %v1104 = vld [vmem:[%s1095 + $0x40] sm:$0xff]
        %v1105 = vld [vmem:[%s1095 + $0x48] sm:$0xff]
        %v1106 = vld [vmem:[%s1095 + $0x50] sm:$0xff]
        %v1107 = vld [vmem:[%s1095 + $0x58] sm:$0xff]
        %v1108 = vld [vmem:[%s1095 + $0x60] sm:$0xff]
        %v1109 = vld [vmem:[%s1095 + $0x68] sm:$0xff]
        %v1110 = vld [vmem:[%s1095 + $0x70] sm:$0xff]
        %v1111 = vld [vmem:[%s1095 + $0x78] sm:$0xff]
        %v1112 = vld [vmem:[%s1095 + $0x80] sm:$0xff]
        %v1113 = vld [vmem:[%s1095 + $0x88] sm:$0xff]
        %v1114 = vld [vmem:[%s1095 + $0x90] sm:$0xff]
        %v1115 = vld [vmem:[%s1095 + $0x98] sm:$0xff]
        %v1116 = vld [vmem:[%s1095 + $0xa0] sm:$0xff]
        %v1117 = vld [vmem:[%s1095 + $0xa8] sm:$0xff]
        %v1118 = vld [vmem:[%s1095 + $0xb0] sm:$0xff]
        %v1119 = vld [vmem:[%s1095 + $0xb8] sm:$0xff]
        %v1120 = vld [vmem:[%s1095 + $0xc0] sm:$0xff]
        %v1121 = vld [vmem:[%s1095 + $0xc8] sm:$0xff]
        %v1122 = vld [vmem:[%s1095 + $0xd0] sm:$0xff]
        %v1123 = vld [vmem:[%s1095 + $0xd8] sm:$0xff]
        %v1124 = vld [vmem:[%s1095 + $0xe0] sm:$0xff]
        %v1125 = vld [vmem:[%s1095 + $0xe8] sm:$0xff]
        %v1126 = vld [vmem:[%s1095 + $0xf0] sm:$0xff]
        %v1127 = vld [vmem:[%s1095 + $0xf8] sm:$0xff]
        %v1128 = vld [vmem:[%s1095 + $0x100] sm:$0xff]
        %v1129 = vld [vmem:[%s1095 + $0x108] sm:$0xff]
        %v1130 = vld [vmem:[%s1095 + $0x110] sm:$0xff]
        %v1131 = vld [vmem:[%s1095 + $0x118] sm:$0xff]
        %v1132 = vld [vmem:[%s1095 + $0x120] sm:$0xff]
        %v1133 = vld [vmem:[%s1095 + $0x128] sm:$0xff]
        %v1134 = vld [vmem:[%s1095 + $0x130] sm:$0xff]
        %v1135 = vld [vmem:[%s1095 + $0x138] sm:$0xff]
        %v1136 = vld [vmem:[%s1095 + $0x140] sm:$0xff]
        %v1137 = vld [vmem:[%s1095 + $0x148] sm:$0xff]
        %v1138 = vld [vmem:[%s1095 + $0x150] sm:$0xff]
        %v1139 = vld [vmem:[%s1095 + $0x158] sm:$0xff]
        %v1140 = vld [vmem:[%s1095 + $0x160] sm:$0xff]
        %v1141 = vld [vmem:[%s1095 + $0x168] sm:$0xff]
        %v1142 = vld [vmem:[%s1095 + $0x170] sm:$0xff]
        %v1143 = vld [vmem:[%s1095 + $0x178] sm:$0xff]
        %v1144 = vld [vmem:[%s1095 + $0x180] sm:$0xff]
        %v1145 = vld [vmem:[%s1095 + $0x188] sm:$0xff]
        %v1146 = vld [vmem:[%s1095 + $0x190] sm:$0xff]
        %v1147 = vld [vmem:[%s1095 + $0x198] sm:$0xff]
        %v1149 = vsel %vm393, %v1082, 0
        %v1152 = vsel %vm393, %v1084, 0
        %v1155 = vsel %vm393, %v1086, 0
        %v1158 = vsel %vm393, %v1088, 0
        %v1161 = vsel %vm393, %v1090, 0
        %v1164 = vsel %vm393, %v1092, 0
        %v1167 = vsel %vm393, %v1094, 0
        %1169 = vmatprep.subr.mxu0 %v1097
        %1170 = vmatpush1.msra.mxu0 %v1096
        %1171 = vmatprep.subr.mxu0 %v1099
        %1172 = vmatpush1.msra.mxu0 %v1098
        %1173 = vmatprep.subr.mxu0 %v1101
        %1174 = vmatpush1.msra.mxu0 %v1100
        %1175 = vmatprep.subr.mxu0 %v1103
        %1176 = vmatpush1.msra.mxu0 %v1102
        %1177 = vmatprep.subr.mxu0 %v1105
        %1178 = vmatpush1.msra.mxu0 %v1104
        %1179 = vmatprep.subr.mxu0 %v1107
        %1180 = vmatpush1.msra.mxu0 %v1106
        %1181 = vmatprep.subr.mxu0 %v1109
        %1182 = vmatpush1.msra.mxu0 %v1108
        %1183 = vmatprep.subr.mxu0 %v1111
        %1184 = vmatpush1.msra.mxu0 %v1110
        %1185 = vmatprep.subr.mxu0 %v1113
        %1186 = vmatpush1.msra.mxu0 %v1112
        %1187 = vmatprep.subr.mxu0 %v1115
        %1188 = vmatpush1.msra.mxu0 %v1114
        %1189 = vmatprep.subr.mxu0 %v1117
        %1190 = vmatpush1.msra.mxu0 %v1116
        %1191 = vmatprep.subr.mxu0 %v1119
        %1192 = vmatpush1.msra.mxu0 %v1118
        %1193 = vmatprep.subr.mxu0 %v1121
        %1194 = vmatpush1.msra.mxu0 %v1120
        %1195 = vmatprep.subr.mxu0 %v1123
        %1196 = vmatpush1.msra.mxu0 %v1122
        %1197 = vmatprep.subr.mxu0 %v1125
        %1198 = vmatpush1.msra.mxu0 %v1124
        %1199 = vmatprep.subr.mxu0 %v1127
        %1200 = vmatpush1.msra.mxu0 %v1126
        %1201 = vmatprep.subr.mxu0 %v1129
        %1202 = vmatpush1.msra.mxu0 %v1128
        %1203 = vmatprep.subr.mxu0 %v1131
        %1204 = vmatpush1.msra.mxu0 %v1130
        %1205 = vmatprep.subr.mxu0 %v1133
        %1206 = vmatpush1.msra.mxu0 %v1132
        %1207 = vmatprep.subr.mxu0 %v1135
        %1208 = vmatpush1.msra.mxu0 %v1134
        %1209 = vmatprep.subr.mxu0 %v1137
        %1210 = vmatpush1.msra.mxu0 %v1136
        %1211 = vmatprep.subr.mxu0 %v1139
        %1212 = vmatpush1.msra.mxu0 %v1138
        %1213 = vmatprep.subr.mxu0 %v1141
        %1214 = vmatpush1.msra.mxu0 %v1140
        %1215 = vmatprep.subr.mxu0 %v1143
        %1216 = vmatpush1.msra.mxu0 %v1142
        %1217 = vmatprep.subr.mxu0 %v1145
        %1218 = vmatpush1.msra.mxu0 %v1144
        %1219 = vmatprep.subr.mxu0 %v1147
        %1220 = vmatpush1.msra.mxu0 %v1146
        %1221 = vmatprep.subr.mxu0 0.0
        %1222 = vmatpush1.msra.mxu0 0.0
        %1223 = vmatprep.subr.mxu0 0.0
        %1224 = vmatpush1.msra.mxu0 0.0
        %1225 = vmatprep.subr.mxu0 0.0
        %1226 = vmatpush1.msra.mxu0 0.0
        %1227 = vmatprep.subr.mxu0 0.0
        %1228 = vmatpush1.msra.mxu0 0.0
        %1229 = vmatprep.subr.mxu0 0.0
        %1230 = vmatpush1.msra.mxu0 0.0
        %1231 = vmatprep.subr.mxu0 0.0
        %1232 = vmatpush1.msra.mxu0 0.0
        %1233 = vmatprep.mubr.f32.mxu0 %v1149
        %1234 = vmatmul.mubr.f32.gmra.mrb[0].mxu0 %v1081
        %v1235 = vpop.f32.mrb[0].mxu0
        %v1236 = vadd.f32 0.0, %v1235
        %v1237 = vpop.f32.mrb[0].mxu0
        %v1238 = vadd.f32 0.0, %v1237
        %1239 = vmatprep.mubr.f32.mxu0 %v1152
        %1240 = vmatmul.mubr.f32.gmra.mrb[0].mxu0 %v1083
        %v1241 = vpop.f32.mrb[0].mxu0
        %v1242 = vadd.f32 0.0, %v1241
        %v1243 = vpop.f32.mrb[0].mxu0
        %v1244 = vadd.f32 0.0, %v1243
        %1245 = vmatprep.mubr.f32.mxu0 %v1155
        %1246 = vmatmul.mubr.f32.gmra.mrb[0].mxu0 %v1085
        %v1247 = vpop.f32.mrb[0].mxu0
        %v1248 = vadd.f32 0.0, %v1247
        %v1249 = vpop.f32.mrb[0].mxu0
        %v1250 = vadd.f32 0.0, %v1249
        %1251 = vmatprep.mubr.f32.mxu0 %v1158
        %1252 = vmatmul.mubr.f32.gmra.mrb[0].mxu0 %v1087
        %v1253 = vpop.f32.mrb[0].mxu0
        %v1254 = vadd.f32 0.0, %v1253
        %v1255 = vpop.f32.mrb[0].mxu0
        %v1256 = vadd.f32 0.0, %v1255
        %1257 = vmatprep.mubr.f32.mxu0 %v1161
        %1258 = vmatmul.mubr.f32.gmra.mrb[0].mxu0 %v1089
        %v1259 = vpop.f32.mrb[0].mxu0
        %v1260 = vadd.f32 0.0, %v1259
        %v1261 = vpop.f32.mrb[0].mxu0
        %v1262 = vadd.f32 0.0, %v1261
        %1263 = vmatprep.mubr.f32.mxu0 %v1164
        %1264 = vmatmul.mubr.f32.gmra.mrb[0].mxu0 %v1091
        %v1265 = vpop.f32.mrb[0].mxu0
        %v1266 = vadd.f32 0.0, %v1265
        %v1267 = vpop.f32.mrb[0].mxu0
        %v1268 = vadd.f32 0.0, %v1267
        %1269 = vmatprep.mubr.f32.mxu0 %v1167
        %1270 = vmatmul.mubr.f32.gmra.mrb[0].mxu0 %v1093
        %v1271 = vpop.f32.mrb[0].mxu0
        %v1272 = vadd.f32 0.0, %v1271
        %v1273 = vpop.f32.mrb[0].mxu0
        %v1274 = vadd.f32 0.0, %v1273
        %1275 = vdwg.mxu0
        %v1276 = vadd.f32 %v1067, %v1236
        %v1277 = vadd.f32 %v1068, %v1238
        %v1278 = vadd.f32 %v1069, %v1242
        %v1279 = vadd.f32 %v1070, %v1244
        %v1280 = vadd.f32 %v1071, %v1248
        %v1281 = vadd.f32 %v1072, %v1250
        %v1282 = vadd.f32 %v1073, %v1254
        %v1283 = vadd.f32 %v1074, %v1256
        %v1284 = vadd.f32 %v1075, %v1260
        %v1285 = vadd.f32 %v1076, %v1262
        %v1286 = vadd.f32 %v1077, %v1266
        %v1287 = vadd.f32 %v1078, %v1268
        %v1288 = vadd.f32 %v1079, %v1272
        %v1289 = vadd.f32 %v1080, %v1274
        %1297 = vrot.lane.b32.xlu0 %v1276, 112
        %v1298 = vpop.permute.xlu0 %1297
        %1299 = vrot.lane.b32.xlu0 %v1278, 112
        %v1300 = vpop.permute.xlu0 %1299
        %1301 = vrot.lane.b32.xlu0 %v1280, 112
        %v1302 = vpop.permute.xlu0 %1301
        %1303 = vrot.lane.b32.xlu0 %v1282, 112
        %v1304 = vpop.permute.xlu0 %1303
        %1305 = vrot.lane.b32.xlu0 %v1284, 112
        %v1306 = vpop.permute.xlu0 %1305
        %1307 = vrot.lane.b32.xlu0 %v1286, 112
        %v1308 = vpop.permute.xlu0 %1307
        %1309 = vrot.lane.b32.xlu0 %v1288, 112
        %v1310 = vpop.permute.xlu0 %1309
        %v1318 = vmax.f32 %v1276, %v1298
        %v1319 = vmax.f32 %v1278, %v1300
        %v1320 = vmax.f32 %v1280, %v1302
        %v1321 = vmax.f32 %v1282, %v1304
        %v1322 = vmax.f32 %v1284, %v1306
        %v1323 = vmax.f32 %v1286, %v1308
        %v1324 = vmax.f32 %v1288, %v1310
        %1325 = vrot.lane.b32.xlu0 %v1276, 96
        %v1326 = vpop.permute.xlu0 %1325
        %1327 = vrot.lane.b32.xlu0 %v1278, 96
        %v1328 = vpop.permute.xlu0 %1327
        %1329 = vrot.lane.b32.xlu0 %v1280, 96
        %v1330 = vpop.permute.xlu0 %1329
        %1331 = vrot.lane.b32.xlu0 %v1282, 96
        %v1332 = vpop.permute.xlu0 %1331
        %1333 = vrot.lane.b32.xlu0 %v1284, 96
        %v1334 = vpop.permute.xlu0 %1333
        %1335 = vrot.lane.b32.xlu0 %v1286, 96
        %v1336 = vpop.permute.xlu0 %1335
        %1337 = vrot.lane.b32.xlu0 %v1288, 96
        %v1338 = vpop.permute.xlu0 %1337
        %v1346 = vmax.f32 %v1318, %v1326
        %v1347 = vmax.f32 %v1319, %v1328
        %v1348 = vmax.f32 %v1320, %v1330
        %v1349 = vmax.f32 %v1321, %v1332
        %v1350 = vmax.f32 %v1322, %v1334
        %v1351 = vmax.f32 %v1323, %v1336
        %v1352 = vmax.f32 %v1324, %v1338
        %1353 = vrot.lane.b32.xlu0 %v1276, 80
        %v1354 = vpop.permute.xlu0 %1353
        %1355 = vrot.lane.b32.xlu0 %v1278, 80
        %v1356 = vpop.permute.xlu0 %1355
        %1357 = vrot.lane.b32.xlu0 %v1280, 80
        %v1358 = vpop.permute.xlu0 %1357
        %1359 = vrot.lane.b32.xlu0 %v1282, 80
        %v1360 = vpop.permute.xlu0 %1359
        %1361 = vrot.lane.b32.xlu0 %v1284, 80
        %v1362 = vpop.permute.xlu0 %1361
        %1363 = vrot.lane.b32.xlu0 %v1286, 80
        %v1364 = vpop.permute.xlu0 %1363
        %1365 = vrot.lane.b32.xlu0 %v1288, 80
        %v1366 = vpop.permute.xlu0 %1365
        %v1374 = vmax.f32 %v1346, %v1354
        %v1375 = vmax.f32 %v1347, %v1356
        %v1376 = vmax.f32 %v1348, %v1358
        %v1377 = vmax.f32 %v1349, %v1360
        %v1378 = vmax.f32 %v1350, %v1362
        %v1379 = vmax.f32 %v1351, %v1364
        %v1380 = vmax.f32 %v1352, %v1366
        %1381 = vrot.lane.b32.xlu0 %v1276, 64
        %v1382 = vpop.permute.xlu0 %1381
        %1383 = vrot.lane.b32.xlu0 %v1278, 64
        %v1384 = vpop.permute.xlu0 %1383
        %1385 = vrot.lane.b32.xlu0 %v1280, 64
        %v1386 = vpop.permute.xlu0 %1385
        %1387 = vrot.lane.b32.xlu0 %v1282, 64
        %v1388 = vpop.permute.xlu0 %1387
        %1389 = vrot.lane.b32.xlu0 %v1284, 64
        %v1390 = vpop.permute.xlu0 %1389
        %1391 = vrot.lane.b32.xlu0 %v1286, 64
        %v1392 = vpop.permute.xlu0 %1391
        %1393 = vrot.lane.b32.xlu0 %v1288, 64
        %v1394 = vpop.permute.xlu0 %1393
        %v1402 = vmax.f32 %v1374, %v1382
        %v1403 = vmax.f32 %v1375, %v1384
        %v1404 = vmax.f32 %v1376, %v1386
        %v1405 = vmax.f32 %v1377, %v1388
        %v1406 = vmax.f32 %v1378, %v1390
        %v1407 = vmax.f32 %v1379, %v1392
        %v1408 = vmax.f32 %v1380, %v1394
        %1409 = vrot.lane.b32.xlu0 %v1276, 48
        %v1410 = vpop.permute.xlu0 %1409
        %1411 = vrot.lane.b32.xlu0 %v1278, 48
        %v1412 = vpop.permute.xlu0 %1411
        %1413 = vrot.lane.b32.xlu0 %v1280, 48
        %v1414 = vpop.permute.xlu0 %1413
        %1415 = vrot.lane.b32.xlu0 %v1282, 48
        %v1416 = vpop.permute.xlu0 %1415
        %1417 = vrot.lane.b32.xlu0 %v1284, 48
        %v1418 = vpop.permute.xlu0 %1417
        %1419 = vrot.lane.b32.xlu0 %v1286, 48
        %v1420 = vpop.permute.xlu0 %1419
        %1421 = vrot.lane.b32.xlu0 %v1288, 48
        %v1422 = vpop.permute.xlu0 %1421
        %v1430 = vmax.f32 %v1402, %v1410
        %v1431 = vmax.f32 %v1403, %v1412
        %v1432 = vmax.f32 %v1404, %v1414
        %v1433 = vmax.f32 %v1405, %v1416
        %v1434 = vmax.f32 %v1406, %v1418
        %v1435 = vmax.f32 %v1407, %v1420
        %v1436 = vmax.f32 %v1408, %v1422
        %1437 = vrot.lane.b32.xlu0 %v1276, 32
        %v1438 = vpop.permute.xlu0 %1437
        %1439 = vrot.lane.b32.xlu0 %v1278, 32
        %v1440 = vpop.permute.xlu0 %1439
        %1441 = vrot.lane.b32.xlu0 %v1280, 32
        %v1442 = vpop.permute.xlu0 %1441
        %1443 = vrot.lane.b32.xlu0 %v1282, 32
        %v1444 = vpop.permute.xlu0 %1443
        %1445 = vrot.lane.b32.xlu0 %v1284, 32
        %v1446 = vpop.permute.xlu0 %1445
        %1447 = vrot.lane.b32.xlu0 %v1286, 32
        %v1448 = vpop.permute.xlu0 %1447
        %1449 = vrot.lane.b32.xlu0 %v1288, 32
        %v1450 = vpop.permute.xlu0 %1449
        %v1458 = vmax.f32 %v1430, %v1438
        %v1459 = vmax.f32 %v1431, %v1440
        %v1460 = vmax.f32 %v1432, %v1442
        %v1461 = vmax.f32 %v1433, %v1444
        %v1462 = vmax.f32 %v1434, %v1446
        %v1463 = vmax.f32 %v1435, %v1448
        %v1464 = vmax.f32 %v1436, %v1450
        %1465 = vrot.lane.b32.xlu0 %v1276, 16
        %v1466 = vpop.permute.xlu0 %1465
        %1467 = vrot.lane.b32.xlu0 %v1278, 16
        %v1468 = vpop.permute.xlu0 %1467
        %1469 = vrot.lane.b32.xlu0 %v1280, 16
        %v1470 = vpop.permute.xlu0 %1469
        %1471 = vrot.lane.b32.xlu0 %v1282, 16
        %v1472 = vpop.permute.xlu0 %1471
        %1473 = vrot.lane.b32.xlu0 %v1284, 16
        %v1474 = vpop.permute.xlu0 %1473
        %1475 = vrot.lane.b32.xlu0 %v1286, 16
        %v1476 = vpop.permute.xlu0 %1475
        %1477 = vrot.lane.b32.xlu0 %v1288, 16
        %v1478 = vpop.permute.xlu0 %1477
        %v1486 = vmax.f32 %v1458, %v1466
        %v1487 = vmax.f32 %v1459, %v1468
        %v1488 = vmax.f32 %v1460, %v1470
        %v1489 = vmax.f32 %v1461, %v1472
        %v1490 = vmax.f32 %v1462, %v1474
        %v1491 = vmax.f32 %v1463, %v1476
        %v1492 = vmax.f32 %v1464, %v1478
        %v1493 = vmax.f32 %v1486, %v1277
        %v1494 = vmax.f32 %v1487, %v1279
        %v1495 = vmax.f32 %v1488, %v1281
        %v1496 = vmax.f32 %v1489, %v1283
        %v1497 = vmax.f32 %v1490, %v1285
        %v1498 = vmax.f32 %v1491, %v1287
        %v1499 = vmax.f32 %v1492, %v1289
        %1507 = vrot.lane.b32.xlu0 %v1277, 112
        %v1508 = vpop.permute.xlu0 %1507
        %1509 = vrot.lane.b32.xlu0 %v1279, 112
        %v1510 = vpop.permute.xlu0 %1509
        %1511 = vrot.lane.b32.xlu0 %v1281, 112
        %v1512 = vpop.permute.xlu0 %1511
        %1513 = vrot.lane.b32.xlu0 %v1283, 112
        %v1514 = vpop.permute.xlu0 %1513
        %1515 = vrot.lane.b32.xlu0 %v1285, 112
        %v1516 = vpop.permute.xlu0 %1515
        %1517 = vrot.lane.b32.xlu0 %v1287, 112
        %v1518 = vpop.permute.xlu0 %1517
        %1519 = vrot.lane.b32.xlu0 %v1289, 112
        %v1520 = vpop.permute.xlu0 %1519
        %v1528 = vmax.f32 %v1493, %v1508
        %v1529 = vmax.f32 %v1494, %v1510
        %v1530 = vmax.f32 %v1495, %v1512
        %v1531 = vmax.f32 %v1496, %v1514
        %v1532 = vmax.f32 %v1497, %v1516
        %v1533 = vmax.f32 %v1498, %v1518
        %v1534 = vmax.f32 %v1499, %v1520
        %1535 = vrot.lane.b32.xlu0 %v1277, 96
        %v1536 = vpop.permute.xlu0 %1535
        %1537 = vrot.lane.b32.xlu0 %v1279, 96
        %v1538 = vpop.permute.xlu0 %1537
        %1539 = vrot.lane.b32.xlu0 %v1281, 96
        %v1540 = vpop.permute.xlu0 %1539
        %1541 = vrot.lane.b32.xlu0 %v1283, 96
        %v1542 = vpop.permute.xlu0 %1541
        %1543 = vrot.lane.b32.xlu0 %v1285, 96
        %v1544 = vpop.permute.xlu0 %1543
        %1545 = vrot.lane.b32.xlu0 %v1287, 96
        %v1546 = vpop.permute.xlu0 %1545
        %1547 = vrot.lane.b32.xlu0 %v1289, 96
        %v1548 = vpop.permute.xlu0 %1547
        %v1556 = vmax.f32 %v1528, %v1536
        %v1557 = vmax.f32 %v1529, %v1538
        %v1558 = vmax.f32 %v1530, %v1540
        %v1559 = vmax.f32 %v1531, %v1542
        %v1560 = vmax.f32 %v1532, %v1544
        %v1561 = vmax.f32 %v1533, %v1546
        %v1562 = vmax.f32 %v1534, %v1548
        %1563 = vrot.lane.b32.xlu0 %v1277, 80
        %v1564 = vpop.permute.xlu0 %1563
        %1565 = vrot.lane.b32.xlu0 %v1279, 80
        %v1566 = vpop.permute.xlu0 %1565
        %1567 = vrot.lane.b32.xlu0 %v1281, 80
        %v1568 = vpop.permute.xlu0 %1567
        %1569 = vrot.lane.b32.xlu0 %v1283, 80
        %v1570 = vpop.permute.xlu0 %1569
        %1571 = vrot.lane.b32.xlu0 %v1285, 80
        %v1572 = vpop.permute.xlu0 %1571
        %1573 = vrot.lane.b32.xlu0 %v1287, 80
        %v1574 = vpop.permute.xlu0 %1573
        %1575 = vrot.lane.b32.xlu0 %v1289, 80
        %v1576 = vpop.permute.xlu0 %1575
        %v1584 = vmax.f32 %v1556, %v1564
        %v1585 = vmax.f32 %v1557, %v1566
        %v1586 = vmax.f32 %v1558, %v1568
        %v1587 = vmax.f32 %v1559, %v1570
        %v1588 = vmax.f32 %v1560, %v1572
        %v1589 = vmax.f32 %v1561, %v1574
        %v1590 = vmax.f32 %v1562, %v1576
        %1591 = vrot.lane.b32.xlu0 %v1277, 64
        %v1592 = vpop.permute.xlu0 %1591
        %1593 = vrot.lane.b32.xlu0 %v1279, 64
        %v1594 = vpop.permute.xlu0 %1593
        %1595 = vrot.lane.b32.xlu0 %v1281, 64
        %v1596 = vpop.permute.xlu0 %1595
        %1597 = vrot.lane.b32.xlu0 %v1283, 64
        %v1598 = vpop.permute.xlu0 %1597
        %1599 = vrot.lane.b32.xlu0 %v1285, 64
        %v1600 = vpop.permute.xlu0 %1599
        %1601 = vrot.lane.b32.xlu0 %v1287, 64
        %v1602 = vpop.permute.xlu0 %1601
        %1603 = vrot.lane.b32.xlu0 %v1289, 64
        %v1604 = vpop.permute.xlu0 %1603
        %v1612 = vmax.f32 %v1584, %v1592
        %v1613 = vmax.f32 %v1585, %v1594
        %v1614 = vmax.f32 %v1586, %v1596
        %v1615 = vmax.f32 %v1587, %v1598
        %v1616 = vmax.f32 %v1588, %v1600
        %v1617 = vmax.f32 %v1589, %v1602
        %v1618 = vmax.f32 %v1590, %v1604
        %v1619 = vld [vmem:[%s2] sm:$0x1]
        %v1620 = vld [vmem:[%s2 + $0x1] sm:$0x1]
        %v1621 = vld [vmem:[%s2 + $0x2] sm:$0x1]
        %v1622 = vlaneseq
        %v1623 = vshrl.u32 %v1622, 7
        %v1624 = vsub.s32 0, %v1623
        %v1625 = vrot.slane %v1619, %v1624
        %v1626 = vadd.f32 %v1612, %v1625
        %v1627 = vadd.f32 %v1613, %v1625
        %v1628 = vadd.f32 %v1614, %v1625
        %v1629 = vadd.f32 %v1615, %v1625
        %v1630 = vadd.f32 %v1616, %v1625
        %v1631 = vadd.f32 %v1617, %v1625
        %v1632 = vadd.f32 %v1618, %v1625
        %v1633 = vmax.f32 %v1626, 0.0
        %v1634 = vmax.f32 %v1627, 0.0
        %v1635 = vmax.f32 %v1628, 0.0
        %v1636 = vmax.f32 %v1629, 0.0
        %v1637 = vmax.f32 %v1630, 0.0
        %v1638 = vmax.f32 %v1631, 0.0
        %v1639 = vmax.f32 %v1632, 0.0
        %v1640 = vlaneseq
        %v1641 = vshrl.u32 %v1640, 7
        %v1642 = vsub.s32 0, %v1641
        %v1643 = vrot.slane %v1620, %v1642
        %v1644 = vmul.f32 %v1633, %v1643
        %v1645 = vmul.f32 %v1634, %v1643
        %v1646 = vmul.f32 %v1635, %v1643
        %v1647 = vmul.f32 %v1636, %v1643
        %v1648 = vmul.f32 %v1637, %v1643
        %v1649 = vmul.f32 %v1638, %v1643
        %v1650 = vmul.f32 %v1639, %v1643
        %v1651 = vlaneseq
        %v1652 = vshrl.u32 %v1651, 7
        %v1653 = vsub.s32 0, %v1652
        %v1654 = vrot.slane %v1621, %v1653
        %v1655 = vadd.f32 %v1644, %v1654
        %v1656 = vadd.f32 %v1645, %v1654
        %v1657 = vadd.f32 %v1646, %v1654
        %v1658 = vadd.f32 %v1647, %v1654
        %v1659 = vadd.f32 %v1648, %v1654
        %v1660 = vadd.f32 %v1649, %v1654
        %v1661 = vadd.f32 %v1650, %v1654
        %v1662 = vld [vmem:[%s3] sm:$0xff]
        %v1663 = vld [vmem:[%s3 + $0x8] sm:$0xff]
        %v1664 = vld [vmem:[%s3 + $0x10] sm:$0xff]
        %v1665 = vld [vmem:[%s3 + $0x18] sm:$0xff]
        %v1666 = vld [vmem:[%s3 + $0x20] sm:$0xff]
        %v1667 = vld [vmem:[%s3 + $0x28] sm:$0xff]
        %v1668 = vld [vmem:[%s3 + $0x30] sm:$0xff]
        %v1669 = vld [vmem:[%s3 + $0x38] sm:$0xff]
        %v1670 = vld [vmem:[%s3 + $0x40] sm:$0xff]
        %v1671 = vld [vmem:[%s3 + $0x48] sm:$0xff]
        %v1672 = vld [vmem:[%s3 + $0x50] sm:$0xff]
        %v1673 = vld [vmem:[%s3 + $0x58] sm:$0xff]
        %v1674 = vld [vmem:[%s3 + $0x60] sm:$0xff]
        %v1675 = vld [vmem:[%s3 + $0x68] sm:$0xff]
        %v1676 = vld [vmem:[%s3 + $0x70] sm:$0xff]
        %v1677 = vld [vmem:[%s3 + $0x78] sm:$0xff]
        %v1678 = vld [vmem:[%s3 + $0x80] sm:$0xff]
        %v1679 = vld [vmem:[%s3 + $0x88] sm:$0xff]
        %v1680 = vld [vmem:[%s3 + $0x90] sm:$0xff]
        %v1681 = vld [vmem:[%s3 + $0x98] sm:$0xff]
        %v1682 = vld [vmem:[%s3 + $0xa0] sm:$0xff]
        %v1683 = vld [vmem:[%s3 + $0xa8] sm:$0xff]
        %v1684 = vld [vmem:[%s3 + $0xb0] sm:$0xff]
        %v1685 = vld [vmem:[%s3 + $0xb8] sm:$0xff]
        %v1686 = vld [vmem:[%s3 + $0xc0] sm:$0xff]
        %v1687 = vld [vmem:[%s3 + $0xc8] sm:$0xff]
        %vm1688 = vcmask 130048
        %v1690 = vsel %vm1688, %v1655, 0
        %v1693 = vsel %vm1688, %v1656, 0
        %v1696 = vsel %vm1688, %v1657, 0
        %v1699 = vsel %vm1688, %v1658, 0
        %v1702 = vsel %vm1688, %v1659, 0
        %v1705 = vsel %vm1688, %v1660, 0
        %v1708 = vsel %vm1688, %v1661, 0
        %1710 = vmatprep.subr.mxu0 %v1663
        %1711 = vmatpush1.msra.mxu0 %v1662
        %1712 = vmatprep.subr.mxu0 %v1676
        %1713 = vmatpush1.msra.mxu0 %v1675
        %1714 = vmatprep.subr.mxu0 0.0
        %1715 = vmatpush1.msra.mxu0 0.0
        %1716 = vmatprep.subr.mxu0 0.0
        %1717 = vmatpush1.msra.mxu0 0.0
        %1718 = vmatprep.subr.mxu0 0.0
        %1719 = vmatpush1.msra.mxu0 0.0
        %1720 = vmatprep.subr.mxu0 0.0
        %1721 = vmatpush1.msra.mxu0 0.0
        %1722 = vmatprep.subr.mxu0 0.0
        %1723 = vmatpush1.msra.mxu0 0.0
        %1724 = vmatprep.subr.mxu0 0.0
        %1725 = vmatpush1.msra.mxu0 0.0
        %1726 = vmatprep.subr.mxu0 0.0
        %1727 = vmatpush1.msra.mxu0 0.0
        %1728 = vmatprep.subr.mxu0 0.0
        %1729 = vmatpush1.msra.mxu0 0.0
        %1730 = vmatprep.subr.mxu0 0.0
        %1731 = vmatpush1.msra.mxu0 0.0
        %1732 = vmatprep.subr.mxu0 0.0
        %1733 = vmatpush1.msra.mxu0 0.0
        %1734 = vmatprep.subr.mxu0 0.0
        %1735 = vmatpush1.msra.mxu0 0.0
        %1736 = vmatprep.subr.mxu0 0.0
        %1737 = vmatpush1.msra.mxu0 0.0
        %1738 = vmatprep.subr.mxu0 0.0
        %1739 = vmatpush1.msra.mxu0 0.0
        %1740 = vmatprep.subr.mxu0 0.0
        %1741 = vmatpush1.msra.mxu0 0.0
        %1742 = vmatprep.subr.mxu0 0.0
        %1743 = vmatpush1.msra.mxu0 0.0
        %1744 = vmatprep.subr.mxu0 0.0
        %1745 = vmatpush1.msra.mxu0 0.0
        %1746 = vmatprep.subr.mxu0 0.0
        %1747 = vmatpush1.msra.mxu0 0.0
        %1748 = vmatprep.subr.mxu0 0.0
        %1749 = vmatpush1.msra.mxu0 0.0
        %1750 = vmatprep.subr.mxu0 0.0
        %1751 = vmatpush1.msra.mxu0 0.0
        %1752 = vmatprep.subr.mxu0 0.0
        %1753 = vmatpush1.msra.mxu0 0.0
        %1754 = vmatprep.subr.mxu0 0.0
        %1755 = vmatpush1.msra.mxu0 0.0
        %1756 = vmatprep.subr.mxu0 0.0
        %1757 = vmatpush1.msra.mxu0 0.0
        %1758 = vmatprep.subr.mxu0 0.0
        %1759 = vmatpush1.msra.mxu0 0.0
        %1760 = vmatprep.subr.mxu0 0.0
        %1761 = vmatpush1.msra.mxu0 0.0
        %1762 = vmatprep.subr.mxu0 0.0
        %1763 = vmatpush1.msra.mxu0 0.0
        %1764 = vmatprep.subr.mxu0 0.0
        %1765 = vmatpush1.msra.mxu0 0.0
        %1766 = vmatprep.subr.mxu0 0.0
        %1767 = vmatpush1.msra.mxu0 0.0
        %1768 = vmatprep.subr.mxu0 0.0
        %1769 = vmatpush1.msra.mxu0 0.0
        %1770 = vmatprep.subr.mxu0 0.0
        %1771 = vmatpush1.msra.mxu0 0.0
        %1772 = vmatprep.subr.mxu0 0.0
        %1773 = vmatpush1.msra.mxu0 0.0
        %1774 = vmatprep.mubr.f32.mxu0 0.0
        %1775 = vmatmul.mubr.f32.gmra.mrb[0].mxu0 %v1690
        %v1776 = vpop.f32.mrb[0].mxu0
        %v1777 = vadd.f32 0.0, %v1776
        %v1778 = vpop.f32.mrb[0].mxu0
        %v1779 = vadd.f32 0.0, %v1778
        %1780 = vmatprep.mubr.f32.mxu0 0.0
        %1781 = vmatmul.mubr.f32.gmra.mrb[0].mxu0 %v1693
        %v1782 = vpop.f32.mrb[0].mxu0
        %v1783 = vpop.f32.mrb[0].mxu0
        %1784 = vmatprep.mubr.f32.mxu0 0.0
        %1785 = vmatmul.mubr.f32.gmra.mrb[0].mxu0 %v1696
        %v1786 = vpop.f32.mrb[0].mxu0
        %v1787 = vpop.f32.mrb[0].mxu0
        %1788 = vmatprep.mubr.f32.mxu0 0.0
        %1789 = vmatmul.mubr.f32.gmra.mrb[0].mxu0 %v1699
        %v1790 = vpop.f32.mrb[0].mxu0
        %v1791 = vpop.f32.mrb[0].mxu0
        %1792 = vmatprep.mubr.f32.mxu0 0.0
        %1793 = vmatmul.mubr.f32.gmra.mrb[0].mxu0 %v1702
        %v1794 = vpop.f32.mrb[0].mxu0
        %v1795 = vpop.f32.mrb[0].mxu0
        %1796 = vmatprep.mubr.f32.mxu0 0.0
        %1797 = vmatmul.mubr.f32.gmra.mrb[0].mxu0 %v1705
        %v1798 = vpop.f32.mrb[0].mxu0
        %v1799 = vpop.f32.mrb[0].mxu0
        %1800 = vmatprep.mubr.f32.mxu0 0.0
        %1801 = vmatmul.mubr.f32.gmra.mrb[0].mxu0 %v1708
        %v1802 = vpop.f32.mrb[0].mxu0
        %v1803 = vpop.f32.mrb[0].mxu0
        %1804 = vdwg.mxu0
        %1805 = vmatprep.subr.mxu0 %v1665
        %1806 = vmatpush1.msra.mxu0 %v1664
        %1807 = vmatprep.subr.mxu0 %v1678
        %1808 = vmatpush1.msra.mxu0 %v1677
        %1809 = vmatprep.subr.mxu0 0.0
        %1810 = vmatpush1.msra.mxu0 0.0
        %1811 = vmatprep.subr.mxu0 0.0
        %1812 = vmatpush1.msra.mxu0 0.0
        %1813 = vmatprep.subr.mxu0 0.0
        %1814 = vmatpush1.msra.mxu0 0.0
        %1815 = vmatprep.subr.mxu0 0.0
        %1816 = vmatpush1.msra.mxu0 0.0
        %1817 = vmatprep.subr.mxu0 0.0
        %1818 = vmatpush1.msra.mxu0 0.0
        %1819 = vmatprep.subr.mxu0 0.0
        %1820 = vmatpush1.msra.mxu0 0.0
        %1821 = vmatprep.subr.mxu0 0.0
        %1822 = vmatpush1.msra.mxu0 0.0
        %1823 = vmatprep.subr.mxu0 0.0
        %1824 = vmatpush1.msra.mxu0 0.0
        %1825 = vmatprep.subr.mxu0 0.0
        %1826 = vmatpush1.msra.mxu0 0.0
        %1827 = vmatprep.subr.mxu0 0.0
        %1828 = vmatpush1.msra.mxu0 0.0
        %1829 = vmatprep.subr.mxu0 0.0
        %1830 = vmatpush1.msra.mxu0 0.0
        %1831 = vmatprep.subr.mxu0 0.0
        %1832 = vmatpush1.msra.mxu0 0.0
        %1833 = vmatprep.subr.mxu0 0.0
        %1834 = vmatpush1.msra.mxu0 0.0
        %1835 = vmatprep.subr.mxu0 0.0
        %1836 = vmatpush1.msra.mxu0 0.0
        %1837 = vmatprep.subr.mxu0 0.0
        %1838 = vmatpush1.msra.mxu0 0.0
        %1839 = vmatprep.subr.mxu0 0.0
        %1840 = vmatpush1.msra.mxu0 0.0
        %1841 = vmatprep.subr.mxu0 0.0
        %1842 = vmatpush1.msra.mxu0 0.0
        %1843 = vmatprep.subr.mxu0 0.0
        %1844 = vmatpush1.msra.mxu0 0.0
        %1845 = vmatprep.subr.mxu0 0.0
        %1846 = vmatpush1.msra.mxu0 0.0
        %1847 = vmatprep.subr.mxu0 0.0
        %1848 = vmatpush1.msra.mxu0 0.0
        %1849 = vmatprep.subr.mxu0 0.0
        %1850 = vmatpush1.msra.mxu0 0.0
        %1851 = vmatprep.subr.mxu0 0.0
        %1852 = vmatpush1.msra.mxu0 0.0
        %1853 = vmatprep.subr.mxu0 0.0
        %1854 = vmatpush1.msra.mxu0 0.0
        %1855 = vmatprep.subr.mxu0 0.0
        %1856 = vmatpush1.msra.mxu0 0.0
        %1857 = vmatprep.subr.mxu0 0.0
        %1858 = vmatpush1.msra.mxu0 0.0
        %1859 = vmatprep.subr.mxu0 0.0
        %1860 = vmatpush1.msra.mxu0 0.0
        %1861 = vmatprep.subr.mxu0 0.0
        %1862 = vmatpush1.msra.mxu0 0.0
        %1863 = vmatprep.subr.mxu0 0.0
        %1864 = vmatpush1.msra.mxu0 0.0
        %1865 = vmatprep.subr.mxu0 0.0
        %1866 = vmatpush1.msra.mxu0 0.0
        %1867 = vmatprep.subr.mxu0 0.0
        %1868 = vmatpush1.msra.mxu0 0.0
        %1869 = vmatprep.mubr.f32.mxu0 0.0
        %1870 = vmatmul.mubr.f32.gmra.mrb[0].mxu0 %v1690
        %v1871 = vpop.f32.mrb[0].mxu0
        %v1872 = vpop.f32.mrb[0].mxu0
        %1873 = vmatprep.mubr.f32.mxu0 0.0
        %1874 = vmatmul.mubr.f32.gmra.mrb[0].mxu0 %v1693
        %v1875 = vpop.f32.mrb[0].mxu0
        %v1876 = vadd.f32 0.0, %v1875
        %v1877 = vpop.f32.mrb[0].mxu0
        %v1878 = vadd.f32 0.0, %v1877
        %1879 = vmatprep.mubr.f32.mxu0 0.0
        %1880 = vmatmul.mubr.f32.gmra.mrb[0].mxu0 %v1696
        %v1881 = vpop.f32.mrb[0].mxu0
        %v1882 = vpop.f32.mrb[0].mxu0
        %1883 = vmatprep.mubr.f32.mxu0 0.0
        %1884 = vmatmul.mubr.f32.gmra.mrb[0].mxu0 %v1699
        %v1885 = vpop.f32.mrb[0].mxu0
        %v1886 = vpop.f32.mrb[0].mxu0
        %1887 = vmatprep.mubr.f32.mxu0 0.0
        %1888 = vmatmul.mubr.f32.gmra.mrb[0].mxu0 %v1702
        %v1889 = vpop.f32.mrb[0].mxu0
        %v1890 = vpop.f32.mrb[0].mxu0
        %1891 = vmatprep.mubr.f32.mxu0 0.0
        %1892 = vmatmul.mubr.f32.gmra.mrb[0].mxu0 %v1705
        %v1893 = vpop.f32.mrb[0].mxu0
        %v1894 = vpop.f32.mrb[0].mxu0
        %1895 = vmatprep.mubr.f32.mxu0 0.0
        %1896 = vmatmul.mubr.f32.gmra.mrb[0].mxu0 %v1708
        %v1897 = vpop.f32.mrb[0].mxu0
        %v1898 = vpop.f32.mrb[0].mxu0
        %1899 = vdwg.mxu0
        %1900 = vmatprep.subr.mxu0 %v1667
        %1901 = vmatpush1.msra.mxu0 %v1666
        %1902 = vmatprep.subr.mxu0 %v1680
        %1903 = vmatpush1.msra.mxu0 %v1679
        %1904 = vmatprep.subr.mxu0 0.0
        %1905 = vmatpush1.msra.mxu0 0.0
        %1906 = vmatprep.subr.mxu0 0.0
        %1907 = vmatpush1.msra.mxu0 0.0
        %1908 = vmatprep.subr.mxu0 0.0
        %1909 = vmatpush1.msra.mxu0 0.0
        %1910 = vmatprep.subr.mxu0 0.0
        %1911 = vmatpush1.msra.mxu0 0.0
        %1912 = vmatprep.subr.mxu0 0.0
        %1913 = vmatpush1.msra.mxu0 0.0
        %1914 = vmatprep.subr.mxu0 0.0
        %1915 = vmatpush1.msra.mxu0 0.0
        %1916 = vmatprep.subr.mxu0 0.0
        %1917 = vmatpush1.msra.mxu0 0.0
        %1918 = vmatprep.subr.mxu0 0.0
        %1919 = vmatpush1.msra.mxu0 0.0
        %1920 = vmatprep.subr.mxu0 0.0
        %1921 = vmatpush1.msra.mxu0 0.0
        %1922 = vmatprep.subr.mxu0 0.0
        %1923 = vmatpush1.msra.mxu0 0.0
        %1924 = vmatprep.subr.mxu0 0.0
        %1925 = vmatpush1.msra.mxu0 0.0
        %1926 = vmatprep.subr.mxu0 0.0
        %1927 = vmatpush1.msra.mxu0 0.0
        %1928 = vmatprep.subr.mxu0 0.0
        %1929 = vmatpush1.msra.mxu0 0.0
        %1930 = vmatprep.subr.mxu0 0.0
        %1931 = vmatpush1.msra.mxu0 0.0
        %1932 = vmatprep.subr.mxu0 0.0
        %1933 = vmatpush1.msra.mxu0 0.0
        %1934 = vmatprep.subr.mxu0 0.0
        %1935 = vmatpush1.msra.mxu0 0.0
        %1936 = vmatprep.subr.mxu0 0.0
        %1937 = vmatpush1.msra.mxu0 0.0
        %1938 = vmatprep.subr.mxu0 0.0
        %1939 = vmatpush1.msra.mxu0 0.0
        %1940 = vmatprep.subr.mxu0 0.0
        %1941 = vmatpush1.msra.mxu0 0.0
        %1942 = vmatprep.subr.mxu0 0.0
        %1943 = vmatpush1.msra.mxu0 0.0
        %1944 = vmatprep.subr.mxu0 0.0
        %1945 = vmatpush1.msra.mxu0 0.0
        %1946 = vmatprep.subr.mxu0 0.0
        %1947 = vmatpush1.msra.mxu0 0.0
        %1948 = vmatprep.subr.mxu0 0.0
        %1949 = vmatpush1.msra.mxu0 0.0
        %1950 = vmatprep.subr.mxu0 0.0
        %1951 = vmatpush1.msra.mxu0 0.0
        %1952 = vmatprep.subr.mxu0 0.0
        %1953 = vmatpush1.msra.mxu0 0.0
        %1954 = vmatprep.subr.mxu0 0.0
        %1955 = vmatpush1.msra.mxu0 0.0
        %1956 = vmatprep.subr.mxu0 0.0
        %1957 = vmatpush1.msra.mxu0 0.0
        %1958 = vmatprep.subr.mxu0 0.0
        %1959 = vmatpush1.msra.mxu0 0.0
        %1960 = vmatprep.subr.mxu0 0.0
        %1961 = vmatpush1.msra.mxu0 0.0
        %1962 = vmatprep.subr.mxu0 0.0
        %1963 = vmatpush1.msra.mxu0 0.0
        %1964 = vmatprep.mubr.f32.mxu0 0.0
        %1965 = vmatmul.mubr.f32.gmra.mrb[0].mxu0 %v1690
        %v1966 = vpop.f32.mrb[0].mxu0
        %v1967 = vpop.f32.mrb[0].mxu0
        %1968 = vmatprep.mubr.f32.mxu0 0.0
        %1969 = vmatmul.mubr.f32.gmra.mrb[0].mxu0 %v1693
        %v1970 = vpop.f32.mrb[0].mxu0
        %v1971 = vpop.f32.mrb[0].mxu0
        %1972 = vmatprep.mubr.f32.mxu0 0.0
        %1973 = vmatmul.mubr.f32.gmra.mrb[0].mxu0 %v1696
        %v1974 = vpop.f32.mrb[0].mxu0
        %v1975 = vadd.f32 0.0, %v1974
        %v1976 = vpop.f32.mrb[0].mxu0
        %v1977 = vadd.f32 0.0, %v1976
        %1978 = vmatprep.mubr.f32.mxu0 0.0
        %1979 = vmatmul.mubr.f32.gmra.mrb[0].mxu0 %v1699
        %v1980 = vpop.f32.mrb[0].mxu0
        %v1981 = vpop.f32.mrb[0].mxu0
        %1982 = vmatprep.mubr.f32.mxu0 0.0
        %1983 = vmatmul.mubr.f32.gmra.mrb[0].mxu0 %v1702
        %v1984 = vpop.f32.mrb[0].mxu0
        %v1985 = vpop.f32.mrb[0].mxu0
        %1986 = vmatprep.mubr.f32.mxu0 0.0
        %1987 = vmatmul.mubr.f32.gmra.mrb[0].mxu0 %v1705
        %v1988 = vpop.f32.mrb[0].mxu0
        %v1989 = vpop.f32.mrb[0].mxu0
        %1990 = vmatprep.mubr.f32.mxu0 0.0
        %1991 = vmatmul.mubr.f32.gmra.mrb[0].mxu0 %v1708
        %v1992 = vpop.f32.mrb[0].mxu0
        %v1993 = vpop.f32.mrb[0].mxu0
        %1994 = vdwg.mxu0
        %1995 = vmatprep.subr.mxu0 %v1669
        %1996 = vmatpush1.msra.mxu0 %v1668
        %1997 = vmatprep.subr.mxu0 %v1682
        %1998 = vmatpush1.msra.mxu0 %v1681
        %1999 = vmatprep.subr.mxu0 0.0
        %2000 = vmatpush1.msra.mxu0 0.0
        %2001 = vmatprep.subr.mxu0 0.0
        %2002 = vmatpush1.msra.mxu0 0.0
        %2003 = vmatprep.subr.mxu0 0.0
        %2004 = vmatpush1.msra.mxu0 0.0
        %2005 = vmatprep.subr.mxu0 0.0
        %2006 = vmatpush1.msra.mxu0 0.0
        %2007 = vmatprep.subr.mxu0 0.0
        %2008 = vmatpush1.msra.mxu0 0.0
        %2009 = vmatprep.subr.mxu0 0.0
        %2010 = vmatpush1.msra.mxu0 0.0
        %2011 = vmatprep.subr.mxu0 0.0
        %2012 = vmatpush1.msra.mxu0 0.0
        %2013 = vmatprep.subr.mxu0 0.0
        %2014 = vmatpush1.msra.mxu0 0.0
        %2015 = vmatprep.subr.mxu0 0.0
        %2016 = vmatpush1.msra.mxu0 0.0
        %2017 = vmatprep.subr.mxu0 0.0
        %2018 = vmatpush1.msra.mxu0 0.0
        %2019 = vmatprep.subr.mxu0 0.0
        %2020 = vmatpush1.msra.mxu0 0.0
        %2021 = vmatprep.subr.mxu0 0.0
        %2022 = vmatpush1.msra.mxu0 0.0
        %2023 = vmatprep.subr.mxu0 0.0
        %2024 = vmatpush1.msra.mxu0 0.0
        %2025 = vmatprep.subr.mxu0 0.0
        %2026 = vmatpush1.msra.mxu0 0.0
        %2027 = vmatprep.subr.mxu0 0.0
        %2028 = vmatpush1.msra.mxu0 0.0
        %2029 = vmatprep.subr.mxu0 0.0
        %2030 = vmatpush1.msra.mxu0 0.0
        %2031 = vmatprep.subr.mxu0 0.0
        %2032 = vmatpush1.msra.mxu0 0.0
        %2033 = vmatprep.subr.mxu0 0.0
        %2034 = vmatpush1.msra.mxu0 0.0
        %2035 = vmatprep.subr.mxu0 0.0
        %2036 = vmatpush1.msra.mxu0 0.0
        %2037 = vmatprep.subr.mxu0 0.0
        %2038 = vmatpush1.msra.mxu0 0.0
        %2039 = vmatprep.subr.mxu0 0.0
        %2040 = vmatpush1.msra.mxu0 0.0
        %2041 = vmatprep.subr.mxu0 0.0
        %2042 = vmatpush1.msra.mxu0 0.0
        %2043 = vmatprep.subr.mxu0 0.0
        %2044 = vmatpush1.msra.mxu0 0.0
        %2045 = vmatprep.subr.mxu0 0.0
        %2046 = vmatpush1.msra.mxu0 0.0
        %2047 = vmatprep.subr.mxu0 0.0
        %2048 = vmatpush1.msra.mxu0 0.0
        %2049 = vmatprep.subr.mxu0 0.0
        %2050 = vmatpush1.msra.mxu0 0.0
        %2051 = vmatprep.subr.mxu0 0.0
        %2052 = vmatpush1.msra.mxu0 0.0
        %2053 = vmatprep.subr.mxu0 0.0
        %2054 = vmatpush1.msra.mxu0 0.0
        %2055 = vmatprep.subr.mxu0 0.0
        %2056 = vmatpush1.msra.mxu0 0.0
        %2057 = vmatprep.subr.mxu0 0.0
        %2058 = vmatpush1.msra.mxu0 0.0
        %2059 = vmatprep.mubr.f32.mxu0 0.0
        %2060 = vmatmul.mubr.f32.gmra.mrb[0].mxu0 %v1690
        %v2061 = vpop.f32.mrb[0].mxu0
        %v2062 = vpop.f32.mrb[0].mxu0
        %2063 = vmatprep.mubr.f32.mxu0 0.0
        %2064 = vmatmul.mubr.f32.gmra.mrb[0].mxu0 %v1693
        %v2065 = vpop.f32.mrb[0].mxu0
        %v2066 = vpop.f32.mrb[0].mxu0
        %2067 = vmatprep.mubr.f32.mxu0 0.0
        %2068 = vmatmul.mubr.f32.gmra.mrb[0].mxu0 %v1696
        %v2069 = vpop.f32.mrb[0].mxu0
        %v2070 = vpop.f32.mrb[0].mxu0
        %2071 = vmatprep.mubr.f32.mxu0 0.0
        %2072 = vmatmul.mubr.f32.gmra.mrb[0].mxu0 %v1699
        %v2073 = vpop.f32.mrb[0].mxu0
        %v2074 = vadd.f32 0.0, %v2073
        %v2075 = vpop.f32.mrb[0].mxu0
        %v2076 = vadd.f32 0.0, %v2075
        %2077 = vmatprep.mubr.f32.mxu0 0.0
        %2078 = vmatmul.mubr.f32.gmra.mrb[0].mxu0 %v1702
        %v2079 = vpop.f32.mrb[0].mxu0
        %v2080 = vpop.f32.mrb[0].mxu0
        %2081 = vmatprep.mubr.f32.mxu0 0.0
        %2082 = vmatmul.mubr.f32.gmra.mrb[0].mxu0 %v1705
        %v2083 = vpop.f32.mrb[0].mxu0
        %v2084 = vpop.f32.mrb[0].mxu0
        %2085 = vmatprep.mubr.f32.mxu0 0.0
        %2086 = vmatmul.mubr.f32.gmra.mrb[0].mxu0 %v1708
        %v2087 = vpop.f32.mrb[0].mxu0
        %v2088 = vpop.f32.mrb[0].mxu0
        %2089 = vdwg.mxu0
        %2090 = vmatprep.subr.mxu0 %v1671
        %2091 = vmatpush1.msra.mxu0 %v1670
        %2092 = vmatprep.subr.mxu0 %v1684
        %2093 = vmatpush1.msra.mxu0 %v1683
        %2094 = vmatprep.subr.mxu0 0.0
        %2095 = vmatpush1.msra.mxu0 0.0
        %2096 = vmatprep.subr.mxu0 0.0
        %2097 = vmatpush1.msra.mxu0 0.0
        %2098 = vmatprep.subr.mxu0 0.0
        %2099 = vmatpush1.msra.mxu0 0.0
        %2100 = vmatprep.subr.mxu0 0.0
        %2101 = vmatpush1.msra.mxu0 0.0
        %2102 = vmatprep.subr.mxu0 0.0
        %2103 = vmatpush1.msra.mxu0 0.0
        %2104 = vmatprep.subr.mxu0 0.0
        %2105 = vmatpush1.msra.mxu0 0.0
        %2106 = vmatprep.subr.mxu0 0.0
        %2107 = vmatpush1.msra.mxu0 0.0
        %2108 = vmatprep.subr.mxu0 0.0
        %2109 = vmatpush1.msra.mxu0 0.0
        %2110 = vmatprep.subr.mxu0 0.0
        %2111 = vmatpush1.msra.mxu0 0.0
        %2112 = vmatprep.subr.mxu0 0.0
        %2113 = vmatpush1.msra.mxu0 0.0
        %2114 = vmatprep.subr.mxu0 0.0
        %2115 = vmatpush1.msra.mxu0 0.0
        %2116 = vmatprep.subr.mxu0 0.0
        %2117 = vmatpush1.msra.mxu0 0.0
        %2118 = vmatprep.subr.mxu0 0.0
        %2119 = vmatpush1.msra.mxu0 0.0
        %2120 = vmatprep.subr.mxu0 0.0
        %2121 = vmatpush1.msra.mxu0 0.0
        %2122 = vmatprep.subr.mxu0 0.0
        %2123 = vmatpush1.msra.mxu0 0.0
        %2124 = vmatprep.subr.mxu0 0.0
        %2125 = vmatpush1.msra.mxu0 0.0
        %2126 = vmatprep.subr.mxu0 0.0
        %2127 = vmatpush1.msra.mxu0 0.0
        %2128 = vmatprep.subr.mxu0 0.0
        %2129 = vmatpush1.msra.mxu0 0.0
        %2130 = vmatprep.subr.mxu0 0.0
        %2131 = vmatpush1.msra.mxu0 0.0
        %2132 = vmatprep.subr.mxu0 0.0
        %2133 = vmatpush1.msra.mxu0 0.0
        %2134 = vmatprep.subr.mxu0 0.0
        %2135 = vmatpush1.msra.mxu0 0.0
        %2136 = vmatprep.subr.mxu0 0.0
        %2137 = vmatpush1.msra.mxu0 0.0
        %2138 = vmatprep.subr.mxu0 0.0
        %2139 = vmatpush1.msra.mxu0 0.0
        %2140 = vmatprep.subr.mxu0 0.0
        %2141 = vmatpush1.msra.mxu0 0.0
        %2142 = vmatprep.subr.mxu0 0.0
        %2143 = vmatpush1.msra.mxu0 0.0
        %2144 = vmatprep.subr.mxu0 0.0
        %2145 = vmatpush1.msra.mxu0 0.0
        %2146 = vmatprep.subr.mxu0 0.0
        %2147 = vmatpush1.msra.mxu0 0.0
        %2148 = vmatprep.subr.mxu0 0.0
        %2149 = vmatpush1.msra.mxu0 0.0
        %2150 = vmatprep.subr.mxu0 0.0
        %2151 = vmatpush1.msra.mxu0 0.0
        %2152 = vmatprep.subr.mxu0 0.0
        %2153 = vmatpush1.msra.mxu0 0.0
        %2154 = vmatprep.mubr.f32.mxu0 0.0
        %2155 = vmatmul.mubr.f32.gmra.mrb[0].mxu0 %v1690
        %v2156 = vpop.f32.mrb[0].mxu0
        %v2157 = vpop.f32.mrb[0].mxu0
        %2158 = vmatprep.mubr.f32.mxu0 0.0
        %2159 = vmatmul.mubr.f32.gmra.mrb[0].mxu0 %v1693
        %v2160 = vpop.f32.mrb[0].mxu0
        %v2161 = vpop.f32.mrb[0].mxu0
        %2162 = vmatprep.mubr.f32.mxu0 0.0
        %2163 = vmatmul.mubr.f32.gmra.mrb[0].mxu0 %v1696
        %v2164 = vpop.f32.mrb[0].mxu0
        %v2165 = vpop.f32.mrb[0].mxu0
        %2166 = vmatprep.mubr.f32.mxu0 0.0
        %2167 = vmatmul.mubr.f32.gmra.mrb[0].mxu0 %v1699
        %v2168 = vpop.f32.mrb[0].mxu0
        %v2169 = vpop.f32.mrb[0].mxu0
        %2170 = vmatprep.mubr.f32.mxu0 0.0
        %2171 = vmatmul.mubr.f32.gmra.mrb[0].mxu0 %v1702
        %v2172 = vpop.f32.mrb[0].mxu0
        %v2173 = vadd.f32 0.0, %v2172
        %v2174 = vpop.f32.mrb[0].mxu0
        %v2175 = vadd.f32 0.0, %v2174
        %2176 = vmatprep.mubr.f32.mxu0 0.0
        %2177 = vmatmul.mubr.f32.gmra.mrb[0].mxu0 %v1705
        %v2178 = vpop.f32.mrb[0].mxu0
        %v2179 = vpop.f32.mrb[0].mxu0
        %2180 = vmatprep.mubr.f32.mxu0 0.0
        %2181 = vmatmul.mubr.f32.gmra.mrb[0].mxu0 %v1708
        %v2182 = vpop.f32.mrb[0].mxu0
        %v2183 = vpop.f32.mrb[0].mxu0
        %2184 = vdwg.mxu0
        %2185 = vmatprep.subr.mxu0 %v1673
        %2186 = vmatpush1.msra.mxu0 %v1672
        %2187 = vmatprep.subr.mxu0 %v1686
        %2188 = vmatpush1.msra.mxu0 %v1685
        %2189 = vmatprep.subr.mxu0 0.0
        %2190 = vmatpush1.msra.mxu0 0.0
        %2191 = vmatprep.subr.mxu0 0.0
        %2192 = vmatpush1.msra.mxu0 0.0
        %2193 = vmatprep.subr.mxu0 0.0
        %2194 = vmatpush1.msra.mxu0 0.0
        %2195 = vmatprep.subr.mxu0 0.0
        %2196 = vmatpush1.msra.mxu0 0.0
        %2197 = vmatprep.subr.mxu0 0.0
        %2198 = vmatpush1.msra.mxu0 0.0
        %2199 = vmatprep.subr.mxu0 0.0
        %2200 = vmatpush1.msra.mxu0 0.0
        %2201 = vmatprep.subr.mxu0 0.0
        %2202 = vmatpush1.msra.mxu0 0.0
        %2203 = vmatprep.subr.mxu0 0.0
        %2204 = vmatpush1.msra.mxu0 0.0
        %2205 = vmatprep.subr.mxu0 0.0
        %2206 = vmatpush1.msra.mxu0 0.0
        %2207 = vmatprep.subr.mxu0 0.0
        %2208 = vmatpush1.msra.mxu0 0.0
        %2209 = vmatprep.subr.mxu0 0.0
        %2210 = vmatpush1.msra.mxu0 0.0
        %2211 = vmatprep.subr.mxu0 0.0
        %2212 = vmatpush1.msra.mxu0 0.0
        %2213 = vmatprep.subr.mxu0 0.0
        %2214 = vmatpush1.msra.mxu0 0.0
        %2215 = vmatprep.subr.mxu0 0.0
        %2216 = vmatpush1.msra.mxu0 0.0
        %2217 = vmatprep.subr.mxu0 0.0
        %2218 = vmatpush1.msra.mxu0 0.0
        %2219 = vmatprep.subr.mxu0 0.0
        %2220 = vmatpush1.msra.mxu0 0.0
        %2221 = vmatprep.subr.mxu0 0.0
        %2222 = vmatpush1.msra.mxu0 0.0
        %2223 = vmatprep.subr.mxu0 0.0
        %2224 = vmatpush1.msra.mxu0 0.0
        %2225 = vmatprep.subr.mxu0 0.0
        %2226 = vmatpush1.msra.mxu0 0.0
        %2227 = vmatprep.subr.mxu0 0.0
        %2228 = vmatpush1.msra.mxu0 0.0
        %2229 = vmatprep.subr.mxu0 0.0
        %2230 = vmatpush1.msra.mxu0 0.0
        %2231 = vmatprep.subr.mxu0 0.0
        %2232 = vmatpush1.msra.mxu0 0.0
        %2233 = vmatprep.subr.mxu0 0.0
        %2234 = vmatpush1.msra.mxu0 0.0
        %2235 = vmatprep.subr.mxu0 0.0
        %2236 = vmatpush1.msra.mxu0 0.0
        %2237 = vmatprep.subr.mxu0 0.0
        %2238 = vmatpush1.msra.mxu0 0.0
        %2239 = vmatprep.subr.mxu0 0.0
        %2240 = vmatpush1.msra.mxu0 0.0
        %2241 = vmatprep.subr.mxu0 0.0
        %2242 = vmatpush1.msra.mxu0 0.0
        %2243 = vmatprep.subr.mxu0 0.0
        %2244 = vmatpush1.msra.mxu0 0.0
        %2245 = vmatprep.subr.mxu0 0.0
        %2246 = vmatpush1.msra.mxu0 0.0
        %2247 = vmatprep.subr.mxu0 0.0
        %2248 = vmatpush1.msra.mxu0 0.0
        %2249 = vmatprep.mubr.f32.mxu0 0.0
        %2250 = vmatmul.mubr.f32.gmra.mrb[0].mxu0 %v1690
        %v2251 = vpop.f32.mrb[0].mxu0
        %v2252 = vpop.f32.mrb[0].mxu0
        %2253 = vmatprep.mubr.f32.mxu0 0.0
        %2254 = vmatmul.mubr.f32.gmra.mrb[0].mxu0 %v1693
        %v2255 = vpop.f32.mrb[0].mxu0
        %v2256 = vpop.f32.mrb[0].mxu0
        %2257 = vmatprep.mubr.f32.mxu0 0.0
        %2258 = vmatmul.mubr.f32.gmra.mrb[0].mxu0 %v1696
        %v2259 = vpop.f32.mrb[0].mxu0
        %v2260 = vpop.f32.mrb[0].mxu0
        %2261 = vmatprep.mubr.f32.mxu0 0.0
        %2262 = vmatmul.mubr.f32.gmra.mrb[0].mxu0 %v1699
        %v2263 = vpop.f32.mrb[0].mxu0
        %v2264 = vpop.f32.mrb[0].mxu0
        %2265 = vmatprep.mubr.f32.mxu0 0.0
        %2266 = vmatmul.mubr.f32.gmra.mrb[0].mxu0 %v1702
        %v2267 = vpop.f32.mrb[0].mxu0
        %v2268 = vpop.f32.mrb[0].mxu0
        %2269 = vmatprep.mubr.f32.mxu0 0.0
        %2270 = vmatmul.mubr.f32.gmra.mrb[0].mxu0 %v1705
        %v2271 = vpop.f32.mrb[0].mxu0
        %v2272 = vadd.f32 0.0, %v2271
        %v2273 = vpop.f32.mrb[0].mxu0
        %v2274 = vadd.f32 0.0, %v2273
        %2275 = vmatprep.mubr.f32.mxu0 0.0
        %2276 = vmatmul.mubr.f32.gmra.mrb[0].mxu0 %v1708
        %v2277 = vpop.f32.mrb[0].mxu0
        %v2278 = vpop.f32.mrb[0].mxu0
        %2279 = vdwg.mxu0
        %2280 = vmatprep.subr.mxu0 0.0
        %2281 = vmatpush1.msra.mxu0 %v1674
        %2282 = vmatprep.subr.mxu0 0.0
        %2283 = vmatpush1.msra.mxu0 %v1687
        %2284 = vmatprep.subr.mxu0 0.0
        %2285 = vmatpush1.msra.mxu0 0.0
        %2286 = vmatprep.subr.mxu0 0.0
        %2287 = vmatpush1.msra.mxu0 0.0
        %2288 = vmatprep.subr.mxu0 0.0
        %2289 = vmatpush1.msra.mxu0 0.0
        %2290 = vmatprep.subr.mxu0 0.0
        %2291 = vmatpush1.msra.mxu0 0.0
        %2292 = vmatprep.subr.mxu0 0.0
        %2293 = vmatpush1.msra.mxu0 0.0
        %2294 = vmatprep.subr.mxu0 0.0
        %2295 = vmatpush1.msra.mxu0 0.0
        %2296 = vmatprep.subr.mxu0 0.0
        %2297 = vmatpush1.msra.mxu0 0.0
        %2298 = vmatprep.subr.mxu0 0.0
        %2299 = vmatpush1.msra.mxu0 0.0
        %2300 = vmatprep.subr.mxu0 0.0
        %2301 = vmatpush1.msra.mxu0 0.0
        %2302 = vmatprep.subr.mxu0 0.0
        %2303 = vmatpush1.msra.mxu0 0.0
        %2304 = vmatprep.subr.mxu0 0.0
        %2305 = vmatpush1.msra.mxu0 0.0
        %2306 = vmatprep.subr.mxu0 0.0
        %2307 = vmatpush1.msra.mxu0 0.0
        %2308 = vmatprep.subr.mxu0 0.0
        %2309 = vmatpush1.msra.mxu0 0.0
        %2310 = vmatprep.subr.mxu0 0.0
        %2311 = vmatpush1.msra.mxu0 0.0
        %2312 = vmatprep.subr.mxu0 0.0
        %2313 = vmatpush1.msra.mxu0 0.0
        %2314 = vmatprep.subr.mxu0 0.0
        %2315 = vmatpush1.msra.mxu0 0.0
        %2316 = vmatprep.subr.mxu0 0.0
        %2317 = vmatpush1.msra.mxu0 0.0
        %2318 = vmatprep.subr.mxu0 0.0
        %2319 = vmatpush1.msra.mxu0 0.0
        %2320 = vmatprep.subr.mxu0 0.0
        %2321 = vmatpush1.msra.mxu0 0.0
        %2322 = vmatprep.subr.mxu0 0.0
        %2323 = vmatpush1.msra.mxu0 0.0
        %2324 = vmatprep.subr.mxu0 0.0
        %2325 = vmatpush1.msra.mxu0 0.0
        %2326 = vmatprep.subr.mxu0 0.0
        %2327 = vmatpush1.msra.mxu0 0.0
        %2328 = vmatprep.subr.mxu0 0.0
        %2329 = vmatpush1.msra.mxu0 0.0
        %2330 = vmatprep.subr.mxu0 0.0
        %2331 = vmatpush1.msra.mxu0 0.0
        %2332 = vmatprep.subr.mxu0 0.0
        %2333 = vmatpush1.msra.mxu0 0.0
        %2334 = vmatprep.subr.mxu0 0.0
        %2335 = vmatpush1.msra.mxu0 0.0
        %2336 = vmatprep.subr.mxu0 0.0
        %2337 = vmatpush1.msra.mxu0 0.0
        %2338 = vmatprep.subr.mxu0 0.0
        %2339 = vmatpush1.msra.mxu0 0.0
        %2340 = vmatprep.subr.mxu0 0.0
        %2341 = vmatpush1.msra.mxu0 0.0
        %2342 = vmatprep.subr.mxu0 0.0
        %2343 = vmatpush1.msra.mxu0 0.0
        %2344 = vmatprep.mubr.f32.mxu0 0.0
        %2345 = vmatmul.mubr.f32.gmra.mrb[0].mxu0 %v1690
        %v2346 = vpop.f32.mrb[0].mxu0
        %v2347 = vpop.f32.mrb[0].mxu0
        %2348 = vmatprep.mubr.f32.mxu0 0.0
        %2349 = vmatmul.mubr.f32.gmra.mrb[0].mxu0 %v1693
        %v2350 = vpop.f32.mrb[0].mxu0
        %v2351 = vpop.f32.mrb[0].mxu0
        %2352 = vmatprep.mubr.f32.mxu0 0.0
        %2353 = vmatmul.mubr.f32.gmra.mrb[0].mxu0 %v1696
        %v2354 = vpop.f32.mrb[0].mxu0
        %v2355 = vpop.f32.mrb[0].mxu0
        %2356 = vmatprep.mubr.f32.mxu0 0.0
        %2357 = vmatmul.mubr.f32.gmra.mrb[0].mxu0 %v1699
        %v2358 = vpop.f32.mrb[0].mxu0
        %v2359 = vpop.f32.mrb[0].mxu0
        %2360 = vmatprep.mubr.f32.mxu0 0.0
        %2361 = vmatmul.mubr.f32.gmra.mrb[0].mxu0 %v1702
        %v2362 = vpop.f32.mrb[0].mxu0
        %v2363 = vpop.f32.mrb[0].mxu0
        %2364 = vmatprep.mubr.f32.mxu0 0.0
        %2365 = vmatmul.mubr.f32.gmra.mrb[0].mxu0 %v1705
        %v2366 = vpop.f32.mrb[0].mxu0
        %v2367 = vpop.f32.mrb[0].mxu0
        %2368 = vmatprep.mubr.f32.mxu0 0.0
        %2369 = vmatmul.mubr.f32.gmra.mrb[0].mxu0 %v1708
        %v2370 = vpop.f32.mrb[0].mxu0
        %v2371 = vadd.f32 0.0, %v2370
        %v2372 = vpop.f32.mrb[0].mxu0
        %2373 = vdwg.mxu0
        %v2374 = vld [vmem:[%s4] sm:$0x1]
        %v2375 = vadd.f32 %v2374, %v1777
        %v2378 = vunpack.c.l.s4 1966171168
        %v2379 = vunpack.c.0.s8 %v2378
        %v2380 = vlaneseq
        %v2381 = vshrl.u32 %v2380, 7
        %v2382 = vsub.s32 %v2379, %v2381
        %v2383 = vrot.slane %v1777, %v2382
        %v2384 = vcombine.high %v2383, %v2383
        %v2386 = vunpack.c.l.s4 1966171168
        %v2387 = vunpack.c.0.s8 %v2386
        %v2388 = vlaneseq
        %v2389 = vshrl.u32 %v2388, 7
        %v2390 = vsub.s32 %v2387, %v2389
        %v2391 = vrot.slane %v2383, %v2390
        %v2393 = vunpack.c.l.s4 1966171168
        %v2394 = vunpack.c.0.s8 %v2393
        %v2395 = vlaneseq
        %v2396 = vshrl.u32 %v2395, 7
        %v2397 = vsub.s32 %v2394, %v2396
        %v2398 = vrot.slane %v2384, %v2397
        %2399 = vrot.lane.b32.xlu0 %v2398, 96
        %v2400 = vpop.permute.xlu0 %2399
        %v2402 = vadd.f32 %v2375, %v2400
        %v2403 = vcombine.high %v2391, %v2391
        %2404 = vrot.lane.b32.xlu0 %v2403, 64
        %v2405 = vpop.permute.xlu0 %2404
        %v2407 = vadd.f32 %v2402, %v2405
        %v2408 = vcombine.high %v2398, %v2398
        %2409 = vrot.lane.b32.xlu0 %v2408, 32
        %v2410 = vpop.permute.xlu0 %2409
        %v2412 = vadd.f32 %v2407, %v2410
        %v2414 = vcombine.high %v1779, %v1779
        %v2416 = vunpack.c.l.s4 1966171168
        %v2417 = vunpack.c.0.s8 %v2416
        %v2418 = vlaneseq
        %v2419 = vshrl.u32 %v2418, 7
        %v2420 = vsub.s32 %v2417, %v2419
        %v2421 = vrot.slane %v2414, %v2420
        %v2423 = vunpack.c.l.s4 1966171168
        %v2424 = vunpack.c.0.s8 %v2423
        %v2425 = vlaneseq
        %v2426 = vshrl.u32 %v2425, 7
        %v2427 = vsub.s32 %v2424, %v2426
        %v2428 = vrot.slane %v2421, %v2427
        %v2430 = vadd.f32 %v2412, %v2428
        %v2431 = vcombine.high %v2421, %v2421
        %v2433 = vunpack.c.l.s4 1966171168
        %v2434 = vunpack.c.0.s8 %v2433
        %v2435 = vlaneseq
        %v2436 = vshrl.u32 %v2435, 7
        %v2437 = vsub.s32 %v2434, %v2436
        %v2438 = vrot.slane %v2431, %v2437
        %2439 = vrot.lane.b32.xlu0 %v2438, 96
        %v2440 = vpop.permute.xlu0 %2439
        %v2442 = vadd.f32 %v2430, %v2440
        %v2443 = vcombine.high %v2428, %v2428
        %2444 = vrot.lane.b32.xlu0 %v2443, 64
        %v2445 = vpop.permute.xlu0 %2444
        %v2447 = vadd.f32 %v2442, %v2445
        %v2448 = vcombine.high %v2438, %v2438
        %2449 = vrot.lane.b32.xlu0 %v2448, 32
        %v2450 = vpop.permute.xlu0 %2449
        %v2452 = vadd.f32 %v2447, %v2450
        %v2453 = vadd.f32 %v2452, %v1876
        %v2456 = vunpack.c.l.s4 1966171168
        %v2457 = vunpack.c.0.s8 %v2456
        %v2458 = vlaneseq
        %v2459 = vshrl.u32 %v2458, 7
        %v2460 = vsub.s32 %v2457, %v2459
        %v2461 = vrot.slane %v1876, %v2460
        %v2462 = vcombine.high %v2461, %v2461
        %v2464 = vunpack.c.l.s4 1966171168
        %v2465 = vunpack.c.0.s8 %v2464
        %v2466 = vlaneseq
        %v2467 = vshrl.u32 %v2466, 7
        %v2468 = vsub.s32 %v2465, %v2467
        %v2469 = vrot.slane %v2461, %v2468
        %v2471 = vunpack.c.l.s4 1966171168
        %v2472 = vunpack.c.0.s8 %v2471
        %v2473 = vlaneseq
        %v2474 = vshrl.u32 %v2473, 7
        %v2475 = vsub.s32 %v2472, %v2474
        %v2476 = vrot.slane %v2462, %v2475
        %2477 = vrot.lane.b32.xlu0 %v2476, 96
        %v2478 = vpop.permute.xlu0 %2477
        %v2480 = vadd.f32 %v2453, %v2478
        %v2481 = vcombine.high %v2469, %v2469
        %2482 = vrot.lane.b32.xlu0 %v2481, 64
        %v2483 = vpop.permute.xlu0 %2482
        %v2485 = vadd.f32 %v2480, %v2483
        %v2486 = vcombine.high %v2476, %v2476
        %2487 = vrot.lane.b32.xlu0 %v2486, 32
        %v2488 = vpop.permute.xlu0 %2487
        %v2490 = vadd.f32 %v2485, %v2488
        %v2492 = vcombine.high %v1878, %v1878
        %v2494 = vunpack.c.l.s4 1966171168
        %v2495 = vunpack.c.0.s8 %v2494
        %v2496 = vlaneseq
        %v2497 = vshrl.u32 %v2496, 7
        %v2498 = vsub.s32 %v2495, %v2497
        %v2499 = vrot.slane %v2492, %v2498
        %v2501 = vunpack.c.l.s4 1966171168
        %v2502 = vunpack.c.0.s8 %v2501
        %v2503 = vlaneseq
        %v2504 = vshrl.u32 %v2503, 7
        %v2505 = vsub.s32 %v2502, %v2504
        %v2506 = vrot.slane %v2499, %v2505
        %v2508 = vadd.f32 %v2490, %v2506
        %v2509 = vcombine.high %v2499, %v2499
        %v2511 = vunpack.c.l.s4 1966171168
        %v2512 = vunpack.c.0.s8 %v2511
        %v2513 = vlaneseq
        %v2514 = vshrl.u32 %v2513, 7
        %v2515 = vsub.s32 %v2512, %v2514
        %v2516 = vrot.slane %v2509, %v2515
        %2517 = vrot.lane.b32.xlu0 %v2516, 96
        %v2518 = vpop.permute.xlu0 %2517
        %v2520 = vadd.f32 %v2508, %v2518
        %v2521 = vcombine.high %v2506, %v2506
        %2522 = vrot.lane.b32.xlu0 %v2521, 64
        %v2523 = vpop.permute.xlu0 %2522
        %v2525 = vadd.f32 %v2520, %v2523
        %v2526 = vcombine.high %v2516, %v2516
        %2527 = vrot.lane.b32.xlu0 %v2526, 32
        %v2528 = vpop.permute.xlu0 %2527
        %v2530 = vadd.f32 %v2525, %v2528
        %v2531 = vadd.f32 %v2530, %v1975
        %v2534 = vunpack.c.l.s4 1966171168
        %v2535 = vunpack.c.0.s8 %v2534
        %v2536 = vlaneseq
        %v2537 = vshrl.u32 %v2536, 7
        %v2538 = vsub.s32 %v2535, %v2537
        %v2539 = vrot.slane %v1975, %v2538
        %v2540 = vcombine.high %v2539, %v2539
        %v2542 = vunpack.c.l.s4 1966171168
        %v2543 = vunpack.c.0.s8 %v2542
        %v2544 = vlaneseq
        %v2545 = vshrl.u32 %v2544, 7
        %v2546 = vsub.s32 %v2543, %v2545
        %v2547 = vrot.slane %v2539, %v2546
        %v2549 = vunpack.c.l.s4 1966171168
        %v2550 = vunpack.c.0.s8 %v2549
        %v2551 = vlaneseq
        %v2552 = vshrl.u32 %v2551, 7
        %v2553 = vsub.s32 %v2550, %v2552
        %v2554 = vrot.slane %v2540, %v2553
        %2555 = vrot.lane.b32.xlu0 %v2554, 96
        %v2556 = vpop.permute.xlu0 %2555
        %v2558 = vadd.f32 %v2531, %v2556
        %v2559 = vcombine.high %v2547, %v2547
        %2560 = vrot.lane.b32.xlu0 %v2559, 64
        %v2561 = vpop.permute.xlu0 %2560
        %v2563 = vadd.f32 %v2558, %v2561
        %v2564 = vcombine.high %v2554, %v2554
        %2565 = vrot.lane.b32.xlu0 %v2564, 32
        %v2566 = vpop.permute.xlu0 %2565
        %v2568 = vadd.f32 %v2563, %v2566
        %v2570 = vcombine.high %v1977, %v1977
        %v2572 = vunpack.c.l.s4 1966171168
        %v2573 = vunpack.c.0.s8 %v2572
        %v2574 = vlaneseq
        %v2575 = vshrl.u32 %v2574, 7
        %v2576 = vsub.s32 %v2573, %v2575
        %v2577 = vrot.slane %v2570, %v2576
        %v2579 = vunpack.c.l.s4 1966171168
        %v2580 = vunpack.c.0.s8 %v2579
        %v2581 = vlaneseq
        %v2582 = vshrl.u32 %v2581, 7
        %v2583 = vsub.s32 %v2580, %v2582
        %v2584 = vrot.slane %v2577, %v2583
        %v2586 = vadd.f32 %v2568, %v2584
        %v2587 = vcombine.high %v2577, %v2577
        %v2589 = vunpack.c.l.s4 1966171168
        %v2590 = vunpack.c.0.s8 %v2589
        %v2591 = vlaneseq
        %v2592 = vshrl.u32 %v2591, 7
        %v2593 = vsub.s32 %v2590, %v2592
        %v2594 = vrot.slane %v2587, %v2593
        %2595 = vrot.lane.b32.xlu0 %v2594, 96
        %v2596 = vpop.permute.xlu0 %2595
        %v2598 = vadd.f32 %v2586, %v2596
        %v2599 = vcombine.high %v2584, %v2584
        %2600 = vrot.lane.b32.xlu0 %v2599, 64
        %v2601 = vpop.permute.xlu0 %2600
        %v2603 = vadd.f32 %v2598, %v2601
        %v2604 = vcombine.high %v2594, %v2594
        %2605 = vrot.lane.b32.xlu0 %v2604, 32
        %v2606 = vpop.permute.xlu0 %2605
        %v2608 = vadd.f32 %v2603, %v2606
        %v2609 = vadd.f32 %v2608, %v2074
        %v2612 = vunpack.c.l.s4 1966171168
        %v2613 = vunpack.c.0.s8 %v2612
        %v2614 = vlaneseq
        %v2615 = vshrl.u32 %v2614, 7
        %v2616 = vsub.s32 %v2613, %v2615
        %v2617 = vrot.slane %v2074, %v2616
        %v2618 = vcombine.high %v2617, %v2617
        %v2620 = vunpack.c.l.s4 1966171168
        %v2621 = vunpack.c.0.s8 %v2620
        %v2622 = vlaneseq
        %v2623 = vshrl.u32 %v2622, 7
        %v2624 = vsub.s32 %v2621, %v2623
        %v2625 = vrot.slane %v2617, %v2624
        %v2627 = vunpack.c.l.s4 1966171168
        %v2628 = vunpack.c.0.s8 %v2627
        %v2629 = vlaneseq
        %v2630 = vshrl.u32 %v2629, 7
        %v2631 = vsub.s32 %v2628, %v2630
        %v2632 = vrot.slane %v2618, %v2631
        %2633 = vrot.lane.b32.xlu0 %v2632, 96
        %v2634 = vpop.permute.xlu0 %2633
        %v2636 = vadd.f32 %v2609, %v2634
        %v2637 = vcombine.high %v2625, %v2625
        %2638 = vrot.lane.b32.xlu0 %v2637, 64
        %v2639 = vpop.permute.xlu0 %2638
        %v2641 = vadd.f32 %v2636, %v2639
        %v2642 = vcombine.high %v2632, %v2632
        %2643 = vrot.lane.b32.xlu0 %v2642, 32
        %v2644 = vpop.permute.xlu0 %2643
        %v2646 = vadd.f32 %v2641, %v2644
        %v2648 = vcombine.high %v2076, %v2076
        %v2650 = vunpack.c.l.s4 1966171168
        %v2651 = vunpack.c.0.s8 %v2650
        %v2652 = vlaneseq
        %v2653 = vshrl.u32 %v2652, 7
        %v2654 = vsub.s32 %v2651, %v2653
        %v2655 = vrot.slane %v2648, %v2654
        %v2657 = vunpack.c.l.s4 1966171168
        %v2658 = vunpack.c.0.s8 %v2657
        %v2659 = vlaneseq
        %v2660 = vshrl.u32 %v2659, 7
        %v2661 = vsub.s32 %v2658, %v2660
        %v2662 = vrot.slane %v2655, %v2661
        %v2664 = vadd.f32 %v2646, %v2662
        %v2665 = vcombine.high %v2655, %v2655
        %v2667 = vunpack.c.l.s4 1966171168
        %v2668 = vunpack.c.0.s8 %v2667
        %v2669 = vlaneseq
        %v2670 = vshrl.u32 %v2669, 7
        %v2671 = vsub.s32 %v2668, %v2670
        %v2672 = vrot.slane %v2665, %v2671
        %2673 = vrot.lane.b32.xlu0 %v2672, 96
        %v2674 = vpop.permute.xlu0 %2673
        %v2676 = vadd.f32 %v2664, %v2674
        %v2677 = vcombine.high %v2662, %v2662
        %2678 = vrot.lane.b32.xlu0 %v2677, 64
        %v2679 = vpop.permute.xlu0 %2678
        %v2681 = vadd.f32 %v2676, %v2679
        %v2682 = vcombine.high %v2672, %v2672
        %2683 = vrot.lane.b32.xlu0 %v2682, 32
        %v2684 = vpop.permute.xlu0 %2683
        %v2686 = vadd.f32 %v2681, %v2684
        %v2687 = vadd.f32 %v2686, %v2173
        %v2690 = vunpack.c.l.s4 1966171168
        %v2691 = vunpack.c.0.s8 %v2690
        %v2692 = vlaneseq
        %v2693 = vshrl.u32 %v2692, 7
        %v2694 = vsub.s32 %v2691, %v2693
        %v2695 = vrot.slane %v2173, %v2694
        %v2696 = vcombine.high %v2695, %v2695
        %v2698 = vunpack.c.l.s4 1966171168
        %v2699 = vunpack.c.0.s8 %v2698
        %v2700 = vlaneseq
        %v2701 = vshrl.u32 %v2700, 7
        %v2702 = vsub.s32 %v2699, %v2701
        %v2703 = vrot.slane %v2695, %v2702
        %v2705 = vunpack.c.l.s4 1966171168
        %v2706 = vunpack.c.0.s8 %v2705
        %v2707 = vlaneseq
        %v2708 = vshrl.u32 %v2707, 7
        %v2709 = vsub.s32 %v2706, %v2708
        %v2710 = vrot.slane %v2696, %v2709
        %2711 = vrot.lane.b32.xlu0 %v2710, 96
        %v2712 = vpop.permute.xlu0 %2711
        %v2714 = vadd.f32 %v2687, %v2712
        %v2715 = vcombine.high %v2703, %v2703
        %2716 = vrot.lane.b32.xlu0 %v2715, 64
        %v2717 = vpop.permute.xlu0 %2716
        %v2719 = vadd.f32 %v2714, %v2717
        %v2720 = vcombine.high %v2710, %v2710
        %2721 = vrot.lane.b32.xlu0 %v2720, 32
        %v2722 = vpop.permute.xlu0 %2721
        %v2724 = vadd.f32 %v2719, %v2722
        %v2726 = vcombine.high %v2175, %v2175
        %v2728 = vunpack.c.l.s4 1966171168
        %v2729 = vunpack.c.0.s8 %v2728
        %v2730 = vlaneseq
        %v2731 = vshrl.u32 %v2730, 7
        %v2732 = vsub.s32 %v2729, %v2731
        %v2733 = vrot.slane %v2726, %v2732
        %v2735 = vunpack.c.l.s4 1966171168
        %v2736 = vunpack.c.0.s8 %v2735
        %v2737 = vlaneseq
        %v2738 = vshrl.u32 %v2737, 7
        %v2739 = vsub.s32 %v2736, %v2738
        %v2740 = vrot.slane %v2733, %v2739
        %v2742 = vadd.f32 %v2724, %v2740
        %v2743 = vcombine.high %v2733, %v2733
        %v2745 = vunpack.c.l.s4 1966171168
        %v2746 = vunpack.c.0.s8 %v2745
        %v2747 = vlaneseq
        %v2748 = vshrl.u32 %v2747, 7
        %v2749 = vsub.s32 %v2746, %v2748
        %v2750 = vrot.slane %v2743, %v2749
        %2751 = vrot.lane.b32.xlu0 %v2750, 96
        %v2752 = vpop.permute.xlu0 %2751
        %v2754 = vadd.f32 %v2742, %v2752
        %v2755 = vcombine.high %v2740, %v2740
        %2756 = vrot.lane.b32.xlu0 %v2755, 64
        %v2757 = vpop.permute.xlu0 %2756
        %v2759 = vadd.f32 %v2754, %v2757
        %v2760 = vcombine.high %v2750, %v2750
        %2761 = vrot.lane.b32.xlu0 %v2760, 32
        %v2762 = vpop.permute.xlu0 %2761
        %v2764 = vadd.f32 %v2759, %v2762
        %v2765 = vadd.f32 %v2764, %v2272
        %v2768 = vunpack.c.l.s4 1966171168
        %v2769 = vunpack.c.0.s8 %v2768
        %v2770 = vlaneseq
        %v2771 = vshrl.u32 %v2770, 7
        %v2772 = vsub.s32 %v2769, %v2771
        %v2773 = vrot.slane %v2272, %v2772
        %v2774 = vcombine.high %v2773, %v2773
        %v2776 = vunpack.c.l.s4 1966171168
        %v2777 = vunpack.c.0.s8 %v2776
        %v2778 = vlaneseq
        %v2779 = vshrl.u32 %v2778, 7
        %v2780 = vsub.s32 %v2777, %v2779
        %v2781 = vrot.slane %v2773, %v2780
        %v2783 = vunpack.c.l.s4 1966171168
        %v2784 = vunpack.c.0.s8 %v2783
        %v2785 = vlaneseq
        %v2786 = vshrl.u32 %v2785, 7
        %v2787 = vsub.s32 %v2784, %v2786
        %v2788 = vrot.slane %v2774, %v2787
        %2789 = vrot.lane.b32.xlu0 %v2788, 96
        %v2790 = vpop.permute.xlu0 %2789
        %v2792 = vadd.f32 %v2765, %v2790
        %v2793 = vcombine.high %v2781, %v2781
        %2794 = vrot.lane.b32.xlu0 %v2793, 64
        %v2795 = vpop.permute.xlu0 %2794
        %v2797 = vadd.f32 %v2792, %v2795
        %v2798 = vcombine.high %v2788, %v2788
        %2799 = vrot.lane.b32.xlu0 %v2798, 32
        %v2800 = vpop.permute.xlu0 %2799
        %v2802 = vadd.f32 %v2797, %v2800
        %v2804 = vcombine.high %v2274, %v2274
        %v2806 = vunpack.c.l.s4 1966171168
        %v2807 = vunpack.c.0.s8 %v2806
        %v2808 = vlaneseq
        %v2809 = vshrl.u32 %v2808, 7
        %v2810 = vsub.s32 %v2807, %v2809
        %v2811 = vrot.slane %v2804, %v2810
        %v2813 = vunpack.c.l.s4 1966171168
        %v2814 = vunpack.c.0.s8 %v2813
        %v2815 = vlaneseq
        %v2816 = vshrl.u32 %v2815, 7
        %v2817 = vsub.s32 %v2814, %v2816
        %v2818 = vrot.slane %v2811, %v2817
        %v2820 = vadd.f32 %v2802, %v2818
        %v2821 = vcombine.high %v2811, %v2811
        %v2823 = vunpack.c.l.s4 1966171168
        %v2824 = vunpack.c.0.s8 %v2823
        %v2825 = vlaneseq
        %v2826 = vshrl.u32 %v2825, 7
        %v2827 = vsub.s32 %v2824, %v2826
        %v2828 = vrot.slane %v2821, %v2827
        %2829 = vrot.lane.b32.xlu0 %v2828, 96
        %v2830 = vpop.permute.xlu0 %2829
        %v2832 = vadd.f32 %v2820, %v2830
        %v2833 = vcombine.high %v2818, %v2818
        %2834 = vrot.lane.b32.xlu0 %v2833, 64
        %v2835 = vpop.permute.xlu0 %2834
        %v2837 = vadd.f32 %v2832, %v2835
        %v2838 = vcombine.high %v2828, %v2828
        %2839 = vrot.lane.b32.xlu0 %v2838, 32
        %v2840 = vpop.permute.xlu0 %2839
        %v2842 = vadd.f32 %v2837, %v2840
        %v2843 = vadd.f32 %v2842, %v2371
        %v2846 = vunpack.c.l.s4 1966171168
        %v2847 = vunpack.c.0.s8 %v2846
        %v2848 = vlaneseq
        %v2849 = vshrl.u32 %v2848, 7
        %v2850 = vsub.s32 %v2847, %v2849
        %v2851 = vrot.slane %v2371, %v2850
        %v2852 = vcombine.high %v2851, %v2851
        %v2854 = vunpack.c.l.s4 1966171168
        %v2855 = vunpack.c.0.s8 %v2854
        %v2856 = vlaneseq
        %v2857 = vshrl.u32 %v2856, 7
        %v2858 = vsub.s32 %v2855, %v2857
        %v2859 = vrot.slane %v2851, %v2858
        %v2861 = vunpack.c.l.s4 1966171168
        %v2862 = vunpack.c.0.s8 %v2861
        %v2863 = vlaneseq
        %v2864 = vshrl.u32 %v2863, 7
        %v2865 = vsub.s32 %v2862, %v2864
        %v2866 = vrot.slane %v2852, %v2865
        %2867 = vrot.lane.b32.xlu0 %v2866, 96
        %v2868 = vpop.permute.xlu0 %2867
        %v2870 = vadd.f32 %v2843, %v2868
        %v2871 = vcombine.high %v2859, %v2859
        %2872 = vrot.lane.b32.xlu0 %v2871, 64
        %v2873 = vpop.permute.xlu0 %2872
        %v2875 = vadd.f32 %v2870, %v2873
        %v2876 = vcombine.high %v2866, %v2866
        %2877 = vrot.lane.b32.xlu0 %v2876, 32
        %v2878 = vpop.permute.xlu0 %2877
        %v2880 = vadd.f32 %v2875, %v2878
        %vm2881 = vcmask 253952
        %2882 = vst.msk [vmem:[%s216] sm:$0x1] %vm2881, %v2880
        %s2883 = sand.u32 %s137, 1
        %s2884 = scalar_lea.sflag [#allocation3], %s2883
        %s2885 = sand.u32 %s137, 1
        %s2886 = scalar_lea.vmem [#allocation2], %s2885
        // Predicated region
        $region41: #{stagernet_forward.3} parent=39 // pred_check
          %p2887 = pneg %p147
        $region42: #{stagernet_forward.3} parent=39 // pred_check_branch
          %2889 = sbr.rel (%p2887) target = $region44
        $region43: #{stagernet_forward.3} parent=39 // pred_region
          %s2891 = ssub.s32 16, 16
          %2892 = vsyncadd %s2884, %s2891
          %s2893 = smul.addr %s19, 16
          %s2894 = scalar_lea.hbm %s5, %s2893
          %s2896 = sshll.u32 %s2886, 4
          %s2897 = int_to_ptr.vmem [resolvable:$true] %s2896
          %2899 = dma.vmem_to_hbm [thread:$0]  %s2897, 16, %s2894, %s2884
        $region44: #{stagernet_forward.3} parent=39 // pred_fallthru
          _
      $region40: #{stagernet_forward.3} parent=5 // pred_fallthru
        _
      %p2900 = scmp.le.s32.totalorder 2, %s14
      // Predicated region
      $region45: #{stagernet_forward.3} parent=5 // pred_check
        %p2901 = pneg %p2900
      $region46: #{stagernet_forward.3} parent=5 // pred_check_branch
        %2903 = sbr.rel (%p2901) target = $region48
      $region47: #{stagernet_forward.3} parent=5 // pred_region
        %s2904 = ssub.s32 %s14, 2
        // Predicated region
        $region49: #{stagernet_forward.3} parent=47 // pred_check
          %p2905 = pneg %p153
        $region50: #{stagernet_forward.3} parent=47 // pred_check_branch
          %2907 = sbr.rel (%p2905) target = $region52
        $region51: #{stagernet_forward.3} parent=47 // pred_region
          %s2908 = sand.u32 %s138, 1
          %s2909 = scalar_lea.sflag [#allocation3], %s2908
          %s2910 = sand.u32 %s138, 1
          %s2911 = scalar_lea.vmem [#allocation2], %s2910
          %2912 = dma.done %s2909, 16
        $region52: #{stagernet_forward.3} parent=47 // pred_fallthru
          _
      $region48: #{stagernet_forward.3} parent=5 // pred_fallthru
        _
    $region6: #{stagernet_forward.3} parent=1 // loop_footer
      %s18 = sadd.s32 1, %s14
    $region7: #{stagernet_forward.3} parent=1 // loop_footer_branch
      %13 = sbr.rel target = $region3
    $region8: #{stagernet_forward.3} parent=1 // loop_exit
      _
    %2913 = vsyncpa [#allocation3], 1
    %s2914 = scalar_lea.sflag [#allocation3], 1
    %2915 = vsyncpa %s2914, 1

</llo_original>
